<compile_context>
chip_gen: v5e
topology: v5e:2x2
jax: 0.10.0
libtpu: 0.0.40
codegen_flags: <defaults>
</compile_context>

<pallas_src>
import functools

import jax
import jax.numpy as jnp
from jax.experimental import pallas as pl
from jax.experimental.pallas import tpu as pltpu

_BN_EPS = 1e-5

# (Cin, Cout, K, conv stride s, conv pad, pool window w, pool stride q)
_CONV_CFGS = [
    dict(cin=1,  cout=8,  k=16, s=2, pad=7, w=8, q=4),
    dict(cin=8,  cout=12, k=12, s=2, pad=5, w=4, q=2),
    dict(cin=12, cout=32, k=9,  s=1, pad=4, w=5, q=2),
    dict(cin=32, cout=64, k=7,  s=1, pad=3, w=4, q=2),
    dict(cin=64, cout=64, k=5,  s=1, pad=2, w=2, q=2),
    dict(cin=64, cout=64, k=3,  s=1, pad=1, w=2, q=2),
    dict(cin=64, cout=72, k=3,  s=1, pad=1, w=2, q=2),
]
# Phase-cascade groups.  Within a group every block hands its output to the
# next one with stride-free lane-dense stores; the single group boundary uses
# a per-row in-VMEM scatter (keeping block 0's Toeplitz weight small).
_GROUPS = ((0, 1, 2, 3), (4, 5, 6))
_FC_IN = 216  # fixed by BinaryLinear(216, classCount) in the PyTorch module


# --------------------------------------------------------------------------
# static planning (all Python ints, evaluated at trace time)
# --------------------------------------------------------------------------
def _make_plan(L):
    """Per-block static parameters.

    For block b: P = #output phases it produces (next block's de-interleave
    factor inside a group), R = s*q*P = de-interleave factor of its padded
    input, n_max = ceil(lp/P) rows per phase, T = #input rows per window.
    """
    lengths, cur = [], L
    for c in _CONV_CFGS:
        lpad = cur + 2 * c["pad"]
        lout = (lpad - c["k"]) // c["s"] + 1
        lp = (lout - c["w"]) // c["q"] + 1
        lengths.append((lpad, lout, lp))
        cur = lp

    plan = [None] * len(_CONV_CFGS)
    for grp in _GROUPS:
        nxt = 1                                   # last block of a group: P=1
        for idx in reversed(grp):
            c = _CONV_CFGS[idx]
            lpad, lout, lp = lengths[idx]
            P = nxt
            R = c["s"] * c["q"] * P
            n_max = -(-lp // P)
            off_max = c["s"] * (c["q"] * (P - 1) + c["w"] - 1) + c["k"] - 1
            T = -(-(off_max + 1) // R)
            plan[idx] = dict(c, P=P, R=R, lp=lp, lpad=lpad, n_max=n_max,
                             T=T, nrows=n_max + T - 1)
            nxt = R
    return plan


def _toeplitz(w, cfg, dtype):
    """Tap-major phase/Toeplitz matmul weight built from sign(W) (bin_wei)."""
    cout, cin, k = w.shape
    wq = jnp.transpose(jnp.sign(w), (2, 1, 0)).reshape(k * cin, cout)
    rows = cfg["T"] * cfg["R"] * cin
    cols = []
    for p in range(cfg["w"]):          # tap-major: pooling = w wide lane slices
        for e in range(cfg["P"]):
            top = cfg["s"] * (cfg["q"] * e + p) * cin
            cols.append(jnp.pad(wq, ((top, rows - top - k * cin), (0, 0))))
    return jnp.concatenate(cols, axis=1).astype(dtype)


# --------------------------------------------------------------------------
# kernel-side pieces
# --------------------------------------------------------------------------
def _sign(x):  # forward value of torch.sign (sign(0) == 0)
    one = jnp.ones_like(x)
    return jnp.where(x > 0, one, jnp.where(x < 0, -one, jnp.zeros_like(x)))


def _fold_phases(v, P, cout):
    """(1, P*cout) with lane layout e*cout+co  ->  per-channel sum (1, cout)."""
    if P == 1:
        return v
    if P & (P - 1) == 0:               # power of two: log2(P) halving adds
        width = P * cout
        while width > cout:
            width //= 2
            v = v[:, :width] + v[:, width:2 * width]
        return v
    return functools.reduce(
        lambda a, b: a + b,
        [v[:, e * cout:(e + 1) * cout] for e in range(P)])


def _block_forward(cfg, d_ref, w_ref, g_ref, b_ref, B, bf16):
    """One BinConv1d + MaxPool1d + BatchNorm1d + BinActivation block.

    Returns the signed output as a lane-dense stacked tile y of shape
    (B*n_max, P*cout) with y[b*n_max + u, e*cout + c] == out[b, P*u + e, c];
    entries whose pooled position P*u + e >= lp are forced to 0.
    """
    P, w, cout = cfg["P"], cfg["w"], cfg["cout"]
    n_max, T, lp = cfg["n_max"], cfg["T"], cfg["lp"]
    W = P * cout

    # Stacked wide row window (both batches along sublanes):
    #   wrow[b*n_max + u, off*cin + c] == x_pad[b, R*u + off, c]
    rows = []
    for b in range(B):
        if T > 1:
            rows.append(jnp.concatenate(
                [d_ref[b, t:t + n_max, :] for t in range(T)], axis=1))
        else:
            rows.append(d_ref[b, 0:n_max, :])
    wrow = jnp.concatenate(rows, axis=0) if B > 1 else rows[0]
    if bf16:
        wrow = wrow.astype(jnp.bfloat16)   # +-1/0 activations: lossless

    # Conv (all phases and pool taps at once) -- a single MXU matmul.
    acts = jnp.dot(wrow, w_ref[...], preferred_element_type=jnp.float32)

    # MaxPool1d: max over w contiguous lane slices of width P*cout.
    pooled = acts[:, 0:W]
    for p in range(1, w):
        pooled = jnp.maximum(pooled, acts[:, p * W:(p + 1) * W])

    # Ragged tail: positions P*(n_max-1)+e >= lp are not real outputs.
    rem = lp % P
    invalid = None
    if rem:
        r_idx = jax.lax.broadcasted_iota(jnp.int32, (B * n_max, W), 0)
        l_idx = jax.lax.broadcasted_iota(jnp.int32, (B * n_max, W), 1)
        last_row = functools.reduce(
            jnp.logical_or,
            [r_idx == (b * n_max + n_max - 1) for b in range(B)])
        invalid = last_row & (l_idx >= rem * cout)
        pooled = jnp.where(invalid, 0.0, pooled)

    # BatchNorm1d, training mode: batch statistics, biased variance.
    cnt = float(B * lp)
    mean = _fold_phases(jnp.sum(pooled, axis=0, keepdims=True), P, cout) / cnt
    mean_w = jnp.concatenate([mean] * P, axis=1) if P > 1 else mean
    diff = pooled - mean_w
    sumsq = _fold_phases(jnp.sum(diff * diff, axis=0, keepdims=True), P, cout)
    if rem:
        # each zeroed invalid entry contributed exactly mean^2 to sumsq.
        sumsq = sumsq - (B * (P - rem)) * (mean * mean)
    var = sumsq / cnt
    scale = g_ref[...] * jax.lax.rsqrt(var + _BN_EPS)
    shift = b_ref[...] - mean * scale
    scale_w = jnp.concatenate([scale] * P, axis=1) if P > 1 else scale
    shift_w = jnp.concatenate([shift] * P, axis=1) if P > 1 else shift
    # TODO(synk): BatchNorm running_mean/running_var updates (training-mode
    # side effect) are not reproduced; only the forward value is.
    y = _sign(pooled * scale_w + shift_w)
    if invalid is not None:
        y = jnp.where(invalid, 0.0, y)   # keep the next block's zero padding
    return y


def _scatter(y, d_next_ref, cfg, cfg_next, B):
    """Store the signed stacked output y as the next block's de-interleaved
    padded input: D[b, j, r*C + c] == out_padded[b, R_next*j + r, c]."""
    P, C, n_max, lp = cfg["P"], cfg["cout"], cfg["n_max"], cfg["lp"]
    pad, nrows_next, R_next = cfg_next["pad"], cfg_next["nrows"], cfg_next["R"]

    if R_next == P:
        # Lane-dense path: one wide store per (batch, sublane-shift delta).
        d_min = -((pad + P - 1) // P)
        d_max = (P - 1 - pad) // P
        for d in range(d_min, d_max + 1):
            r0 = max(0, pad + d * P)
            r1 = min(P, pad + (d + 1) * P)
            if r1 <= r0:
                continue
            e0 = r0 - pad - d * P
            j_lo = max(0, -d)
            j_hi = min(n_max - d, nrows_next)
            if j_hi <= j_lo:
                continue
            for b in range(B):
                d_next_ref[b, j_lo:j_hi, r0 * C:r1 * C] = \
                    y[b * n_max + j_lo + d:b * n_max + j_hi + d,
                      e0 * C:(e0 + r1 - r0) * C]
    else:
        # Group boundary (this block has P == 1, next needs R_next > 1):
        # per-row scatter, ~2*lp (= 52) small stores -- far cheaper than the
        # HBM round trip + second pallas_call it replaces.
        for b in range(B):
            for t in range(lp):
                pos = t + pad
                j, r = pos // R_next, pos % R_next
                d_next_ref[b, j:j + 1, r * C:(r + 1) * C] = \
                    y[b * n_max + t:b * n_max + t + 1, :]
    # rows never written stay zero == the next block's conv zero padding.


def _make_fused_kernel(plan, B):
    n = len(plan)

    def kernel(*refs):
        it = iter(refs)
        d = next(it)
        blocks = [(next(it), next(it), next(it)) for _ in range(n)]
        wlin_ref = next(it)
        out_ref = next(it)
        scratch = [next(it) for _ in range(n - 1)]

        for s_ref in scratch:            # zeros == implicit conv zero padding
            s_ref[...] = jnp.zeros(s_ref.shape, s_ref.dtype)

        for i, cfg in enumerate(plan):
            w_ref, g_ref, b_ref = blocks[i]
            # Block 0 consumes the raw f32 signal (reference numerics);
            # all later blocks consume exact +-1/0 activations -> bf16.
            y = _block_forward(cfg, d, w_ref, g_ref, b_ref, B, bf16=(i != 0))
            if i + 1 < n:
                _scatter(y, scratch[i], cfg, plan[i + 1], B)
                d = scratch[i]
            else:
                # Flatten (torch (B, C, L) order folded into wlin) +
                # BinaryLinear: both batches in one bf16 matmul.
                lp, n_max = cfg["lp"], cfg["n_max"]
                feats = []
                for b in range(B):
                    feats.append(jnp.concatenate(
                        [y[b * n_max + l:b * n_max + l + 1, :]
                         for l in range(lp)], axis=1))
                feat = (jnp.concatenate(feats, axis=0) if B > 1
                        else feats[0]).astype(jnp.bfloat16)
                out_ref[...] = jnp.dot(feat, wlin_ref[...],
                                       preferred_element_type=jnp.float32)

    return kernel


# --------------------------------------------------------------------------
# parameters, one-time weight prep, forward
# --------------------------------------------------------------------------
def init_params(key, class_count):
    params = {"blocks": []}
    for c in _CONV_CFGS:
        key, kw = jax.random.split(key)
        w = 0.1 * jax.random.normal(kw, (c["cout"], c["cin"], c["k"]),
                                    jnp.float32)
        params["blocks"].append((w,
                                 jnp.ones((c["cout"],), jnp.float32),
                                 jnp.zeros((c["cout"],), jnp.float32)))
    key, kf = jax.random.split(key)
    params["fc_w"] = 0.1 * jax.random.normal(kf, (class_count, _FC_IN),
                                             jnp.float32)
    return params


def prepare_params(params, L):
    """One-time prep: binarized tap-major Toeplitz conv weights, signed and
    flatten-permuted FC weight, BN affine params reshaped for the kernel."""
    plan = _make_plan(L)
    tw, gammas, betas = [], [], []
    for i, cfg in enumerate(plan):
        w, gamma, beta = params["blocks"][i]
        dt = jnp.float32 if i == 0 else jnp.bfloat16  # blocks >=1 see +-1/0
        tw.append(_toeplitz(w, cfg, dt))
        gammas.append(gamma.reshape(1, -1).astype(jnp.float32))
        betas.append(beta.reshape(1, -1).astype(jnp.float32))
    n_classes = params["fc_w"].shape[0]
    lp7, cout7 = plan[-1]["lp"], plan[-1]["cout"]
    assert lp7 * cout7 == params["fc_w"].shape[1], \
        "input length inconsistent with BinaryLinear(216, ...)"
    wlin = jnp.transpose(
        jnp.sign(params["fc_w"]).reshape(n_classes, cout7, lp7),
        (2, 1, 0)).reshape(lp7 * cout7, n_classes)
    return {"tw": tw, "gamma": gammas, "beta": betas,
            "wlin": wlin.astype(jnp.bfloat16)}


@jax.jit
def binet_forward(x_ncw, prepared):
    # x_ncw: (B, 1, L) exactly like the PyTorch module.  L must satisfy the
    # architecture's length arithmetic so the flattened size is 216
    # (e.g. L = 3600, a standard ECG segment length).
    B, cin, L = x_ncw.shape
    assert cin == 1
    plan = _make_plan(L)
    n_classes = prepared["wlin"].shape[1]

    # Block-0 de-interleaved padded input: with cin == 1 this is a plain
    # pad + reshape, D0[b, j, r] == x_pad[b, R0*j + r].
    cfg0 = plan[0]
    total = cfg0["nrows"] * cfg0["R"]
    d0 = jnp.pad(x_ncw.reshape(B, L).astype(jnp.float32),
                 ((0, 0), (cfg0["pad"], total - L - cfg0["pad"]))
                 ).reshape(B, cfg0["nrows"], cfg0["R"] * cfg0["cin"])

    args = [d0]
    for i in range(len(plan)):
        args += [prepared["tw"][i], prepared["gamma"][i], prepared["beta"][i]]
    args.append(prepared["wlin"])

    # Single fused kernel: every intermediate activation lives in VMEM
    # scratch; total weights + scratch < 3 MiB (fits v5e/v6e/v7x defaults).
    return pl.pallas_call(
        _make_fused_kernel(plan, B),
        out_shape=jax.ShapeDtypeStruct((B, n_classes), jnp.float32),
        scratch_shapes=[
            pltpu.VMEM((B, c["nrows"], c["R"] * c["cin"]), jnp.float32)
            for c in plan[1:]],
    )(*args)


if __name__ == "__main__":
    key = jax.random.PRNGKey(0)
    key, kx = jax.random.split(key)
    # Smallest batch; L=3600 is fixed by the module (flatten must give 216).
    B, L, n_classes = 2, 3600, 5
    params = init_params(key, n_classes)
    prepared = prepare_params(params, L)      # one-time weight preparation
    x = jax.random.normal(kx, (B, 1, L), jnp.float32)
    out = binet_forward(x, prepared)
    jax.block_until_ready(out)
    assert out.shape == (B, n_classes), out.shape
    print("KERNEL_OK")
</pallas_src>

<mosaic_0001>
module attributes {stable_mosaic.version = 11 : i64} {
  func.func @kernel(%arg0: memref<2x30x128xf32, #tpu.memory_space<vmem>>, %arg1: memref<256x1024xf32, #tpu.memory_space<vmem>>, %arg2: memref<1x8xf32, #tpu.memory_space<vmem>>, %arg3: memref<1x8xf32, #tpu.memory_space<vmem>>, %arg4: memref<256x192xbf16, #tpu.memory_space<vmem>>, %arg5: memref<1x12xf32, #tpu.memory_space<vmem>>, %arg6: memref<1x12xf32, #tpu.memory_space<vmem>>, %arg7: memref<192x320xbf16, #tpu.memory_space<vmem>>, %arg8: memref<1x32xf32, #tpu.memory_space<vmem>>, %arg9: memref<1x32xf32, #tpu.memory_space<vmem>>, %arg10: memref<320x256xbf16, #tpu.memory_space<vmem>>, %arg11: memref<1x64xf32, #tpu.memory_space<vmem>>, %arg12: memref<1x64xf32, #tpu.memory_space<vmem>>, %arg13: memref<1024x512xbf16, #tpu.memory_space<vmem>>, %arg14: memref<1x64xf32, #tpu.memory_space<vmem>>, %arg15: memref<1x64xf32, #tpu.memory_space<vmem>>, %arg16: memref<512x256xbf16, #tpu.memory_space<vmem>>, %arg17: memref<1x64xf32, #tpu.memory_space<vmem>>, %arg18: memref<1x64xf32, #tpu.memory_space<vmem>>, %arg19: memref<256x144xbf16, #tpu.memory_space<vmem>>, %arg20: memref<1x72xf32, #tpu.memory_space<vmem>>, %arg21: memref<1x72xf32, #tpu.memory_space<vmem>>, %arg22: memref<216x5xbf16, #tpu.memory_space<vmem>>, %arg23: memref<2x5xf32, #tpu.memory_space<vmem>>, %arg24: memref<2x29x128xf32, #tpu.memory_space<vmem>>, %arg25: memref<2x30x48xf32, #tpu.memory_space<vmem>>, %arg26: memref<2x30x64xf32, #tpu.memory_space<vmem>>, %arg27: memref<2x5x512xf32, #tpu.memory_space<vmem>>, %arg28: memref<2x4x256xf32, #tpu.memory_space<vmem>>, %arg29: memref<2x4x128xf32, #tpu.memory_space<vmem>>) attributes {dimension_semantics = [], scalar_prefetch = 0 : i64, scratch_operands = 6 : i64, tpu.core_type = #tpu.core_type<tc>} {
    %cst = arith.constant 0.000000e+00 : f32
    %0 = vector.broadcast %cst : f32 to vector<2x29x128xf32>
    %c0 = arith.constant 0 : index
    %c0_0 = arith.constant 0 : index
    %c0_1 = arith.constant 0 : index
    %1 = vector.load %arg24[%c0, %c0_0, %c0_1] : memref<2x29x128xf32, #tpu.memory_space<vmem>>, vector<2x29x128xf32>
    tpu.vector_store %arg24[%c0, %c0_0, %c0_1], %0 {strides = array<i32>} : memref<2x29x128xf32, #tpu.memory_space<vmem>>, vector<2x29x128xf32>,
    %cst_2 = arith.constant 0.000000e+00 : f32
    %2 = vector.broadcast %cst_2 : f32 to vector<2x30x48xf32>
    %c0_3 = arith.constant 0 : index
    %c0_4 = arith.constant 0 : index
    %c0_5 = arith.constant 0 : index
    %3 = vector.load %arg25[%c0_3, %c0_4, %c0_5] : memref<2x30x48xf32, #tpu.memory_space<vmem>>, vector<2x30x48xf32>
    tpu.vector_store %arg25[%c0_3, %c0_4, %c0_5], %2 {strides = array<i32>} : memref<2x30x48xf32, #tpu.memory_space<vmem>>, vector<2x30x48xf32>,
    %cst_6 = arith.constant 0.000000e+00 : f32
    %4 = vector.broadcast %cst_6 : f32 to vector<2x30x64xf32>
    %c0_7 = arith.constant 0 : index
    %c0_8 = arith.constant 0 : index
    %c0_9 = arith.constant 0 : index
    %5 = vector.load %arg26[%c0_7, %c0_8, %c0_9] : memref<2x30x64xf32, #tpu.memory_space<vmem>>, vector<2x30x64xf32>
    tpu.vector_store %arg26[%c0_7, %c0_8, %c0_9], %4 {strides = array<i32>} : memref<2x30x64xf32, #tpu.memory_space<vmem>>, vector<2x30x64xf32>,
    %cst_10 = arith.constant 0.000000e+00 : f32
    %6 = vector.broadcast %cst_10 : f32 to vector<2x5x512xf32>
    %c0_11 = arith.constant 0 : index
    %c0_12 = arith.constant 0 : index
    %c0_13 = arith.constant 0 : index
    %7 = vector.load %arg27[%c0_11, %c0_12, %c0_13] : memref<2x5x512xf32, #tpu.memory_space<vmem>>, vector<2x5x512xf32>
    tpu.vector_store %arg27[%c0_11, %c0_12, %c0_13], %6 {strides = array<i32>} : memref<2x5x512xf32, #tpu.memory_space<vmem>>, vector<2x5x512xf32>,
    %cst_14 = arith.constant 0.000000e+00 : f32
    %8 = vector.broadcast %cst_14 : f32 to vector<2x4x256xf32>
    %c0_15 = arith.constant 0 : index
    %c0_16 = arith.constant 0 : index
    %c0_17 = arith.constant 0 : index
    %9 = vector.load %arg28[%c0_15, %c0_16, %c0_17] : memref<2x4x256xf32, #tpu.memory_space<vmem>>, vector<2x4x256xf32>
    tpu.vector_store %arg28[%c0_15, %c0_16, %c0_17], %8 {strides = array<i32>} : memref<2x4x256xf32, #tpu.memory_space<vmem>>, vector<2x4x256xf32>,
    %cst_18 = arith.constant 0.000000e+00 : f32
    %10 = vector.broadcast %cst_18 : f32 to vector<2x4x128xf32>
    %c0_19 = arith.constant 0 : index
    %c0_20 = arith.constant 0 : index
    %c0_21 = arith.constant 0 : index
    %11 = vector.load %arg29[%c0_19, %c0_20, %c0_21] : memref<2x4x128xf32, #tpu.memory_space<vmem>>, vector<2x4x128xf32>
    tpu.vector_store %arg29[%c0_19, %c0_20, %c0_21], %10 {strides = array<i32>} : memref<2x4x128xf32, #tpu.memory_space<vmem>>, vector<2x4x128xf32>,
    %c0_22 = arith.constant 0 : index
    %c0_23 = arith.constant 0 : index
    %c0_24 = arith.constant 0 : index
    %12 = vector.load %arg0[%c0_22, %c0_23, %c0_24] : memref<2x30x128xf32, #tpu.memory_space<vmem>>, vector<1x29x128xf32>
    %13 = vector.shape_cast %12 : vector<1x29x128xf32> to vector<29x128xf32>
    %c0_25 = arith.constant 0 : index
    %c1 = arith.constant 1 : index
    %c0_26 = arith.constant 0 : index
    %14 = vector.load %arg0[%c0_25, %c1, %c0_26] : memref<2x30x128xf32, #tpu.memory_space<vmem>>, vector<1x29x128xf32>
    %15 = vector.shape_cast %14 : vector<1x29x128xf32> to vector<29x128xf32>
    %16 = tpu.concatenate %13, %15 in 1 : vector<29x128xf32>, vector<29x128xf32> -> vector<29x256xf32>
    %c1_27 = arith.constant 1 : index
    %c0_28 = arith.constant 0 : index
    %c0_29 = arith.constant 0 : index
    %17 = vector.load %arg0[%c1_27, %c0_28, %c0_29] : memref<2x30x128xf32, #tpu.memory_space<vmem>>, vector<1x29x128xf32>
    %18 = vector.shape_cast %17 : vector<1x29x128xf32> to vector<29x128xf32>
    %c1_30 = arith.constant 1 : index
    %c1_31 = arith.constant 1 : index
    %c0_32 = arith.constant 0 : index
    %19 = vector.load %arg0[%c1_30, %c1_31, %c0_32] : memref<2x30x128xf32, #tpu.memory_space<vmem>>, vector<1x29x128xf32>
    %20 = vector.shape_cast %19 : vector<1x29x128xf32> to vector<29x128xf32>
    %21 = tpu.concatenate %18, %20 in 1 : vector<29x128xf32>, vector<29x128xf32> -> vector<29x256xf32>
    %22 = tpu.concatenate %16, %21 in 0 : vector<29x256xf32>, vector<29x256xf32> -> vector<58x256xf32>
    %c0_33 = arith.constant 0 : index
    %c0_34 = arith.constant 0 : index
    %23 = vector.load %arg1[%c0_33, %c0_34] : memref<256x1024xf32, #tpu.memory_space<vmem>>, vector<256x1024xf32>
    %cst_35 = arith.constant dense<0.000000e+00> : vector<58x1024xf32>
    %24 = tpu.matmul %22, %23, %cst_35 {dimension_numbers = #tpu.dot_dimension_numbers<[1], [0], [0], [1], [0, 0, 1, 1], [], []>} : vector<58x256xf32>, vector<256x1024xf32>, vector<58x1024xf32> -> vector<58x1024xf32>
    %25 = vector.extract_strided_slice %24 {offsets = [0, 0], sizes = [58, 128], strides = [1, 1]} : vector<58x1024xf32> to vector<58x128xf32>
    %26 = vector.extract_strided_slice %24 {offsets = [0, 128], sizes = [58, 128], strides = [1, 1]} : vector<58x1024xf32> to vector<58x128xf32>
    %27 = arith.maximumf %25, %26 : vector<58x128xf32>
    %28 = vector.extract_strided_slice %24 {offsets = [0, 256], sizes = [58, 128], strides = [1, 1]} : vector<58x1024xf32> to vector<58x128xf32>
    %29 = arith.maximumf %27, %28 : vector<58x128xf32>
    %30 = vector.extract_strided_slice %24 {offsets = [0, 384], sizes = [58, 128], strides = [1, 1]} : vector<58x1024xf32> to vector<58x128xf32>
    %31 = arith.maximumf %29, %30 : vector<58x128xf32>
    %32 = vector.extract_strided_slice %24 {offsets = [0, 512], sizes = [58, 128], strides = [1, 1]} : vector<58x1024xf32> to vector<58x128xf32>
    %33 = arith.maximumf %31, %32 : vector<58x128xf32>
    %34 = vector.extract_strided_slice %24 {offsets = [0, 640], sizes = [58, 128], strides = [1, 1]} : vector<58x1024xf32> to vector<58x128xf32>
    %35 = arith.maximumf %33, %34 : vector<58x128xf32>
    %36 = vector.extract_strided_slice %24 {offsets = [0, 768], sizes = [58, 128], strides = [1, 1]} : vector<58x1024xf32> to vector<58x128xf32>
    %37 = arith.maximumf %35, %36 : vector<58x128xf32>
    %38 = vector.extract_strided_slice %24 {offsets = [0, 896], sizes = [58, 128], strides = [1, 1]} : vector<58x1024xf32> to vector<58x128xf32>
    %39 = arith.maximumf %37, %38 : vector<58x128xf32>
    %40 = tpu.iota {dimensions = array<i32: 0>} : vector<58x128xi32>
    %41 = tpu.iota {dimensions = array<i32: 1>} : vector<58x128xi32>
    %c28_i32 = arith.constant 28 : i32
    %42 = vector.broadcast %c28_i32 : i32 to vector<58x128xi32>
    %43 = arith.cmpi eq, %40, %42 : vector<58x128xi32>
    %c57_i32 = arith.constant 57 : i32
    %44 = vector.broadcast %c57_i32 : i32 to vector<58x128xi32>
    %45 = arith.cmpi eq, %40, %44 : vector<58x128xi32>
    %46 = arith.ori %43, %45 : vector<58x128xi1>
    %c8_i32 = arith.constant 8 : i32
    %47 = vector.broadcast %c8_i32 : i32 to vector<58x128xi32>
    %48 = arith.cmpi sge, %41, %47 : vector<58x128xi32>
    %49 = arith.andi %46, %48 : vector<58x128xi1>
    %cst_36 = arith.constant 0.000000e+00 : f32
    %50 = vector.broadcast %cst_36 : f32 to vector<58x128xf32>
    %51 = arith.select %49, %50, %39 : vector<58x128xi1>, vector<58x128xf32>
    %cst_37 = arith.constant dense<0.000000e+00> : vector<128xf32>
    %52 = vector.multi_reduction <add>, %51, %cst_37 [0] : vector<58x128xf32> to vector<128xf32>
    %53 = vector.shape_cast %52 : vector<128xf32> to vector<1x128xf32>
    %54 = vector.extract_strided_slice %53 {offsets = [0, 0], sizes = [1, 64], strides = [1, 1]} : vector<1x128xf32> to vector<1x64xf32>
    %55 = vector.extract_strided_slice %53 {offsets = [0, 64], sizes = [1, 64], strides = [1, 1]} : vector<1x128xf32> to vector<1x64xf32>
    %56 = arith.addf %54, %55 : vector<1x64xf32>
    %57 = vector.extract_strided_slice %56 {offsets = [0, 0], sizes = [1, 32], strides = [1, 1]} : vector<1x64xf32> to vector<1x32xf32>
    %58 = vector.extract_strided_slice %56 {offsets = [0, 32], sizes = [1, 32], strides = [1, 1]} : vector<1x64xf32> to vector<1x32xf32>
    %59 = arith.addf %57, %58 : vector<1x32xf32>
    %60 = vector.extract_strided_slice %59 {offsets = [0, 0], sizes = [1, 16], strides = [1, 1]} : vector<1x32xf32> to vector<1x16xf32>
    %61 = vector.extract_strided_slice %59 {offsets = [0, 16], sizes = [1, 16], strides = [1, 1]} : vector<1x32xf32> to vector<1x16xf32>
    %62 = arith.addf %60, %61 : vector<1x16xf32>
    %63 = vector.extract_strided_slice %62 {offsets = [0, 0], sizes = [1, 8], strides = [1, 1]} : vector<1x16xf32> to vector<1x8xf32>
    %64 = vector.extract_strided_slice %62 {offsets = [0, 8], sizes = [1, 8], strides = [1, 1]} : vector<1x16xf32> to vector<1x8xf32>
    %65 = arith.addf %63, %64 : vector<1x8xf32>
    %cst_38 = arith.constant 8.980000e+02 : f32
    %66 = vector.broadcast %cst_38 : f32 to vector<1x8xf32>
    %67 = arith.divf %65, %66 : vector<1x8xf32>
    %68 = tpu.concatenate %67, %67, %67, %67, %67, %67, %67, %67, %67, %67, %67, %67, %67, %67, %67, %67 in 1 : vector<1x8xf32>, vector<1x8xf32>, vector<1x8xf32>, vector<1x8xf32>, vector<1x8xf32>, vector<1x8xf32>, vector<1x8xf32>, vector<1x8xf32>, vector<1x8xf32>, vector<1x8xf32>, vector<1x8xf32>, vector<1x8xf32>, vector<1x8xf32>, vector<1x8xf32>, vector<1x8xf32>, vector<1x8xf32> -> vector<1x128xf32>
    %69 = vector.broadcast %68 : vector<1x128xf32> to vector<58x128xf32>
    %70 = arith.subf %51, %69 : vector<58x128xf32>
    %71 = arith.mulf %70, %70 : vector<58x128xf32>
    %cst_39 = arith.constant dense<0.000000e+00> : vector<128xf32>
    %72 = vector.multi_reduction <add>, %71, %cst_39 [0] : vector<58x128xf32> to vector<128xf32>
    %73 = vector.shape_cast %72 : vector<128xf32> to vector<1x128xf32>
    %74 = vector.extract_strided_slice %73 {offsets = [0, 0], sizes = [1, 64], strides = [1, 1]} : vector<1x128xf32> to vector<1x64xf32>
    %75 = vector.extract_strided_slice %73 {offsets = [0, 64], sizes = [1, 64], strides = [1, 1]} : vector<1x128xf32> to vector<1x64xf32>
    %76 = arith.addf %74, %75 : vector<1x64xf32>
    %77 = vector.extract_strided_slice %76 {offsets = [0, 0], sizes = [1, 32], strides = [1, 1]} : vector<1x64xf32> to vector<1x32xf32>
    %78 = vector.extract_strided_slice %76 {offsets = [0, 32], sizes = [1, 32], strides = [1, 1]} : vector<1x64xf32> to vector<1x32xf32>
    %79 = arith.addf %77, %78 : vector<1x32xf32>
    %80 = vector.extract_strided_slice %79 {offsets = [0, 0], sizes = [1, 16], strides = [1, 1]} : vector<1x32xf32> to vector<1x16xf32>
    %81 = vector.extract_strided_slice %79 {offsets = [0, 16], sizes = [1, 16], strides = [1, 1]} : vector<1x32xf32> to vector<1x16xf32>
    %82 = arith.addf %80, %81 : vector<1x16xf32>
    %83 = vector.extract_strided_slice %82 {offsets = [0, 0], sizes = [1, 8], strides = [1, 1]} : vector<1x16xf32> to vector<1x8xf32>
    %84 = vector.extract_strided_slice %82 {offsets = [0, 8], sizes = [1, 8], strides = [1, 1]} : vector<1x16xf32> to vector<1x8xf32>
    %85 = arith.addf %83, %84 : vector<1x8xf32>
    %86 = arith.mulf %67, %67 : vector<1x8xf32>
    %cst_40 = arith.constant 3.000000e+01 : f32
    %87 = vector.broadcast %cst_40 : f32 to vector<1x8xf32>
    %88 = arith.mulf %87, %86 : vector<1x8xf32>
    %89 = arith.subf %85, %88 : vector<1x8xf32>
    %cst_41 = arith.constant 8.980000e+02 : f32
    %90 = vector.broadcast %cst_41 : f32 to vector<1x8xf32>
    %91 = arith.divf %89, %90 : vector<1x8xf32>
    %c0_42 = arith.constant 0 : index
    %c0_43 = arith.constant 0 : index
    %92 = vector.load %arg2[%c0_42, %c0_43] : memref<1x8xf32, #tpu.memory_space<vmem>>, vector<1x8xf32>
    %cst_44 = arith.constant 9.99999974E-6 : f32
    %93 = vector.broadcast %cst_44 : f32 to vector<1x8xf32>
    %94 = arith.addf %91, %93 : vector<1x8xf32>
    %95 = math.rsqrt %94 : vector<1x8xf32>
    %96 = arith.mulf %92, %95 : vector<1x8xf32>
    %c0_45 = arith.constant 0 : index
    %c0_46 = arith.constant 0 : index
    %97 = vector.load %arg3[%c0_45, %c0_46] : memref<1x8xf32, #tpu.memory_space<vmem>>, vector<1x8xf32>
    %98 = arith.mulf %67, %96 : vector<1x8xf32>
    %99 = arith.subf %97, %98 : vector<1x8xf32>
    %100 = tpu.concatenate %96, %96, %96, %96, %96, %96, %96, %96, %96, %96, %96, %96, %96, %96, %96, %96 in 1 : vector<1x8xf32>, vector<1x8xf32>, vector<1x8xf32>, vector<1x8xf32>, vector<1x8xf32>, vector<1x8xf32>, vector<1x8xf32>, vector<1x8xf32>, vector<1x8xf32>, vector<1x8xf32>, vector<1x8xf32>, vector<1x8xf32>, vector<1x8xf32>, vector<1x8xf32>, vector<1x8xf32>, vector<1x8xf32> -> vector<1x128xf32>
    %101 = tpu.concatenate %99, %99, %99, %99, %99, %99, %99, %99, %99, %99, %99, %99, %99, %99, %99, %99 in 1 : vector<1x8xf32>, vector<1x8xf32>, vector<1x8xf32>, vector<1x8xf32>, vector<1x8xf32>, vector<1x8xf32>, vector<1x8xf32>, vector<1x8xf32>, vector<1x8xf32>, vector<1x8xf32>, vector<1x8xf32>, vector<1x8xf32>, vector<1x8xf32>, vector<1x8xf32>, vector<1x8xf32>, vector<1x8xf32> -> vector<1x128xf32>
    %102 = vector.broadcast %100 : vector<1x128xf32> to vector<58x128xf32>
    %103 = arith.mulf %51, %102 : vector<58x128xf32>
    %104 = vector.broadcast %101 : vector<1x128xf32> to vector<58x128xf32>
    %105 = arith.addf %103, %104 : vector<58x128xf32>
    %cst_47 = arith.constant 1.000000e+00 : f32
    %106 = vector.broadcast %cst_47 : f32 to vector<58x128xf32>
    %cst_48 = arith.constant 0.000000e+00 : f32
    %107 = vector.broadcast %cst_48 : f32 to vector<58x128xf32>
    %108 = arith.cmpf ogt, %105, %107 : vector<58x128xf32>
    %cst_49 = arith.constant 0.000000e+00 : f32
    %109 = vector.broadcast %cst_49 : f32 to vector<58x128xf32>
    %110 = arith.cmpf olt, %105, %109 : vector<58x128xf32>
    %cst_50 = arith.constant 0.000000e+00 : f32
    %111 = vector.broadcast %cst_50 : f32 to vector<58x128xf32>
    %112 = arith.subf %111, %106 : vector<58x128xf32>
    %cst_51 = arith.constant 0.000000e+00 : f32
    %113 = vector.broadcast %cst_51 : f32 to vector<58x128xf32>
    %114 = arith.select %110, %112, %113 : vector<58x128xi1>, vector<58x128xf32>
    %115 = arith.select %108, %106, %114 : vector<58x128xi1>, vector<58x128xf32>
    %cst_52 = arith.constant 0.000000e+00 : f32
    %116 = vector.broadcast %cst_52 : f32 to vector<58x128xf32>
    %117 = arith.select %49, %116, %115 : vector<58x128xi1>, vector<58x128xf32>
    %118 = vector.extract_strided_slice %117 {offsets = [0, 88], sizes = [28, 40], strides = [1, 1]} : vector<58x128xf32> to vector<28x40xf32>
    %c0_53 = arith.constant 0 : index
    %c1_54 = arith.constant 1 : index
    %c0_55 = arith.constant 0 : index
    %119 = vector.load %arg24[%c0_53, %c1_54, %c0_55] : memref<2x29x128xf32, #tpu.memory_space<vmem>>, vector<1x28x40xf32>
    %120 = vector.shape_cast %119 : vector<1x28x40xf32> to vector<28x40xf32>
    %121 = vector.shape_cast %118 : vector<28x40xf32> to vector<1x28x40xf32>
    tpu.vector_store %arg24[%c0_53, %c1_54, %c0_55], %121 {strides = array<i32>} : memref<2x29x128xf32, #tpu.memory_space<vmem>>, vector<1x28x40xf32>,
    %122 = vector.extract_strided_slice %117 {offsets = [29, 88], sizes = [28, 40], strides = [1, 1]} : vector<58x128xf32> to vector<28x40xf32>
    %c1_56 = arith.constant 1 : index
    %c1_57 = arith.constant 1 : index
    %c0_58 = arith.constant 0 : index
    %123 = vector.load %arg24[%c1_56, %c1_57, %c0_58] : memref<2x29x128xf32, #tpu.memory_space<vmem>>, vector<1x28x40xf32>
    %124 = vector.shape_cast %123 : vector<1x28x40xf32> to vector<28x40xf32>
    %125 = vector.shape_cast %122 : vector<28x40xf32> to vector<1x28x40xf32>
    tpu.vector_store %arg24[%c1_56, %c1_57, %c0_58], %125 {strides = array<i32>} : memref<2x29x128xf32, #tpu.memory_space<vmem>>, vector<1x28x40xf32>,
    %126 = vector.extract_strided_slice %117 {offsets = [0, 0], sizes = [29, 88], strides = [1, 1]} : vector<58x128xf32> to vector<29x88xf32>
    %c0_59 = arith.constant 0 : index
    %c0_60 = arith.constant 0 : index
    %c40 = arith.constant 40 : index
    %127 = vector.load %arg24[%c0_59, %c0_60, %c40] : memref<2x29x128xf32, #tpu.memory_space<vmem>>, vector<1x29x88xf32>
    %128 = vector.shape_cast %127 : vector<1x29x88xf32> to vector<29x88xf32>
    %129 = vector.shape_cast %126 : vector<29x88xf32> to vector<1x29x88xf32>
    tpu.vector_store %arg24[%c0_59, %c0_60, %c40], %129 {strides = array<i32>} : memref<2x29x128xf32, #tpu.memory_space<vmem>>, vector<1x29x88xf32>,
    %130 = vector.extract_strided_slice %117 {offsets = [29, 0], sizes = [29, 88], strides = [1, 1]} : vector<58x128xf32> to vector<29x88xf32>
    %c1_61 = arith.constant 1 : index
    %c0_62 = arith.constant 0 : index
    %c40_63 = arith.constant 40 : index
    %131 = vector.load %arg24[%c1_61, %c0_62, %c40_63] : memref<2x29x128xf32, #tpu.memory_space<vmem>>, vector<1x29x88xf32>
    %132 = vector.shape_cast %131 : vector<1x29x88xf32> to vector<29x88xf32>
    %133 = vector.shape_cast %130 : vector<29x88xf32> to vector<1x29x88xf32>
    tpu.vector_store %arg24[%c1_61, %c0_62, %c40_63], %133 {strides = array<i32>} : memref<2x29x128xf32, #tpu.memory_space<vmem>>, vector<1x29x88xf32>,
    %c0_64 = arith.constant 0 : index
    %c0_65 = arith.constant 0 : index
    %c0_66 = arith.constant 0 : index
    %134 = vector.load %arg24[%c0_64, %c0_65, %c0_66] : memref<2x29x128xf32, #tpu.memory_space<vmem>>, vector<1x28x128xf32>
    %135 = vector.shape_cast %134 : vector<1x28x128xf32> to vector<28x128xf32>
    %c0_67 = arith.constant 0 : index
    %c1_68 = arith.constant 1 : index
    %c0_69 = arith.constant 0 : index
    %136 = vector.load %arg24[%c0_67, %c1_68, %c0_69] : memref<2x29x128xf32, #tpu.memory_space<vmem>>, vector<1x28x128xf32>
    %137 = vector.shape_cast %136 : vector<1x28x128xf32> to vector<28x128xf32>
    %138 = tpu.concatenate %135, %137 in 1 : vector<28x128xf32>, vector<28x128xf32> -> vector<28x256xf32>
    %c1_70 = arith.constant 1 : index
    %c0_71 = arith.constant 0 : index
    %c0_72 = arith.constant 0 : index
    %139 = vector.load %arg24[%c1_70, %c0_71, %c0_72] : memref<2x29x128xf32, #tpu.memory_space<vmem>>, vector<1x28x128xf32>
    %140 = vector.shape_cast %139 : vector<1x28x128xf32> to vector<28x128xf32>
    %c1_73 = arith.constant 1 : index
    %c1_74 = arith.constant 1 : index
    %c0_75 = arith.constant 0 : index
    %141 = vector.load %arg24[%c1_73, %c1_74, %c0_75] : memref<2x29x128xf32, #tpu.memory_space<vmem>>, vector<1x28x128xf32>
    %142 = vector.shape_cast %141 : vector<1x28x128xf32> to vector<28x128xf32>
    %143 = tpu.concatenate %140, %142 in 1 : vector<28x128xf32>, vector<28x128xf32> -> vector<28x256xf32>
    %144 = tpu.concatenate %138, %143 in 0 : vector<28x256xf32>, vector<28x256xf32> -> vector<56x256xf32>
    %145 = arith.truncf %144 : vector<56x256xf32> to vector<56x256xbf16>
    %c0_76 = arith.constant 0 : index
    %c0_77 = arith.constant 0 : index
    %146 = vector.load %arg4[%c0_76, %c0_77] : memref<256x192xbf16, #tpu.memory_space<vmem>>, vector<256x192xbf16>
    %cst_78 = arith.constant dense<0.000000e+00> : vector<56x192xf32>
    %147 = tpu.matmul %145, %146, %cst_78 {dimension_numbers = #tpu.dot_dimension_numbers<[1], [0], [0], [1], [0, 0, 1, 1], [], []>} : vector<56x256xbf16>, vector<256x192xbf16>, vector<56x192xf32> -> vector<56x192xf32>
    %148 = vector.extract_strided_slice %147 {offsets = [0, 0], sizes = [56, 48], strides = [1, 1]} : vector<56x192xf32> to vector<56x48xf32>
    %149 = vector.extract_strided_slice %147 {offsets = [0, 48], sizes = [56, 48], strides = [1, 1]} : vector<56x192xf32> to vector<56x48xf32>
    %150 = arith.maximumf %148, %149 : vector<56x48xf32>
    %151 = vector.extract_strided_slice %147 {offsets = [0, 96], sizes = [56, 48], strides = [1, 1]} : vector<56x192xf32> to vector<56x48xf32>
    %152 = arith.maximumf %150, %151 : vector<56x48xf32>
    %153 = vector.extract_strided_slice %147 {offsets = [0, 144], sizes = [56, 48], strides = [1, 1]} : vector<56x192xf32> to vector<56x48xf32>
    %154 = arith.maximumf %152, %153 : vector<56x48xf32>
    %155 = tpu.iota {dimensions = array<i32: 0>} : vector<56x48xi32>
    %156 = tpu.iota {dimensions = array<i32: 1>} : vector<56x48xi32>
    %c27_i32 = arith.constant 27 : i32
    %157 = vector.broadcast %c27_i32 : i32 to vector<56x48xi32>
    %158 = arith.cmpi eq, %155, %157 : vector<56x48xi32>
    %c55_i32 = arith.constant 55 : i32
    %159 = vector.broadcast %c55_i32 : i32 to vector<56x48xi32>
    %160 = arith.cmpi eq, %155, %159 : vector<56x48xi32>
    %161 = arith.ori %158, %160 : vector<56x48xi1>
    %c36_i32 = arith.constant 36 : i32
    %162 = vector.broadcast %c36_i32 : i32 to vector<56x48xi32>
    %163 = arith.cmpi sge, %156, %162 : vector<56x48xi32>
    %164 = arith.andi %161, %163 : vector<56x48xi1>
    %cst_79 = arith.constant 0.000000e+00 : f32
    %165 = vector.broadcast %cst_79 : f32 to vector<56x48xf32>
    %166 = arith.select %164, %165, %154 : vector<56x48xi1>, vector<56x48xf32>
    %cst_80 = arith.constant dense<0.000000e+00> : vector<48xf32>
    %167 = vector.multi_reduction <add>, %166, %cst_80 [0] : vector<56x48xf32> to vector<48xf32>
    %168 = vector.shape_cast %167 : vector<48xf32> to vector<1x48xf32>
    %169 = vector.extract_strided_slice %168 {offsets = [0, 0], sizes = [1, 24], strides = [1, 1]} : vector<1x48xf32> to vector<1x24xf32>
    %170 = vector.extract_strided_slice %168 {offsets = [0, 24], sizes = [1, 24], strides = [1, 1]} : vector<1x48xf32> to vector<1x24xf32>
    %171 = arith.addf %169, %170 : vector<1x24xf32>
    %172 = vector.extract_strided_slice %171 {offsets = [0, 0], sizes = [1, 12], strides = [1, 1]} : vector<1x24xf32> to vector<1x12xf32>
    %173 = vector.extract_strided_slice %171 {offsets = [0, 12], sizes = [1, 12], strides = [1, 1]} : vector<1x24xf32> to vector<1x12xf32>
    %174 = arith.addf %172, %173 : vector<1x12xf32>
    %cst_81 = arith.constant 2.220000e+02 : f32
    %175 = vector.broadcast %cst_81 : f32 to vector<1x12xf32>
    %176 = arith.divf %174, %175 : vector<1x12xf32>
    %177 = tpu.concatenate %176, %176, %176, %176 in 1 : vector<1x12xf32>, vector<1x12xf32>, vector<1x12xf32>, vector<1x12xf32> -> vector<1x48xf32>
    %178 = vector.broadcast %177 : vector<1x48xf32> to vector<56x48xf32>
    %179 = arith.subf %166, %178 : vector<56x48xf32>
    %180 = arith.mulf %179, %179 : vector<56x48xf32>
    %cst_82 = arith.constant dense<0.000000e+00> : vector<48xf32>
    %181 = vector.multi_reduction <add>, %180, %cst_82 [0] : vector<56x48xf32> to vector<48xf32>
    %182 = vector.shape_cast %181 : vector<48xf32> to vector<1x48xf32>
    %183 = vector.extract_strided_slice %182 {offsets = [0, 0], sizes = [1, 24], strides = [1, 1]} : vector<1x48xf32> to vector<1x24xf32>
    %184 = vector.extract_strided_slice %182 {offsets = [0, 24], sizes = [1, 24], strides = [1, 1]} : vector<1x48xf32> to vector<1x24xf32>
    %185 = arith.addf %183, %184 : vector<1x24xf32>
    %186 = vector.extract_strided_slice %185 {offsets = [0, 0], sizes = [1, 12], strides = [1, 1]} : vector<1x24xf32> to vector<1x12xf32>
    %187 = vector.extract_strided_slice %185 {offsets = [0, 12], sizes = [1, 12], strides = [1, 1]} : vector<1x24xf32> to vector<1x12xf32>
    %188 = arith.addf %186, %187 : vector<1x12xf32>
    %189 = arith.mulf %176, %176 : vector<1x12xf32>
    %cst_83 = arith.constant 2.000000e+00 : f32
    %190 = vector.broadcast %cst_83 : f32 to vector<1x12xf32>
    %191 = arith.mulf %190, %189 : vector<1x12xf32>
    %192 = arith.subf %188, %191 : vector<1x12xf32>
    %cst_84 = arith.constant 2.220000e+02 : f32
    %193 = vector.broadcast %cst_84 : f32 to vector<1x12xf32>
    %194 = arith.divf %192, %193 : vector<1x12xf32>
    %c0_85 = arith.constant 0 : index
    %c0_86 = arith.constant 0 : index
    %195 = vector.load %arg5[%c0_85, %c0_86] : memref<1x12xf32, #tpu.memory_space<vmem>>, vector<1x12xf32>
    %cst_87 = arith.constant 9.99999974E-6 : f32
    %196 = vector.broadcast %cst_87 : f32 to vector<1x12xf32>
    %197 = arith.addf %194, %196 : vector<1x12xf32>
    %198 = math.rsqrt %197 : vector<1x12xf32>
    %199 = arith.mulf %195, %198 : vector<1x12xf32>
    %c0_88 = arith.constant 0 : index
    %c0_89 = arith.constant 0 : index
    %200 = vector.load %arg6[%c0_88, %c0_89] : memref<1x12xf32, #tpu.memory_space<vmem>>, vector<1x12xf32>
    %201 = arith.mulf %176, %199 : vector<1x12xf32>
    %202 = arith.subf %200, %201 : vector<1x12xf32>
    %203 = tpu.concatenate %199, %199, %199, %199 in 1 : vector<1x12xf32>, vector<1x12xf32>, vector<1x12xf32>, vector<1x12xf32> -> vector<1x48xf32>
    %204 = tpu.concatenate %202, %202, %202, %202 in 1 : vector<1x12xf32>, vector<1x12xf32>, vector<1x12xf32>, vector<1x12xf32> -> vector<1x48xf32>
    %205 = vector.broadcast %203 : vector<1x48xf32> to vector<56x48xf32>
    %206 = arith.mulf %166, %205 : vector<56x48xf32>
    %207 = vector.broadcast %204 : vector<1x48xf32> to vector<56x48xf32>
    %208 = arith.addf %206, %207 : vector<56x48xf32>
    %cst_90 = arith.constant 1.000000e+00 : f32
    %209 = vector.broadcast %cst_90 : f32 to vector<56x48xf32>
    %cst_91 = arith.constant 0.000000e+00 : f32
    %210 = vector.broadcast %cst_91 : f32 to vector<56x48xf32>
    %211 = arith.cmpf ogt, %208, %210 : vector<56x48xf32>
    %cst_92 = arith.constant 0.000000e+00 : f32
    %212 = vector.broadcast %cst_92 : f32 to vector<56x48xf32>
    %213 = arith.cmpf olt, %208, %212 : vector<56x48xf32>
    %cst_93 = arith.constant 0.000000e+00 : f32
    %214 = vector.broadcast %cst_93 : f32 to vector<56x48xf32>
    %215 = arith.subf %214, %209 : vector<56x48xf32>
    %cst_94 = arith.constant 0.000000e+00 : f32
    %216 = vector.broadcast %cst_94 : f32 to vector<56x48xf32>
    %217 = arith.select %213, %215, %216 : vector<56x48xi1>, vector<56x48xf32>
    %218 = arith.select %211, %209, %217 : vector<56x48xi1>, vector<56x48xf32>
    %cst_95 = arith.constant 0.000000e+00 : f32
    %219 = vector.broadcast %cst_95 : f32 to vector<56x48xf32>
    %220 = arith.select %164, %219, %218 : vector<56x48xi1>, vector<56x48xf32>
    %221 = vector.extract_strided_slice %220 {offsets = [0, 0], sizes = [28, 48], strides = [1, 1]} : vector<56x48xf32> to vector<28x48xf32>
    %c0_96 = arith.constant 0 : index
    %c1_97 = arith.constant 1 : index
    %c0_98 = arith.constant 0 : index
    %222 = vector.load %arg25[%c0_96, %c1_97, %c0_98] : memref<2x30x48xf32, #tpu.memory_space<vmem>>, vector<1x28x48xf32>
    %223 = vector.shape_cast %222 : vector<1x28x48xf32> to vector<28x48xf32>
    %224 = vector.shape_cast %221 : vector<28x48xf32> to vector<1x28x48xf32>
    tpu.vector_store %arg25[%c0_96, %c1_97, %c0_98], %224 {strides = array<i32>} : memref<2x30x48xf32, #tpu.memory_space<vmem>>, vector<1x28x48xf32>,
    %225 = vector.extract_strided_slice %220 {offsets = [28, 0], sizes = [28, 48], strides = [1, 1]} : vector<56x48xf32> to vector<28x48xf32>
    %c1_99 = arith.constant 1 : index
    %c1_100 = arith.constant 1 : index
    %c0_101 = arith.constant 0 : index
    %226 = vector.load %arg25[%c1_99, %c1_100, %c0_101] : memref<2x30x48xf32, #tpu.memory_space<vmem>>, vector<1x28x48xf32>
    %227 = vector.shape_cast %226 : vector<1x28x48xf32> to vector<28x48xf32>
    %228 = vector.shape_cast %225 : vector<28x48xf32> to vector<1x28x48xf32>
    tpu.vector_store %arg25[%c1_99, %c1_100, %c0_101], %228 {strides = array<i32>} : memref<2x30x48xf32, #tpu.memory_space<vmem>>, vector<1x28x48xf32>,
    %c0_102 = arith.constant 0 : index
    %c0_103 = arith.constant 0 : index
    %c0_104 = arith.constant 0 : index
    %229 = vector.load %arg25[%c0_102, %c0_103, %c0_104] : memref<2x30x48xf32, #tpu.memory_space<vmem>>, vector<1x27x48xf32>
    %230 = vector.shape_cast %229 : vector<1x27x48xf32> to vector<27x48xf32>
    %c0_105 = arith.constant 0 : index
    %c1_106 = arith.constant 1 : index
    %c0_107 = arith.constant 0 : index
    %231 = vector.load %arg25[%c0_105, %c1_106, %c0_107] : memref<2x30x48xf32, #tpu.memory_space<vmem>>, vector<1x27x48xf32>
    %232 = vector.shape_cast %231 : vector<1x27x48xf32> to vector<27x48xf32>
    %c0_108 = arith.constant 0 : index
    %c2 = arith.constant 2 : index
    %c0_109 = arith.constant 0 : index
    %233 = vector.load %arg25[%c0_108, %c2, %c0_109] : memref<2x30x48xf32, #tpu.memory_space<vmem>>, vector<1x27x48xf32>
    %234 = vector.shape_cast %233 : vector<1x27x48xf32> to vector<27x48xf32>
    %c0_110 = arith.constant 0 : index
    %c3 = arith.constant 3 : index
    %c0_111 = arith.constant 0 : index
    %235 = vector.load %arg25[%c0_110, %c3, %c0_111] : memref<2x30x48xf32, #tpu.memory_space<vmem>>, vector<1x27x48xf32>
    %236 = vector.shape_cast %235 : vector<1x27x48xf32> to vector<27x48xf32>
    %237 = tpu.concatenate %230, %232, %234, %236 in 1 : vector<27x48xf32>, vector<27x48xf32>, vector<27x48xf32>, vector<27x48xf32> -> vector<27x192xf32>
    %c1_112 = arith.constant 1 : index
    %c0_113 = arith.constant 0 : index
    %c0_114 = arith.constant 0 : index
    %238 = vector.load %arg25[%c1_112, %c0_113, %c0_114] : memref<2x30x48xf32, #tpu.memory_space<vmem>>, vector<1x27x48xf32>
    %239 = vector.shape_cast %238 : vector<1x27x48xf32> to vector<27x48xf32>
    %c1_115 = arith.constant 1 : index
    %c1_116 = arith.constant 1 : index
    %c0_117 = arith.constant 0 : index
    %240 = vector.load %arg25[%c1_115, %c1_116, %c0_117] : memref<2x30x48xf32, #tpu.memory_space<vmem>>, vector<1x27x48xf32>
    %241 = vector.shape_cast %240 : vector<1x27x48xf32> to vector<27x48xf32>
    %c1_118 = arith.constant 1 : index
    %c2_119 = arith.constant 2 : index
    %c0_120 = arith.constant 0 : index
    %242 = vector.load %arg25[%c1_118, %c2_119, %c0_120] : memref<2x30x48xf32, #tpu.memory_space<vmem>>, vector<1x27x48xf32>
    %243 = vector.shape_cast %242 : vector<1x27x48xf32> to vector<27x48xf32>
    %c1_121 = arith.constant 1 : index
    %c3_122 = arith.constant 3 : index
    %c0_123 = arith.constant 0 : index
    %244 = vector.load %arg25[%c1_121, %c3_122, %c0_123] : memref<2x30x48xf32, #tpu.memory_space<vmem>>, vector<1x27x48xf32>
    %245 = vector.shape_cast %244 : vector<1x27x48xf32> to vector<27x48xf32>
    %246 = tpu.concatenate %239, %241, %243, %245 in 1 : vector<27x48xf32>, vector<27x48xf32>, vector<27x48xf32>, vector<27x48xf32> -> vector<27x192xf32>
    %247 = tpu.concatenate %237, %246 in 0 : vector<27x192xf32>, vector<27x192xf32> -> vector<54x192xf32>
    %248 = arith.truncf %247 : vector<54x192xf32> to vector<54x192xbf16>
    %c0_124 = arith.constant 0 : index
    %c0_125 = arith.constant 0 : index
    %249 = vector.load %arg7[%c0_124, %c0_125] : memref<192x320xbf16, #tpu.memory_space<vmem>>, vector<192x320xbf16>
    %cst_126 = arith.constant dense<0.000000e+00> : vector<54x320xf32>
    %250 = tpu.matmul %248, %249, %cst_126 {dimension_numbers = #tpu.dot_dimension_numbers<[1], [0], [0], [1], [0, 0, 1, 1], [], []>} : vector<54x192xbf16>, vector<192x320xbf16>, vector<54x320xf32> -> vector<54x320xf32>
    %251 = vector.extract_strided_slice %250 {offsets = [0, 0], sizes = [54, 64], strides = [1, 1]} : vector<54x320xf32> to vector<54x64xf32>
    %252 = vector.extract_strided_slice %250 {offsets = [0, 64], sizes = [54, 64], strides = [1, 1]} : vector<54x320xf32> to vector<54x64xf32>
    %253 = arith.maximumf %251, %252 : vector<54x64xf32>
    %254 = vector.extract_strided_slice %250 {offsets = [0, 128], sizes = [54, 64], strides = [1, 1]} : vector<54x320xf32> to vector<54x64xf32>
    %255 = arith.maximumf %253, %254 : vector<54x64xf32>
    %256 = vector.extract_strided_slice %250 {offsets = [0, 192], sizes = [54, 64], strides = [1, 1]} : vector<54x320xf32> to vector<54x64xf32>
    %257 = arith.maximumf %255, %256 : vector<54x64xf32>
    %258 = vector.extract_strided_slice %250 {offsets = [0, 256], sizes = [54, 64], strides = [1, 1]} : vector<54x320xf32> to vector<54x64xf32>
    %259 = arith.maximumf %257, %258 : vector<54x64xf32>
    %cst_127 = arith.constant dense<0.000000e+00> : vector<64xf32>
    %260 = vector.multi_reduction <add>, %259, %cst_127 [0] : vector<54x64xf32> to vector<64xf32>
    %261 = vector.shape_cast %260 : vector<64xf32> to vector<1x64xf32>
    %262 = vector.extract_strided_slice %261 {offsets = [0, 0], sizes = [1, 32], strides = [1, 1]} : vector<1x64xf32> to vector<1x32xf32>
    %263 = vector.extract_strided_slice %261 {offsets = [0, 32], sizes = [1, 32], strides = [1, 1]} : vector<1x64xf32> to vector<1x32xf32>
    %264 = arith.addf %262, %263 : vector<1x32xf32>
    %cst_128 = arith.constant 1.080000e+02 : f32
    %265 = vector.broadcast %cst_128 : f32 to vector<1x32xf32>
    %266 = arith.divf %264, %265 : vector<1x32xf32>
    %267 = tpu.concatenate %266, %266 in 1 : vector<1x32xf32>, vector<1x32xf32> -> vector<1x64xf32>
    %268 = vector.broadcast %267 : vector<1x64xf32> to vector<54x64xf32>
    %269 = arith.subf %259, %268 : vector<54x64xf32>
    %270 = arith.mulf %269, %269 : vector<54x64xf32>
    %cst_129 = arith.constant dense<0.000000e+00> : vector<64xf32>
    %271 = vector.multi_reduction <add>, %270, %cst_129 [0] : vector<54x64xf32> to vector<64xf32>
    %272 = vector.shape_cast %271 : vector<64xf32> to vector<1x64xf32>
    %273 = vector.extract_strided_slice %272 {offsets = [0, 0], sizes = [1, 32], strides = [1, 1]} : vector<1x64xf32> to vector<1x32xf32>
    %274 = vector.extract_strided_slice %272 {offsets = [0, 32], sizes = [1, 32], strides = [1, 1]} : vector<1x64xf32> to vector<1x32xf32>
    %275 = arith.addf %273, %274 : vector<1x32xf32>
    %cst_130 = arith.constant 1.080000e+02 : f32
    %276 = vector.broadcast %cst_130 : f32 to vector<1x32xf32>
    %277 = arith.divf %275, %276 : vector<1x32xf32>
    %c0_131 = arith.constant 0 : index
    %c0_132 = arith.constant 0 : index
    %278 = vector.load %arg8[%c0_131, %c0_132] : memref<1x32xf32, #tpu.memory_space<vmem>>, vector<1x32xf32>
    %cst_133 = arith.constant 9.99999974E-6 : f32
    %279 = vector.broadcast %cst_133 : f32 to vector<1x32xf32>
    %280 = arith.addf %277, %279 : vector<1x32xf32>
    %281 = math.rsqrt %280 : vector<1x32xf32>
    %282 = arith.mulf %278, %281 : vector<1x32xf32>
    %c0_134 = arith.constant 0 : index
    %c0_135 = arith.constant 0 : index
    %283 = vector.load %arg9[%c0_134, %c0_135] : memref<1x32xf32, #tpu.memory_space<vmem>>, vector<1x32xf32>
    %284 = arith.mulf %266, %282 : vector<1x32xf32>
    %285 = arith.subf %283, %284 : vector<1x32xf32>
    %286 = tpu.concatenate %282, %282 in 1 : vector<1x32xf32>, vector<1x32xf32> -> vector<1x64xf32>
    %287 = tpu.concatenate %285, %285 in 1 : vector<1x32xf32>, vector<1x32xf32> -> vector<1x64xf32>
    %288 = vector.broadcast %286 : vector<1x64xf32> to vector<54x64xf32>
    %289 = arith.mulf %259, %288 : vector<54x64xf32>
    %290 = vector.broadcast %287 : vector<1x64xf32> to vector<54x64xf32>
    %291 = arith.addf %289, %290 : vector<54x64xf32>
    %cst_136 = arith.constant 1.000000e+00 : f32
    %292 = vector.broadcast %cst_136 : f32 to vector<54x64xf32>
    %cst_137 = arith.constant 0.000000e+00 : f32
    %293 = vector.broadcast %cst_137 : f32 to vector<54x64xf32>
    %294 = arith.cmpf ogt, %291, %293 : vector<54x64xf32>
    %cst_138 = arith.constant 0.000000e+00 : f32
    %295 = vector.broadcast %cst_138 : f32 to vector<54x64xf32>
    %296 = arith.cmpf olt, %291, %295 : vector<54x64xf32>
    %cst_139 = arith.constant 0.000000e+00 : f32
    %297 = vector.broadcast %cst_139 : f32 to vector<54x64xf32>
    %298 = arith.subf %297, %292 : vector<54x64xf32>
    %cst_140 = arith.constant 0.000000e+00 : f32
    %299 = vector.broadcast %cst_140 : f32 to vector<54x64xf32>
    %300 = arith.select %296, %298, %299 : vector<54x64xi1>, vector<54x64xf32>
    %301 = arith.select %294, %292, %300 : vector<54x64xi1>, vector<54x64xf32>
    %302 = vector.extract_strided_slice %301 {offsets = [0, 32], sizes = [27, 32], strides = [1, 1]} : vector<54x64xf32> to vector<27x32xf32>
    %c0_141 = arith.constant 0 : index
    %c2_142 = arith.constant 2 : index
    %c0_143 = arith.constant 0 : index
    %303 = vector.load %arg26[%c0_141, %c2_142, %c0_143] : memref<2x30x64xf32, #tpu.memory_space<vmem>>, vector<1x27x32xf32>
    %304 = vector.shape_cast %303 : vector<1x27x32xf32> to vector<27x32xf32>
    %305 = vector.shape_cast %302 : vector<27x32xf32> to vector<1x27x32xf32>
    tpu.vector_store %arg26[%c0_141, %c2_142, %c0_143], %305 {strides = array<i32>} : memref<2x30x64xf32, #tpu.memory_space<vmem>>, vector<1x27x32xf32>,
    %306 = vector.extract_strided_slice %301 {offsets = [27, 32], sizes = [27, 32], strides = [1, 1]} : vector<54x64xf32> to vector<27x32xf32>
    %c1_144 = arith.constant 1 : index
    %c2_145 = arith.constant 2 : index
    %c0_146 = arith.constant 0 : index
    %307 = vector.load %arg26[%c1_144, %c2_145, %c0_146] : memref<2x30x64xf32, #tpu.memory_space<vmem>>, vector<1x27x32xf32>
    %308 = vector.shape_cast %307 : vector<1x27x32xf32> to vector<27x32xf32>
    %309 = vector.shape_cast %306 : vector<27x32xf32> to vector<1x27x32xf32>
    tpu.vector_store %arg26[%c1_144, %c2_145, %c0_146], %309 {strides = array<i32>} : memref<2x30x64xf32, #tpu.memory_space<vmem>>, vector<1x27x32xf32>,
    %310 = vector.extract_strided_slice %301 {offsets = [0, 0], sizes = [27, 32], strides = [1, 1]} : vector<54x64xf32> to vector<27x32xf32>
    %c0_147 = arith.constant 0 : index
    %c1_148 = arith.constant 1 : index
    %c32 = arith.constant 32 : index
    %311 = vector.load %arg26[%c0_147, %c1_148, %c32] : memref<2x30x64xf32, #tpu.memory_space<vmem>>, vector<1x27x32xf32>
    %312 = vector.shape_cast %311 : vector<1x27x32xf32> to vector<27x32xf32>
    %313 = vector.shape_cast %310 : vector<27x32xf32> to vector<1x27x32xf32>
    tpu.vector_store %arg26[%c0_147, %c1_148, %c32], %313 {strides = array<i32>} : memref<2x30x64xf32, #tpu.memory_space<vmem>>, vector<1x27x32xf32>,
    %314 = vector.extract_strided_slice %301 {offsets = [27, 0], sizes = [27, 32], strides = [1, 1]} : vector<54x64xf32> to vector<27x32xf32>
    %c1_149 = arith.constant 1 : index
    %c1_150 = arith.constant 1 : index
    %c32_151 = arith.constant 32 : index
    %315 = vector.load %arg26[%c1_149, %c1_150, %c32_151] : memref<2x30x64xf32, #tpu.memory_space<vmem>>, vector<1x27x32xf32>
    %316 = vector.shape_cast %315 : vector<1x27x32xf32> to vector<27x32xf32>
    %317 = vector.shape_cast %314 : vector<27x32xf32> to vector<1x27x32xf32>
    tpu.vector_store %arg26[%c1_149, %c1_150, %c32_151], %317 {strides = array<i32>} : memref<2x30x64xf32, #tpu.memory_space<vmem>>, vector<1x27x32xf32>,
    %c0_152 = arith.constant 0 : index
    %c0_153 = arith.constant 0 : index
    %c0_154 = arith.constant 0 : index
    %318 = vector.load %arg26[%c0_152, %c0_153, %c0_154] : memref<2x30x64xf32, #tpu.memory_space<vmem>>, vector<1x26x64xf32>
    %319 = vector.shape_cast %318 : vector<1x26x64xf32> to vector<26x64xf32>
    %c0_155 = arith.constant 0 : index
    %c1_156 = arith.constant 1 : index
    %c0_157 = arith.constant 0 : index
    %320 = vector.load %arg26[%c0_155, %c1_156, %c0_157] : memref<2x30x64xf32, #tpu.memory_space<vmem>>, vector<1x26x64xf32>
    %321 = vector.shape_cast %320 : vector<1x26x64xf32> to vector<26x64xf32>
    %c0_158 = arith.constant 0 : index
    %c2_159 = arith.constant 2 : index
    %c0_160 = arith.constant 0 : index
    %322 = vector.load %arg26[%c0_158, %c2_159, %c0_160] : memref<2x30x64xf32, #tpu.memory_space<vmem>>, vector<1x26x64xf32>
    %323 = vector.shape_cast %322 : vector<1x26x64xf32> to vector<26x64xf32>
    %c0_161 = arith.constant 0 : index
    %c3_162 = arith.constant 3 : index
    %c0_163 = arith.constant 0 : index
    %324 = vector.load %arg26[%c0_161, %c3_162, %c0_163] : memref<2x30x64xf32, #tpu.memory_space<vmem>>, vector<1x26x64xf32>
    %325 = vector.shape_cast %324 : vector<1x26x64xf32> to vector<26x64xf32>
    %c0_164 = arith.constant 0 : index
    %c4 = arith.constant 4 : index
    %c0_165 = arith.constant 0 : index
    %326 = vector.load %arg26[%c0_164, %c4, %c0_165] : memref<2x30x64xf32, #tpu.memory_space<vmem>>, vector<1x26x64xf32>
    %327 = vector.shape_cast %326 : vector<1x26x64xf32> to vector<26x64xf32>
    %328 = tpu.concatenate %319, %321, %323, %325, %327 in 1 : vector<26x64xf32>, vector<26x64xf32>, vector<26x64xf32>, vector<26x64xf32>, vector<26x64xf32> -> vector<26x320xf32>
    %c1_166 = arith.constant 1 : index
    %c0_167 = arith.constant 0 : index
    %c0_168 = arith.constant 0 : index
    %329 = vector.load %arg26[%c1_166, %c0_167, %c0_168] : memref<2x30x64xf32, #tpu.memory_space<vmem>>, vector<1x26x64xf32>
    %330 = vector.shape_cast %329 : vector<1x26x64xf32> to vector<26x64xf32>
    %c1_169 = arith.constant 1 : index
    %c1_170 = arith.constant 1 : index
    %c0_171 = arith.constant 0 : index
    %331 = vector.load %arg26[%c1_169, %c1_170, %c0_171] : memref<2x30x64xf32, #tpu.memory_space<vmem>>, vector<1x26x64xf32>
    %332 = vector.shape_cast %331 : vector<1x26x64xf32> to vector<26x64xf32>
    %c1_172 = arith.constant 1 : index
    %c2_173 = arith.constant 2 : index
    %c0_174 = arith.constant 0 : index
    %333 = vector.load %arg26[%c1_172, %c2_173, %c0_174] : memref<2x30x64xf32, #tpu.memory_space<vmem>>, vector<1x26x64xf32>
    %334 = vector.shape_cast %333 : vector<1x26x64xf32> to vector<26x64xf32>
    %c1_175 = arith.constant 1 : index
    %c3_176 = arith.constant 3 : index
    %c0_177 = arith.constant 0 : index
    %335 = vector.load %arg26[%c1_175, %c3_176, %c0_177] : memref<2x30x64xf32, #tpu.memory_space<vmem>>, vector<1x26x64xf32>
    %336 = vector.shape_cast %335 : vector<1x26x64xf32> to vector<26x64xf32>
    %c1_178 = arith.constant 1 : index
    %c4_179 = arith.constant 4 : index
    %c0_180 = arith.constant 0 : index
    %337 = vector.load %arg26[%c1_178, %c4_179, %c0_180] : memref<2x30x64xf32, #tpu.memory_space<vmem>>, vector<1x26x64xf32>
    %338 = vector.shape_cast %337 : vector<1x26x64xf32> to vector<26x64xf32>
    %339 = tpu.concatenate %330, %332, %334, %336, %338 in 1 : vector<26x64xf32>, vector<26x64xf32>, vector<26x64xf32>, vector<26x64xf32>, vector<26x64xf32> -> vector<26x320xf32>
    %340 = tpu.concatenate %328, %339 in 0 : vector<26x320xf32>, vector<26x320xf32> -> vector<52x320xf32>
    %341 = arith.truncf %340 : vector<52x320xf32> to vector<52x320xbf16>
    %c0_181 = arith.constant 0 : index
    %c0_182 = arith.constant 0 : index
    %342 = vector.load %arg10[%c0_181, %c0_182] : memref<320x256xbf16, #tpu.memory_space<vmem>>, vector<320x256xbf16>
    %cst_183 = arith.constant dense<0.000000e+00> : vector<52x256xf32>
    %343 = tpu.matmul %341, %342, %cst_183 {dimension_numbers = #tpu.dot_dimension_numbers<[1], [0], [0], [1], [0, 0, 1, 1], [], []>} : vector<52x320xbf16>, vector<320x256xbf16>, vector<52x256xf32> -> vector<52x256xf32>
    %344 = vector.extract_strided_slice %343 {offsets = [0, 0], sizes = [52, 64], strides = [1, 1]} : vector<52x256xf32> to vector<52x64xf32>
    %345 = vector.extract_strided_slice %343 {offsets = [0, 64], sizes = [52, 64], strides = [1, 1]} : vector<52x256xf32> to vector<52x64xf32>
    %346 = arith.maximumf %344, %345 : vector<52x64xf32>
    %347 = vector.extract_strided_slice %343 {offsets = [0, 128], sizes = [52, 64], strides = [1, 1]} : vector<52x256xf32> to vector<52x64xf32>
    %348 = arith.maximumf %346, %347 : vector<52x64xf32>
    %349 = vector.extract_strided_slice %343 {offsets = [0, 192], sizes = [52, 64], strides = [1, 1]} : vector<52x256xf32> to vector<52x64xf32>
    %350 = arith.maximumf %348, %349 : vector<52x64xf32>
    %cst_184 = arith.constant dense<0.000000e+00> : vector<64xf32>
    %351 = vector.multi_reduction <add>, %350, %cst_184 [0] : vector<52x64xf32> to vector<64xf32>
    %352 = vector.shape_cast %351 : vector<64xf32> to vector<1x64xf32>
    %cst_185 = arith.constant 5.200000e+01 : f32
    %353 = vector.broadcast %cst_185 : f32 to vector<1x64xf32>
    %354 = arith.divf %352, %353 : vector<1x64xf32>
    %355 = vector.broadcast %354 : vector<1x64xf32> to vector<52x64xf32>
    %356 = arith.subf %350, %355 : vector<52x64xf32>
    %357 = arith.mulf %356, %356 : vector<52x64xf32>
    %cst_186 = arith.constant dense<0.000000e+00> : vector<64xf32>
    %358 = vector.multi_reduction <add>, %357, %cst_186 [0] : vector<52x64xf32> to vector<64xf32>
    %359 = vector.shape_cast %358 : vector<64xf32> to vector<1x64xf32>
    %cst_187 = arith.constant 5.200000e+01 : f32
    %360 = vector.broadcast %cst_187 : f32 to vector<1x64xf32>
    %361 = arith.divf %359, %360 : vector<1x64xf32>
    %c0_188 = arith.constant 0 : index
    %c0_189 = arith.constant 0 : index
    %362 = vector.load %arg11[%c0_188, %c0_189] : memref<1x64xf32, #tpu.memory_space<vmem>>, vector<1x64xf32>
    %cst_190 = arith.constant 9.99999974E-6 : f32
    %363 = vector.broadcast %cst_190 : f32 to vector<1x64xf32>
    %364 = arith.addf %361, %363 : vector<1x64xf32>
    %365 = math.rsqrt %364 : vector<1x64xf32>
    %366 = arith.mulf %362, %365 : vector<1x64xf32>
    %c0_191 = arith.constant 0 : index
    %c0_192 = arith.constant 0 : index
    %367 = vector.load %arg12[%c0_191, %c0_192] : memref<1x64xf32, #tpu.memory_space<vmem>>, vector<1x64xf32>
    %368 = arith.mulf %354, %366 : vector<1x64xf32>
    %369 = arith.subf %367, %368 : vector<1x64xf32>
    %370 = vector.broadcast %366 : vector<1x64xf32> to vector<52x64xf32>
    %371 = arith.mulf %350, %370 : vector<52x64xf32>
    %372 = vector.broadcast %369 : vector<1x64xf32> to vector<52x64xf32>
    %373 = arith.addf %371, %372 : vector<52x64xf32>
    %cst_193 = arith.constant 1.000000e+00 : f32
    %374 = vector.broadcast %cst_193 : f32 to vector<52x64xf32>
    %cst_194 = arith.constant 0.000000e+00 : f32
    %375 = vector.broadcast %cst_194 : f32 to vector<52x64xf32>
    %376 = arith.cmpf ogt, %373, %375 : vector<52x64xf32>
    %cst_195 = arith.constant 0.000000e+00 : f32
    %377 = vector.broadcast %cst_195 : f32 to vector<52x64xf32>
    %378 = arith.cmpf olt, %373, %377 : vector<52x64xf32>
    %cst_196 = arith.constant 0.000000e+00 : f32
    %379 = vector.broadcast %cst_196 : f32 to vector<52x64xf32>
    %380 = arith.subf %379, %374 : vector<52x64xf32>
    %cst_197 = arith.constant 0.000000e+00 : f32
    %381 = vector.broadcast %cst_197 : f32 to vector<52x64xf32>
    %382 = arith.select %378, %380, %381 : vector<52x64xi1>, vector<52x64xf32>
    %383 = arith.select %376, %374, %382 : vector<52x64xi1>, vector<52x64xf32>
    %384 = vector.extract_strided_slice %383 {offsets = [0, 0], sizes = [1, 64], strides = [1, 1]} : vector<52x64xf32> to vector<1x64xf32>
    %c0_198 = arith.constant 0 : index
    %c0_199 = arith.constant 0 : index
    %c128 = arith.constant 128 : index
    %385 = vector.load %arg27[%c0_198, %c0_199, %c128] : memref<2x5x512xf32, #tpu.memory_space<vmem>>, vector<1x1x64xf32>
    %386 = vector.shape_cast %385 : vector<1x1x64xf32> to vector<1x64xf32>
    %387 = vector.shape_cast %384 : vector<1x64xf32> to vector<1x1x64xf32>
    tpu.vector_store %arg27[%c0_198, %c0_199, %c128], %387 {strides = array<i32>} : memref<2x5x512xf32, #tpu.memory_space<vmem>>, vector<1x1x64xf32>,
    %388 = vector.extract_strided_slice %383 {offsets = [1, 0], sizes = [1, 64], strides = [1, 1]} : vector<52x64xf32> to vector<1x64xf32>
    %c0_200 = arith.constant 0 : index
    %c0_201 = arith.constant 0 : index
    %c192 = arith.constant 192 : index
    %389 = vector.load %arg27[%c0_200, %c0_201, %c192] : memref<2x5x512xf32, #tpu.memory_space<vmem>>, vector<1x1x64xf32>
    %390 = vector.shape_cast %389 : vector<1x1x64xf32> to vector<1x64xf32>
    %391 = vector.shape_cast %388 : vector<1x64xf32> to vector<1x1x64xf32>
    tpu.vector_store %arg27[%c0_200, %c0_201, %c192], %391 {strides = array<i32>} : memref<2x5x512xf32, #tpu.memory_space<vmem>>, vector<1x1x64xf32>,
    %392 = vector.extract_strided_slice %383 {offsets = [2, 0], sizes = [1, 64], strides = [1, 1]} : vector<52x64xf32> to vector<1x64xf32>
    %c0_202 = arith.constant 0 : index
    %c0_203 = arith.constant 0 : index
    %c256 = arith.constant 256 : index
    %393 = vector.load %arg27[%c0_202, %c0_203, %c256] : memref<2x5x512xf32, #tpu.memory_space<vmem>>, vector<1x1x64xf32>
    %394 = vector.shape_cast %393 : vector<1x1x64xf32> to vector<1x64xf32>
    %395 = vector.shape_cast %392 : vector<1x64xf32> to vector<1x1x64xf32>
    tpu.vector_store %arg27[%c0_202, %c0_203, %c256], %395 {strides = array<i32>} : memref<2x5x512xf32, #tpu.memory_space<vmem>>, vector<1x1x64xf32>,
    %396 = vector.extract_strided_slice %383 {offsets = [3, 0], sizes = [1, 64], strides = [1, 1]} : vector<52x64xf32> to vector<1x64xf32>
    %c0_204 = arith.constant 0 : index
    %c0_205 = arith.constant 0 : index
    %c320 = arith.constant 320 : index
    %397 = vector.load %arg27[%c0_204, %c0_205, %c320] : memref<2x5x512xf32, #tpu.memory_space<vmem>>, vector<1x1x64xf32>
    %398 = vector.shape_cast %397 : vector<1x1x64xf32> to vector<1x64xf32>
    %399 = vector.shape_cast %396 : vector<1x64xf32> to vector<1x1x64xf32>
    tpu.vector_store %arg27[%c0_204, %c0_205, %c320], %399 {strides = array<i32>} : memref<2x5x512xf32, #tpu.memory_space<vmem>>, vector<1x1x64xf32>,
    %400 = vector.extract_strided_slice %383 {offsets = [4, 0], sizes = [1, 64], strides = [1, 1]} : vector<52x64xf32> to vector<1x64xf32>
    %c0_206 = arith.constant 0 : index
    %c0_207 = arith.constant 0 : index
    %c384 = arith.constant 384 : index
    %401 = vector.load %arg27[%c0_206, %c0_207, %c384] : memref<2x5x512xf32, #tpu.memory_space<vmem>>, vector<1x1x64xf32>
    %402 = vector.shape_cast %401 : vector<1x1x64xf32> to vector<1x64xf32>
    %403 = vector.shape_cast %400 : vector<1x64xf32> to vector<1x1x64xf32>
    tpu.vector_store %arg27[%c0_206, %c0_207, %c384], %403 {strides = array<i32>} : memref<2x5x512xf32, #tpu.memory_space<vmem>>, vector<1x1x64xf32>,
    %404 = vector.extract_strided_slice %383 {offsets = [5, 0], sizes = [1, 64], strides = [1, 1]} : vector<52x64xf32> to vector<1x64xf32>
    %c0_208 = arith.constant 0 : index
    %c0_209 = arith.constant 0 : index
    %c448 = arith.constant 448 : index
    %405 = vector.load %arg27[%c0_208, %c0_209, %c448] : memref<2x5x512xf32, #tpu.memory_space<vmem>>, vector<1x1x64xf32>
    %406 = vector.shape_cast %405 : vector<1x1x64xf32> to vector<1x64xf32>
    %407 = vector.shape_cast %404 : vector<1x64xf32> to vector<1x1x64xf32>
    tpu.vector_store %arg27[%c0_208, %c0_209, %c448], %407 {strides = array<i32>} : memref<2x5x512xf32, #tpu.memory_space<vmem>>, vector<1x1x64xf32>,
    %408 = vector.extract_strided_slice %383 {offsets = [6, 0], sizes = [1, 64], strides = [1, 1]} : vector<52x64xf32> to vector<1x64xf32>
    %c0_210 = arith.constant 0 : index
    %c1_211 = arith.constant 1 : index
    %c0_212 = arith.constant 0 : index
    %409 = vector.load %arg27[%c0_210, %c1_211, %c0_212] : memref<2x5x512xf32, #tpu.memory_space<vmem>>, vector<1x1x64xf32>
    %410 = vector.shape_cast %409 : vector<1x1x64xf32> to vector<1x64xf32>
    %411 = vector.shape_cast %408 : vector<1x64xf32> to vector<1x1x64xf32>
    tpu.vector_store %arg27[%c0_210, %c1_211, %c0_212], %411 {strides = array<i32>} : memref<2x5x512xf32, #tpu.memory_space<vmem>>, vector<1x1x64xf32>,
    %412 = vector.extract_strided_slice %383 {offsets = [7, 0], sizes = [1, 64], strides = [1, 1]} : vector<52x64xf32> to vector<1x64xf32>
    %c0_213 = arith.constant 0 : index
    %c1_214 = arith.constant 1 : index
    %c64 = arith.constant 64 : index
    %413 = vector.load %arg27[%c0_213, %c1_214, %c64] : memref<2x5x512xf32, #tpu.memory_space<vmem>>, vector<1x1x64xf32>
    %414 = vector.shape_cast %413 : vector<1x1x64xf32> to vector<1x64xf32>
    %415 = vector.shape_cast %412 : vector<1x64xf32> to vector<1x1x64xf32>
    tpu.vector_store %arg27[%c0_213, %c1_214, %c64], %415 {strides = array<i32>} : memref<2x5x512xf32, #tpu.memory_space<vmem>>, vector<1x1x64xf32>,
    %416 = vector.extract_strided_slice %383 {offsets = [8, 0], sizes = [1, 64], strides = [1, 1]} : vector<52x64xf32> to vector<1x64xf32>
    %c0_215 = arith.constant 0 : index
    %c1_216 = arith.constant 1 : index
    %c128_217 = arith.constant 128 : index
    %417 = vector.load %arg27[%c0_215, %c1_216, %c128_217] : memref<2x5x512xf32, #tpu.memory_space<vmem>>, vector<1x1x64xf32>
    %418 = vector.shape_cast %417 : vector<1x1x64xf32> to vector<1x64xf32>
    %419 = vector.shape_cast %416 : vector<1x64xf32> to vector<1x1x64xf32>
    tpu.vector_store %arg27[%c0_215, %c1_216, %c128_217], %419 {strides = array<i32>} : memref<2x5x512xf32, #tpu.memory_space<vmem>>, vector<1x1x64xf32>,
    %420 = vector.extract_strided_slice %383 {offsets = [9, 0], sizes = [1, 64], strides = [1, 1]} : vector<52x64xf32> to vector<1x64xf32>
    %c0_218 = arith.constant 0 : index
    %c1_219 = arith.constant 1 : index
    %c192_220 = arith.constant 192 : index
    %421 = vector.load %arg27[%c0_218, %c1_219, %c192_220] : memref<2x5x512xf32, #tpu.memory_space<vmem>>, vector<1x1x64xf32>
    %422 = vector.shape_cast %421 : vector<1x1x64xf32> to vector<1x64xf32>
    %423 = vector.shape_cast %420 : vector<1x64xf32> to vector<1x1x64xf32>
    tpu.vector_store %arg27[%c0_218, %c1_219, %c192_220], %423 {strides = array<i32>} : memref<2x5x512xf32, #tpu.memory_space<vmem>>, vector<1x1x64xf32>,
    %424 = vector.extract_strided_slice %383 {offsets = [10, 0], sizes = [1, 64], strides = [1, 1]} : vector<52x64xf32> to vector<1x64xf32>
    %c0_221 = arith.constant 0 : index
    %c1_222 = arith.constant 1 : index
    %c256_223 = arith.constant 256 : index
    %425 = vector.load %arg27[%c0_221, %c1_222, %c256_223] : memref<2x5x512xf32, #tpu.memory_space<vmem>>, vector<1x1x64xf32>
    %426 = vector.shape_cast %425 : vector<1x1x64xf32> to vector<1x64xf32>
    %427 = vector.shape_cast %424 : vector<1x64xf32> to vector<1x1x64xf32>
    tpu.vector_store %arg27[%c0_221, %c1_222, %c256_223], %427 {strides = array<i32>} : memref<2x5x512xf32, #tpu.memory_space<vmem>>, vector<1x1x64xf32>,
    %428 = vector.extract_strided_slice %383 {offsets = [11, 0], sizes = [1, 64], strides = [1, 1]} : vector<52x64xf32> to vector<1x64xf32>
    %c0_224 = arith.constant 0 : index
    %c1_225 = arith.constant 1 : index
    %c320_226 = arith.constant 320 : index
    %429 = vector.load %arg27[%c0_224, %c1_225, %c320_226] : memref<2x5x512xf32, #tpu.memory_space<vmem>>, vector<1x1x64xf32>
    %430 = vector.shape_cast %429 : vector<1x1x64xf32> to vector<1x64xf32>
    %431 = vector.shape_cast %428 : vector<1x64xf32> to vector<1x1x64xf32>
    tpu.vector_store %arg27[%c0_224, %c1_225, %c320_226], %431 {strides = array<i32>} : memref<2x5x512xf32, #tpu.memory_space<vmem>>, vector<1x1x64xf32>,
    %432 = vector.extract_strided_slice %383 {offsets = [12, 0], sizes = [1, 64], strides = [1, 1]} : vector<52x64xf32> to vector<1x64xf32>
    %c0_227 = arith.constant 0 : index
    %c1_228 = arith.constant 1 : index
    %c384_229 = arith.constant 384 : index
    %433 = vector.load %arg27[%c0_227, %c1_228, %c384_229] : memref<2x5x512xf32, #tpu.memory_space<vmem>>, vector<1x1x64xf32>
    %434 = vector.shape_cast %433 : vector<1x1x64xf32> to vector<1x64xf32>
    %435 = vector.shape_cast %432 : vector<1x64xf32> to vector<1x1x64xf32>
    tpu.vector_store %arg27[%c0_227, %c1_228, %c384_229], %435 {strides = array<i32>} : memref<2x5x512xf32, #tpu.memory_space<vmem>>, vector<1x1x64xf32>,
    %436 = vector.extract_strided_slice %383 {offsets = [13, 0], sizes = [1, 64], strides = [1, 1]} : vector<52x64xf32> to vector<1x64xf32>
    %c0_230 = arith.constant 0 : index
    %c1_231 = arith.constant 1 : index
    %c448_232 = arith.constant 448 : index
    %437 = vector.load %arg27[%c0_230, %c1_231, %c448_232] : memref<2x5x512xf32, #tpu.memory_space<vmem>>, vector<1x1x64xf32>
    %438 = vector.shape_cast %437 : vector<1x1x64xf32> to vector<1x64xf32>
    %439 = vector.shape_cast %436 : vector<1x64xf32> to vector<1x1x64xf32>
    tpu.vector_store %arg27[%c0_230, %c1_231, %c448_232], %439 {strides = array<i32>} : memref<2x5x512xf32, #tpu.memory_space<vmem>>, vector<1x1x64xf32>,
    %440 = vector.extract_strided_slice %383 {offsets = [14, 0], sizes = [1, 64], strides = [1, 1]} : vector<52x64xf32> to vector<1x64xf32>
    %c0_233 = arith.constant 0 : index
    %c2_234 = arith.constant 2 : index
    %c0_235 = arith.constant 0 : index
    %441 = vector.load %arg27[%c0_233, %c2_234, %c0_235] : memref<2x5x512xf32, #tpu.memory_space<vmem>>, vector<1x1x64xf32>
    %442 = vector.shape_cast %441 : vector<1x1x64xf32> to vector<1x64xf32>
    %443 = vector.shape_cast %440 : vector<1x64xf32> to vector<1x1x64xf32>
    tpu.vector_store %arg27[%c0_233, %c2_234, %c0_235], %443 {strides = array<i32>} : memref<2x5x512xf32, #tpu.memory_space<vmem>>, vector<1x1x64xf32>,
    %444 = vector.extract_strided_slice %383 {offsets = [15, 0], sizes = [1, 64], strides = [1, 1]} : vector<52x64xf32> to vector<1x64xf32>
    %c0_236 = arith.constant 0 : index
    %c2_237 = arith.constant 2 : index
    %c64_238 = arith.constant 64 : index
    %445 = vector.load %arg27[%c0_236, %c2_237, %c64_238] : memref<2x5x512xf32, #tpu.memory_space<vmem>>, vector<1x1x64xf32>
    %446 = vector.shape_cast %445 : vector<1x1x64xf32> to vector<1x64xf32>
    %447 = vector.shape_cast %444 : vector<1x64xf32> to vector<1x1x64xf32>
    tpu.vector_store %arg27[%c0_236, %c2_237, %c64_238], %447 {strides = array<i32>} : memref<2x5x512xf32, #tpu.memory_space<vmem>>, vector<1x1x64xf32>,
    %448 = vector.extract_strided_slice %383 {offsets = [16, 0], sizes = [1, 64], strides = [1, 1]} : vector<52x64xf32> to vector<1x64xf32>
    %c0_239 = arith.constant 0 : index
    %c2_240 = arith.constant 2 : index
    %c128_241 = arith.constant 128 : index
    %449 = vector.load %arg27[%c0_239, %c2_240, %c128_241] : memref<2x5x512xf32, #tpu.memory_space<vmem>>, vector<1x1x64xf32>
    %450 = vector.shape_cast %449 : vector<1x1x64xf32> to vector<1x64xf32>
    %451 = vector.shape_cast %448 : vector<1x64xf32> to vector<1x1x64xf32>
    tpu.vector_store %arg27[%c0_239, %c2_240, %c128_241], %451 {strides = array<i32>} : memref<2x5x512xf32, #tpu.memory_space<vmem>>, vector<1x1x64xf32>,
    %452 = vector.extract_strided_slice %383 {offsets = [17, 0], sizes = [1, 64], strides = [1, 1]} : vector<52x64xf32> to vector<1x64xf32>
    %c0_242 = arith.constant 0 : index
    %c2_243 = arith.constant 2 : index
    %c192_244 = arith.constant 192 : index
    %453 = vector.load %arg27[%c0_242, %c2_243, %c192_244] : memref<2x5x512xf32, #tpu.memory_space<vmem>>, vector<1x1x64xf32>
    %454 = vector.shape_cast %453 : vector<1x1x64xf32> to vector<1x64xf32>
    %455 = vector.shape_cast %452 : vector<1x64xf32> to vector<1x1x64xf32>
    tpu.vector_store %arg27[%c0_242, %c2_243, %c192_244], %455 {strides = array<i32>} : memref<2x5x512xf32, #tpu.memory_space<vmem>>, vector<1x1x64xf32>,
    %456 = vector.extract_strided_slice %383 {offsets = [18, 0], sizes = [1, 64], strides = [1, 1]} : vector<52x64xf32> to vector<1x64xf32>
    %c0_245 = arith.constant 0 : index
    %c2_246 = arith.constant 2 : index
    %c256_247 = arith.constant 256 : index
    %457 = vector.load %arg27[%c0_245, %c2_246, %c256_247] : memref<2x5x512xf32, #tpu.memory_space<vmem>>, vector<1x1x64xf32>
    %458 = vector.shape_cast %457 : vector<1x1x64xf32> to vector<1x64xf32>
    %459 = vector.shape_cast %456 : vector<1x64xf32> to vector<1x1x64xf32>
    tpu.vector_store %arg27[%c0_245, %c2_246, %c256_247], %459 {strides = array<i32>} : memref<2x5x512xf32, #tpu.memory_space<vmem>>, vector<1x1x64xf32>,
    %460 = vector.extract_strided_slice %383 {offsets = [19, 0], sizes = [1, 64], strides = [1, 1]} : vector<52x64xf32> to vector<1x64xf32>
    %c0_248 = arith.constant 0 : index
    %c2_249 = arith.constant 2 : index
    %c320_250 = arith.constant 320 : index
    %461 = vector.load %arg27[%c0_248, %c2_249, %c320_250] : memref<2x5x512xf32, #tpu.memory_space<vmem>>, vector<1x1x64xf32>
    %462 = vector.shape_cast %461 : vector<1x1x64xf32> to vector<1x64xf32>
    %463 = vector.shape_cast %460 : vector<1x64xf32> to vector<1x1x64xf32>
    tpu.vector_store %arg27[%c0_248, %c2_249, %c320_250], %463 {strides = array<i32>} : memref<2x5x512xf32, #tpu.memory_space<vmem>>, vector<1x1x64xf32>,
    %464 = vector.extract_strided_slice %383 {offsets = [20, 0], sizes = [1, 64], strides = [1, 1]} : vector<52x64xf32> to vector<1x64xf32>
    %c0_251 = arith.constant 0 : index
    %c2_252 = arith.constant 2 : index
    %c384_253 = arith.constant 384 : index
    %465 = vector.load %arg27[%c0_251, %c2_252, %c384_253] : memref<2x5x512xf32, #tpu.memory_space<vmem>>, vector<1x1x64xf32>
    %466 = vector.shape_cast %465 : vector<1x1x64xf32> to vector<1x64xf32>
    %467 = vector.shape_cast %464 : vector<1x64xf32> to vector<1x1x64xf32>
    tpu.vector_store %arg27[%c0_251, %c2_252, %c384_253], %467 {strides = array<i32>} : memref<2x5x512xf32, #tpu.memory_space<vmem>>, vector<1x1x64xf32>,
    %468 = vector.extract_strided_slice %383 {offsets = [21, 0], sizes = [1, 64], strides = [1, 1]} : vector<52x64xf32> to vector<1x64xf32>
    %c0_254 = arith.constant 0 : index
    %c2_255 = arith.constant 2 : index
    %c448_256 = arith.constant 448 : index
    %469 = vector.load %arg27[%c0_254, %c2_255, %c448_256] : memref<2x5x512xf32, #tpu.memory_space<vmem>>, vector<1x1x64xf32>
    %470 = vector.shape_cast %469 : vector<1x1x64xf32> to vector<1x64xf32>
    %471 = vector.shape_cast %468 : vector<1x64xf32> to vector<1x1x64xf32>
    tpu.vector_store %arg27[%c0_254, %c2_255, %c448_256], %471 {strides = array<i32>} : memref<2x5x512xf32, #tpu.memory_space<vmem>>, vector<1x1x64xf32>,
    %472 = vector.extract_strided_slice %383 {offsets = [22, 0], sizes = [1, 64], strides = [1, 1]} : vector<52x64xf32> to vector<1x64xf32>
    %c0_257 = arith.constant 0 : index
    %c3_258 = arith.constant 3 : index
    %c0_259 = arith.constant 0 : index
    %473 = vector.load %arg27[%c0_257, %c3_258, %c0_259] : memref<2x5x512xf32, #tpu.memory_space<vmem>>, vector<1x1x64xf32>
    %474 = vector.shape_cast %473 : vector<1x1x64xf32> to vector<1x64xf32>
    %475 = vector.shape_cast %472 : vector<1x64xf32> to vector<1x1x64xf32>
    tpu.vector_store %arg27[%c0_257, %c3_258, %c0_259], %475 {strides = array<i32>} : memref<2x5x512xf32, #tpu.memory_space<vmem>>, vector<1x1x64xf32>,
    %476 = vector.extract_strided_slice %383 {offsets = [23, 0], sizes = [1, 64], strides = [1, 1]} : vector<52x64xf32> to vector<1x64xf32>
    %c0_260 = arith.constant 0 : index
    %c3_261 = arith.constant 3 : index
    %c64_262 = arith.constant 64 : index
    %477 = vector.load %arg27[%c0_260, %c3_261, %c64_262] : memref<2x5x512xf32, #tpu.memory_space<vmem>>, vector<1x1x64xf32>
    %478 = vector.shape_cast %477 : vector<1x1x64xf32> to vector<1x64xf32>
    %479 = vector.shape_cast %476 : vector<1x64xf32> to vector<1x1x64xf32>
    tpu.vector_store %arg27[%c0_260, %c3_261, %c64_262], %479 {strides = array<i32>} : memref<2x5x512xf32, #tpu.memory_space<vmem>>, vector<1x1x64xf32>,
    %480 = vector.extract_strided_slice %383 {offsets = [24, 0], sizes = [1, 64], strides = [1, 1]} : vector<52x64xf32> to vector<1x64xf32>
    %c0_263 = arith.constant 0 : index
    %c3_264 = arith.constant 3 : index
    %c128_265 = arith.constant 128 : index
    %481 = vector.load %arg27[%c0_263, %c3_264, %c128_265] : memref<2x5x512xf32, #tpu.memory_space<vmem>>, vector<1x1x64xf32>
    %482 = vector.shape_cast %481 : vector<1x1x64xf32> to vector<1x64xf32>
    %483 = vector.shape_cast %480 : vector<1x64xf32> to vector<1x1x64xf32>
    tpu.vector_store %arg27[%c0_263, %c3_264, %c128_265], %483 {strides = array<i32>} : memref<2x5x512xf32, #tpu.memory_space<vmem>>, vector<1x1x64xf32>,
    %484 = vector.extract_strided_slice %383 {offsets = [25, 0], sizes = [1, 64], strides = [1, 1]} : vector<52x64xf32> to vector<1x64xf32>
    %c0_266 = arith.constant 0 : index
    %c3_267 = arith.constant 3 : index
    %c192_268 = arith.constant 192 : index
    %485 = vector.load %arg27[%c0_266, %c3_267, %c192_268] : memref<2x5x512xf32, #tpu.memory_space<vmem>>, vector<1x1x64xf32>
    %486 = vector.shape_cast %485 : vector<1x1x64xf32> to vector<1x64xf32>
    %487 = vector.shape_cast %484 : vector<1x64xf32> to vector<1x1x64xf32>
    tpu.vector_store %arg27[%c0_266, %c3_267, %c192_268], %487 {strides = array<i32>} : memref<2x5x512xf32, #tpu.memory_space<vmem>>, vector<1x1x64xf32>,
    %488 = vector.extract_strided_slice %383 {offsets = [26, 0], sizes = [1, 64], strides = [1, 1]} : vector<52x64xf32> to vector<1x64xf32>
    %c1_269 = arith.constant 1 : index
    %c0_270 = arith.constant 0 : index
    %c128_271 = arith.constant 128 : index
    %489 = vector.load %arg27[%c1_269, %c0_270, %c128_271] : memref<2x5x512xf32, #tpu.memory_space<vmem>>, vector<1x1x64xf32>
    %490 = vector.shape_cast %489 : vector<1x1x64xf32> to vector<1x64xf32>
    %491 = vector.shape_cast %488 : vector<1x64xf32> to vector<1x1x64xf32>
    tpu.vector_store %arg27[%c1_269, %c0_270, %c128_271], %491 {strides = array<i32>} : memref<2x5x512xf32, #tpu.memory_space<vmem>>, vector<1x1x64xf32>,
    %492 = vector.extract_strided_slice %383 {offsets = [27, 0], sizes = [1, 64], strides = [1, 1]} : vector<52x64xf32> to vector<1x64xf32>
    %c1_272 = arith.constant 1 : index
    %c0_273 = arith.constant 0 : index
    %c192_274 = arith.constant 192 : index
    %493 = vector.load %arg27[%c1_272, %c0_273, %c192_274] : memref<2x5x512xf32, #tpu.memory_space<vmem>>, vector<1x1x64xf32>
    %494 = vector.shape_cast %493 : vector<1x1x64xf32> to vector<1x64xf32>
    %495 = vector.shape_cast %492 : vector<1x64xf32> to vector<1x1x64xf32>
    tpu.vector_store %arg27[%c1_272, %c0_273, %c192_274], %495 {strides = array<i32>} : memref<2x5x512xf32, #tpu.memory_space<vmem>>, vector<1x1x64xf32>,
    %496 = vector.extract_strided_slice %383 {offsets = [28, 0], sizes = [1, 64], strides = [1, 1]} : vector<52x64xf32> to vector<1x64xf32>
    %c1_275 = arith.constant 1 : index
    %c0_276 = arith.constant 0 : index
    %c256_277 = arith.constant 256 : index
    %497 = vector.load %arg27[%c1_275, %c0_276, %c256_277] : memref<2x5x512xf32, #tpu.memory_space<vmem>>, vector<1x1x64xf32>
    %498 = vector.shape_cast %497 : vector<1x1x64xf32> to vector<1x64xf32>
    %499 = vector.shape_cast %496 : vector<1x64xf32> to vector<1x1x64xf32>
    tpu.vector_store %arg27[%c1_275, %c0_276, %c256_277], %499 {strides = array<i32>} : memref<2x5x512xf32, #tpu.memory_space<vmem>>, vector<1x1x64xf32>,
    %500 = vector.extract_strided_slice %383 {offsets = [29, 0], sizes = [1, 64], strides = [1, 1]} : vector<52x64xf32> to vector<1x64xf32>
    %c1_278 = arith.constant 1 : index
    %c0_279 = arith.constant 0 : index
    %c320_280 = arith.constant 320 : index
    %501 = vector.load %arg27[%c1_278, %c0_279, %c320_280] : memref<2x5x512xf32, #tpu.memory_space<vmem>>, vector<1x1x64xf32>
    %502 = vector.shape_cast %501 : vector<1x1x64xf32> to vector<1x64xf32>
    %503 = vector.shape_cast %500 : vector<1x64xf32> to vector<1x1x64xf32>
    tpu.vector_store %arg27[%c1_278, %c0_279, %c320_280], %503 {strides = array<i32>} : memref<2x5x512xf32, #tpu.memory_space<vmem>>, vector<1x1x64xf32>,
    %504 = vector.extract_strided_slice %383 {offsets = [30, 0], sizes = [1, 64], strides = [1, 1]} : vector<52x64xf32> to vector<1x64xf32>
    %c1_281 = arith.constant 1 : index
    %c0_282 = arith.constant 0 : index
    %c384_283 = arith.constant 384 : index
    %505 = vector.load %arg27[%c1_281, %c0_282, %c384_283] : memref<2x5x512xf32, #tpu.memory_space<vmem>>, vector<1x1x64xf32>
    %506 = vector.shape_cast %505 : vector<1x1x64xf32> to vector<1x64xf32>
    %507 = vector.shape_cast %504 : vector<1x64xf32> to vector<1x1x64xf32>
    tpu.vector_store %arg27[%c1_281, %c0_282, %c384_283], %507 {strides = array<i32>} : memref<2x5x512xf32, #tpu.memory_space<vmem>>, vector<1x1x64xf32>,
    %508 = vector.extract_strided_slice %383 {offsets = [31, 0], sizes = [1, 64], strides = [1, 1]} : vector<52x64xf32> to vector<1x64xf32>
    %c1_284 = arith.constant 1 : index
    %c0_285 = arith.constant 0 : index
    %c448_286 = arith.constant 448 : index
    %509 = vector.load %arg27[%c1_284, %c0_285, %c448_286] : memref<2x5x512xf32, #tpu.memory_space<vmem>>, vector<1x1x64xf32>
    %510 = vector.shape_cast %509 : vector<1x1x64xf32> to vector<1x64xf32>
    %511 = vector.shape_cast %508 : vector<1x64xf32> to vector<1x1x64xf32>
    tpu.vector_store %arg27[%c1_284, %c0_285, %c448_286], %511 {strides = array<i32>} : memref<2x5x512xf32, #tpu.memory_space<vmem>>, vector<1x1x64xf32>,
    %512 = vector.extract_strided_slice %383 {offsets = [32, 0], sizes = [1, 64], strides = [1, 1]} : vector<52x64xf32> to vector<1x64xf32>
    %c1_287 = arith.constant 1 : index
    %c1_288 = arith.constant 1 : index
    %c0_289 = arith.constant 0 : index
    %513 = vector.load %arg27[%c1_287, %c1_288, %c0_289] : memref<2x5x512xf32, #tpu.memory_space<vmem>>, vector<1x1x64xf32>
    %514 = vector.shape_cast %513 : vector<1x1x64xf32> to vector<1x64xf32>
    %515 = vector.shape_cast %512 : vector<1x64xf32> to vector<1x1x64xf32>
    tpu.vector_store %arg27[%c1_287, %c1_288, %c0_289], %515 {strides = array<i32>} : memref<2x5x512xf32, #tpu.memory_space<vmem>>, vector<1x1x64xf32>,
    %516 = vector.extract_strided_slice %383 {offsets = [33, 0], sizes = [1, 64], strides = [1, 1]} : vector<52x64xf32> to vector<1x64xf32>
    %c1_290 = arith.constant 1 : index
    %c1_291 = arith.constant 1 : index
    %c64_292 = arith.constant 64 : index
    %517 = vector.load %arg27[%c1_290, %c1_291, %c64_292] : memref<2x5x512xf32, #tpu.memory_space<vmem>>, vector<1x1x64xf32>
    %518 = vector.shape_cast %517 : vector<1x1x64xf32> to vector<1x64xf32>
    %519 = vector.shape_cast %516 : vector<1x64xf32> to vector<1x1x64xf32>
    tpu.vector_store %arg27[%c1_290, %c1_291, %c64_292], %519 {strides = array<i32>} : memref<2x5x512xf32, #tpu.memory_space<vmem>>, vector<1x1x64xf32>,
    %520 = vector.extract_strided_slice %383 {offsets = [34, 0], sizes = [1, 64], strides = [1, 1]} : vector<52x64xf32> to vector<1x64xf32>
    %c1_293 = arith.constant 1 : index
    %c1_294 = arith.constant 1 : index
    %c128_295 = arith.constant 128 : index
    %521 = vector.load %arg27[%c1_293, %c1_294, %c128_295] : memref<2x5x512xf32, #tpu.memory_space<vmem>>, vector<1x1x64xf32>
    %522 = vector.shape_cast %521 : vector<1x1x64xf32> to vector<1x64xf32>
    %523 = vector.shape_cast %520 : vector<1x64xf32> to vector<1x1x64xf32>
    tpu.vector_store %arg27[%c1_293, %c1_294, %c128_295], %523 {strides = array<i32>} : memref<2x5x512xf32, #tpu.memory_space<vmem>>, vector<1x1x64xf32>,
    %524 = vector.extract_strided_slice %383 {offsets = [35, 0], sizes = [1, 64], strides = [1, 1]} : vector<52x64xf32> to vector<1x64xf32>
    %c1_296 = arith.constant 1 : index
    %c1_297 = arith.constant 1 : index
    %c192_298 = arith.constant 192 : index
    %525 = vector.load %arg27[%c1_296, %c1_297, %c192_298] : memref<2x5x512xf32, #tpu.memory_space<vmem>>, vector<1x1x64xf32>
    %526 = vector.shape_cast %525 : vector<1x1x64xf32> to vector<1x64xf32>
    %527 = vector.shape_cast %524 : vector<1x64xf32> to vector<1x1x64xf32>
    tpu.vector_store %arg27[%c1_296, %c1_297, %c192_298], %527 {strides = array<i32>} : memref<2x5x512xf32, #tpu.memory_space<vmem>>, vector<1x1x64xf32>,
    %528 = vector.extract_strided_slice %383 {offsets = [36, 0], sizes = [1, 64], strides = [1, 1]} : vector<52x64xf32> to vector<1x64xf32>
    %c1_299 = arith.constant 1 : index
    %c1_300 = arith.constant 1 : index
    %c256_301 = arith.constant 256 : index
    %529 = vector.load %arg27[%c1_299, %c1_300, %c256_301] : memref<2x5x512xf32, #tpu.memory_space<vmem>>, vector<1x1x64xf32>
    %530 = vector.shape_cast %529 : vector<1x1x64xf32> to vector<1x64xf32>
    %531 = vector.shape_cast %528 : vector<1x64xf32> to vector<1x1x64xf32>
    tpu.vector_store %arg27[%c1_299, %c1_300, %c256_301], %531 {strides = array<i32>} : memref<2x5x512xf32, #tpu.memory_space<vmem>>, vector<1x1x64xf32>,
    %532 = vector.extract_strided_slice %383 {offsets = [37, 0], sizes = [1, 64], strides = [1, 1]} : vector<52x64xf32> to vector<1x64xf32>
    %c1_302 = arith.constant 1 : index
    %c1_303 = arith.constant 1 : index
    %c320_304 = arith.constant 320 : index
    %533 = vector.load %arg27[%c1_302, %c1_303, %c320_304] : memref<2x5x512xf32, #tpu.memory_space<vmem>>, vector<1x1x64xf32>
    %534 = vector.shape_cast %533 : vector<1x1x64xf32> to vector<1x64xf32>
    %535 = vector.shape_cast %532 : vector<1x64xf32> to vector<1x1x64xf32>
    tpu.vector_store %arg27[%c1_302, %c1_303, %c320_304], %535 {strides = array<i32>} : memref<2x5x512xf32, #tpu.memory_space<vmem>>, vector<1x1x64xf32>,
    %536 = vector.extract_strided_slice %383 {offsets = [38, 0], sizes = [1, 64], strides = [1, 1]} : vector<52x64xf32> to vector<1x64xf32>
    %c1_305 = arith.constant 1 : index
    %c1_306 = arith.constant 1 : index
    %c384_307 = arith.constant 384 : index
    %537 = vector.load %arg27[%c1_305, %c1_306, %c384_307] : memref<2x5x512xf32, #tpu.memory_space<vmem>>, vector<1x1x64xf32>
    %538 = vector.shape_cast %537 : vector<1x1x64xf32> to vector<1x64xf32>
    %539 = vector.shape_cast %536 : vector<1x64xf32> to vector<1x1x64xf32>
    tpu.vector_store %arg27[%c1_305, %c1_306, %c384_307], %539 {strides = array<i32>} : memref<2x5x512xf32, #tpu.memory_space<vmem>>, vector<1x1x64xf32>,
    %540 = vector.extract_strided_slice %383 {offsets = [39, 0], sizes = [1, 64], strides = [1, 1]} : vector<52x64xf32> to vector<1x64xf32>
    %c1_308 = arith.constant 1 : index
    %c1_309 = arith.constant 1 : index
    %c448_310 = arith.constant 448 : index
    %541 = vector.load %arg27[%c1_308, %c1_309, %c448_310] : memref<2x5x512xf32, #tpu.memory_space<vmem>>, vector<1x1x64xf32>
    %542 = vector.shape_cast %541 : vector<1x1x64xf32> to vector<1x64xf32>
    %543 = vector.shape_cast %540 : vector<1x64xf32> to vector<1x1x64xf32>
    tpu.vector_store %arg27[%c1_308, %c1_309, %c448_310], %543 {strides = array<i32>} : memref<2x5x512xf32, #tpu.memory_space<vmem>>, vector<1x1x64xf32>,
    %544 = vector.extract_strided_slice %383 {offsets = [40, 0], sizes = [1, 64], strides = [1, 1]} : vector<52x64xf32> to vector<1x64xf32>
    %c1_311 = arith.constant 1 : index
    %c2_312 = arith.constant 2 : index
    %c0_313 = arith.constant 0 : index
    %545 = vector.load %arg27[%c1_311, %c2_312, %c0_313] : memref<2x5x512xf32, #tpu.memory_space<vmem>>, vector<1x1x64xf32>
    %546 = vector.shape_cast %545 : vector<1x1x64xf32> to vector<1x64xf32>
    %547 = vector.shape_cast %544 : vector<1x64xf32> to vector<1x1x64xf32>
    tpu.vector_store %arg27[%c1_311, %c2_312, %c0_313], %547 {strides = array<i32>} : memref<2x5x512xf32, #tpu.memory_space<vmem>>, vector<1x1x64xf32>,
    %548 = vector.extract_strided_slice %383 {offsets = [41, 0], sizes = [1, 64], strides = [1, 1]} : vector<52x64xf32> to vector<1x64xf32>
    %c1_314 = arith.constant 1 : index
    %c2_315 = arith.constant 2 : index
    %c64_316 = arith.constant 64 : index
    %549 = vector.load %arg27[%c1_314, %c2_315, %c64_316] : memref<2x5x512xf32, #tpu.memory_space<vmem>>, vector<1x1x64xf32>
    %550 = vector.shape_cast %549 : vector<1x1x64xf32> to vector<1x64xf32>
    %551 = vector.shape_cast %548 : vector<1x64xf32> to vector<1x1x64xf32>
    tpu.vector_store %arg27[%c1_314, %c2_315, %c64_316], %551 {strides = array<i32>} : memref<2x5x512xf32, #tpu.memory_space<vmem>>, vector<1x1x64xf32>,
    %552 = vector.extract_strided_slice %383 {offsets = [42, 0], sizes = [1, 64], strides = [1, 1]} : vector<52x64xf32> to vector<1x64xf32>
    %c1_317 = arith.constant 1 : index
    %c2_318 = arith.constant 2 : index
    %c128_319 = arith.constant 128 : index
    %553 = vector.load %arg27[%c1_317, %c2_318, %c128_319] : memref<2x5x512xf32, #tpu.memory_space<vmem>>, vector<1x1x64xf32>
    %554 = vector.shape_cast %553 : vector<1x1x64xf32> to vector<1x64xf32>
    %555 = vector.shape_cast %552 : vector<1x64xf32> to vector<1x1x64xf32>
    tpu.vector_store %arg27[%c1_317, %c2_318, %c128_319], %555 {strides = array<i32>} : memref<2x5x512xf32, #tpu.memory_space<vmem>>, vector<1x1x64xf32>,
    %556 = vector.extract_strided_slice %383 {offsets = [43, 0], sizes = [1, 64], strides = [1, 1]} : vector<52x64xf32> to vector<1x64xf32>
    %c1_320 = arith.constant 1 : index
    %c2_321 = arith.constant 2 : index
    %c192_322 = arith.constant 192 : index
    %557 = vector.load %arg27[%c1_320, %c2_321, %c192_322] : memref<2x5x512xf32, #tpu.memory_space<vmem>>, vector<1x1x64xf32>
    %558 = vector.shape_cast %557 : vector<1x1x64xf32> to vector<1x64xf32>
    %559 = vector.shape_cast %556 : vector<1x64xf32> to vector<1x1x64xf32>
    tpu.vector_store %arg27[%c1_320, %c2_321, %c192_322], %559 {strides = array<i32>} : memref<2x5x512xf32, #tpu.memory_space<vmem>>, vector<1x1x64xf32>,
    %560 = vector.extract_strided_slice %383 {offsets = [44, 0], sizes = [1, 64], strides = [1, 1]} : vector<52x64xf32> to vector<1x64xf32>
    %c1_323 = arith.constant 1 : index
    %c2_324 = arith.constant 2 : index
    %c256_325 = arith.constant 256 : index
    %561 = vector.load %arg27[%c1_323, %c2_324, %c256_325] : memref<2x5x512xf32, #tpu.memory_space<vmem>>, vector<1x1x64xf32>
    %562 = vector.shape_cast %561 : vector<1x1x64xf32> to vector<1x64xf32>
    %563 = vector.shape_cast %560 : vector<1x64xf32> to vector<1x1x64xf32>
    tpu.vector_store %arg27[%c1_323, %c2_324, %c256_325], %563 {strides = array<i32>} : memref<2x5x512xf32, #tpu.memory_space<vmem>>, vector<1x1x64xf32>,
    %564 = vector.extract_strided_slice %383 {offsets = [45, 0], sizes = [1, 64], strides = [1, 1]} : vector<52x64xf32> to vector<1x64xf32>
    %c1_326 = arith.constant 1 : index
    %c2_327 = arith.constant 2 : index
    %c320_328 = arith.constant 320 : index
    %565 = vector.load %arg27[%c1_326, %c2_327, %c320_328] : memref<2x5x512xf32, #tpu.memory_space<vmem>>, vector<1x1x64xf32>
    %566 = vector.shape_cast %565 : vector<1x1x64xf32> to vector<1x64xf32>
    %567 = vector.shape_cast %564 : vector<1x64xf32> to vector<1x1x64xf32>
    tpu.vector_store %arg27[%c1_326, %c2_327, %c320_328], %567 {strides = array<i32>} : memref<2x5x512xf32, #tpu.memory_space<vmem>>, vector<1x1x64xf32>,
    %568 = vector.extract_strided_slice %383 {offsets = [46, 0], sizes = [1, 64], strides = [1, 1]} : vector<52x64xf32> to vector<1x64xf32>
    %c1_329 = arith.constant 1 : index
    %c2_330 = arith.constant 2 : index
    %c384_331 = arith.constant 384 : index
    %569 = vector.load %arg27[%c1_329, %c2_330, %c384_331] : memref<2x5x512xf32, #tpu.memory_space<vmem>>, vector<1x1x64xf32>
    %570 = vector.shape_cast %569 : vector<1x1x64xf32> to vector<1x64xf32>
    %571 = vector.shape_cast %568 : vector<1x64xf32> to vector<1x1x64xf32>
    tpu.vector_store %arg27[%c1_329, %c2_330, %c384_331], %571 {strides = array<i32>} : memref<2x5x512xf32, #tpu.memory_space<vmem>>, vector<1x1x64xf32>,
    %572 = vector.extract_strided_slice %383 {offsets = [47, 0], sizes = [1, 64], strides = [1, 1]} : vector<52x64xf32> to vector<1x64xf32>
    %c1_332 = arith.constant 1 : index
    %c2_333 = arith.constant 2 : index
    %c448_334 = arith.constant 448 : index
    %573 = vector.load %arg27[%c1_332, %c2_333, %c448_334] : memref<2x5x512xf32, #tpu.memory_space<vmem>>, vector<1x1x64xf32>
    %574 = vector.shape_cast %573 : vector<1x1x64xf32> to vector<1x64xf32>
    %575 = vector.shape_cast %572 : vector<1x64xf32> to vector<1x1x64xf32>
    tpu.vector_store %arg27[%c1_332, %c2_333, %c448_334], %575 {strides = array<i32>} : memref<2x5x512xf32, #tpu.memory_space<vmem>>, vector<1x1x64xf32>,
    %576 = vector.extract_strided_slice %383 {offsets = [48, 0], sizes = [1, 64], strides = [1, 1]} : vector<52x64xf32> to vector<1x64xf32>
    %c1_335 = arith.constant 1 : index
    %c3_336 = arith.constant 3 : index
    %c0_337 = arith.constant 0 : index
    %577 = vector.load %arg27[%c1_335, %c3_336, %c0_337] : memref<2x5x512xf32, #tpu.memory_space<vmem>>, vector<1x1x64xf32>
    %578 = vector.shape_cast %577 : vector<1x1x64xf32> to vector<1x64xf32>
    %579 = vector.shape_cast %576 : vector<1x64xf32> to vector<1x1x64xf32>
    tpu.vector_store %arg27[%c1_335, %c3_336, %c0_337], %579 {strides = array<i32>} : memref<2x5x512xf32, #tpu.memory_space<vmem>>, vector<1x1x64xf32>,
    %580 = vector.extract_strided_slice %383 {offsets = [49, 0], sizes = [1, 64], strides = [1, 1]} : vector<52x64xf32> to vector<1x64xf32>
    %c1_338 = arith.constant 1 : index
    %c3_339 = arith.constant 3 : index
    %c64_340 = arith.constant 64 : index
    %581 = vector.load %arg27[%c1_338, %c3_339, %c64_340] : memref<2x5x512xf32, #tpu.memory_space<vmem>>, vector<1x1x64xf32>
    %582 = vector.shape_cast %581 : vector<1x1x64xf32> to vector<1x64xf32>
    %583 = vector.shape_cast %580 : vector<1x64xf32> to vector<1x1x64xf32>
    tpu.vector_store %arg27[%c1_338, %c3_339, %c64_340], %583 {strides = array<i32>} : memref<2x5x512xf32, #tpu.memory_space<vmem>>, vector<1x1x64xf32>,
    %584 = vector.extract_strided_slice %383 {offsets = [50, 0], sizes = [1, 64], strides = [1, 1]} : vector<52x64xf32> to vector<1x64xf32>
    %c1_341 = arith.constant 1 : index
    %c3_342 = arith.constant 3 : index
    %c128_343 = arith.constant 128 : index
    %585 = vector.load %arg27[%c1_341, %c3_342, %c128_343] : memref<2x5x512xf32, #tpu.memory_space<vmem>>, vector<1x1x64xf32>
    %586 = vector.shape_cast %585 : vector<1x1x64xf32> to vector<1x64xf32>
    %587 = vector.shape_cast %584 : vector<1x64xf32> to vector<1x1x64xf32>
    tpu.vector_store %arg27[%c1_341, %c3_342, %c128_343], %587 {strides = array<i32>} : memref<2x5x512xf32, #tpu.memory_space<vmem>>, vector<1x1x64xf32>,
    %588 = vector.extract_strided_slice %383 {offsets = [51, 0], sizes = [1, 64], strides = [1, 1]} : vector<52x64xf32> to vector<1x64xf32>
    %c1_344 = arith.constant 1 : index
    %c3_345 = arith.constant 3 : index
    %c192_346 = arith.constant 192 : index
    %589 = vector.load %arg27[%c1_344, %c3_345, %c192_346] : memref<2x5x512xf32, #tpu.memory_space<vmem>>, vector<1x1x64xf32>
    %590 = vector.shape_cast %589 : vector<1x1x64xf32> to vector<1x64xf32>
    %591 = vector.shape_cast %588 : vector<1x64xf32> to vector<1x1x64xf32>
    tpu.vector_store %arg27[%c1_344, %c3_345, %c192_346], %591 {strides = array<i32>} : memref<2x5x512xf32, #tpu.memory_space<vmem>>, vector<1x1x64xf32>,
    %c0_347 = arith.constant 0 : index
    %c0_348 = arith.constant 0 : index
    %c0_349 = arith.constant 0 : index
    %592 = vector.load %arg27[%c0_347, %c0_348, %c0_349] : memref<2x5x512xf32, #tpu.memory_space<vmem>>, vector<1x4x512xf32>
    %593 = vector.shape_cast %592 : vector<1x4x512xf32> to vector<4x512xf32>
    %c0_350 = arith.constant 0 : index
    %c1_351 = arith.constant 1 : index
    %c0_352 = arith.constant 0 : index
    %594 = vector.load %arg27[%c0_350, %c1_351, %c0_352] : memref<2x5x512xf32, #tpu.memory_space<vmem>>, vector<1x4x512xf32>
    %595 = vector.shape_cast %594 : vector<1x4x512xf32> to vector<4x512xf32>
    %596 = tpu.concatenate %593, %595 in 1 : vector<4x512xf32>, vector<4x512xf32> -> vector<4x1024xf32>
    %c1_353 = arith.constant 1 : index
    %c0_354 = arith.constant 0 : index
    %c0_355 = arith.constant 0 : index
    %597 = vector.load %arg27[%c1_353, %c0_354, %c0_355] : memref<2x5x512xf32, #tpu.memory_space<vmem>>, vector<1x4x512xf32>
    %598 = vector.shape_cast %597 : vector<1x4x512xf32> to vector<4x512xf32>
    %c1_356 = arith.constant 1 : index
    %c1_357 = arith.constant 1 : index
    %c0_358 = arith.constant 0 : index
    %599 = vector.load %arg27[%c1_356, %c1_357, %c0_358] : memref<2x5x512xf32, #tpu.memory_space<vmem>>, vector<1x4x512xf32>
    %600 = vector.shape_cast %599 : vector<1x4x512xf32> to vector<4x512xf32>
    %601 = tpu.concatenate %598, %600 in 1 : vector<4x512xf32>, vector<4x512xf32> -> vector<4x1024xf32>
    %602 = tpu.concatenate %596, %601 in 0 : vector<4x1024xf32>, vector<4x1024xf32> -> vector<8x1024xf32>
    %603 = arith.truncf %602 : vector<8x1024xf32> to vector<8x1024xbf16>
    %c0_359 = arith.constant 0 : index
    %c0_360 = arith.constant 0 : index
    %604 = vector.load %arg13[%c0_359, %c0_360] : memref<1024x512xbf16, #tpu.memory_space<vmem>>, vector<1024x512xbf16>
    %cst_361 = arith.constant dense<0.000000e+00> : vector<8x512xf32>
    %605 = tpu.matmul %603, %604, %cst_361 {dimension_numbers = #tpu.dot_dimension_numbers<[1], [0], [0], [1], [0, 0, 1, 1], [], []>} : vector<8x1024xbf16>, vector<1024x512xbf16>, vector<8x512xf32> -> vector<8x512xf32>
    %606 = vector.extract_strided_slice %605 {offsets = [0, 0], sizes = [8, 256], strides = [1, 1]} : vector<8x512xf32> to vector<8x256xf32>
    %607 = vector.extract_strided_slice %605 {offsets = [0, 256], sizes = [8, 256], strides = [1, 1]} : vector<8x512xf32> to vector<8x256xf32>
    %608 = arith.maximumf %606, %607 : vector<8x256xf32>
    %609 = tpu.iota {dimensions = array<i32: 0>} : vector<8x256xi32>
    %610 = tpu.iota {dimensions = array<i32: 1>} : vector<8x256xi32>
    %c3_i32 = arith.constant 3 : i32
    %611 = vector.broadcast %c3_i32 : i32 to vector<8x256xi32>
    %612 = arith.cmpi eq, %609, %611 : vector<8x256xi32>
    %c7_i32 = arith.constant 7 : i32
    %613 = vector.broadcast %c7_i32 : i32 to vector<8x256xi32>
    %614 = arith.cmpi eq, %609, %613 : vector<8x256xi32>
    %615 = arith.ori %612, %614 : vector<8x256xi1>
    %c64_i32 = arith.constant 64 : i32
    %616 = vector.broadcast %c64_i32 : i32 to vector<8x256xi32>
    %617 = arith.cmpi sge, %610, %616 : vector<8x256xi32>
    %618 = arith.andi %615, %617 : vector<8x256xi1>
    %cst_362 = arith.constant 0.000000e+00 : f32
    %619 = vector.broadcast %cst_362 : f32 to vector<8x256xf32>
    %620 = arith.select %618, %619, %608 : vector<8x256xi1>, vector<8x256xf32>
    %cst_363 = arith.constant dense<0.000000e+00> : vector<256xf32>
    %621 = vector.multi_reduction <add>, %620, %cst_363 [0] : vector<8x256xf32> to vector<256xf32>
    %622 = vector.shape_cast %621 : vector<256xf32> to vector<1x256xf32>
    %623 = vector.extract_strided_slice %622 {offsets = [0, 0], sizes = [1, 128], strides = [1, 1]} : vector<1x256xf32> to vector<1x128xf32>
    %624 = vector.extract_strided_slice %622 {offsets = [0, 128], sizes = [1, 128], strides = [1, 1]} : vector<1x256xf32> to vector<1x128xf32>
    %625 = arith.addf %623, %624 : vector<1x128xf32>
    %626 = vector.extract_strided_slice %625 {offsets = [0, 0], sizes = [1, 64], strides = [1, 1]} : vector<1x128xf32> to vector<1x64xf32>
    %627 = vector.extract_strided_slice %625 {offsets = [0, 64], sizes = [1, 64], strides = [1, 1]} : vector<1x128xf32> to vector<1x64xf32>
    %628 = arith.addf %626, %627 : vector<1x64xf32>
    %cst_364 = arith.constant 2.600000e+01 : f32
    %629 = vector.broadcast %cst_364 : f32 to vector<1x64xf32>
    %630 = arith.divf %628, %629 : vector<1x64xf32>
    %631 = tpu.concatenate %630, %630, %630, %630 in 1 : vector<1x64xf32>, vector<1x64xf32>, vector<1x64xf32>, vector<1x64xf32> -> vector<1x256xf32>
    %632 = vector.broadcast %631 : vector<1x256xf32> to vector<8x256xf32>
    %633 = arith.subf %620, %632 : vector<8x256xf32>
    %634 = arith.mulf %633, %633 : vector<8x256xf32>
    %cst_365 = arith.constant dense<0.000000e+00> : vector<256xf32>
    %635 = vector.multi_reduction <add>, %634, %cst_365 [0] : vector<8x256xf32> to vector<256xf32>
    %636 = vector.shape_cast %635 : vector<256xf32> to vector<1x256xf32>
    %637 = vector.extract_strided_slice %636 {offsets = [0, 0], sizes = [1, 128], strides = [1, 1]} : vector<1x256xf32> to vector<1x128xf32>
    %638 = vector.extract_strided_slice %636 {offsets = [0, 128], sizes = [1, 128], strides = [1, 1]} : vector<1x256xf32> to vector<1x128xf32>
    %639 = arith.addf %637, %638 : vector<1x128xf32>
    %640 = vector.extract_strided_slice %639 {offsets = [0, 0], sizes = [1, 64], strides = [1, 1]} : vector<1x128xf32> to vector<1x64xf32>
    %641 = vector.extract_strided_slice %639 {offsets = [0, 64], sizes = [1, 64], strides = [1, 1]} : vector<1x128xf32> to vector<1x64xf32>
    %642 = arith.addf %640, %641 : vector<1x64xf32>
    %643 = arith.mulf %630, %630 : vector<1x64xf32>
    %cst_366 = arith.constant 6.000000e+00 : f32
    %644 = vector.broadcast %cst_366 : f32 to vector<1x64xf32>
    %645 = arith.mulf %644, %643 : vector<1x64xf32>
    %646 = arith.subf %642, %645 : vector<1x64xf32>
    %cst_367 = arith.constant 2.600000e+01 : f32
    %647 = vector.broadcast %cst_367 : f32 to vector<1x64xf32>
    %648 = arith.divf %646, %647 : vector<1x64xf32>
    %c0_368 = arith.constant 0 : index
    %c0_369 = arith.constant 0 : index
    %649 = vector.load %arg14[%c0_368, %c0_369] : memref<1x64xf32, #tpu.memory_space<vmem>>, vector<1x64xf32>
    %cst_370 = arith.constant 9.99999974E-6 : f32
    %650 = vector.broadcast %cst_370 : f32 to vector<1x64xf32>
    %651 = arith.addf %648, %650 : vector<1x64xf32>
    %652 = math.rsqrt %651 : vector<1x64xf32>
    %653 = arith.mulf %649, %652 : vector<1x64xf32>
    %c0_371 = arith.constant 0 : index
    %c0_372 = arith.constant 0 : index
    %654 = vector.load %arg15[%c0_371, %c0_372] : memref<1x64xf32, #tpu.memory_space<vmem>>, vector<1x64xf32>
    %655 = arith.mulf %630, %653 : vector<1x64xf32>
    %656 = arith.subf %654, %655 : vector<1x64xf32>
    %657 = tpu.concatenate %653, %653, %653, %653 in 1 : vector<1x64xf32>, vector<1x64xf32>, vector<1x64xf32>, vector<1x64xf32> -> vector<1x256xf32>
    %658 = tpu.concatenate %656, %656, %656, %656 in 1 : vector<1x64xf32>, vector<1x64xf32>, vector<1x64xf32>, vector<1x64xf32> -> vector<1x256xf32>
    %659 = vector.broadcast %657 : vector<1x256xf32> to vector<8x256xf32>
    %660 = arith.mulf %620, %659 : vector<8x256xf32>
    %661 = vector.broadcast %658 : vector<1x256xf32> to vector<8x256xf32>
    %662 = arith.addf %660, %661 : vector<8x256xf32>
    %cst_373 = arith.constant 1.000000e+00 : f32
    %663 = vector.broadcast %cst_373 : f32 to vector<8x256xf32>
    %cst_374 = arith.constant 0.000000e+00 : f32
    %664 = vector.broadcast %cst_374 : f32 to vector<8x256xf32>
    %665 = arith.cmpf ogt, %662, %664 : vector<8x256xf32>
    %cst_375 = arith.constant 0.000000e+00 : f32
    %666 = vector.broadcast %cst_375 : f32 to vector<8x256xf32>
    %667 = arith.cmpf olt, %662, %666 : vector<8x256xf32>
    %cst_376 = arith.constant 0.000000e+00 : f32
    %668 = vector.broadcast %cst_376 : f32 to vector<8x256xf32>
    %669 = arith.subf %668, %663 : vector<8x256xf32>
    %cst_377 = arith.constant 0.000000e+00 : f32
    %670 = vector.broadcast %cst_377 : f32 to vector<8x256xf32>
    %671 = arith.select %667, %669, %670 : vector<8x256xi1>, vector<8x256xf32>
    %672 = arith.select %665, %663, %671 : vector<8x256xi1>, vector<8x256xf32>
    %cst_378 = arith.constant 0.000000e+00 : f32
    %673 = vector.broadcast %cst_378 : f32 to vector<8x256xf32>
    %674 = arith.select %618, %673, %672 : vector<8x256xi1>, vector<8x256xf32>
    %675 = vector.extract_strided_slice %674 {offsets = [0, 192], sizes = [3, 64], strides = [1, 1]} : vector<8x256xf32> to vector<3x64xf32>
    %c0_379 = arith.constant 0 : index
    %c1_380 = arith.constant 1 : index
    %c0_381 = arith.constant 0 : index
    %676 = vector.load %arg28[%c0_379, %c1_380, %c0_381] : memref<2x4x256xf32, #tpu.memory_space<vmem>>, vector<1x3x64xf32>
    %677 = vector.shape_cast %676 : vector<1x3x64xf32> to vector<3x64xf32>
    %678 = vector.shape_cast %675 : vector<3x64xf32> to vector<1x3x64xf32>
    tpu.vector_store %arg28[%c0_379, %c1_380, %c0_381], %678 {strides = array<i32>} : memref<2x4x256xf32, #tpu.memory_space<vmem>>, vector<1x3x64xf32>,
    %679 = vector.extract_strided_slice %674 {offsets = [4, 192], sizes = [3, 64], strides = [1, 1]} : vector<8x256xf32> to vector<3x64xf32>
    %c1_382 = arith.constant 1 : index
    %c1_383 = arith.constant 1 : index
    %c0_384 = arith.constant 0 : index
    %680 = vector.load %arg28[%c1_382, %c1_383, %c0_384] : memref<2x4x256xf32, #tpu.memory_space<vmem>>, vector<1x3x64xf32>
    %681 = vector.shape_cast %680 : vector<1x3x64xf32> to vector<3x64xf32>
    %682 = vector.shape_cast %679 : vector<3x64xf32> to vector<1x3x64xf32>
    tpu.vector_store %arg28[%c1_382, %c1_383, %c0_384], %682 {strides = array<i32>} : memref<2x4x256xf32, #tpu.memory_space<vmem>>, vector<1x3x64xf32>,
    %683 = vector.extract_strided_slice %674 {offsets = [0, 0], sizes = [4, 192], strides = [1, 1]} : vector<8x256xf32> to vector<4x192xf32>
    %c0_385 = arith.constant 0 : index
    %c0_386 = arith.constant 0 : index
    %c64_387 = arith.constant 64 : index
    %684 = vector.load %arg28[%c0_385, %c0_386, %c64_387] : memref<2x4x256xf32, #tpu.memory_space<vmem>>, vector<1x4x192xf32>
    %685 = vector.shape_cast %684 : vector<1x4x192xf32> to vector<4x192xf32>
    %686 = vector.shape_cast %683 : vector<4x192xf32> to vector<1x4x192xf32>
    tpu.vector_store %arg28[%c0_385, %c0_386, %c64_387], %686 {strides = array<i32>} : memref<2x4x256xf32, #tpu.memory_space<vmem>>, vector<1x4x192xf32>,
    %687 = vector.extract_strided_slice %674 {offsets = [4, 0], sizes = [4, 192], strides = [1, 1]} : vector<8x256xf32> to vector<4x192xf32>
    %c1_388 = arith.constant 1 : index
    %c0_389 = arith.constant 0 : index
    %c64_390 = arith.constant 64 : index
    %688 = vector.load %arg28[%c1_388, %c0_389, %c64_390] : memref<2x4x256xf32, #tpu.memory_space<vmem>>, vector<1x4x192xf32>
    %689 = vector.shape_cast %688 : vector<1x4x192xf32> to vector<4x192xf32>
    %690 = vector.shape_cast %687 : vector<4x192xf32> to vector<1x4x192xf32>
    tpu.vector_store %arg28[%c1_388, %c0_389, %c64_390], %690 {strides = array<i32>} : memref<2x4x256xf32, #tpu.memory_space<vmem>>, vector<1x4x192xf32>,
    %c0_391 = arith.constant 0 : index
    %c0_392 = arith.constant 0 : index
    %c0_393 = arith.constant 0 : index
    %691 = vector.load %arg28[%c0_391, %c0_392, %c0_393] : memref<2x4x256xf32, #tpu.memory_space<vmem>>, vector<1x3x256xf32>
    %692 = vector.shape_cast %691 : vector<1x3x256xf32> to vector<3x256xf32>
    %c0_394 = arith.constant 0 : index
    %c1_395 = arith.constant 1 : index
    %c0_396 = arith.constant 0 : index
    %693 = vector.load %arg28[%c0_394, %c1_395, %c0_396] : memref<2x4x256xf32, #tpu.memory_space<vmem>>, vector<1x3x256xf32>
    %694 = vector.shape_cast %693 : vector<1x3x256xf32> to vector<3x256xf32>
    %695 = tpu.concatenate %692, %694 in 1 : vector<3x256xf32>, vector<3x256xf32> -> vector<3x512xf32>
    %c1_397 = arith.constant 1 : index
    %c0_398 = arith.constant 0 : index
    %c0_399 = arith.constant 0 : index
    %696 = vector.load %arg28[%c1_397, %c0_398, %c0_399] : memref<2x4x256xf32, #tpu.memory_space<vmem>>, vector<1x3x256xf32>
    %697 = vector.shape_cast %696 : vector<1x3x256xf32> to vector<3x256xf32>
    %c1_400 = arith.constant 1 : index
    %c1_401 = arith.constant 1 : index
    %c0_402 = arith.constant 0 : index
    %698 = vector.load %arg28[%c1_400, %c1_401, %c0_402] : memref<2x4x256xf32, #tpu.memory_space<vmem>>, vector<1x3x256xf32>
    %699 = vector.shape_cast %698 : vector<1x3x256xf32> to vector<3x256xf32>
    %700 = tpu.concatenate %697, %699 in 1 : vector<3x256xf32>, vector<3x256xf32> -> vector<3x512xf32>
    %701 = tpu.concatenate %695, %700 in 0 : vector<3x512xf32>, vector<3x512xf32> -> vector<6x512xf32>
    %702 = arith.truncf %701 : vector<6x512xf32> to vector<6x512xbf16>
    %c0_403 = arith.constant 0 : index
    %c0_404 = arith.constant 0 : index
    %703 = vector.load %arg16[%c0_403, %c0_404] : memref<512x256xbf16, #tpu.memory_space<vmem>>, vector<512x256xbf16>
    %cst_405 = arith.constant dense<0.000000e+00> : vector<6x256xf32>
    %704 = tpu.matmul %702, %703, %cst_405 {dimension_numbers = #tpu.dot_dimension_numbers<[1], [0], [0], [1], [0, 0, 1, 1], [], []>} : vector<6x512xbf16>, vector<512x256xbf16>, vector<6x256xf32> -> vector<6x256xf32>
    %705 = vector.extract_strided_slice %704 {offsets = [0, 0], sizes = [6, 128], strides = [1, 1]} : vector<6x256xf32> to vector<6x128xf32>
    %706 = vector.extract_strided_slice %704 {offsets = [0, 128], sizes = [6, 128], strides = [1, 1]} : vector<6x256xf32> to vector<6x128xf32>
    %707 = arith.maximumf %705, %706 : vector<6x128xf32>
    %cst_406 = arith.constant dense<0.000000e+00> : vector<128xf32>
    %708 = vector.multi_reduction <add>, %707, %cst_406 [0] : vector<6x128xf32> to vector<128xf32>
    %709 = vector.shape_cast %708 : vector<128xf32> to vector<1x128xf32>
    %710 = vector.extract_strided_slice %709 {offsets = [0, 0], sizes = [1, 64], strides = [1, 1]} : vector<1x128xf32> to vector<1x64xf32>
    %711 = vector.extract_strided_slice %709 {offsets = [0, 64], sizes = [1, 64], strides = [1, 1]} : vector<1x128xf32> to vector<1x64xf32>
    %712 = arith.addf %710, %711 : vector<1x64xf32>
    %cst_407 = arith.constant 1.200000e+01 : f32
    %713 = vector.broadcast %cst_407 : f32 to vector<1x64xf32>
    %714 = arith.divf %712, %713 : vector<1x64xf32>
    %715 = tpu.concatenate %714, %714 in 1 : vector<1x64xf32>, vector<1x64xf32> -> vector<1x128xf32>
    %716 = vector.broadcast %715 : vector<1x128xf32> to vector<6x128xf32>
    %717 = arith.subf %707, %716 : vector<6x128xf32>
    %718 = arith.mulf %717, %717 : vector<6x128xf32>
    %cst_408 = arith.constant dense<0.000000e+00> : vector<128xf32>
    %719 = vector.multi_reduction <add>, %718, %cst_408 [0] : vector<6x128xf32> to vector<128xf32>
    %720 = vector.shape_cast %719 : vector<128xf32> to vector<1x128xf32>
    %721 = vector.extract_strided_slice %720 {offsets = [0, 0], sizes = [1, 64], strides = [1, 1]} : vector<1x128xf32> to vector<1x64xf32>
    %722 = vector.extract_strided_slice %720 {offsets = [0, 64], sizes = [1, 64], strides = [1, 1]} : vector<1x128xf32> to vector<1x64xf32>
    %723 = arith.addf %721, %722 : vector<1x64xf32>
    %cst_409 = arith.constant 1.200000e+01 : f32
    %724 = vector.broadcast %cst_409 : f32 to vector<1x64xf32>
    %725 = arith.divf %723, %724 : vector<1x64xf32>
    %c0_410 = arith.constant 0 : index
    %c0_411 = arith.constant 0 : index
    %726 = vector.load %arg17[%c0_410, %c0_411] : memref<1x64xf32, #tpu.memory_space<vmem>>, vector<1x64xf32>
    %cst_412 = arith.constant 9.99999974E-6 : f32
    %727 = vector.broadcast %cst_412 : f32 to vector<1x64xf32>
    %728 = arith.addf %725, %727 : vector<1x64xf32>
    %729 = math.rsqrt %728 : vector<1x64xf32>
    %730 = arith.mulf %726, %729 : vector<1x64xf32>
    %c0_413 = arith.constant 0 : index
    %c0_414 = arith.constant 0 : index
    %731 = vector.load %arg18[%c0_413, %c0_414] : memref<1x64xf32, #tpu.memory_space<vmem>>, vector<1x64xf32>
    %732 = arith.mulf %714, %730 : vector<1x64xf32>
    %733 = arith.subf %731, %732 : vector<1x64xf32>
    %734 = tpu.concatenate %730, %730 in 1 : vector<1x64xf32>, vector<1x64xf32> -> vector<1x128xf32>
    %735 = tpu.concatenate %733, %733 in 1 : vector<1x64xf32>, vector<1x64xf32> -> vector<1x128xf32>
    %736 = vector.broadcast %734 : vector<1x128xf32> to vector<6x128xf32>
    %737 = arith.mulf %707, %736 : vector<6x128xf32>
    %738 = vector.broadcast %735 : vector<1x128xf32> to vector<6x128xf32>
    %739 = arith.addf %737, %738 : vector<6x128xf32>
    %cst_415 = arith.constant 1.000000e+00 : f32
    %740 = vector.broadcast %cst_415 : f32 to vector<6x128xf32>
    %cst_416 = arith.constant 0.000000e+00 : f32
    %741 = vector.broadcast %cst_416 : f32 to vector<6x128xf32>
    %742 = arith.cmpf ogt, %739, %741 : vector<6x128xf32>
    %cst_417 = arith.constant 0.000000e+00 : f32
    %743 = vector.broadcast %cst_417 : f32 to vector<6x128xf32>
    %744 = arith.cmpf olt, %739, %743 : vector<6x128xf32>
    %cst_418 = arith.constant 0.000000e+00 : f32
    %745 = vector.broadcast %cst_418 : f32 to vector<6x128xf32>
    %746 = arith.subf %745, %740 : vector<6x128xf32>
    %cst_419 = arith.constant 0.000000e+00 : f32
    %747 = vector.broadcast %cst_419 : f32 to vector<6x128xf32>
    %748 = arith.select %744, %746, %747 : vector<6x128xi1>, vector<6x128xf32>
    %749 = arith.select %742, %740, %748 : vector<6x128xi1>, vector<6x128xf32>
    %750 = vector.extract_strided_slice %749 {offsets = [0, 64], sizes = [3, 64], strides = [1, 1]} : vector<6x128xf32> to vector<3x64xf32>
    %c0_420 = arith.constant 0 : index
    %c1_421 = arith.constant 1 : index
    %c0_422 = arith.constant 0 : index
    %751 = vector.load %arg29[%c0_420, %c1_421, %c0_422] : memref<2x4x128xf32, #tpu.memory_space<vmem>>, vector<1x3x64xf32>
    %752 = vector.shape_cast %751 : vector<1x3x64xf32> to vector<3x64xf32>
    %753 = vector.shape_cast %750 : vector<3x64xf32> to vector<1x3x64xf32>
    tpu.vector_store %arg29[%c0_420, %c1_421, %c0_422], %753 {strides = array<i32>} : memref<2x4x128xf32, #tpu.memory_space<vmem>>, vector<1x3x64xf32>,
    %754 = vector.extract_strided_slice %749 {offsets = [3, 64], sizes = [3, 64], strides = [1, 1]} : vector<6x128xf32> to vector<3x64xf32>
    %c1_423 = arith.constant 1 : index
    %c1_424 = arith.constant 1 : index
    %c0_425 = arith.constant 0 : index
    %755 = vector.load %arg29[%c1_423, %c1_424, %c0_425] : memref<2x4x128xf32, #tpu.memory_space<vmem>>, vector<1x3x64xf32>
    %756 = vector.shape_cast %755 : vector<1x3x64xf32> to vector<3x64xf32>
    %757 = vector.shape_cast %754 : vector<3x64xf32> to vector<1x3x64xf32>
    tpu.vector_store %arg29[%c1_423, %c1_424, %c0_425], %757 {strides = array<i32>} : memref<2x4x128xf32, #tpu.memory_space<vmem>>, vector<1x3x64xf32>,
    %758 = vector.extract_strided_slice %749 {offsets = [0, 0], sizes = [3, 64], strides = [1, 1]} : vector<6x128xf32> to vector<3x64xf32>
    %c0_426 = arith.constant 0 : index
    %c0_427 = arith.constant 0 : index
    %c64_428 = arith.constant 64 : index
    %759 = vector.load %arg29[%c0_426, %c0_427, %c64_428] : memref<2x4x128xf32, #tpu.memory_space<vmem>>, vector<1x3x64xf32>
    %760 = vector.shape_cast %759 : vector<1x3x64xf32> to vector<3x64xf32>
    %761 = vector.shape_cast %758 : vector<3x64xf32> to vector<1x3x64xf32>
    tpu.vector_store %arg29[%c0_426, %c0_427, %c64_428], %761 {strides = array<i32>} : memref<2x4x128xf32, #tpu.memory_space<vmem>>, vector<1x3x64xf32>,
    %762 = vector.extract_strided_slice %749 {offsets = [3, 0], sizes = [3, 64], strides = [1, 1]} : vector<6x128xf32> to vector<3x64xf32>
    %c1_429 = arith.constant 1 : index
    %c0_430 = arith.constant 0 : index
    %c64_431 = arith.constant 64 : index
    %763 = vector.load %arg29[%c1_429, %c0_430, %c64_431] : memref<2x4x128xf32, #tpu.memory_space<vmem>>, vector<1x3x64xf32>
    %764 = vector.shape_cast %763 : vector<1x3x64xf32> to vector<3x64xf32>
    %765 = vector.shape_cast %762 : vector<3x64xf32> to vector<1x3x64xf32>
    tpu.vector_store %arg29[%c1_429, %c0_430, %c64_431], %765 {strides = array<i32>} : memref<2x4x128xf32, #tpu.memory_space<vmem>>, vector<1x3x64xf32>,
    %c0_432 = arith.constant 0 : index
    %c0_433 = arith.constant 0 : index
    %c0_434 = arith.constant 0 : index
    %766 = vector.load %arg29[%c0_432, %c0_433, %c0_434] : memref<2x4x128xf32, #tpu.memory_space<vmem>>, vector<1x3x128xf32>
    %767 = vector.shape_cast %766 : vector<1x3x128xf32> to vector<3x128xf32>
    %c0_435 = arith.constant 0 : index
    %c1_436 = arith.constant 1 : index
    %c0_437 = arith.constant 0 : index
    %768 = vector.load %arg29[%c0_435, %c1_436, %c0_437] : memref<2x4x128xf32, #tpu.memory_space<vmem>>, vector<1x3x128xf32>
    %769 = vector.shape_cast %768 : vector<1x3x128xf32> to vector<3x128xf32>
    %770 = tpu.concatenate %767, %769 in 1 : vector<3x128xf32>, vector<3x128xf32> -> vector<3x256xf32>
    %c1_438 = arith.constant 1 : index
    %c0_439 = arith.constant 0 : index
    %c0_440 = arith.constant 0 : index
    %771 = vector.load %arg29[%c1_438, %c0_439, %c0_440] : memref<2x4x128xf32, #tpu.memory_space<vmem>>, vector<1x3x128xf32>
    %772 = vector.shape_cast %771 : vector<1x3x128xf32> to vector<3x128xf32>
    %c1_441 = arith.constant 1 : index
    %c1_442 = arith.constant 1 : index
    %c0_443 = arith.constant 0 : index
    %773 = vector.load %arg29[%c1_441, %c1_442, %c0_443] : memref<2x4x128xf32, #tpu.memory_space<vmem>>, vector<1x3x128xf32>
    %774 = vector.shape_cast %773 : vector<1x3x128xf32> to vector<3x128xf32>
    %775 = tpu.concatenate %772, %774 in 1 : vector<3x128xf32>, vector<3x128xf32> -> vector<3x256xf32>
    %776 = tpu.concatenate %770, %775 in 0 : vector<3x256xf32>, vector<3x256xf32> -> vector<6x256xf32>
    %777 = arith.truncf %776 : vector<6x256xf32> to vector<6x256xbf16>
    %c0_444 = arith.constant 0 : index
    %c0_445 = arith.constant 0 : index
    %778 = vector.load %arg19[%c0_444, %c0_445] : memref<256x144xbf16, #tpu.memory_space<vmem>>, vector<256x144xbf16>
    %cst_446 = arith.constant dense<0.000000e+00> : vector<6x144xf32>
    %779 = tpu.matmul %777, %778, %cst_446 {dimension_numbers = #tpu.dot_dimension_numbers<[1], [0], [0], [1], [0, 0, 1, 1], [], []>} : vector<6x256xbf16>, vector<256x144xbf16>, vector<6x144xf32> -> vector<6x144xf32>
    %780 = vector.extract_strided_slice %779 {offsets = [0, 0], sizes = [6, 72], strides = [1, 1]} : vector<6x144xf32> to vector<6x72xf32>
    %781 = vector.extract_strided_slice %779 {offsets = [0, 72], sizes = [6, 72], strides = [1, 1]} : vector<6x144xf32> to vector<6x72xf32>
    %782 = arith.maximumf %780, %781 : vector<6x72xf32>
    %cst_447 = arith.constant dense<0.000000e+00> : vector<72xf32>
    %783 = vector.multi_reduction <add>, %782, %cst_447 [0] : vector<6x72xf32> to vector<72xf32>
    %784 = vector.shape_cast %783 : vector<72xf32> to vector<1x72xf32>
    %cst_448 = arith.constant 6.000000e+00 : f32
    %785 = vector.broadcast %cst_448 : f32 to vector<1x72xf32>
    %786 = arith.divf %784, %785 : vector<1x72xf32>
    %787 = vector.broadcast %786 : vector<1x72xf32> to vector<6x72xf32>
    %788 = arith.subf %782, %787 : vector<6x72xf32>
    %789 = arith.mulf %788, %788 : vector<6x72xf32>
    %cst_449 = arith.constant dense<0.000000e+00> : vector<72xf32>
    %790 = vector.multi_reduction <add>, %789, %cst_449 [0] : vector<6x72xf32> to vector<72xf32>
    %791 = vector.shape_cast %790 : vector<72xf32> to vector<1x72xf32>
    %cst_450 = arith.constant 6.000000e+00 : f32
    %792 = vector.broadcast %cst_450 : f32 to vector<1x72xf32>
    %793 = arith.divf %791, %792 : vector<1x72xf32>
    %c0_451 = arith.constant 0 : index
    %c0_452 = arith.constant 0 : index
    %794 = vector.load %arg20[%c0_451, %c0_452] : memref<1x72xf32, #tpu.memory_space<vmem>>, vector<1x72xf32>
    %cst_453 = arith.constant 9.99999974E-6 : f32
    %795 = vector.broadcast %cst_453 : f32 to vector<1x72xf32>
    %796 = arith.addf %793, %795 : vector<1x72xf32>
    %797 = math.rsqrt %796 : vector<1x72xf32>
    %798 = arith.mulf %794, %797 : vector<1x72xf32>
    %c0_454 = arith.constant 0 : index
    %c0_455 = arith.constant 0 : index
    %799 = vector.load %arg21[%c0_454, %c0_455] : memref<1x72xf32, #tpu.memory_space<vmem>>, vector<1x72xf32>
    %800 = arith.mulf %786, %798 : vector<1x72xf32>
    %801 = arith.subf %799, %800 : vector<1x72xf32>
    %802 = vector.broadcast %798 : vector<1x72xf32> to vector<6x72xf32>
    %803 = arith.mulf %782, %802 : vector<6x72xf32>
    %804 = vector.broadcast %801 : vector<1x72xf32> to vector<6x72xf32>
    %805 = arith.addf %803, %804 : vector<6x72xf32>
    %cst_456 = arith.constant 1.000000e+00 : f32
    %806 = vector.broadcast %cst_456 : f32 to vector<6x72xf32>
    %cst_457 = arith.constant 0.000000e+00 : f32
    %807 = vector.broadcast %cst_457 : f32 to vector<6x72xf32>
    %808 = arith.cmpf ogt, %805, %807 : vector<6x72xf32>
    %cst_458 = arith.constant 0.000000e+00 : f32
    %809 = vector.broadcast %cst_458 : f32 to vector<6x72xf32>
    %810 = arith.cmpf olt, %805, %809 : vector<6x72xf32>
    %cst_459 = arith.constant 0.000000e+00 : f32
    %811 = vector.broadcast %cst_459 : f32 to vector<6x72xf32>
    %812 = arith.subf %811, %806 : vector<6x72xf32>
    %cst_460 = arith.constant 0.000000e+00 : f32
    %813 = vector.broadcast %cst_460 : f32 to vector<6x72xf32>
    %814 = arith.select %810, %812, %813 : vector<6x72xi1>, vector<6x72xf32>
    %815 = arith.select %808, %806, %814 : vector<6x72xi1>, vector<6x72xf32>
    %816 = vector.extract_strided_slice %815 {offsets = [0, 0], sizes = [1, 72], strides = [1, 1]} : vector<6x72xf32> to vector<1x72xf32>
    %817 = vector.extract_strided_slice %815 {offsets = [1, 0], sizes = [1, 72], strides = [1, 1]} : vector<6x72xf32> to vector<1x72xf32>
    %818 = vector.extract_strided_slice %815 {offsets = [2, 0], sizes = [1, 72], strides = [1, 1]} : vector<6x72xf32> to vector<1x72xf32>
    %819 = tpu.concatenate %816, %817, %818 in 1 : vector<1x72xf32>, vector<1x72xf32>, vector<1x72xf32> -> vector<1x216xf32>
    %820 = vector.extract_strided_slice %815 {offsets = [3, 0], sizes = [1, 72], strides = [1, 1]} : vector<6x72xf32> to vector<1x72xf32>
    %821 = vector.extract_strided_slice %815 {offsets = [4, 0], sizes = [1, 72], strides = [1, 1]} : vector<6x72xf32> to vector<1x72xf32>
    %822 = vector.extract_strided_slice %815 {offsets = [5, 0], sizes = [1, 72], strides = [1, 1]} : vector<6x72xf32> to vector<1x72xf32>
    %823 = tpu.concatenate %820, %821, %822 in 1 : vector<1x72xf32>, vector<1x72xf32>, vector<1x72xf32> -> vector<1x216xf32>
    %824 = tpu.concatenate %819, %823 in 0 : vector<1x216xf32>, vector<1x216xf32> -> vector<2x216xf32>
    %825 = arith.truncf %824 : vector<2x216xf32> to vector<2x216xbf16>
    %c0_461 = arith.constant 0 : index
    %c0_462 = arith.constant 0 : index
    %826 = vector.load %arg22[%c0_461, %c0_462] : memref<216x5xbf16, #tpu.memory_space<vmem>>, vector<216x5xbf16>
    %cst_463 = arith.constant dense<0.000000e+00> : vector<2x5xf32>
    %827 = tpu.matmul %825, %826, %cst_463 {dimension_numbers = #tpu.dot_dimension_numbers<[1], [0], [0], [1], [0, 0, 1, 1], [], []>} : vector<2x216xbf16>, vector<216x5xbf16>, vector<2x5xf32> -> vector<2x5xf32>
    %c0_464 = arith.constant 0 : index
    %c0_465 = arith.constant 0 : index
    %828 = vector.load %arg23[%c0_464, %c0_465] : memref<2x5xf32, #tpu.memory_space<vmem>>, vector<2x5xf32>
    tpu.vector_store %arg23[%c0_464, %c0_465], %827 {strides = array<i32>} : memref<2x5xf32, #tpu.memory_space<vmem>>, vector<2x5xf32>,
    return
  }
}

</mosaic_0001>

<llo_original>
// kernel: binet_forward.1
$region0: #{binet_forward.1}
  #allocation0 [shape = 'u32[]', space=smem, size = 0x4, offset = 0x4, fixed_abs, tag = 'smem constant byte address 0x4 - core index']
  #allocation1 [shape = 'u32[72,128]{1,0:T(1,128)}', space=vmem, size = 0x9000, scoped, tag = 'internal scratch']
  #allocation2 [shape = 'f32[2,29,128]{2,1,0:T(8,128)}', space=vmem, size = 0x8000, scoped, tag = 'scratch operand']
  #allocation3 [shape = 'f32[2,30,48]{2,1,0:T(8,128)}', space=vmem, size = 0x8000, scoped, tag = 'scratch operand']
  #allocation4 [shape = 'f32[2,30,64]{2,1,0:T(8,128)}', space=vmem, size = 0x8000, scoped, tag = 'scratch operand']
  #allocation5 [shape = 'f32[2,5,512]{2,1,0:T(8,128)}', space=vmem, size = 0x8000, scoped, tag = 'scratch operand']
  #allocation6 [shape = 'f32[2,4,256]{2,1,0:T(4,128)}', space=vmem, size = 0x2000, scoped, tag = 'scratch operand']
  #allocation7 [shape = 'f32[2,4,128]{2,1,0:T(4,128)}', space=vmem, size = 0x1000, scoped, tag = 'scratch operand']
  %s0 = inlined_call_operand.vmem [shape: f32[2,30,128], index: 0, kind: input, shape index: {}]
  %s1 = inlined_call_operand.hbm [shape: f32[256,1024], index: 1, kind: input, shape index: {}]
  %s2 = inlined_call_operand.vmem [shape: f32[1,8], index: 2, kind: input, shape index: {}]
  %s3 = inlined_call_operand.vmem [shape: f32[1,8], index: 3, kind: input, shape index: {}]
  %s4 = inlined_call_operand.vmem [shape: bf16[256,192], index: 4, kind: input, shape index: {}]
  %s5 = inlined_call_operand.vmem [shape: f32[1,12], index: 5, kind: input, shape index: {}]
  %s6 = inlined_call_operand.vmem [shape: f32[1,12], index: 6, kind: input, shape index: {}]
  %s7 = inlined_call_operand.hbm [shape: bf16[192,320], index: 7, kind: input, shape index: {}]
  %s8 = inlined_call_operand.vmem [shape: f32[1,32], index: 8, kind: input, shape index: {}]
  %s9 = inlined_call_operand.vmem [shape: f32[1,32], index: 9, kind: input, shape index: {}]
  %s10 = inlined_call_operand.vmem [shape: bf16[320,256], index: 10, kind: input, shape index: {}]
  %s11 = inlined_call_operand.vmem [shape: f32[1,64], index: 11, kind: input, shape index: {}]
  %s12 = inlined_call_operand.vmem [shape: f32[1,64], index: 12, kind: input, shape index: {}]
  %s13 = inlined_call_operand.hbm [shape: bf16[1024,512], index: 13, kind: input, shape index: {}]
  %s14 = inlined_call_operand.vmem [shape: f32[1,64], index: 14, kind: input, shape index: {}]
  %s15 = inlined_call_operand.vmem [shape: f32[1,64], index: 15, kind: input, shape index: {}]
  %s16 = inlined_call_operand.vmem [shape: bf16[512,256], index: 16, kind: input, shape index: {}]
  %s17 = inlined_call_operand.vmem [shape: f32[1,64], index: 17, kind: input, shape index: {}]
  %s18 = inlined_call_operand.vmem [shape: f32[1,64], index: 18, kind: input, shape index: {}]
  %s19 = inlined_call_operand.vmem [shape: bf16[256,144], index: 19, kind: input, shape index: {}]
  %s20 = inlined_call_operand.vmem [shape: f32[1,72], index: 20, kind: input, shape index: {}]
  %s21 = inlined_call_operand.vmem [shape: f32[1,72], index: 21, kind: input, shape index: {}]
  %s22 = inlined_call_operand.vmem [shape: bf16[216,5], index: 22, kind: input, shape index: {}]
  %s23 = inlined_call_operand.hbm [shape: f32[2,5], index: 23, kind: output, shape index: {}]
  %s24 = sld [smem:[#allocation0]]
  $region114: #{binet_forward.1} parent=0
    _
  %s26 = ssub.s32 1, %s24
  %s27 = scalar_select 0, %s26, %s24
  $region1: #{binet_forward.1} parent=0
    #allocation8 [shape = 'u8[1048576]{0}', space=vmem, size = 0x100000, scoped, tag = 'input window, operand 1, single buffered']
    #allocation9 [shape = 's32[1]{0}', space=sflag, size = 0x4, scoped, tag = 'scoped memory for binet_forward.1']
    #allocation10 [shape = 's32[1]{0}', space=sflag, size = 0x4, scoped, tag = 'scoped memory for binet_forward.1']
    #allocation11 [shape = 'u8[147456]{0}', space=vmem, size = 0x24000, scoped, tag = 'input window, operand 7, single buffered']
    #allocation12 [shape = 's32[1]{0}', space=sflag, size = 0x4, scoped, tag = 'scoped memory for binet_forward.1']
    #allocation13 [shape = 'u8[1048576]{0}', space=vmem, size = 0x100000, scoped, tag = 'input window, operand 13, single buffered']
    #allocation14 [shape = 'u8[1024]{0}', space=vmem, size = 0x400, scoped, tag = 'output window, operand 0, single buffered']
    %28 = vsyncpa [#allocation9], 0
    %29 = vsyncpa [#allocation12], 0
    %30 = vsyncpa [#allocation10], 0
    // Predicated region
    $region2: #{binet_forward.1} parent=1 // pred_check
      _
    $region3: #{binet_forward.1} parent=1 // pred_check_branch
      %32 = sbr.rel (0) target = $region5
    $region4: #{binet_forward.1} parent=1 // pred_region
      _
    $region5: #{binet_forward.1} parent=1 // pred_fallthru
      _
    // Predicated region
    $region6: #{binet_forward.1} parent=1 // pred_check
      _
    $region7: #{binet_forward.1} parent=1 // pred_check_branch
      %34 = sbr.rel (0) target = $region9
    $region8: #{binet_forward.1} parent=1 // pred_region
      %36 = vsyncadd [#allocation9], 0
      %s37 = sshll.u32 %s1, 4
      %s38 = int_to_ptr.hbm [resolvable:$true] %s37
      %s39 = sshll.u32 [#allocation8], 4
      %s40 = int_to_ptr.vmem [resolvable:$true] %s39
      %45 = dma.hbm_to_vmem [thread:$0]  %s38, 32768, %s40, [#allocation9], 1024, 1024, 64
    $region9: #{binet_forward.1} parent=1 // pred_fallthru
      _
    // Predicated region
    $region10: #{binet_forward.1} parent=1 // pred_check
      _
    $region11: #{binet_forward.1} parent=1 // pred_check_branch
      %47 = sbr.rel (0) target = $region13
    $region12: #{binet_forward.1} parent=1 // pred_region
      _
    $region13: #{binet_forward.1} parent=1 // pred_fallthru
      _
    // Predicated region
    $region14: #{binet_forward.1} parent=1 // pred_check
      _
    $region15: #{binet_forward.1} parent=1 // pred_check_branch
      %49 = sbr.rel (0) target = $region17
    $region16: #{binet_forward.1} parent=1 // pred_region
      _
    $region17: #{binet_forward.1} parent=1 // pred_fallthru
      _
    // Predicated region
    $region18: #{binet_forward.1} parent=1 // pred_check
      _
    $region19: #{binet_forward.1} parent=1 // pred_check_branch
      %51 = sbr.rel (0) target = $region21
    $region20: #{binet_forward.1} parent=1 // pred_region
      _
    $region21: #{binet_forward.1} parent=1 // pred_fallthru
      _
    // Predicated region
    $region22: #{binet_forward.1} parent=1 // pred_check
      _
    $region23: #{binet_forward.1} parent=1 // pred_check_branch
      %53 = sbr.rel (0) target = $region25
    $region24: #{binet_forward.1} parent=1 // pred_region
      _
    $region25: #{binet_forward.1} parent=1 // pred_fallthru
      _
    // Predicated region
    $region26: #{binet_forward.1} parent=1 // pred_check
      _
    $region27: #{binet_forward.1} parent=1 // pred_check_branch
      %55 = sbr.rel (0) target = $region29
    $region28: #{binet_forward.1} parent=1 // pred_region
      _
    $region29: #{binet_forward.1} parent=1 // pred_fallthru
      _
    // Predicated region
    $region30: #{binet_forward.1} parent=1 // pred_check
      _
    $region31: #{binet_forward.1} parent=1 // pred_check_branch
      %57 = sbr.rel (0) target = $region33
    $region32: #{binet_forward.1} parent=1 // pred_region
      %59 = vsyncadd [#allocation12], 0
      %s60 = sshll.u32 %s7, 4
      %s61 = int_to_ptr.hbm [resolvable:$true] %s60
      %s62 = sshll.u32 [#allocation11], 4
      %s63 = int_to_ptr.vmem [resolvable:$true] %s62
      %68 = dma.hbm_to_vmem [thread:$0]  %s61, 4608, %s63, [#allocation12], 192, 192, 12
    $region33: #{binet_forward.1} parent=1 // pred_fallthru
      _
    // Predicated region
    $region34: #{binet_forward.1} parent=1 // pred_check
      _
    $region35: #{binet_forward.1} parent=1 // pred_check_branch
      %70 = sbr.rel (0) target = $region37
    $region36: #{binet_forward.1} parent=1 // pred_region
      _
    $region37: #{binet_forward.1} parent=1 // pred_fallthru
      _
    // Predicated region
    $region38: #{binet_forward.1} parent=1 // pred_check
      _
    $region39: #{binet_forward.1} parent=1 // pred_check_branch
      %72 = sbr.rel (0) target = $region41
    $region40: #{binet_forward.1} parent=1 // pred_region
      _
    $region41: #{binet_forward.1} parent=1 // pred_fallthru
      _
    // Predicated region
    $region42: #{binet_forward.1} parent=1 // pred_check
      _
    $region43: #{binet_forward.1} parent=1 // pred_check_branch
      %74 = sbr.rel (0) target = $region45
    $region44: #{binet_forward.1} parent=1 // pred_region
      _
    $region45: #{binet_forward.1} parent=1 // pred_fallthru
      _
    // Predicated region
    $region46: #{binet_forward.1} parent=1 // pred_check
      _
    $region47: #{binet_forward.1} parent=1 // pred_check_branch
      %76 = sbr.rel (0) target = $region49
    $region48: #{binet_forward.1} parent=1 // pred_region
      _
    $region49: #{binet_forward.1} parent=1 // pred_fallthru
      _
    // Predicated region
    $region50: #{binet_forward.1} parent=1 // pred_check
      _
    $region51: #{binet_forward.1} parent=1 // pred_check_branch
      %78 = sbr.rel (0) target = $region53
    $region52: #{binet_forward.1} parent=1 // pred_region
      _
    $region53: #{binet_forward.1} parent=1 // pred_fallthru
      _
    // Predicated region
    $region54: #{binet_forward.1} parent=1 // pred_check
      _
    $region55: #{binet_forward.1} parent=1 // pred_check_branch
      %80 = sbr.rel (0) target = $region57
    $region56: #{binet_forward.1} parent=1 // pred_region
      %82 = vsyncadd [#allocation12], 0
      %s83 = sshll.u32 %s13, 4
      %s84 = int_to_ptr.hbm [resolvable:$true] %s83
      %s85 = sshll.u32 [#allocation13], 4
      %s86 = int_to_ptr.vmem [resolvable:$true] %s85
      %91 = dma.hbm_to_vmem [thread:$0]  %s84, 32768, %s86, [#allocation12], 256, 256, 16
    $region57: #{binet_forward.1} parent=1 // pred_fallthru
      _
    // Predicated region
    $region58: #{binet_forward.1} parent=1 // pred_check
      _
    $region59: #{binet_forward.1} parent=1 // pred_check_branch
      %93 = sbr.rel (0) target = $region61
    $region60: #{binet_forward.1} parent=1 // pred_region
      _
    $region61: #{binet_forward.1} parent=1 // pred_fallthru
      _
    // Predicated region
    $region62: #{binet_forward.1} parent=1 // pred_check
      _
    $region63: #{binet_forward.1} parent=1 // pred_check_branch
      %95 = sbr.rel (0) target = $region65
    $region64: #{binet_forward.1} parent=1 // pred_region
      _
    $region65: #{binet_forward.1} parent=1 // pred_fallthru
      _
    // Predicated region
    $region66: #{binet_forward.1} parent=1 // pred_check
      _
    $region67: #{binet_forward.1} parent=1 // pred_check_branch
      %97 = sbr.rel (0) target = $region69
    $region68: #{binet_forward.1} parent=1 // pred_region
      _
    $region69: #{binet_forward.1} parent=1 // pred_fallthru
      _
    // Predicated region
    $region70: #{binet_forward.1} parent=1 // pred_check
      _
    $region71: #{binet_forward.1} parent=1 // pred_check_branch
      %99 = sbr.rel (0) target = $region73
    $region72: #{binet_forward.1} parent=1 // pred_region
      _
    $region73: #{binet_forward.1} parent=1 // pred_fallthru
      _
    // Predicated region
    $region74: #{binet_forward.1} parent=1 // pred_check
      _
    $region75: #{binet_forward.1} parent=1 // pred_check_branch
      %101 = sbr.rel (0) target = $region77
    $region76: #{binet_forward.1} parent=1 // pred_region
      _
    $region77: #{binet_forward.1} parent=1 // pred_fallthru
      _
    // Predicated region
    $region78: #{binet_forward.1} parent=1 // pred_check
      _
    $region79: #{binet_forward.1} parent=1 // pred_check_branch
      %103 = sbr.rel (0) target = $region81
    $region80: #{binet_forward.1} parent=1 // pred_region
      _
    $region81: #{binet_forward.1} parent=1 // pred_fallthru
      _
    // Predicated region
    $region82: #{binet_forward.1} parent=1 // pred_check
      _
    $region83: #{binet_forward.1} parent=1 // pred_check_branch
      %105 = sbr.rel (0) target = $region85
    $region84: #{binet_forward.1} parent=1 // pred_region
      _
    $region85: #{binet_forward.1} parent=1 // pred_fallthru
      _
    // Predicated region
    $region86: #{binet_forward.1} parent=1 // pred_check
      _
    $region87: #{binet_forward.1} parent=1 // pred_check_branch
      %107 = sbr.rel (0) target = $region89
    $region88: #{binet_forward.1} parent=1 // pred_region
      _
    $region89: #{binet_forward.1} parent=1 // pred_fallthru
      _
    // Predicated region
    $region90: #{binet_forward.1} parent=1 // pred_check
      _
    $region91: #{binet_forward.1} parent=1 // pred_check_branch
      %109 = sbr.rel (0) target = $region93
    $region92: #{binet_forward.1} parent=1 // pred_region
      _
    $region93: #{binet_forward.1} parent=1 // pred_fallthru
      _
    // Predicated region
    $region94: #{binet_forward.1} parent=1 // pred_check
      _
    $region95: #{binet_forward.1} parent=1 // pred_check_branch
      %111 = sbr.rel (0) target = $region97
    $region96: #{binet_forward.1} parent=1 // pred_region
      %113 = dma.done [#allocation9], 32768
    $region97: #{binet_forward.1} parent=1 // pred_fallthru
      _
    // Predicated region
    $region98: #{binet_forward.1} parent=1 // pred_check
      _
    $region99: #{binet_forward.1} parent=1 // pred_check_branch
      %115 = sbr.rel (0) target = $region101
    $region100: #{binet_forward.1} parent=1 // pred_region
      %117 = dma.done [#allocation12], 4608
    $region101: #{binet_forward.1} parent=1 // pred_fallthru
      _
    // Predicated region
    $region102: #{binet_forward.1} parent=1 // pred_check
      _
    $region103: #{binet_forward.1} parent=1 // pred_check_branch
      %119 = sbr.rel (0) target = $region105
    $region104: #{binet_forward.1} parent=1 // pred_region
      %121 = dma.done [#allocation12], 32768
    $region105: #{binet_forward.1} parent=1 // pred_fallthru
      _
    %123 = vst [vmem:[#allocation2] sm:$0xff] 0.0
    %124 = vst [vmem:[#allocation2 + $0x8] sm:$0xff] 0.0
    %125 = vst [vmem:[#allocation2 + $0x10] sm:$0xff] 0.0
    %126 = vst [vmem:[#allocation2 + $0x18] sm:$0x1f] 0.0
    %127 = vst [vmem:[#allocation2 + $0x20] sm:$0xff] 0.0
    %128 = vst [vmem:[#allocation2 + $0x28] sm:$0xff] 0.0
    %129 = vst [vmem:[#allocation2 + $0x30] sm:$0xff] 0.0
    %130 = vst [vmem:[#allocation2 + $0x38] sm:$0x1f] 0.0
    %vm131 = vcmask 392192
    %132 = vst.msk [vmem:[#allocation3] sm:$0xff] %vm131, 0.0
    %133 = vst.msk [vmem:[#allocation3 + $0x8] sm:$0xff] %vm131, 0.0
    %134 = vst.msk [vmem:[#allocation3 + $0x10] sm:$0xff] %vm131, 0.0
    %vm135 = vcmask 390144
    %136 = vst.msk [vmem:[#allocation3 + $0x18] sm:$0x3f] %vm135, 0.0
    %137 = vst.msk [vmem:[#allocation3 + $0x20] sm:$0xff] %vm131, 0.0
    %138 = vst.msk [vmem:[#allocation3 + $0x28] sm:$0xff] %vm131, 0.0
    %139 = vst.msk [vmem:[#allocation3 + $0x30] sm:$0xff] %vm131, 0.0
    %140 = vst.msk [vmem:[#allocation3 + $0x38] sm:$0x3f] %vm135, 0.0
    %vm141 = vcmask 523264
    %142 = vst.msk [vmem:[#allocation4] sm:$0xff] %vm141, 0.0
    %143 = vst.msk [vmem:[#allocation4 + $0x8] sm:$0xff] %vm141, 0.0
    %144 = vst.msk [vmem:[#allocation4 + $0x10] sm:$0xff] %vm141, 0.0
    %vm145 = vcmask 521216
    %146 = vst.msk [vmem:[#allocation4 + $0x18] sm:$0x3f] %vm145, 0.0
    %147 = vst.msk [vmem:[#allocation4 + $0x20] sm:$0xff] %vm141, 0.0
    %148 = vst.msk [vmem:[#allocation4 + $0x28] sm:$0xff] %vm141, 0.0
    %149 = vst.msk [vmem:[#allocation4 + $0x30] sm:$0xff] %vm141, 0.0
    %150 = vst.msk [vmem:[#allocation4 + $0x38] sm:$0x3f] %vm145, 0.0
    %151 = vst [vmem:[#allocation5] sm:$0x1f] 0.0
    %152 = vst [vmem:[#allocation5 + $0x8] sm:$0x1f] 0.0
    %153 = vst [vmem:[#allocation5 + $0x10] sm:$0x1f] 0.0
    %154 = vst [vmem:[#allocation5 + $0x18] sm:$0x1f] 0.0
    %155 = vst [vmem:[#allocation5 + $0x20] sm:$0x1f] 0.0
    %156 = vst [vmem:[#allocation5 + $0x28] sm:$0x1f] 0.0
    %157 = vst [vmem:[#allocation5 + $0x30] sm:$0x1f] 0.0
    %158 = vst [vmem:[#allocation5 + $0x38] sm:$0x1f] 0.0
    %159 = vst [vmem:[#allocation6] sm:$0xff] 0.0
    %160 = vst [vmem:[#allocation6 + $0x8] sm:$0xff] 0.0
    %161 = vst [vmem:[#allocation7] sm:$0xf] 0.0
    %162 = vst [vmem:[#allocation7 + $0x4] sm:$0xf] 0.0
    %v163 = vld [vmem:[%s0] sm:$0xff]
    %v164 = vld [vmem:[%s0 + $0x8] sm:$0xff]
    %v165 = vld [vmem:[%s0 + $0x10] sm:$0xff]
    %v166 = vld [vmem:[%s0 + $0x18] sm:$0x1f]
    %v167 = vld [vmem:[%s0 + $0x1] sm:$0xff]
    %v168 = vld [vmem:[%s0 + $0x9] sm:$0xff]
    %v169 = vld [vmem:[%s0 + $0x11] sm:$0xff]
    %v170 = vld [vmem:[%s0 + $0x19] sm:$0x1f]
    %s171 = scalar_lea.vmem %s0, 32
    %v172 = vld [vmem:[%s171] sm:$0xff]
    %v173 = vld [vmem:[%s171 + $0x8] sm:$0xff]
    %v174 = vld [vmem:[%s171 + $0x10] sm:$0xff]
    %v175 = vld [vmem:[%s171 + $0x18] sm:$0x1f]
    %v176 = vld [vmem:[%s171 + $0x1] sm:$0xff]
    %v177 = vld [vmem:[%s171 + $0x9] sm:$0xff]
    %v178 = vld [vmem:[%s171 + $0x11] sm:$0xff]
    %v179 = vld [vmem:[%s171 + $0x19] sm:$0x1f]
    %vm188 = vcmask 1044480
    %v189 = vrot.slane %v172, 3
    %v190 = vrot.slane %v176, 3
    %v191 = vrot.slane %v173, 3
    %v192 = vsel %vm188, %v189, %v191
    %v193 = vrot.slane %v177, 3
    %v194 = vsel %vm188, %v190, %v193
    %v195 = vrot.slane %v174, 3
    %v196 = vsel %vm188, %v191, %v195
    %v197 = vrot.slane %v178, 3
    %v198 = vsel %vm188, %v193, %v197
    %v199 = vrot.slane %v175, 3
    %v200 = vsel %vm188, %v195, %v199
    %v201 = vrot.slane %v179, 3
    %v202 = vsel %vm188, %v197, %v201
    %v213 = vsel %vm188, %v166, %v189
    %v214 = vsel %vm188, %v170, %v190
    %v215 = vld [vmem:[#allocation8] sm:$0xff]
    %v216 = vld [vmem:[#allocation8 + $0x8] sm:$0xff]
    %v217 = vld [vmem:[#allocation8 + $0x10] sm:$0xff]
    %v218 = vld [vmem:[#allocation8 + $0x18] sm:$0xff]
    %v219 = vld [vmem:[#allocation8 + $0x20] sm:$0xff]
    %v220 = vld [vmem:[#allocation8 + $0x28] sm:$0xff]
    %v221 = vld [vmem:[#allocation8 + $0x30] sm:$0xff]
    %v222 = vld [vmem:[#allocation8 + $0x38] sm:$0xff]
    %v223 = vld [vmem:[#allocation8 + $0x40] sm:$0xff]
    %v224 = vld [vmem:[#allocation8 + $0x48] sm:$0xff]
    %v225 = vld [vmem:[#allocation8 + $0x50] sm:$0xff]
    %v226 = vld [vmem:[#allocation8 + $0x58] sm:$0xff]
    %v227 = vld [vmem:[#allocation8 + $0x60] sm:$0xff]
    %v228 = vld [vmem:[#allocation8 + $0x68] sm:$0xff]
    %v229 = vld [vmem:[#allocation8 + $0x70] sm:$0xff]
    %v230 = vld [vmem:[#allocation8 + $0x78] sm:$0xff]
    %v231 = vld [vmem:[#allocation8 + $0x80] sm:$0xff]
    %v232 = vld [vmem:[#allocation8 + $0x88] sm:$0xff]
    %v233 = vld [vmem:[#allocation8 + $0x90] sm:$0xff]
    %v234 = vld [vmem:[#allocation8 + $0x98] sm:$0xff]
    %v235 = vld [vmem:[#allocation8 + $0xa0] sm:$0xff]
    %v236 = vld [vmem:[#allocation8 + $0xa8] sm:$0xff]
    %v237 = vld [vmem:[#allocation8 + $0xb0] sm:$0xff]
    %v238 = vld [vmem:[#allocation8 + $0xb8] sm:$0xff]
    %v239 = vld [vmem:[#allocation8 + $0xc0] sm:$0xff]
    %v240 = vld [vmem:[#allocation8 + $0xc8] sm:$0xff]
    %v241 = vld [vmem:[#allocation8 + $0xd0] sm:$0xff]
    %v242 = vld [vmem:[#allocation8 + $0xd8] sm:$0xff]
    %v243 = vld [vmem:[#allocation8 + $0xe0] sm:$0xff]
    %v244 = vld [vmem:[#allocation8 + $0xe8] sm:$0xff]
    %v245 = vld [vmem:[#allocation8 + $0xf0] sm:$0xff]
    %v246 = vld [vmem:[#allocation8 + $0xf8] sm:$0xff]
    %v247 = vld [vmem:[#allocation8 + $0x100] sm:$0xff]
    %v248 = vld [vmem:[#allocation8 + $0x108] sm:$0xff]
    %v249 = vld [vmem:[#allocation8 + $0x110] sm:$0xff]
    %v250 = vld [vmem:[#allocation8 + $0x118] sm:$0xff]
    %v251 = vld [vmem:[#allocation8 + $0x120] sm:$0xff]
    %v252 = vld [vmem:[#allocation8 + $0x128] sm:$0xff]
    %v253 = vld [vmem:[#allocation8 + $0x130] sm:$0xff]
    %v254 = vld [vmem:[#allocation8 + $0x138] sm:$0xff]
    %v255 = vld [vmem:[#allocation8 + $0x140] sm:$0xff]
    %v256 = vld [vmem:[#allocation8 + $0x148] sm:$0xff]
    %v257 = vld [vmem:[#allocation8 + $0x150] sm:$0xff]
    %v258 = vld [vmem:[#allocation8 + $0x158] sm:$0xff]
    %v259 = vld [vmem:[#allocation8 + $0x160] sm:$0xff]
    %v260 = vld [vmem:[#allocation8 + $0x168] sm:$0xff]
    %v261 = vld [vmem:[#allocation8 + $0x170] sm:$0xff]
    %v262 = vld [vmem:[#allocation8 + $0x178] sm:$0xff]
    %v263 = vld [vmem:[#allocation8 + $0x180] sm:$0xff]
    %v264 = vld [vmem:[#allocation8 + $0x188] sm:$0xff]
    %v265 = vld [vmem:[#allocation8 + $0x190] sm:$0xff]
    %v266 = vld [vmem:[#allocation8 + $0x198] sm:$0xff]
    %v267 = vld [vmem:[#allocation8 + $0x1a0] sm:$0xff]
    %v268 = vld [vmem:[#allocation8 + $0x1a8] sm:$0xff]
    %v269 = vld [vmem:[#allocation8 + $0x1b0] sm:$0xff]
    %v270 = vld [vmem:[#allocation8 + $0x1b8] sm:$0xff]
    %v271 = vld [vmem:[#allocation8 + $0x1c0] sm:$0xff]
    %v272 = vld [vmem:[#allocation8 + $0x1c8] sm:$0xff]
    %v273 = vld [vmem:[#allocation8 + $0x1d0] sm:$0xff]
    %v274 = vld [vmem:[#allocation8 + $0x1d8] sm:$0xff]
    %v275 = vld [vmem:[#allocation8 + $0x1e0] sm:$0xff]
    %v276 = vld [vmem:[#allocation8 + $0x1e8] sm:$0xff]
    %v277 = vld [vmem:[#allocation8 + $0x1f0] sm:$0xff]
    %v278 = vld [vmem:[#allocation8 + $0x1f8] sm:$0xff]
    %v279 = vld [vmem:[#allocation8 + $0x200] sm:$0xff]
    %v280 = vld [vmem:[#allocation8 + $0x208] sm:$0xff]
    %v281 = vld [vmem:[#allocation8 + $0x210] sm:$0xff]
    %v282 = vld [vmem:[#allocation8 + $0x218] sm:$0xff]
    %v283 = vld [vmem:[#allocation8 + $0x220] sm:$0xff]
    %v284 = vld [vmem:[#allocation8 + $0x228] sm:$0xff]
    %v285 = vld [vmem:[#allocation8 + $0x230] sm:$0xff]
    %v286 = vld [vmem:[#allocation8 + $0x238] sm:$0xff]
    %v287 = vld [vmem:[#allocation8 + $0x240] sm:$0xff]
    %v288 = vld [vmem:[#allocation8 + $0x248] sm:$0xff]
    %v289 = vld [vmem:[#allocation8 + $0x250] sm:$0xff]
    %v290 = vld [vmem:[#allocation8 + $0x258] sm:$0xff]
    %v291 = vld [vmem:[#allocation8 + $0x260] sm:$0xff]
    %v292 = vld [vmem:[#allocation8 + $0x268] sm:$0xff]
    %v293 = vld [vmem:[#allocation8 + $0x270] sm:$0xff]
    %v294 = vld [vmem:[#allocation8 + $0x278] sm:$0xff]
    %v295 = vld [vmem:[#allocation8 + $0x280] sm:$0xff]
    %v296 = vld [vmem:[#allocation8 + $0x288] sm:$0xff]
    %v297 = vld [vmem:[#allocation8 + $0x290] sm:$0xff]
    %v298 = vld [vmem:[#allocation8 + $0x298] sm:$0xff]
    %v299 = vld [vmem:[#allocation8 + $0x2a0] sm:$0xff]
    %v300 = vld [vmem:[#allocation8 + $0x2a8] sm:$0xff]
    %v301 = vld [vmem:[#allocation8 + $0x2b0] sm:$0xff]
    %v302 = vld [vmem:[#allocation8 + $0x2b8] sm:$0xff]
    %v303 = vld [vmem:[#allocation8 + $0x2c0] sm:$0xff]
    %v304 = vld [vmem:[#allocation8 + $0x2c8] sm:$0xff]
    %v305 = vld [vmem:[#allocation8 + $0x2d0] sm:$0xff]
    %v306 = vld [vmem:[#allocation8 + $0x2d8] sm:$0xff]
    %v307 = vld [vmem:[#allocation8 + $0x2e0] sm:$0xff]
    %v308 = vld [vmem:[#allocation8 + $0x2e8] sm:$0xff]
    %v309 = vld [vmem:[#allocation8 + $0x2f0] sm:$0xff]
    %v310 = vld [vmem:[#allocation8 + $0x2f8] sm:$0xff]
    %v311 = vld [vmem:[#allocation8 + $0x300] sm:$0xff]
    %v312 = vld [vmem:[#allocation8 + $0x308] sm:$0xff]
    %v313 = vld [vmem:[#allocation8 + $0x310] sm:$0xff]
    %v314 = vld [vmem:[#allocation8 + $0x318] sm:$0xff]
    %v315 = vld [vmem:[#allocation8 + $0x320] sm:$0xff]
    %v316 = vld [vmem:[#allocation8 + $0x328] sm:$0xff]
    %v317 = vld [vmem:[#allocation8 + $0x330] sm:$0xff]
    %v318 = vld [vmem:[#allocation8 + $0x338] sm:$0xff]
    %v319 = vld [vmem:[#allocation8 + $0x340] sm:$0xff]
    %v320 = vld [vmem:[#allocation8 + $0x348] sm:$0xff]
    %v321 = vld [vmem:[#allocation8 + $0x350] sm:$0xff]
    %v322 = vld [vmem:[#allocation8 + $0x358] sm:$0xff]
    %v323 = vld [vmem:[#allocation8 + $0x360] sm:$0xff]
    %v324 = vld [vmem:[#allocation8 + $0x368] sm:$0xff]
    %v325 = vld [vmem:[#allocation8 + $0x370] sm:$0xff]
    %v326 = vld [vmem:[#allocation8 + $0x378] sm:$0xff]
    %v327 = vld [vmem:[#allocation8 + $0x380] sm:$0xff]
    %v328 = vld [vmem:[#allocation8 + $0x388] sm:$0xff]
    %v329 = vld [vmem:[#allocation8 + $0x390] sm:$0xff]
    %v330 = vld [vmem:[#allocation8 + $0x398] sm:$0xff]
    %v331 = vld [vmem:[#allocation8 + $0x3a0] sm:$0xff]
    %v332 = vld [vmem:[#allocation8 + $0x3a8] sm:$0xff]
    %v333 = vld [vmem:[#allocation8 + $0x3b0] sm:$0xff]
    %v334 = vld [vmem:[#allocation8 + $0x3b8] sm:$0xff]
    %v335 = vld [vmem:[#allocation8 + $0x3c0] sm:$0xff]
    %v336 = vld [vmem:[#allocation8 + $0x3c8] sm:$0xff]
    %v337 = vld [vmem:[#allocation8 + $0x3d0] sm:$0xff]
    %v338 = vld [vmem:[#allocation8 + $0x3d8] sm:$0xff]
    %v339 = vld [vmem:[#allocation8 + $0x3e0] sm:$0xff]
    %v340 = vld [vmem:[#allocation8 + $0x3e8] sm:$0xff]
    %v341 = vld [vmem:[#allocation8 + $0x3f0] sm:$0xff]
    %v342 = vld [vmem:[#allocation8 + $0x3f8] sm:$0xff]
    %v343 = vld [vmem:[#allocation8 + $0x400] sm:$0xff]
    %v344 = vld [vmem:[#allocation8 + $0x408] sm:$0xff]
    %v345 = vld [vmem:[#allocation8 + $0x410] sm:$0xff]
    %v346 = vld [vmem:[#allocation8 + $0x418] sm:$0xff]
    %v347 = vld [vmem:[#allocation8 + $0x420] sm:$0xff]
    %v348 = vld [vmem:[#allocation8 + $0x428] sm:$0xff]
    %v349 = vld [vmem:[#allocation8 + $0x430] sm:$0xff]
    %v350 = vld [vmem:[#allocation8 + $0x438] sm:$0xff]
    %v351 = vld [vmem:[#allocation8 + $0x440] sm:$0xff]
    %v352 = vld [vmem:[#allocation8 + $0x448] sm:$0xff]
    %v353 = vld [vmem:[#allocation8 + $0x450] sm:$0xff]
    %v354 = vld [vmem:[#allocation8 + $0x458] sm:$0xff]
    %v355 = vld [vmem:[#allocation8 + $0x460] sm:$0xff]
    %v356 = vld [vmem:[#allocation8 + $0x468] sm:$0xff]
    %v357 = vld [vmem:[#allocation8 + $0x470] sm:$0xff]
    %v358 = vld [vmem:[#allocation8 + $0x478] sm:$0xff]
    %v359 = vld [vmem:[#allocation8 + $0x480] sm:$0xff]
    %v360 = vld [vmem:[#allocation8 + $0x488] sm:$0xff]
    %v361 = vld [vmem:[#allocation8 + $0x490] sm:$0xff]
    %v362 = vld [vmem:[#allocation8 + $0x498] sm:$0xff]
    %v363 = vld [vmem:[#allocation8 + $0x4a0] sm:$0xff]
    %v364 = vld [vmem:[#allocation8 + $0x4a8] sm:$0xff]
    %v365 = vld [vmem:[#allocation8 + $0x4b0] sm:$0xff]
    %v366 = vld [vmem:[#allocation8 + $0x4b8] sm:$0xff]
    %v367 = vld [vmem:[#allocation8 + $0x4c0] sm:$0xff]
    %v368 = vld [vmem:[#allocation8 + $0x4c8] sm:$0xff]
    %v369 = vld [vmem:[#allocation8 + $0x4d0] sm:$0xff]
    %v370 = vld [vmem:[#allocation8 + $0x4d8] sm:$0xff]
    %v371 = vld [vmem:[#allocation8 + $0x4e0] sm:$0xff]
    %v372 = vld [vmem:[#allocation8 + $0x4e8] sm:$0xff]
    %v373 = vld [vmem:[#allocation8 + $0x4f0] sm:$0xff]
    %v374 = vld [vmem:[#allocation8 + $0x4f8] sm:$0xff]
    %v375 = vld [vmem:[#allocation8 + $0x500] sm:$0xff]
    %v376 = vld [vmem:[#allocation8 + $0x508] sm:$0xff]
    %v377 = vld [vmem:[#allocation8 + $0x510] sm:$0xff]
    %v378 = vld [vmem:[#allocation8 + $0x518] sm:$0xff]
    %v379 = vld [vmem:[#allocation8 + $0x520] sm:$0xff]
    %v380 = vld [vmem:[#allocation8 + $0x528] sm:$0xff]
    %v381 = vld [vmem:[#allocation8 + $0x530] sm:$0xff]
    %v382 = vld [vmem:[#allocation8 + $0x538] sm:$0xff]
    %v383 = vld [vmem:[#allocation8 + $0x540] sm:$0xff]
    %v384 = vld [vmem:[#allocation8 + $0x548] sm:$0xff]
    %v385 = vld [vmem:[#allocation8 + $0x550] sm:$0xff]
    %v386 = vld [vmem:[#allocation8 + $0x558] sm:$0xff]
    %v387 = vld [vmem:[#allocation8 + $0x560] sm:$0xff]
    %v388 = vld [vmem:[#allocation8 + $0x568] sm:$0xff]
    %v389 = vld [vmem:[#allocation8 + $0x570] sm:$0xff]
    %v390 = vld [vmem:[#allocation8 + $0x578] sm:$0xff]
    %v391 = vld [vmem:[#allocation8 + $0x580] sm:$0xff]
    %v392 = vld [vmem:[#allocation8 + $0x588] sm:$0xff]
    %v393 = vld [vmem:[#allocation8 + $0x590] sm:$0xff]
    %v394 = vld [vmem:[#allocation8 + $0x598] sm:$0xff]
    %v395 = vld [vmem:[#allocation8 + $0x5a0] sm:$0xff]
    %v396 = vld [vmem:[#allocation8 + $0x5a8] sm:$0xff]
    %v397 = vld [vmem:[#allocation8 + $0x5b0] sm:$0xff]
    %v398 = vld [vmem:[#allocation8 + $0x5b8] sm:$0xff]
    %v399 = vld [vmem:[#allocation8 + $0x5c0] sm:$0xff]
    %v400 = vld [vmem:[#allocation8 + $0x5c8] sm:$0xff]
    %v401 = vld [vmem:[#allocation8 + $0x5d0] sm:$0xff]
    %v402 = vld [vmem:[#allocation8 + $0x5d8] sm:$0xff]
    %v403 = vld [vmem:[#allocation8 + $0x5e0] sm:$0xff]
    %v404 = vld [vmem:[#allocation8 + $0x5e8] sm:$0xff]
    %v405 = vld [vmem:[#allocation8 + $0x5f0] sm:$0xff]
    %v406 = vld [vmem:[#allocation8 + $0x5f8] sm:$0xff]
    %v407 = vld [vmem:[#allocation8 + $0x600] sm:$0xff]
    %v408 = vld [vmem:[#allocation8 + $0x608] sm:$0xff]
    %v409 = vld [vmem:[#allocation8 + $0x610] sm:$0xff]
    %v410 = vld [vmem:[#allocation8 + $0x618] sm:$0xff]
    %v411 = vld [vmem:[#allocation8 + $0x620] sm:$0xff]
    %v412 = vld [vmem:[#allocation8 + $0x628] sm:$0xff]
    %v413 = vld [vmem:[#allocation8 + $0x630] sm:$0xff]
    %v414 = vld [vmem:[#allocation8 + $0x638] sm:$0xff]
    %v415 = vld [vmem:[#allocation8 + $0x640] sm:$0xff]
    %v416 = vld [vmem:[#allocation8 + $0x648] sm:$0xff]
    %v417 = vld [vmem:[#allocation8 + $0x650] sm:$0xff]
    %v418 = vld [vmem:[#allocation8 + $0x658] sm:$0xff]
    %v419 = vld [vmem:[#allocation8 + $0x660] sm:$0xff]
    %v420 = vld [vmem:[#allocation8 + $0x668] sm:$0xff]
    %v421 = vld [vmem:[#allocation8 + $0x670] sm:$0xff]
    %v422 = vld [vmem:[#allocation8 + $0x678] sm:$0xff]
    %v423 = vld [vmem:[#allocation8 + $0x680] sm:$0xff]
    %v424 = vld [vmem:[#allocation8 + $0x688] sm:$0xff]
    %v425 = vld [vmem:[#allocation8 + $0x690] sm:$0xff]
    %v426 = vld [vmem:[#allocation8 + $0x698] sm:$0xff]
    %v427 = vld [vmem:[#allocation8 + $0x6a0] sm:$0xff]
    %v428 = vld [vmem:[#allocation8 + $0x6a8] sm:$0xff]
    %v429 = vld [vmem:[#allocation8 + $0x6b0] sm:$0xff]
    %v430 = vld [vmem:[#allocation8 + $0x6b8] sm:$0xff]
    %v431 = vld [vmem:[#allocation8 + $0x6c0] sm:$0xff]
    %v432 = vld [vmem:[#allocation8 + $0x6c8] sm:$0xff]
    %v433 = vld [vmem:[#allocation8 + $0x6d0] sm:$0xff]
    %v434 = vld [vmem:[#allocation8 + $0x6d8] sm:$0xff]
    %v435 = vld [vmem:[#allocation8 + $0x6e0] sm:$0xff]
    %v436 = vld [vmem:[#allocation8 + $0x6e8] sm:$0xff]
    %v437 = vld [vmem:[#allocation8 + $0x6f0] sm:$0xff]
    %v438 = vld [vmem:[#allocation8 + $0x6f8] sm:$0xff]
    %v439 = vld [vmem:[#allocation8 + $0x700] sm:$0xff]
    %v440 = vld [vmem:[#allocation8 + $0x708] sm:$0xff]
    %v441 = vld [vmem:[#allocation8 + $0x710] sm:$0xff]
    %v442 = vld [vmem:[#allocation8 + $0x718] sm:$0xff]
    %v443 = vld [vmem:[#allocation8 + $0x720] sm:$0xff]
    %v444 = vld [vmem:[#allocation8 + $0x728] sm:$0xff]
    %v445 = vld [vmem:[#allocation8 + $0x730] sm:$0xff]
    %v446 = vld [vmem:[#allocation8 + $0x738] sm:$0xff]
    %v447 = vld [vmem:[#allocation8 + $0x740] sm:$0xff]
    %v448 = vld [vmem:[#allocation8 + $0x748] sm:$0xff]
    %v449 = vld [vmem:[#allocation8 + $0x750] sm:$0xff]
    %v450 = vld [vmem:[#allocation8 + $0x758] sm:$0xff]
    %v451 = vld [vmem:[#allocation8 + $0x760] sm:$0xff]
    %v452 = vld [vmem:[#allocation8 + $0x768] sm:$0xff]
    %v453 = vld [vmem:[#allocation8 + $0x770] sm:$0xff]
    %v454 = vld [vmem:[#allocation8 + $0x778] sm:$0xff]
    %v455 = vld [vmem:[#allocation8 + $0x780] sm:$0xff]
    %v456 = vld [vmem:[#allocation8 + $0x788] sm:$0xff]
    %v457 = vld [vmem:[#allocation8 + $0x790] sm:$0xff]
    %v458 = vld [vmem:[#allocation8 + $0x798] sm:$0xff]
    %v459 = vld [vmem:[#allocation8 + $0x7a0] sm:$0xff]
    %v460 = vld [vmem:[#allocation8 + $0x7a8] sm:$0xff]
    %v461 = vld [vmem:[#allocation8 + $0x7b0] sm:$0xff]
    %v462 = vld [vmem:[#allocation8 + $0x7b8] sm:$0xff]
    %v463 = vld [vmem:[#allocation8 + $0x7c0] sm:$0xff]
    %v464 = vld [vmem:[#allocation8 + $0x7c8] sm:$0xff]
    %v465 = vld [vmem:[#allocation8 + $0x7d0] sm:$0xff]
    %v466 = vld [vmem:[#allocation8 + $0x7d8] sm:$0xff]
    %v467 = vld [vmem:[#allocation8 + $0x7e0] sm:$0xff]
    %v468 = vld [vmem:[#allocation8 + $0x7e8] sm:$0xff]
    %v469 = vld [vmem:[#allocation8 + $0x7f0] sm:$0xff]
    %v470 = vld [vmem:[#allocation8 + $0x7f8] sm:$0xff]
    %471 = vmatpush.msra.mxu0 %v335
    %472 = vmatpush.msra.mxu0 %v327
    %473 = vmatpush.msra.mxu0 %v319
    %474 = vmatpush.msra.mxu0 %v311
    %475 = vmatpush.msra.mxu0 %v303
    %476 = vmatpush.msra.mxu0 %v295
    %477 = vmatpush.msra.mxu0 %v287
    %478 = vmatpush.msra.mxu0 %v279
    %479 = vmatpush.msra.mxu0 %v271
    %480 = vmatpush.msra.mxu0 %v263
    %481 = vmatpush.msra.mxu0 %v255
    %482 = vmatpush.msra.mxu0 %v247
    %483 = vmatpush.msra.mxu0 %v239
    %484 = vmatpush.msra.mxu0 %v231
    %485 = vmatpush.msra.mxu0 %v223
    %486 = vmatpush.msra.mxu0 %v215
    %487 = vmatmul.f32.gmra.mxu0 %v163
    %v488 = vpop.f32.mrf.mxu0
    %v489 = vadd.f32 0.0, %v488
    %490 = vmatmul.f32.gmra.mxu0 %v164
    %v491 = vpop.f32.mrf.mxu0
    %v492 = vadd.f32 0.0, %v491
    %493 = vmatmul.f32.gmra.mxu0 %v165
    %v494 = vpop.f32.mrf.mxu0
    %v495 = vadd.f32 0.0, %v494
    %496 = vmatmul.f32.gmra.mxu0 %v213
    %v497 = vpop.f32.mrf.mxu0
    %v498 = vadd.f32 0.0, %v497
    %499 = vmatmul.f32.gmra.mxu0 %v192
    %v500 = vpop.f32.mrf.mxu0
    %v501 = vadd.f32 0.0, %v500
    %502 = vmatmul.f32.gmra.mxu0 %v196
    %v503 = vpop.f32.mrf.mxu0
    %v504 = vadd.f32 0.0, %v503
    %505 = vmatmul.f32.gmra.mxu0 %v200
    %v506 = vpop.f32.mrf.mxu0
    %v507 = vadd.f32 0.0, %v506
    %508 = vmatmul.f32.gmra.mxu0 %v199
    %v509 = vpop.f32.mrf.mxu0
    %v510 = vadd.f32 0.0, %v509
    %511 = vdwg.mxu0
    %512 = vmatpush.msra.mxu0 %v463
    %513 = vmatpush.msra.mxu0 %v455
    %514 = vmatpush.msra.mxu0 %v447
    %515 = vmatpush.msra.mxu0 %v439
    %516 = vmatpush.msra.mxu0 %v431
    %517 = vmatpush.msra.mxu0 %v423
    %518 = vmatpush.msra.mxu0 %v415
    %519 = vmatpush.msra.mxu0 %v407
    %520 = vmatpush.msra.mxu0 %v399
    %521 = vmatpush.msra.mxu0 %v391
    %522 = vmatpush.msra.mxu0 %v383
    %523 = vmatpush.msra.mxu0 %v375
    %524 = vmatpush.msra.mxu0 %v367
    %525 = vmatpush.msra.mxu0 %v359
    %526 = vmatpush.msra.mxu0 %v351
    %527 = vmatpush.msra.mxu0 %v343
    %528 = vmatmul.f32.gmra.mxu0 %v167
    %v529 = vpop.f32.mrf.mxu0
    %v530 = vadd.f32 %v489, %v529
    %531 = vmatmul.f32.gmra.mxu0 %v168
    %v532 = vpop.f32.mrf.mxu0
    %v533 = vadd.f32 %v492, %v532
    %534 = vmatmul.f32.gmra.mxu0 %v169
    %v535 = vpop.f32.mrf.mxu0
    %v536 = vadd.f32 %v495, %v535
    %537 = vmatmul.f32.gmra.mxu0 %v214
    %v538 = vpop.f32.mrf.mxu0
    %v539 = vadd.f32 %v498, %v538
    %540 = vmatmul.f32.gmra.mxu0 %v194
    %v541 = vpop.f32.mrf.mxu0
    %v542 = vadd.f32 %v501, %v541
    %543 = vmatmul.f32.gmra.mxu0 %v198
    %v544 = vpop.f32.mrf.mxu0
    %v545 = vadd.f32 %v504, %v544
    %546 = vmatmul.f32.gmra.mxu0 %v202
    %v547 = vpop.f32.mrf.mxu0
    %v548 = vadd.f32 %v507, %v547
    %549 = vmatmul.f32.gmra.mxu0 %v201
    %v550 = vpop.f32.mrf.mxu0
    %v551 = vadd.f32 %v510, %v550
    %552 = vdwg.mxu0
    %553 = vmatpush.msra.mxu0 %v336
    %554 = vmatpush.msra.mxu0 %v328
    %555 = vmatpush.msra.mxu0 %v320
    %556 = vmatpush.msra.mxu0 %v312
    %557 = vmatpush.msra.mxu0 %v304
    %558 = vmatpush.msra.mxu0 %v296
    %559 = vmatpush.msra.mxu0 %v288
    %560 = vmatpush.msra.mxu0 %v280
    %561 = vmatpush.msra.mxu0 %v272
    %562 = vmatpush.msra.mxu0 %v264
    %563 = vmatpush.msra.mxu0 %v256
    %564 = vmatpush.msra.mxu0 %v248
    %565 = vmatpush.msra.mxu0 %v240
    %566 = vmatpush.msra.mxu0 %v232
    %567 = vmatpush.msra.mxu0 %v224
    %568 = vmatpush.msra.mxu0 %v216
    %569 = vmatmul.f32.gmra.mxu0 %v163
    %v570 = vpop.f32.mrf.mxu0
    %v571 = vadd.f32 0.0, %v570
    %572 = vmatmul.f32.gmra.mxu0 %v164
    %v573 = vpop.f32.mrf.mxu0
    %v574 = vadd.f32 0.0, %v573
    %575 = vmatmul.f32.gmra.mxu0 %v165
    %v576 = vpop.f32.mrf.mxu0
    %v577 = vadd.f32 0.0, %v576
    %578 = vmatmul.f32.gmra.mxu0 %v213
    %v579 = vpop.f32.mrf.mxu0
    %v580 = vadd.f32 0.0, %v579
    %581 = vmatmul.f32.gmra.mxu0 %v192
    %v582 = vpop.f32.mrf.mxu0
    %v583 = vadd.f32 0.0, %v582
    %584 = vmatmul.f32.gmra.mxu0 %v196
    %v585 = vpop.f32.mrf.mxu0
    %v586 = vadd.f32 0.0, %v585
    %587 = vmatmul.f32.gmra.mxu0 %v200
    %v588 = vpop.f32.mrf.mxu0
    %v589 = vadd.f32 0.0, %v588
    %590 = vmatmul.f32.gmra.mxu0 %v199
    %v591 = vpop.f32.mrf.mxu0
    %v592 = vadd.f32 0.0, %v591
    %593 = vdwg.mxu0
    %594 = vmatpush.msra.mxu0 %v464
    %595 = vmatpush.msra.mxu0 %v456
    %596 = vmatpush.msra.mxu0 %v448
    %597 = vmatpush.msra.mxu0 %v440
    %598 = vmatpush.msra.mxu0 %v432
    %599 = vmatpush.msra.mxu0 %v424
    %600 = vmatpush.msra.mxu0 %v416
    %601 = vmatpush.msra.mxu0 %v408
    %602 = vmatpush.msra.mxu0 %v400
    %603 = vmatpush.msra.mxu0 %v392
    %604 = vmatpush.msra.mxu0 %v384
    %605 = vmatpush.msra.mxu0 %v376
    %606 = vmatpush.msra.mxu0 %v368
    %607 = vmatpush.msra.mxu0 %v360
    %608 = vmatpush.msra.mxu0 %v352
    %609 = vmatpush.msra.mxu0 %v344
    %610 = vmatmul.f32.gmra.mxu0 %v167
    %v611 = vpop.f32.mrf.mxu0
    %v612 = vadd.f32 %v571, %v611
    %613 = vmatmul.f32.gmra.mxu0 %v168
    %v614 = vpop.f32.mrf.mxu0
    %v615 = vadd.f32 %v574, %v614
    %616 = vmatmul.f32.gmra.mxu0 %v169
    %v617 = vpop.f32.mrf.mxu0
    %v618 = vadd.f32 %v577, %v617
    %619 = vmatmul.f32.gmra.mxu0 %v214
    %v620 = vpop.f32.mrf.mxu0
    %v621 = vadd.f32 %v580, %v620
    %622 = vmatmul.f32.gmra.mxu0 %v194
    %v623 = vpop.f32.mrf.mxu0
    %v624 = vadd.f32 %v583, %v623
    %625 = vmatmul.f32.gmra.mxu0 %v198
    %v626 = vpop.f32.mrf.mxu0
    %v627 = vadd.f32 %v586, %v626
    %628 = vmatmul.f32.gmra.mxu0 %v202
    %v629 = vpop.f32.mrf.mxu0
    %v630 = vadd.f32 %v589, %v629
    %631 = vmatmul.f32.gmra.mxu0 %v201
    %v632 = vpop.f32.mrf.mxu0
    %v633 = vadd.f32 %v592, %v632
    %634 = vdwg.mxu0
    %635 = vmatpush.msra.mxu0 %v337
    %636 = vmatpush.msra.mxu0 %v329
    %637 = vmatpush.msra.mxu0 %v321
    %638 = vmatpush.msra.mxu0 %v313
    %639 = vmatpush.msra.mxu0 %v305
    %640 = vmatpush.msra.mxu0 %v297
    %641 = vmatpush.msra.mxu0 %v289
    %642 = vmatpush.msra.mxu0 %v281
    %643 = vmatpush.msra.mxu0 %v273
    %644 = vmatpush.msra.mxu0 %v265
    %645 = vmatpush.msra.mxu0 %v257
    %646 = vmatpush.msra.mxu0 %v249
    %647 = vmatpush.msra.mxu0 %v241
    %648 = vmatpush.msra.mxu0 %v233
    %649 = vmatpush.msra.mxu0 %v225
    %650 = vmatpush.msra.mxu0 %v217
    %651 = vmatmul.f32.gmra.mxu0 %v163
    %v652 = vpop.f32.mrf.mxu0
    %v653 = vadd.f32 0.0, %v652
    %654 = vmatmul.f32.gmra.mxu0 %v164
    %v655 = vpop.f32.mrf.mxu0
    %v656 = vadd.f32 0.0, %v655
    %657 = vmatmul.f32.gmra.mxu0 %v165
    %v658 = vpop.f32.mrf.mxu0
    %v659 = vadd.f32 0.0, %v658
    %660 = vmatmul.f32.gmra.mxu0 %v213
    %v661 = vpop.f32.mrf.mxu0
    %v662 = vadd.f32 0.0, %v661
    %663 = vmatmul.f32.gmra.mxu0 %v192
    %v664 = vpop.f32.mrf.mxu0
    %v665 = vadd.f32 0.0, %v664
    %666 = vmatmul.f32.gmra.mxu0 %v196
    %v667 = vpop.f32.mrf.mxu0
    %v668 = vadd.f32 0.0, %v667
    %669 = vmatmul.f32.gmra.mxu0 %v200
    %v670 = vpop.f32.mrf.mxu0
    %v671 = vadd.f32 0.0, %v670
    %672 = vmatmul.f32.gmra.mxu0 %v199
    %v673 = vpop.f32.mrf.mxu0
    %v674 = vadd.f32 0.0, %v673
    %675 = vdwg.mxu0
    %676 = vmatpush.msra.mxu0 %v465
    %677 = vmatpush.msra.mxu0 %v457
    %678 = vmatpush.msra.mxu0 %v449
    %679 = vmatpush.msra.mxu0 %v441
    %680 = vmatpush.msra.mxu0 %v433
    %681 = vmatpush.msra.mxu0 %v425
    %682 = vmatpush.msra.mxu0 %v417
    %683 = vmatpush.msra.mxu0 %v409
    %684 = vmatpush.msra.mxu0 %v401
    %685 = vmatpush.msra.mxu0 %v393
    %686 = vmatpush.msra.mxu0 %v385
    %687 = vmatpush.msra.mxu0 %v377
    %688 = vmatpush.msra.mxu0 %v369
    %689 = vmatpush.msra.mxu0 %v361
    %690 = vmatpush.msra.mxu0 %v353
    %691 = vmatpush.msra.mxu0 %v345
    %692 = vmatmul.f32.gmra.mxu0 %v167
    %v693 = vpop.f32.mrf.mxu0
    %v694 = vadd.f32 %v653, %v693
    %695 = vmatmul.f32.gmra.mxu0 %v168
    %v696 = vpop.f32.mrf.mxu0
    %v697 = vadd.f32 %v656, %v696
    %698 = vmatmul.f32.gmra.mxu0 %v169
    %v699 = vpop.f32.mrf.mxu0
    %v700 = vadd.f32 %v659, %v699
    %701 = vmatmul.f32.gmra.mxu0 %v214
    %v702 = vpop.f32.mrf.mxu0
    %v703 = vadd.f32 %v662, %v702
    %704 = vmatmul.f32.gmra.mxu0 %v194
    %v705 = vpop.f32.mrf.mxu0
    %v706 = vadd.f32 %v665, %v705
    %707 = vmatmul.f32.gmra.mxu0 %v198
    %v708 = vpop.f32.mrf.mxu0
    %v709 = vadd.f32 %v668, %v708
    %710 = vmatmul.f32.gmra.mxu0 %v202
    %v711 = vpop.f32.mrf.mxu0
    %v712 = vadd.f32 %v671, %v711
    %713 = vmatmul.f32.gmra.mxu0 %v201
    %v714 = vpop.f32.mrf.mxu0
    %v715 = vadd.f32 %v674, %v714
    %716 = vdwg.mxu0
    %717 = vmatpush.msra.mxu0 %v338
    %718 = vmatpush.msra.mxu0 %v330
    %719 = vmatpush.msra.mxu0 %v322
    %720 = vmatpush.msra.mxu0 %v314
    %721 = vmatpush.msra.mxu0 %v306
    %722 = vmatpush.msra.mxu0 %v298
    %723 = vmatpush.msra.mxu0 %v290
    %724 = vmatpush.msra.mxu0 %v282
    %725 = vmatpush.msra.mxu0 %v274
    %726 = vmatpush.msra.mxu0 %v266
    %727 = vmatpush.msra.mxu0 %v258
    %728 = vmatpush.msra.mxu0 %v250
    %729 = vmatpush.msra.mxu0 %v242
    %730 = vmatpush.msra.mxu0 %v234
    %731 = vmatpush.msra.mxu0 %v226
    %732 = vmatpush.msra.mxu0 %v218
    %733 = vmatmul.f32.gmra.mxu0 %v163
    %v734 = vpop.f32.mrf.mxu0
    %v735 = vadd.f32 0.0, %v734
    %736 = vmatmul.f32.gmra.mxu0 %v164
    %v737 = vpop.f32.mrf.mxu0
    %v738 = vadd.f32 0.0, %v737
    %739 = vmatmul.f32.gmra.mxu0 %v165
    %v740 = vpop.f32.mrf.mxu0
    %v741 = vadd.f32 0.0, %v740
    %742 = vmatmul.f32.gmra.mxu0 %v213
    %v743 = vpop.f32.mrf.mxu0
    %v744 = vadd.f32 0.0, %v743
    %745 = vmatmul.f32.gmra.mxu0 %v192
    %v746 = vpop.f32.mrf.mxu0
    %v747 = vadd.f32 0.0, %v746
    %748 = vmatmul.f32.gmra.mxu0 %v196
    %v749 = vpop.f32.mrf.mxu0
    %v750 = vadd.f32 0.0, %v749
    %751 = vmatmul.f32.gmra.mxu0 %v200
    %v752 = vpop.f32.mrf.mxu0
    %v753 = vadd.f32 0.0, %v752
    %754 = vmatmul.f32.gmra.mxu0 %v199
    %v755 = vpop.f32.mrf.mxu0
    %v756 = vadd.f32 0.0, %v755
    %757 = vdwg.mxu0
    %758 = vmatpush.msra.mxu0 %v466
    %759 = vmatpush.msra.mxu0 %v458
    %760 = vmatpush.msra.mxu0 %v450
    %761 = vmatpush.msra.mxu0 %v442
    %762 = vmatpush.msra.mxu0 %v434
    %763 = vmatpush.msra.mxu0 %v426
    %764 = vmatpush.msra.mxu0 %v418
    %765 = vmatpush.msra.mxu0 %v410
    %766 = vmatpush.msra.mxu0 %v402
    %767 = vmatpush.msra.mxu0 %v394
    %768 = vmatpush.msra.mxu0 %v386
    %769 = vmatpush.msra.mxu0 %v378
    %770 = vmatpush.msra.mxu0 %v370
    %771 = vmatpush.msra.mxu0 %v362
    %772 = vmatpush.msra.mxu0 %v354
    %773 = vmatpush.msra.mxu0 %v346
    %774 = vmatmul.f32.gmra.mxu0 %v167
    %v775 = vpop.f32.mrf.mxu0
    %v776 = vadd.f32 %v735, %v775
    %777 = vmatmul.f32.gmra.mxu0 %v168
    %v778 = vpop.f32.mrf.mxu0
    %v779 = vadd.f32 %v738, %v778
    %780 = vmatmul.f32.gmra.mxu0 %v169
    %v781 = vpop.f32.mrf.mxu0
    %v782 = vadd.f32 %v741, %v781
    %783 = vmatmul.f32.gmra.mxu0 %v214
    %v784 = vpop.f32.mrf.mxu0
    %v785 = vadd.f32 %v744, %v784
    %786 = vmatmul.f32.gmra.mxu0 %v194
    %v787 = vpop.f32.mrf.mxu0
    %v788 = vadd.f32 %v747, %v787
    %789 = vmatmul.f32.gmra.mxu0 %v198
    %v790 = vpop.f32.mrf.mxu0
    %v791 = vadd.f32 %v750, %v790
    %792 = vmatmul.f32.gmra.mxu0 %v202
    %v793 = vpop.f32.mrf.mxu0
    %v794 = vadd.f32 %v753, %v793
    %795 = vmatmul.f32.gmra.mxu0 %v201
    %v796 = vpop.f32.mrf.mxu0
    %v797 = vadd.f32 %v756, %v796
    %798 = vdwg.mxu0
    %799 = vmatpush.msra.mxu0 %v339
    %800 = vmatpush.msra.mxu0 %v331
    %801 = vmatpush.msra.mxu0 %v323
    %802 = vmatpush.msra.mxu0 %v315
    %803 = vmatpush.msra.mxu0 %v307
    %804 = vmatpush.msra.mxu0 %v299
    %805 = vmatpush.msra.mxu0 %v291
    %806 = vmatpush.msra.mxu0 %v283
    %807 = vmatpush.msra.mxu0 %v275
    %808 = vmatpush.msra.mxu0 %v267
    %809 = vmatpush.msra.mxu0 %v259
    %810 = vmatpush.msra.mxu0 %v251
    %811 = vmatpush.msra.mxu0 %v243
    %812 = vmatpush.msra.mxu0 %v235
    %813 = vmatpush.msra.mxu0 %v227
    %814 = vmatpush.msra.mxu0 %v219
    %815 = vmatmul.f32.gmra.mxu0 %v163
    %v816 = vpop.f32.mrf.mxu0
    %v817 = vadd.f32 0.0, %v816
    %818 = vmatmul.f32.gmra.mxu0 %v164
    %v819 = vpop.f32.mrf.mxu0
    %v820 = vadd.f32 0.0, %v819
    %821 = vmatmul.f32.gmra.mxu0 %v165
    %v822 = vpop.f32.mrf.mxu0
    %v823 = vadd.f32 0.0, %v822
    %824 = vmatmul.f32.gmra.mxu0 %v213
    %v825 = vpop.f32.mrf.mxu0
    %v826 = vadd.f32 0.0, %v825
    %827 = vmatmul.f32.gmra.mxu0 %v192
    %v828 = vpop.f32.mrf.mxu0
    %v829 = vadd.f32 0.0, %v828
    %830 = vmatmul.f32.gmra.mxu0 %v196
    %v831 = vpop.f32.mrf.mxu0
    %v832 = vadd.f32 0.0, %v831
    %833 = vmatmul.f32.gmra.mxu0 %v200
    %v834 = vpop.f32.mrf.mxu0
    %v835 = vadd.f32 0.0, %v834
    %836 = vmatmul.f32.gmra.mxu0 %v199
    %v837 = vpop.f32.mrf.mxu0
    %v838 = vadd.f32 0.0, %v837
    %839 = vdwg.mxu0
    %840 = vmatpush.msra.mxu0 %v467
    %841 = vmatpush.msra.mxu0 %v459
    %842 = vmatpush.msra.mxu0 %v451
    %843 = vmatpush.msra.mxu0 %v443
    %844 = vmatpush.msra.mxu0 %v435
    %845 = vmatpush.msra.mxu0 %v427
    %846 = vmatpush.msra.mxu0 %v419
    %847 = vmatpush.msra.mxu0 %v411
    %848 = vmatpush.msra.mxu0 %v403
    %849 = vmatpush.msra.mxu0 %v395
    %850 = vmatpush.msra.mxu0 %v387
    %851 = vmatpush.msra.mxu0 %v379
    %852 = vmatpush.msra.mxu0 %v371
    %853 = vmatpush.msra.mxu0 %v363
    %854 = vmatpush.msra.mxu0 %v355
    %855 = vmatpush.msra.mxu0 %v347
    %856 = vmatmul.f32.gmra.mxu0 %v167
    %v857 = vpop.f32.mrf.mxu0
    %v858 = vadd.f32 %v817, %v857
    %859 = vmatmul.f32.gmra.mxu0 %v168
    %v860 = vpop.f32.mrf.mxu0
    %v861 = vadd.f32 %v820, %v860
    %862 = vmatmul.f32.gmra.mxu0 %v169
    %v863 = vpop.f32.mrf.mxu0
    %v864 = vadd.f32 %v823, %v863
    %865 = vmatmul.f32.gmra.mxu0 %v214
    %v866 = vpop.f32.mrf.mxu0
    %v867 = vadd.f32 %v826, %v866
    %868 = vmatmul.f32.gmra.mxu0 %v194
    %v869 = vpop.f32.mrf.mxu0
    %v870 = vadd.f32 %v829, %v869
    %871 = vmatmul.f32.gmra.mxu0 %v198
    %v872 = vpop.f32.mrf.mxu0
    %v873 = vadd.f32 %v832, %v872
    %874 = vmatmul.f32.gmra.mxu0 %v202
    %v875 = vpop.f32.mrf.mxu0
    %v876 = vadd.f32 %v835, %v875
    %877 = vmatmul.f32.gmra.mxu0 %v201
    %v878 = vpop.f32.mrf.mxu0
    %v879 = vadd.f32 %v838, %v878
    %880 = vdwg.mxu0
    %881 = vmatpush.msra.mxu0 %v340
    %882 = vmatpush.msra.mxu0 %v332
    %883 = vmatpush.msra.mxu0 %v324
    %884 = vmatpush.msra.mxu0 %v316
    %885 = vmatpush.msra.mxu0 %v308
    %886 = vmatpush.msra.mxu0 %v300
    %887 = vmatpush.msra.mxu0 %v292
    %888 = vmatpush.msra.mxu0 %v284
    %889 = vmatpush.msra.mxu0 %v276
    %890 = vmatpush.msra.mxu0 %v268
    %891 = vmatpush.msra.mxu0 %v260
    %892 = vmatpush.msra.mxu0 %v252
    %893 = vmatpush.msra.mxu0 %v244
    %894 = vmatpush.msra.mxu0 %v236
    %895 = vmatpush.msra.mxu0 %v228
    %896 = vmatpush.msra.mxu0 %v220
    %897 = vmatmul.f32.gmra.mxu0 %v163
    %v898 = vpop.f32.mrf.mxu0
    %v899 = vadd.f32 0.0, %v898
    %900 = vmatmul.f32.gmra.mxu0 %v164
    %v901 = vpop.f32.mrf.mxu0
    %v902 = vadd.f32 0.0, %v901
    %903 = vmatmul.f32.gmra.mxu0 %v165
    %v904 = vpop.f32.mrf.mxu0
    %v905 = vadd.f32 0.0, %v904
    %906 = vmatmul.f32.gmra.mxu0 %v213
    %v907 = vpop.f32.mrf.mxu0
    %v908 = vadd.f32 0.0, %v907
    %909 = vmatmul.f32.gmra.mxu0 %v192
    %v910 = vpop.f32.mrf.mxu0
    %v911 = vadd.f32 0.0, %v910
    %912 = vmatmul.f32.gmra.mxu0 %v196
    %v913 = vpop.f32.mrf.mxu0
    %v914 = vadd.f32 0.0, %v913
    %915 = vmatmul.f32.gmra.mxu0 %v200
    %v916 = vpop.f32.mrf.mxu0
    %v917 = vadd.f32 0.0, %v916
    %918 = vmatmul.f32.gmra.mxu0 %v199
    %v919 = vpop.f32.mrf.mxu0
    %v920 = vadd.f32 0.0, %v919
    %921 = vdwg.mxu0
    %922 = vmatpush.msra.mxu0 %v468
    %923 = vmatpush.msra.mxu0 %v460
    %924 = vmatpush.msra.mxu0 %v452
    %925 = vmatpush.msra.mxu0 %v444
    %926 = vmatpush.msra.mxu0 %v436
    %927 = vmatpush.msra.mxu0 %v428
    %928 = vmatpush.msra.mxu0 %v420
    %929 = vmatpush.msra.mxu0 %v412
    %930 = vmatpush.msra.mxu0 %v404
    %931 = vmatpush.msra.mxu0 %v396
    %932 = vmatpush.msra.mxu0 %v388
    %933 = vmatpush.msra.mxu0 %v380
    %934 = vmatpush.msra.mxu0 %v372
    %935 = vmatpush.msra.mxu0 %v364
    %936 = vmatpush.msra.mxu0 %v356
    %937 = vmatpush.msra.mxu0 %v348
    %938 = vmatmul.f32.gmra.mxu0 %v167
    %v939 = vpop.f32.mrf.mxu0
    %v940 = vadd.f32 %v899, %v939
    %941 = vmatmul.f32.gmra.mxu0 %v168
    %v942 = vpop.f32.mrf.mxu0
    %v943 = vadd.f32 %v902, %v942
    %944 = vmatmul.f32.gmra.mxu0 %v169
    %v945 = vpop.f32.mrf.mxu0
    %v946 = vadd.f32 %v905, %v945
    %947 = vmatmul.f32.gmra.mxu0 %v214
    %v948 = vpop.f32.mrf.mxu0
    %v949 = vadd.f32 %v908, %v948
    %950 = vmatmul.f32.gmra.mxu0 %v194
    %v951 = vpop.f32.mrf.mxu0
    %v952 = vadd.f32 %v911, %v951
    %953 = vmatmul.f32.gmra.mxu0 %v198
    %v954 = vpop.f32.mrf.mxu0
    %v955 = vadd.f32 %v914, %v954
    %956 = vmatmul.f32.gmra.mxu0 %v202
    %v957 = vpop.f32.mrf.mxu0
    %v958 = vadd.f32 %v917, %v957
    %959 = vmatmul.f32.gmra.mxu0 %v201
    %v960 = vpop.f32.mrf.mxu0
    %v961 = vadd.f32 %v920, %v960
    %962 = vdwg.mxu0
    %963 = vmatpush.msra.mxu0 %v341
    %964 = vmatpush.msra.mxu0 %v333
    %965 = vmatpush.msra.mxu0 %v325
    %966 = vmatpush.msra.mxu0 %v317
    %967 = vmatpush.msra.mxu0 %v309
    %968 = vmatpush.msra.mxu0 %v301
    %969 = vmatpush.msra.mxu0 %v293
    %970 = vmatpush.msra.mxu0 %v285
    %971 = vmatpush.msra.mxu0 %v277
    %972 = vmatpush.msra.mxu0 %v269
    %973 = vmatpush.msra.mxu0 %v261
    %974 = vmatpush.msra.mxu0 %v253
    %975 = vmatpush.msra.mxu0 %v245
    %976 = vmatpush.msra.mxu0 %v237
    %977 = vmatpush.msra.mxu0 %v229
    %978 = vmatpush.msra.mxu0 %v221
    %979 = vmatmul.f32.gmra.mxu0 %v163
    %v980 = vpop.f32.mrf.mxu0
    %v981 = vadd.f32 0.0, %v980
    %982 = vmatmul.f32.gmra.mxu0 %v164
    %v983 = vpop.f32.mrf.mxu0
    %v984 = vadd.f32 0.0, %v983
    %985 = vmatmul.f32.gmra.mxu0 %v165
    %v986 = vpop.f32.mrf.mxu0
    %v987 = vadd.f32 0.0, %v986
    %988 = vmatmul.f32.gmra.mxu0 %v213
    %v989 = vpop.f32.mrf.mxu0
    %v990 = vadd.f32 0.0, %v989
    %991 = vmatmul.f32.gmra.mxu0 %v192
    %v992 = vpop.f32.mrf.mxu0
    %v993 = vadd.f32 0.0, %v992
    %994 = vmatmul.f32.gmra.mxu0 %v196
    %v995 = vpop.f32.mrf.mxu0
    %v996 = vadd.f32 0.0, %v995
    %997 = vmatmul.f32.gmra.mxu0 %v200
    %v998 = vpop.f32.mrf.mxu0
    %v999 = vadd.f32 0.0, %v998
    %1000 = vmatmul.f32.gmra.mxu0 %v199
    %v1001 = vpop.f32.mrf.mxu0
    %v1002 = vadd.f32 0.0, %v1001
    %1003 = vdwg.mxu0
    %1004 = vmatpush.msra.mxu0 %v469
    %1005 = vmatpush.msra.mxu0 %v461
    %1006 = vmatpush.msra.mxu0 %v453
    %1007 = vmatpush.msra.mxu0 %v445
    %1008 = vmatpush.msra.mxu0 %v437
    %1009 = vmatpush.msra.mxu0 %v429
    %1010 = vmatpush.msra.mxu0 %v421
    %1011 = vmatpush.msra.mxu0 %v413
    %1012 = vmatpush.msra.mxu0 %v405
    %1013 = vmatpush.msra.mxu0 %v397
    %1014 = vmatpush.msra.mxu0 %v389
    %1015 = vmatpush.msra.mxu0 %v381
    %1016 = vmatpush.msra.mxu0 %v373
    %1017 = vmatpush.msra.mxu0 %v365
    %1018 = vmatpush.msra.mxu0 %v357
    %1019 = vmatpush.msra.mxu0 %v349
    %1020 = vmatmul.f32.gmra.mxu0 %v167
    %v1021 = vpop.f32.mrf.mxu0
    %v1022 = vadd.f32 %v981, %v1021
    %1023 = vmatmul.f32.gmra.mxu0 %v168
    %v1024 = vpop.f32.mrf.mxu0
    %v1025 = vadd.f32 %v984, %v1024
    %1026 = vmatmul.f32.gmra.mxu0 %v169
    %v1027 = vpop.f32.mrf.mxu0
    %v1028 = vadd.f32 %v987, %v1027
    %1029 = vmatmul.f32.gmra.mxu0 %v214
    %v1030 = vpop.f32.mrf.mxu0
    %v1031 = vadd.f32 %v990, %v1030
    %1032 = vmatmul.f32.gmra.mxu0 %v194
    %v1033 = vpop.f32.mrf.mxu0
    %v1034 = vadd.f32 %v993, %v1033
    %1035 = vmatmul.f32.gmra.mxu0 %v198
    %v1036 = vpop.f32.mrf.mxu0
    %v1037 = vadd.f32 %v996, %v1036
    %1038 = vmatmul.f32.gmra.mxu0 %v202
    %v1039 = vpop.f32.mrf.mxu0
    %v1040 = vadd.f32 %v999, %v1039
    %1041 = vmatmul.f32.gmra.mxu0 %v201
    %v1042 = vpop.f32.mrf.mxu0
    %v1043 = vadd.f32 %v1002, %v1042
    %1044 = vdwg.mxu0
    %1045 = vmatpush.msra.mxu0 %v342
    %1046 = vmatpush.msra.mxu0 %v334
    %1047 = vmatpush.msra.mxu0 %v326
    %1048 = vmatpush.msra.mxu0 %v318
    %1049 = vmatpush.msra.mxu0 %v310
    %1050 = vmatpush.msra.mxu0 %v302
    %1051 = vmatpush.msra.mxu0 %v294
    %1052 = vmatpush.msra.mxu0 %v286
    %1053 = vmatpush.msra.mxu0 %v278
    %1054 = vmatpush.msra.mxu0 %v270
    %1055 = vmatpush.msra.mxu0 %v262
    %1056 = vmatpush.msra.mxu0 %v254
    %1057 = vmatpush.msra.mxu0 %v246
    %1058 = vmatpush.msra.mxu0 %v238
    %1059 = vmatpush.msra.mxu0 %v230
    %1060 = vmatpush.msra.mxu0 %v222
    %1061 = vmatmul.f32.gmra.mxu0 %v163
    %v1062 = vpop.f32.mrf.mxu0
    %v1063 = vadd.f32 0.0, %v1062
    %1064 = vmatmul.f32.gmra.mxu0 %v164
    %v1065 = vpop.f32.mrf.mxu0
    %v1066 = vadd.f32 0.0, %v1065
    %1067 = vmatmul.f32.gmra.mxu0 %v165
    %v1068 = vpop.f32.mrf.mxu0
    %v1069 = vadd.f32 0.0, %v1068
    %1070 = vmatmul.f32.gmra.mxu0 %v213
    %v1071 = vpop.f32.mrf.mxu0
    %v1072 = vadd.f32 0.0, %v1071
    %1073 = vmatmul.f32.gmra.mxu0 %v192
    %v1074 = vpop.f32.mrf.mxu0
    %v1075 = vadd.f32 0.0, %v1074
    %1076 = vmatmul.f32.gmra.mxu0 %v196
    %v1077 = vpop.f32.mrf.mxu0
    %v1078 = vadd.f32 0.0, %v1077
    %1079 = vmatmul.f32.gmra.mxu0 %v200
    %v1080 = vpop.f32.mrf.mxu0
    %v1081 = vadd.f32 0.0, %v1080
    %1082 = vmatmul.f32.gmra.mxu0 %v199
    %v1083 = vpop.f32.mrf.mxu0
    %v1084 = vadd.f32 0.0, %v1083
    %1085 = vdwg.mxu0
    %1086 = vmatpush.msra.mxu0 %v470
    %1087 = vmatpush.msra.mxu0 %v462
    %1088 = vmatpush.msra.mxu0 %v454
    %1089 = vmatpush.msra.mxu0 %v446
    %1090 = vmatpush.msra.mxu0 %v438
    %1091 = vmatpush.msra.mxu0 %v430
    %1092 = vmatpush.msra.mxu0 %v422
    %1093 = vmatpush.msra.mxu0 %v414
    %1094 = vmatpush.msra.mxu0 %v406
    %1095 = vmatpush.msra.mxu0 %v398
    %1096 = vmatpush.msra.mxu0 %v390
    %1097 = vmatpush.msra.mxu0 %v382
    %1098 = vmatpush.msra.mxu0 %v374
    %1099 = vmatpush.msra.mxu0 %v366
    %1100 = vmatpush.msra.mxu0 %v358
    %1101 = vmatpush.msra.mxu0 %v350
    %1102 = vmatmul.f32.gmra.mxu0 %v167
    %v1103 = vpop.f32.mrf.mxu0
    %v1104 = vadd.f32 %v1063, %v1103
    %1105 = vmatmul.f32.gmra.mxu0 %v168
    %v1106 = vpop.f32.mrf.mxu0
    %v1107 = vadd.f32 %v1066, %v1106
    %1108 = vmatmul.f32.gmra.mxu0 %v169
    %v1109 = vpop.f32.mrf.mxu0
    %v1110 = vadd.f32 %v1069, %v1109
    %1111 = vmatmul.f32.gmra.mxu0 %v214
    %v1112 = vpop.f32.mrf.mxu0
    %v1113 = vadd.f32 %v1072, %v1112
    %1114 = vmatmul.f32.gmra.mxu0 %v194
    %v1115 = vpop.f32.mrf.mxu0
    %v1116 = vadd.f32 %v1075, %v1115
    %1117 = vmatmul.f32.gmra.mxu0 %v198
    %v1118 = vpop.f32.mrf.mxu0
    %v1119 = vadd.f32 %v1078, %v1118
    %1120 = vmatmul.f32.gmra.mxu0 %v202
    %v1121 = vpop.f32.mrf.mxu0
    %v1122 = vadd.f32 %v1081, %v1121
    %1123 = vmatmul.f32.gmra.mxu0 %v201
    %v1124 = vpop.f32.mrf.mxu0
    %v1125 = vadd.f32 %v1084, %v1124
    %1126 = vdwg.mxu0
    %v1127 = vmax.f32 %v530, %v612
    %v1128 = vmax.f32 %v533, %v615
    %v1129 = vmax.f32 %v536, %v618
    %v1130 = vmax.f32 %v539, %v621
    %v1131 = vmax.f32 %v542, %v624
    %v1132 = vmax.f32 %v545, %v627
    %v1133 = vmax.f32 %v548, %v630
    %v1134 = vmax.f32 %v551, %v633
    %v1135 = vmax.f32 %v1127, %v694
    %v1136 = vmax.f32 %v1128, %v697
    %v1137 = vmax.f32 %v1129, %v700
    %v1138 = vmax.f32 %v1130, %v703
    %v1139 = vmax.f32 %v1131, %v706
    %v1140 = vmax.f32 %v1132, %v709
    %v1141 = vmax.f32 %v1133, %v712
    %v1142 = vmax.f32 %v1134, %v715
    %v1143 = vmax.f32 %v1135, %v776
    %v1144 = vmax.f32 %v1136, %v779
    %v1145 = vmax.f32 %v1137, %v782
    %v1146 = vmax.f32 %v1138, %v785
    %v1147 = vmax.f32 %v1139, %v788
    %v1148 = vmax.f32 %v1140, %v791
    %v1149 = vmax.f32 %v1141, %v794
    %v1150 = vmax.f32 %v1142, %v797
    %v1151 = vmax.f32 %v1143, %v858
    %v1152 = vmax.f32 %v1144, %v861
    %v1153 = vmax.f32 %v1145, %v864
    %v1154 = vmax.f32 %v1146, %v867
    %v1155 = vmax.f32 %v1147, %v870
    %v1156 = vmax.f32 %v1148, %v873
    %v1157 = vmax.f32 %v1149, %v876
    %v1158 = vmax.f32 %v1150, %v879
    %v1159 = vmax.f32 %v1151, %v940
    %v1160 = vmax.f32 %v1152, %v943
    %v1161 = vmax.f32 %v1153, %v946
    %v1162 = vmax.f32 %v1154, %v949
    %v1163 = vmax.f32 %v1155, %v952
    %v1164 = vmax.f32 %v1156, %v955
    %v1165 = vmax.f32 %v1157, %v958
    %v1166 = vmax.f32 %v1158, %v961
    %v1167 = vmax.f32 %v1159, %v1022
    %v1168 = vmax.f32 %v1160, %v1025
    %v1169 = vmax.f32 %v1161, %v1028
    %v1170 = vmax.f32 %v1162, %v1031
    %v1171 = vmax.f32 %v1163, %v1034
    %v1172 = vmax.f32 %v1164, %v1037
    %v1173 = vmax.f32 %v1165, %v1040
    %v1174 = vmax.f32 %v1166, %v1043
    %v1175 = vmax.f32 %v1167, %v1104
    %v1176 = vmax.f32 %v1168, %v1107
    %v1177 = vmax.f32 %v1169, %v1110
    %v1178 = vmax.f32 %v1170, %v1113
    %v1179 = vmax.f32 %v1171, %v1116
    %v1180 = vmax.f32 %v1172, %v1119
    %v1181 = vmax.f32 %v1173, %v1122
    %v1182 = vmax.f32 %v1174, %v1125
    %v1183 = vlaneseq
    %v1184 = vshrl.u32 %v1183, 7
    %v1185 = vadd.s32 %v1184, 8
    %v1186 = vadd.s32 %v1184, 16
    %v1187 = vadd.s32 %v1184, 24
    %v1188 = vadd.s32 %v1184, 32
    %v1189 = vadd.s32 %v1184, 40
    %v1190 = vadd.s32 %v1184, 48
    %v1191 = vadd.s32 %v1184, 56
    %v1192 = vlaneseq
    %v1193 = vand.u32 %v1192, 127
    %vm1194 = vcmp.eq.s32.totalorder %v1184, 28
    %vm1195 = vcmp.eq.s32.totalorder %v1185, 28
    %vm1196 = vcmp.eq.s32.totalorder %v1186, 28
    %vm1197 = vcmp.eq.s32.totalorder %v1187, 28
    %vm1198 = vcmp.eq.s32.totalorder %v1188, 28
    %vm1199 = vcmp.eq.s32.totalorder %v1189, 28
    %vm1200 = vcmp.eq.s32.totalorder %v1190, 28
    %vm1201 = vcmp.eq.s32.totalorder %v1191, 28
    %vm1202 = vcmp.eq.s32.totalorder %v1184, 57
    %vm1203 = vcmp.eq.s32.totalorder %v1185, 57
    %vm1204 = vcmp.eq.s32.totalorder %v1186, 57
    %vm1205 = vcmp.eq.s32.totalorder %v1187, 57
    %vm1206 = vcmp.eq.s32.totalorder %v1188, 57
    %vm1207 = vcmp.eq.s32.totalorder %v1189, 57
    %vm1208 = vcmp.eq.s32.totalorder %v1190, 57
    %vm1209 = vcmp.eq.s32.totalorder %v1191, 57
    %vm1210 = vmor %vm1194, %vm1202
    %vm1211 = vmor %vm1195, %vm1203
    %vm1212 = vmor %vm1196, %vm1204
    %vm1213 = vmor %vm1197, %vm1205
    %vm1214 = vmor %vm1198, %vm1206
    %vm1215 = vmor %vm1199, %vm1207
    %vm1216 = vmor %vm1200, %vm1208
    %vm1217 = vmor %vm1201, %vm1209
    %vm1218 = vcmp.ge.s32.totalorder %v1193, 8
    %vm1219 = vmand %vm1210, %vm1218
    %vm1220 = vmand %vm1211, %vm1218
    %vm1221 = vmand %vm1212, %vm1218
    %vm1222 = vmand %vm1213, %vm1218
    %vm1223 = vmand %vm1214, %vm1218
    %vm1224 = vmand %vm1215, %vm1218
    %vm1225 = vmand %vm1216, %vm1218
    %vm1226 = vmand %vm1217, %vm1218
    %v1227 = vsel %vm1219, 0.0, %v1175
    %v1228 = vsel %vm1220, 0.0, %v1176
    %v1229 = vsel %vm1221, 0.0, %v1177
    %v1230 = vsel %vm1222, 0.0, %v1178
    %v1231 = vsel %vm1223, 0.0, %v1179
    %v1232 = vsel %vm1224, 0.0, %v1180
    %v1233 = vsel %vm1225, 0.0, %v1181
    %v1234 = vsel %vm1226, 0.0, %v1182
    %v1235 = vadd.f32 %v1227, %v1228
    %v1236 = vadd.f32 %v1235, %v1229
    %v1237 = vadd.f32 %v1236, %v1230
    %v1238 = vadd.f32 %v1237, %v1231
    %v1239 = vadd.f32 %v1238, %v1232
    %v1240 = vadd.f32 %v1239, %v1233
    %vm1241 = vcmask 1041408
    %v1242 = vsel %vm1241, %v1234, 0.0
    %v1243 = vadd.f32 %v1240, %v1242
    %v1244 = vrot.slane %v1243, 4
    %v1245 = vadd.f32 %v1243, %v1244
    %v1246 = vrot.slane %v1245, 2
    %v1247 = vadd.f32 %v1245, %v1246
    %v1248 = vrot.slane %v1247, 1
    %v1249 = vadd.f32 %v1247, %v1248
    %1251 = vrot.lane.b32.xlu0 %v1249, 64
    %v1252 = vpop.permute.xlu0 %1251
    %v1254 = vadd.f32 %v1249, %v1252
    %1256 = vrot.lane.b32.xlu0 %v1254, 96
    %v1257 = vpop.permute.xlu0 %1256
    %v1259 = vadd.f32 %v1254, %v1257
    %1261 = vrot.lane.b32.xlu0 %v1259, 112
    %v1262 = vpop.permute.xlu0 %1261
    %v1264 = vadd.f32 %v1259, %v1262
    %1266 = vrot.lane.b32.xlu0 %v1264, 120
    %v1267 = vpop.permute.xlu0 %1266
    %v1269 = vadd.f32 %v1264, %v1267
    %v1270 = vrcp.pop 898.0
    %v1271 = vmul.f32 898.0, %v1270
    %v1272 = vsub.f32 1.0, %v1271
    %v1273 = vmul.f32 %v1270, %v1272
    %v1274 = vadd.f32 %v1270, %v1273
    %vm1275 = vweird.f32 %v1270
    %v1276 = vsel %vm1275, %v1270, %v1274
    %v1277 = vmul.f32 %v1269, %v1276
    %1279 = vrot.lane.b32.xlu0 %v1277, 8
    %v1280 = vpop.permute.xlu0 %1279
    %1282 = vrot.lane.b32.xlu0 %v1277, 16
    %v1283 = vpop.permute.xlu0 %1282
    %1285 = vrot.lane.b32.xlu0 %v1277, 24
    %v1286 = vpop.permute.xlu0 %1285
    %1288 = vrot.lane.b32.xlu0 %v1277, 32
    %v1289 = vpop.permute.xlu0 %1288
    %1291 = vrot.lane.b32.xlu0 %v1277, 40
    %v1292 = vpop.permute.xlu0 %1291
    %1294 = vrot.lane.b32.xlu0 %v1277, 48
    %v1295 = vpop.permute.xlu0 %1294
    %1297 = vrot.lane.b32.xlu0 %v1277, 56
    %v1298 = vpop.permute.xlu0 %1297
    %1300 = vrot.lane.b32.xlu0 %v1277, 64
    %v1301 = vpop.permute.xlu0 %1300
    %1303 = vrot.lane.b32.xlu0 %v1277, 72
    %v1304 = vpop.permute.xlu0 %1303
    %1306 = vrot.lane.b32.xlu0 %v1277, 80
    %v1307 = vpop.permute.xlu0 %1306
    %1309 = vrot.lane.b32.xlu0 %v1277, 88
    %v1310 = vpop.permute.xlu0 %1309
    %1312 = vrot.lane.b32.xlu0 %v1277, 96
    %v1313 = vpop.permute.xlu0 %1312
    %1315 = vrot.lane.b32.xlu0 %v1277, 104
    %v1316 = vpop.permute.xlu0 %1315
    %1318 = vrot.lane.b32.xlu0 %v1277, 112
    %v1319 = vpop.permute.xlu0 %1318
    %1321 = vrot.lane.b32.xlu0 %v1277, 120
    %v1322 = vpop.permute.xlu0 %1321
    %vm1324 = vcmask 64512
    %v1325 = vsel %vm1324, %v1277, %v1280
    %vm1326 = vcmask 130048
    %v1327 = vsel %vm1326, %v1325, %v1283
    %vm1328 = vcmask 195584
    %v1329 = vsel %vm1328, %v1327, %v1286
    %vm1330 = vcmask 261120
    %v1331 = vsel %vm1330, %v1329, %v1289
    %vm1332 = vcmask 326656
    %v1333 = vsel %vm1332, %v1331, %v1292
    %v1334 = vsel %vm131, %v1333, %v1295
    %vm1335 = vcmask 457728
    %v1336 = vsel %vm1335, %v1334, %v1298
    %v1337 = vsel %vm141, %v1336, %v1301
    %vm1338 = vcmask 588800
    %v1339 = vsel %vm1338, %v1337, %v1304
    %vm1340 = vcmask 654336
    %v1341 = vsel %vm1340, %v1339, %v1307
    %vm1342 = vcmask 719872
    %v1343 = vsel %vm1342, %v1341, %v1310
    %vm1344 = vcmask 785408
    %v1345 = vsel %vm1344, %v1343, %v1313
    %vm1346 = vcmask 850944
    %v1347 = vsel %vm1346, %v1345, %v1316
    %vm1348 = vcmask 916480
    %v1349 = vsel %vm1348, %v1347, %v1319
    %vm1350 = vcmask 982016
    %v1351 = vsel %vm1350, %v1349, %v1322
    %v1352 = vperm.slane %v1351, 0
    %v1353 = vsub.f32 %v1227, %v1352
    %v1354 = vsub.f32 %v1228, %v1352
    %v1355 = vsub.f32 %v1229, %v1352
    %v1356 = vsub.f32 %v1230, %v1352
    %v1357 = vsub.f32 %v1231, %v1352
    %v1358 = vsub.f32 %v1232, %v1352
    %v1359 = vsub.f32 %v1233, %v1352
    %v1360 = vsub.f32 %v1234, %v1352
    %v1361 = vmul.f32 %v1353, %v1353
    %v1362 = vmul.f32 %v1354, %v1354
    %v1363 = vmul.f32 %v1355, %v1355
    %v1364 = vmul.f32 %v1356, %v1356
    %v1365 = vmul.f32 %v1357, %v1357
    %v1366 = vmul.f32 %v1358, %v1358
    %v1367 = vmul.f32 %v1359, %v1359
    %v1368 = vmul.f32 %v1360, %v1360
    %v1369 = vadd.f32 %v1361, %v1362
    %v1370 = vadd.f32 %v1369, %v1363
    %v1371 = vadd.f32 %v1370, %v1364
    %v1372 = vadd.f32 %v1371, %v1365
    %v1373 = vadd.f32 %v1372, %v1366
    %v1374 = vadd.f32 %v1373, %v1367
    %v1375 = vsel %vm1241, %v1368, 0.0
    %v1376 = vadd.f32 %v1374, %v1375
    %v1377 = vrot.slane %v1376, 4
    %v1378 = vadd.f32 %v1376, %v1377
    %v1379 = vrot.slane %v1378, 2
    %v1380 = vadd.f32 %v1378, %v1379
    %v1381 = vrot.slane %v1380, 1
    %v1382 = vadd.f32 %v1380, %v1381
    %1384 = vrot.lane.b32.xlu0 %v1382, 64
    %v1385 = vpop.permute.xlu0 %1384
    %v1387 = vadd.f32 %v1382, %v1385
    %1389 = vrot.lane.b32.xlu0 %v1387, 96
    %v1390 = vpop.permute.xlu0 %1389
    %v1392 = vadd.f32 %v1387, %v1390
    %1394 = vrot.lane.b32.xlu0 %v1392, 112
    %v1395 = vpop.permute.xlu0 %1394
    %v1397 = vadd.f32 %v1392, %v1395
    %1399 = vrot.lane.b32.xlu0 %v1397, 120
    %v1400 = vpop.permute.xlu0 %1399
    %v1402 = vadd.f32 %v1397, %v1400
    %v1403 = vmul.f32 %v1277, %v1277
    %v1404 = vmul.f32 %v1403, 30.0
    %v1405 = vsub.f32 %v1402, %v1404
    %v1406 = vmul.f32 %v1405, %v1276
    %v1407 = vld [vmem:[%s2] sm:$0x1]
    %v1408 = vadd.f32 %v1406, 1e-05
    %v1409 = vrsqrt.pop %v1408
    %v1410 = vmul.f32 %v1409, %v1408
    %v1411 = vmul.f32 %v1410, %v1409
    %v1412 = vmul.f32 0.5, %v1411
    %v1413 = vsub.f32 1.5, %v1412
    %v1414 = vmul.f32 %v1409, %v1413
    %vm1415 = vweird.f32 %v1408
    %vm1416 = vweird.f32 %v1409
    %vm1417 = vmor %vm1415, %vm1416
    %v1418 = vsel %vm1417, %v1409, %v1414
    %v1419 = vmul.f32 %v1407, %v1418
    %v1420 = vld [vmem:[%s3] sm:$0x1]
    %v1421 = vmul.f32 %v1277, %v1419
    %v1422 = vsub.f32 %v1420, %v1421
    %v1424 = vperm.slane %v1419, 0
    %1425 = vrot.lane.b32.xlu0 %v1424, 8
    %v1426 = vpop.permute.xlu0 %1425
    %1428 = vrot.lane.b32.xlu0 %v1424, 16
    %v1429 = vpop.permute.xlu0 %1428
    %1431 = vrot.lane.b32.xlu0 %v1424, 24
    %v1432 = vpop.permute.xlu0 %1431
    %1434 = vrot.lane.b32.xlu0 %v1424, 32
    %v1435 = vpop.permute.xlu0 %1434
    %1437 = vrot.lane.b32.xlu0 %v1424, 40
    %v1438 = vpop.permute.xlu0 %1437
    %1440 = vrot.lane.b32.xlu0 %v1424, 48
    %v1441 = vpop.permute.xlu0 %1440
    %1443 = vrot.lane.b32.xlu0 %v1424, 56
    %v1444 = vpop.permute.xlu0 %1443
    %1446 = vrot.lane.b32.xlu0 %v1424, 64
    %v1447 = vpop.permute.xlu0 %1446
    %1449 = vrot.lane.b32.xlu0 %v1424, 72
    %v1450 = vpop.permute.xlu0 %1449
    %1452 = vrot.lane.b32.xlu0 %v1424, 80
    %v1453 = vpop.permute.xlu0 %1452
    %1455 = vrot.lane.b32.xlu0 %v1424, 88
    %v1456 = vpop.permute.xlu0 %1455
    %1458 = vrot.lane.b32.xlu0 %v1424, 96
    %v1459 = vpop.permute.xlu0 %1458
    %1461 = vrot.lane.b32.xlu0 %v1424, 104
    %v1462 = vpop.permute.xlu0 %1461
    %1464 = vrot.lane.b32.xlu0 %v1424, 112
    %v1465 = vpop.permute.xlu0 %1464
    %1467 = vrot.lane.b32.xlu0 %v1424, 120
    %v1468 = vpop.permute.xlu0 %1467
    %v1470 = vsel %vm1324, %v1419, %v1426
    %v1471 = vsel %vm1326, %v1470, %v1429
    %v1472 = vsel %vm1328, %v1471, %v1432
    %v1473 = vsel %vm1330, %v1472, %v1435
    %v1474 = vsel %vm1332, %v1473, %v1438
    %v1475 = vsel %vm131, %v1474, %v1441
    %v1476 = vsel %vm1335, %v1475, %v1444
    %v1477 = vsel %vm141, %v1476, %v1447
    %v1478 = vsel %vm1338, %v1477, %v1450
    %v1479 = vsel %vm1340, %v1478, %v1453
    %v1480 = vsel %vm1342, %v1479, %v1456
    %v1481 = vsel %vm1344, %v1480, %v1459
    %v1482 = vsel %vm1346, %v1481, %v1462
    %v1483 = vsel %vm1348, %v1482, %v1465
    %v1484 = vsel %vm1350, %v1483, %v1468
    %v1486 = vperm.slane %v1422, 0
    %1487 = vrot.lane.b32.xlu0 %v1486, 8
    %v1488 = vpop.permute.xlu0 %1487
    %1490 = vrot.lane.b32.xlu0 %v1486, 16
    %v1491 = vpop.permute.xlu0 %1490
    %1493 = vrot.lane.b32.xlu0 %v1486, 24
    %v1494 = vpop.permute.xlu0 %1493
    %1496 = vrot.lane.b32.xlu0 %v1486, 32
    %v1497 = vpop.permute.xlu0 %1496
    %1499 = vrot.lane.b32.xlu0 %v1486, 40
    %v1500 = vpop.permute.xlu0 %1499
    %1502 = vrot.lane.b32.xlu0 %v1486, 48
    %v1503 = vpop.permute.xlu0 %1502
    %1505 = vrot.lane.b32.xlu0 %v1486, 56
    %v1506 = vpop.permute.xlu0 %1505
    %1508 = vrot.lane.b32.xlu0 %v1486, 64
    %v1509 = vpop.permute.xlu0 %1508
    %1511 = vrot.lane.b32.xlu0 %v1486, 72
    %v1512 = vpop.permute.xlu0 %1511
    %1514 = vrot.lane.b32.xlu0 %v1486, 80
    %v1515 = vpop.permute.xlu0 %1514
    %1517 = vrot.lane.b32.xlu0 %v1486, 88
    %v1518 = vpop.permute.xlu0 %1517
    %1520 = vrot.lane.b32.xlu0 %v1486, 96
    %v1521 = vpop.permute.xlu0 %1520
    %1523 = vrot.lane.b32.xlu0 %v1486, 104
    %v1524 = vpop.permute.xlu0 %1523
    %1526 = vrot.lane.b32.xlu0 %v1486, 112
    %v1527 = vpop.permute.xlu0 %1526
    %1529 = vrot.lane.b32.xlu0 %v1486, 120
    %v1530 = vpop.permute.xlu0 %1529
    %v1532 = vsel %vm1324, %v1422, %v1488
    %v1533 = vsel %vm1326, %v1532, %v1491
    %v1534 = vsel %vm1328, %v1533, %v1494
    %v1535 = vsel %vm1330, %v1534, %v1497
    %v1536 = vsel %vm1332, %v1535, %v1500
    %v1537 = vsel %vm131, %v1536, %v1503
    %v1538 = vsel %vm1335, %v1537, %v1506
    %v1539 = vsel %vm141, %v1538, %v1509
    %v1540 = vsel %vm1338, %v1539, %v1512
    %v1541 = vsel %vm1340, %v1540, %v1515
    %v1542 = vsel %vm1342, %v1541, %v1518
    %v1543 = vsel %vm1344, %v1542, %v1521
    %v1544 = vsel %vm1346, %v1543, %v1524
    %v1545 = vsel %vm1348, %v1544, %v1527
    %v1546 = vsel %vm1350, %v1545, %v1530
    %v1547 = vperm.slane %v1484, 0
    %v1548 = vmul.f32 %v1227, %v1547
    %v1549 = vmul.f32 %v1228, %v1547
    %v1550 = vmul.f32 %v1229, %v1547
    %v1551 = vmul.f32 %v1230, %v1547
    %v1552 = vmul.f32 %v1231, %v1547
    %v1553 = vmul.f32 %v1232, %v1547
    %v1554 = vmul.f32 %v1233, %v1547
    %v1555 = vmul.f32 %v1234, %v1547
    %v1556 = vperm.slane %v1546, 0
    %v1557 = vadd.f32 %v1548, %v1556
    %v1558 = vadd.f32 %v1549, %v1556
    %v1559 = vadd.f32 %v1550, %v1556
    %v1560 = vadd.f32 %v1551, %v1556
    %v1561 = vadd.f32 %v1552, %v1556
    %v1562 = vadd.f32 %v1553, %v1556
    %v1563 = vadd.f32 %v1554, %v1556
    %v1564 = vadd.f32 %v1555, %v1556
    %vm1565 = vcmp.gt.f32.partialorder %v1557, 0.0
    %vm1566 = vcmp.gt.f32.partialorder %v1558, 0.0
    %vm1567 = vcmp.gt.f32.partialorder %v1559, 0.0
    %vm1568 = vcmp.gt.f32.partialorder %v1560, 0.0
    %vm1569 = vcmp.gt.f32.partialorder %v1561, 0.0
    %vm1570 = vcmp.gt.f32.partialorder %v1562, 0.0
    %vm1571 = vcmp.gt.f32.partialorder %v1563, 0.0
    %vm1572 = vcmp.gt.f32.partialorder %v1564, 0.0
    %vm1573 = vcmp.lt.f32.partialorder %v1557, 0.0
    %vm1574 = vcmp.lt.f32.partialorder %v1558, 0.0
    %vm1575 = vcmp.lt.f32.partialorder %v1559, 0.0
    %vm1576 = vcmp.lt.f32.partialorder %v1560, 0.0
    %vm1577 = vcmp.lt.f32.partialorder %v1561, 0.0
    %vm1578 = vcmp.lt.f32.partialorder %v1562, 0.0
    %vm1579 = vcmp.lt.f32.partialorder %v1563, 0.0
    %vm1580 = vcmp.lt.f32.partialorder %v1564, 0.0
    %v1581 = vsel %vm1573, -1.0, 0.0
    %v1582 = vsel %vm1574, -1.0, 0.0
    %v1583 = vsel %vm1575, -1.0, 0.0
    %v1584 = vsel %vm1576, -1.0, 0.0
    %v1585 = vsel %vm1577, -1.0, 0.0
    %v1586 = vsel %vm1578, -1.0, 0.0
    %v1587 = vsel %vm1579, -1.0, 0.0
    %v1588 = vsel %vm1580, -1.0, 0.0
    %v1589 = vsel %vm1565, 1.0, %v1581
    %v1590 = vsel %vm1566, 1.0, %v1582
    %v1591 = vsel %vm1567, 1.0, %v1583
    %v1592 = vsel %vm1568, 1.0, %v1584
    %v1593 = vsel %vm1569, 1.0, %v1585
    %v1594 = vsel %vm1570, 1.0, %v1586
    %v1595 = vsel %vm1571, 1.0, %v1587
    %v1596 = vsel %vm1572, 1.0, %v1588
    %v1597 = vsel %vm1219, 0.0, %v1589
    %v1598 = vsel %vm1220, 0.0, %v1590
    %v1599 = vsel %vm1221, 0.0, %v1591
    %v1600 = vsel %vm1222, 0.0, %v1592
    %v1601 = vsel %vm1223, 0.0, %v1593
    %v1602 = vsel %vm1224, 0.0, %v1594
    %v1603 = vsel %vm1225, 0.0, %v1595
    %v1604 = vsel %vm1226, 0.0, %v1596
    %1609 = vrot.lane.b32.xlu0 %v1597, 40
    %v1610 = vpop.permute.xlu0 %1609
    %1611 = vrot.lane.b32.xlu0 %v1598, 40
    %v1612 = vpop.permute.xlu0 %1611
    %1613 = vrot.lane.b32.xlu0 %v1599, 40
    %v1614 = vpop.permute.xlu0 %1613
    %1615 = vrot.lane.b32.xlu0 %v1600, 40
    %v1616 = vpop.permute.xlu0 %1615
    %1621 = vst.msk [vmem:[#allocation2 + $0x1] sm:$0xff] %vm1332, %v1610
    %1622 = vst.msk [vmem:[#allocation2 + $0x9] sm:$0xff] %vm1332, %v1612
    %1623 = vst.msk [vmem:[#allocation2 + $0x11] sm:$0xff] %vm1332, %v1614
    %vm1624 = vcmask 322560
    %1625 = vst.msk [vmem:[#allocation2 + $0x19] sm:$0xf] %vm1624, %v1616
    %1630 = vrot.lane.b32.xlu0 %v1601, 40
    %v1631 = vpop.permute.xlu0 %1630
    %1632 = vrot.lane.b32.xlu0 %v1602, 40
    %v1633 = vpop.permute.xlu0 %1632
    %1634 = vrot.lane.b32.xlu0 %v1603, 40
    %v1635 = vpop.permute.xlu0 %1634
    %1636 = vrot.lane.b32.xlu0 %v1604, 40
    %v1637 = vpop.permute.xlu0 %1636
    %s1642 = scalar_lea.vmem [#allocation2], 32
    %vm1643 = vcmask 326661
    %1644 = vst.msk [vmem:[%s1642 - $0x4] sm:$0xe0] %vm1643, %v1616
    %1645 = vst.msk [vmem:[%s1642 + $0x4] sm:$0xff] %vm1332, %v1631
    %1646 = vst.msk [vmem:[%s1642 + $0xc] sm:$0xff] %vm1332, %v1633
    %1647 = vst.msk [vmem:[%s1642 + $0x14] sm:$0xff] %vm1332, %v1635
    %vm1648 = vcmask 319488
    %1649 = vst.msk [vmem:[%s1642 + $0x1c] sm:$0x1] %vm1648, %v1637
    %vm1650 = vcmask 1047872
    %1651 = vst.msk [vmem:[#allocation2] sm:$0xff] %vm1650, %v1610
    %1652 = vst.msk [vmem:[#allocation2 + $0x8] sm:$0xff] %vm1650, %v1612
    %1653 = vst.msk [vmem:[#allocation2 + $0x10] sm:$0xff] %vm1650, %v1614
    %vm1654 = vcmask 1044800
    %1655 = vst.msk [vmem:[#allocation2 + $0x18] sm:$0x1f] %vm1654, %v1616
    %vm1656 = vcmask 1047877
    %1657 = vst.msk [vmem:[%s1642 - $0x5] sm:$0xe0] %vm1656, %v1616
    %1658 = vst.msk [vmem:[%s1642 + $0x3] sm:$0xff] %vm1650, %v1631
    %1659 = vst.msk [vmem:[%s1642 + $0xb] sm:$0xff] %vm1650, %v1633
    %1660 = vst.msk [vmem:[%s1642 + $0x13] sm:$0xff] %vm1650, %v1635
    %vm1661 = vcmask 1041728
    %1662 = vst.msk [vmem:[%s1642 + $0x1b] sm:$0x3] %vm1661, %v1637
    %v1663 = vld [vmem:[#allocation2] sm:$0xff]
    %v1664 = vld [vmem:[#allocation2 + $0x8] sm:$0xff]
    %v1665 = vld [vmem:[#allocation2 + $0x10] sm:$0xff]
    %v1666 = vld [vmem:[#allocation2 + $0x18] sm:$0xf]
    %v1667 = vld [vmem:[#allocation2 + $0x1] sm:$0xff]
    %v1668 = vld [vmem:[#allocation2 + $0x9] sm:$0xff]
    %v1669 = vld [vmem:[#allocation2 + $0x11] sm:$0xff]
    %v1670 = vld [vmem:[#allocation2 + $0x19] sm:$0xf]
    %v1671 = vld [vmem:[%s1642] sm:$0xff]
    %v1672 = vld [vmem:[%s1642 + $0x8] sm:$0xff]
    %v1673 = vld [vmem:[%s1642 + $0x10] sm:$0xff]
    %v1674 = vld [vmem:[%s1642 + $0x18] sm:$0xf]
    %v1675 = vld [vmem:[%s1642 + $0x1] sm:$0xff]
    %v1676 = vld [vmem:[%s1642 + $0x9] sm:$0xff]
    %v1677 = vld [vmem:[%s1642 + $0x11] sm:$0xff]
    %v1678 = vld [vmem:[%s1642 + $0x19] sm:$0xf]
    %vm1687 = vcmask 1043456
    %v1688 = vrot.slane %v1671, 4
    %v1689 = vrot.slane %v1675, 4
    %v1690 = vrot.slane %v1672, 4
    %v1691 = vsel %vm1687, %v1688, %v1690
    %v1692 = vrot.slane %v1676, 4
    %v1693 = vsel %vm1687, %v1689, %v1692
    %v1694 = vrot.slane %v1673, 4
    %v1695 = vsel %vm1687, %v1690, %v1694
    %v1696 = vrot.slane %v1677, 4
    %v1697 = vsel %vm1687, %v1692, %v1696
    %v1698 = vrot.slane %v1674, 4
    %v1699 = vsel %vm1687, %v1694, %v1698
    %v1700 = vrot.slane %v1678, 4
    %v1701 = vsel %vm1687, %v1696, %v1700
    %v1710 = vsel %vm1687, %v1666, %v1688
    %v1711 = vsel %vm1687, %v1670, %v1689
    %v1712 = vpack.c.bf16 %v1664, %v1663
    %v1713 = vpack.c.bf16 %v1668, %v1667
    %v1714 = vpack.c.bf16 %v1710, %v1665
    %v1715 = vpack.c.bf16 %v1711, %v1669
    %v1716 = vpack.c.bf16 %v1695, %v1691
    %v1717 = vpack.c.bf16 %v1697, %v1693
    %v1718 = vpack.c.bf16 %v1699, %v1699
    %v1719 = vpack.c.bf16 %v1701, %v1701
    %v1720 = vld [vmem:[%s4] sm:$0xff]
    %v1721 = vld [vmem:[%s4 + $0x8] sm:$0xff]
    %v1722 = vld [vmem:[%s4 + $0x10] sm:$0xff]
    %v1723 = vld [vmem:[%s4 + $0x18] sm:$0xff]
    %v1724 = vld [vmem:[%s4 + $0x20] sm:$0xff]
    %v1725 = vld [vmem:[%s4 + $0x28] sm:$0xff]
    %v1726 = vld [vmem:[%s4 + $0x30] sm:$0xff]
    %v1727 = vld [vmem:[%s4 + $0x38] sm:$0xff]
    %v1728 = vld [vmem:[%s4 + $0x40] sm:$0xff]
    %v1729 = vld [vmem:[%s4 + $0x48] sm:$0xff]
    %v1730 = vld [vmem:[%s4 + $0x50] sm:$0xff]
    %v1731 = vld [vmem:[%s4 + $0x58] sm:$0xff]
    %v1732 = vld [vmem:[%s4 + $0x60] sm:$0xff]
    %v1733 = vld [vmem:[%s4 + $0x68] sm:$0xff]
    %v1734 = vld [vmem:[%s4 + $0x70] sm:$0xff]
    %v1735 = vld [vmem:[%s4 + $0x78] sm:$0xff]
    %v1736 = vld [vmem:[%s4 + $0x80] sm:$0xff]
    %v1737 = vld [vmem:[%s4 + $0x88] sm:$0xff]
    %v1738 = vld [vmem:[%s4 + $0x90] sm:$0xff]
    %v1739 = vld [vmem:[%s4 + $0x98] sm:$0xff]
    %v1740 = vld [vmem:[%s4 + $0xa0] sm:$0xff]
    %v1741 = vld [vmem:[%s4 + $0xa8] sm:$0xff]
    %v1742 = vld [vmem:[%s4 + $0xb0] sm:$0xff]
    %v1743 = vld [vmem:[%s4 + $0xb8] sm:$0xff]
    %v1744 = vld [vmem:[%s4 + $0xc0] sm:$0xff]
    %v1745 = vld [vmem:[%s4 + $0xc8] sm:$0xff]
    %v1746 = vld [vmem:[%s4 + $0xd0] sm:$0xff]
    %v1747 = vld [vmem:[%s4 + $0xd8] sm:$0xff]
    %v1748 = vld [vmem:[%s4 + $0xe0] sm:$0xff]
    %v1749 = vld [vmem:[%s4 + $0xe8] sm:$0xff]
    %v1750 = vld [vmem:[%s4 + $0xf0] sm:$0xff]
    %v1751 = vld [vmem:[%s4 + $0xf8] sm:$0xff]
    %v1784 = vunpack.c.l.b16 %v1720
    %v1785 = vunpack.c.h.b16 %v1720
    %v1786 = vunpack.c.l.b16 %v1721
    %v1787 = vunpack.c.h.b16 %v1721
    %v1788 = vunpack.c.l.b16 %v1722
    %v1789 = vunpack.c.h.b16 %v1722
    %v1790 = vunpack.c.l.b16 %v1723
    %v1791 = vunpack.c.h.b16 %v1723
    %v1792 = vunpack.c.l.b16 %v1724
    %v1793 = vunpack.c.h.b16 %v1724
    %v1794 = vunpack.c.l.b16 %v1725
    %v1795 = vunpack.c.h.b16 %v1725
    %v1796 = vunpack.c.l.b16 %v1726
    %v1797 = vunpack.c.h.b16 %v1726
    %v1798 = vunpack.c.l.b16 %v1727
    %v1799 = vunpack.c.h.b16 %v1727
    %v1800 = vunpack.c.l.b16 %v1728
    %v1801 = vunpack.c.h.b16 %v1728
    %v1802 = vunpack.c.l.b16 %v1729
    %v1803 = vunpack.c.h.b16 %v1729
    %v1804 = vunpack.c.l.b16 %v1730
    %v1805 = vunpack.c.h.b16 %v1730
    %v1806 = vunpack.c.l.b16 %v1731
    %v1807 = vunpack.c.h.b16 %v1731
    %v1808 = vunpack.c.l.b16 %v1732
    %v1809 = vunpack.c.h.b16 %v1732
    %v1810 = vunpack.c.l.b16 %v1733
    %v1811 = vunpack.c.h.b16 %v1733
    %v1812 = vunpack.c.l.b16 %v1734
    %v1813 = vunpack.c.h.b16 %v1734
    %v1814 = vunpack.c.l.b16 %v1735
    %v1815 = vunpack.c.h.b16 %v1735
    %v1816 = vunpack.c.l.b16 %v1736
    %v1817 = vunpack.c.h.b16 %v1736
    %v1818 = vunpack.c.l.b16 %v1737
    %v1819 = vunpack.c.h.b16 %v1737
    %v1820 = vunpack.c.l.b16 %v1738
    %v1821 = vunpack.c.h.b16 %v1738
    %v1822 = vunpack.c.l.b16 %v1739
    %v1823 = vunpack.c.h.b16 %v1739
    %v1824 = vunpack.c.l.b16 %v1740
    %v1825 = vunpack.c.h.b16 %v1740
    %v1826 = vunpack.c.l.b16 %v1741
    %v1827 = vunpack.c.h.b16 %v1741
    %v1828 = vunpack.c.l.b16 %v1742
    %v1829 = vunpack.c.h.b16 %v1742
    %v1830 = vunpack.c.l.b16 %v1743
    %v1831 = vunpack.c.h.b16 %v1743
    %v1832 = vunpack.c.l.b16 %v1744
    %v1833 = vunpack.c.h.b16 %v1744
    %v1834 = vunpack.c.l.b16 %v1745
    %v1835 = vunpack.c.h.b16 %v1745
    %v1836 = vunpack.c.l.b16 %v1746
    %v1837 = vunpack.c.h.b16 %v1746
    %v1838 = vunpack.c.l.b16 %v1747
    %v1839 = vunpack.c.h.b16 %v1747
    %v1840 = vunpack.c.l.b16 %v1748
    %v1841 = vunpack.c.h.b16 %v1748
    %v1842 = vunpack.c.l.b16 %v1749
    %v1843 = vunpack.c.h.b16 %v1749
    %v1844 = vunpack.c.l.b16 %v1750
    %v1845 = vunpack.c.h.b16 %v1750
    %v1846 = vunpack.c.l.b16 %v1751
    %v1847 = vunpack.c.h.b16 %v1751
    %v1848 = vpack.c.b16 %v1786, %v1784
    %v1849 = vpack.c.b16 %v1787, %v1785
    %v1850 = vpack.c.b16 %v1790, %v1788
    %v1851 = vpack.c.b16 %v1791, %v1789
    %v1852 = vpack.c.b16 %v1794, %v1792
    %v1853 = vpack.c.b16 %v1795, %v1793
    %v1854 = vpack.c.b16 %v1798, %v1796
    %v1855 = vpack.c.b16 %v1799, %v1797
    %v1856 = vpack.c.b16 %v1802, %v1800
    %v1857 = vpack.c.b16 %v1803, %v1801
    %v1858 = vpack.c.b16 %v1806, %v1804
    %v1859 = vpack.c.b16 %v1807, %v1805
    %v1860 = vpack.c.b16 %v1810, %v1808
    %v1861 = vpack.c.b16 %v1811, %v1809
    %v1862 = vpack.c.b16 %v1814, %v1812
    %v1863 = vpack.c.b16 %v1815, %v1813
    %v1864 = vpack.c.b16 %v1818, %v1816
    %v1865 = vpack.c.b16 %v1819, %v1817
    %v1866 = vpack.c.b16 %v1822, %v1820
    %v1867 = vpack.c.b16 %v1823, %v1821
    %v1868 = vpack.c.b16 %v1826, %v1824
    %v1869 = vpack.c.b16 %v1827, %v1825
    %v1870 = vpack.c.b16 %v1830, %v1828
    %v1871 = vpack.c.b16 %v1831, %v1829
    %v1872 = vpack.c.b16 %v1834, %v1832
    %v1873 = vpack.c.b16 %v1835, %v1833
    %v1874 = vpack.c.b16 %v1838, %v1836
    %v1875 = vpack.c.b16 %v1839, %v1837
    %v1876 = vpack.c.b16 %v1842, %v1840
    %v1877 = vpack.c.b16 %v1843, %v1841
    %v1878 = vpack.c.b16 %v1846, %v1844
    %v1879 = vpack.c.b16 %v1847, %v1845
    %1912 = vmatpush.bf16.msra.mxu0 %v1862
    %1913 = vmatpush.bf16.msra.mxu0 %v1860
    %1914 = vmatpush.bf16.msra.mxu0 %v1858
    %1915 = vmatpush.bf16.msra.mxu0 %v1856
    %1916 = vmatpush.bf16.msra.mxu0 %v1854
    %1917 = vmatpush.bf16.msra.mxu0 %v1852
    %1918 = vmatpush.bf16.msra.mxu0 %v1850
    %1919 = vmatpush.bf16.msra.mxu0 %v1848
    %1920 = vmatmul.bf16.gmra.mxu0 %v1712
    %v1921 = vpop.f32.mrf.mxu0
    %v1922 = vadd.f32 0.0, %v1921
    %v1923 = vpop.f32.mrf.mxu0
    %v1924 = vadd.f32 0.0, %v1923
    %1925 = vmatmul.bf16.gmra.mxu0 %v1714
    %v1926 = vpop.f32.mrf.mxu0
    %v1927 = vadd.f32 0.0, %v1926
    %v1928 = vpop.f32.mrf.mxu0
    %v1929 = vadd.f32 0.0, %v1928
    %1930 = vmatmul.bf16.gmra.mxu0 %v1716
    %v1931 = vpop.f32.mrf.mxu0
    %v1932 = vadd.f32 0.0, %v1931
    %v1933 = vpop.f32.mrf.mxu0
    %v1934 = vadd.f32 0.0, %v1933
    %1935 = vmatmul.bf16.gmra.mxu0 %v1718
    %v1936 = vpop.f32.mrf.mxu0
    %v1937 = vadd.f32 0.0, %v1936
    %v1938 = vpop.f32.mrf.mxu0
    %1939 = vdwg.mxu0
    %1940 = vmatpush.bf16.msra.mxu0 %v1878
    %1941 = vmatpush.bf16.msra.mxu0 %v1876
    %1942 = vmatpush.bf16.msra.mxu0 %v1874
    %1943 = vmatpush.bf16.msra.mxu0 %v1872
    %1944 = vmatpush.bf16.msra.mxu0 %v1870
    %1945 = vmatpush.bf16.msra.mxu0 %v1868
    %1946 = vmatpush.bf16.msra.mxu0 %v1866
    %1947 = vmatpush.bf16.msra.mxu0 %v1864
    %1948 = vmatmul.bf16.gmra.mxu0 %v1713
    %v1949 = vpop.f32.mrf.mxu0
    %v1950 = vadd.f32 %v1922, %v1949
    %v1951 = vpop.f32.mrf.mxu0
    %v1952 = vadd.f32 %v1924, %v1951
    %1953 = vmatmul.bf16.gmra.mxu0 %v1715
    %v1954 = vpop.f32.mrf.mxu0
    %v1955 = vadd.f32 %v1927, %v1954
    %v1956 = vpop.f32.mrf.mxu0
    %v1957 = vadd.f32 %v1929, %v1956
    %1958 = vmatmul.bf16.gmra.mxu0 %v1717
    %v1959 = vpop.f32.mrf.mxu0
    %v1960 = vadd.f32 %v1932, %v1959
    %v1961 = vpop.f32.mrf.mxu0
    %v1962 = vadd.f32 %v1934, %v1961
    %1963 = vmatmul.bf16.gmra.mxu0 %v1719
    %v1964 = vpop.f32.mrf.mxu0
    %v1965 = vadd.f32 %v1937, %v1964
    %v1966 = vpop.f32.mrf.mxu0
    %1967 = vdwg.mxu0
    %1968 = vmatpush.bf16.msra.mxu0 %v1863
    %1969 = vmatpush.bf16.msra.mxu0 %v1861
    %1970 = vmatpush.bf16.msra.mxu0 %v1859
    %1971 = vmatpush.bf16.msra.mxu0 %v1857
    %1972 = vmatpush.bf16.msra.mxu0 %v1855
    %1973 = vmatpush.bf16.msra.mxu0 %v1853
    %1974 = vmatpush.bf16.msra.mxu0 %v1851
    %1975 = vmatpush.bf16.msra.mxu0 %v1849
    %1976 = vmatmul.bf16.gmra.mxu0 %v1712
    %v1977 = vpop.f32.mrf.mxu0
    %v1978 = vadd.f32 0.0, %v1977
    %v1979 = vpop.f32.mrf.mxu0
    %v1980 = vadd.f32 0.0, %v1979
    %1981 = vmatmul.bf16.gmra.mxu0 %v1714
    %v1982 = vpop.f32.mrf.mxu0
    %v1983 = vadd.f32 0.0, %v1982
    %v1984 = vpop.f32.mrf.mxu0
    %v1985 = vadd.f32 0.0, %v1984
    %1986 = vmatmul.bf16.gmra.mxu0 %v1716
    %v1987 = vpop.f32.mrf.mxu0
    %v1988 = vadd.f32 0.0, %v1987
    %v1989 = vpop.f32.mrf.mxu0
    %v1990 = vadd.f32 0.0, %v1989
    %1991 = vmatmul.bf16.gmra.mxu0 %v1718
    %v1992 = vpop.f32.mrf.mxu0
    %v1993 = vadd.f32 0.0, %v1992
    %v1994 = vpop.f32.mrf.mxu0
    %1995 = vdwg.mxu0
    %1996 = vmatpush.bf16.msra.mxu0 %v1879
    %1997 = vmatpush.bf16.msra.mxu0 %v1877
    %1998 = vmatpush.bf16.msra.mxu0 %v1875
    %1999 = vmatpush.bf16.msra.mxu0 %v1873
    %2000 = vmatpush.bf16.msra.mxu0 %v1871
    %2001 = vmatpush.bf16.msra.mxu0 %v1869
    %2002 = vmatpush.bf16.msra.mxu0 %v1867
    %2003 = vmatpush.bf16.msra.mxu0 %v1865
    %2004 = vmatmul.bf16.gmra.mxu0 %v1713
    %v2005 = vpop.f32.mrf.mxu0
    %v2006 = vadd.f32 %v1978, %v2005
    %v2007 = vpop.f32.mrf.mxu0
    %v2008 = vadd.f32 %v1980, %v2007
    %2009 = vmatmul.bf16.gmra.mxu0 %v1715
    %v2010 = vpop.f32.mrf.mxu0
    %v2011 = vadd.f32 %v1983, %v2010
    %v2012 = vpop.f32.mrf.mxu0
    %v2013 = vadd.f32 %v1985, %v2012
    %2014 = vmatmul.bf16.gmra.mxu0 %v1717
    %v2015 = vpop.f32.mrf.mxu0
    %v2016 = vadd.f32 %v1988, %v2015
    %v2017 = vpop.f32.mrf.mxu0
    %v2018 = vadd.f32 %v1990, %v2017
    %2019 = vmatmul.bf16.gmra.mxu0 %v1719
    %v2020 = vpop.f32.mrf.mxu0
    %v2021 = vadd.f32 %v1993, %v2020
    %v2022 = vpop.f32.mrf.mxu0
    %2023 = vdwg.mxu0
    %2031 = vrot.lane.b32.xlu0 %v1950, 80
    %v2032 = vpop.permute.xlu0 %2031
    %2033 = vrot.lane.b32.xlu0 %v1952, 80
    %v2034 = vpop.permute.xlu0 %2033
    %2035 = vrot.lane.b32.xlu0 %v1955, 80
    %v2036 = vpop.permute.xlu0 %2035
    %2037 = vrot.lane.b32.xlu0 %v1957, 80
    %v2038 = vpop.permute.xlu0 %2037
    %2039 = vrot.lane.b32.xlu0 %v1960, 80
    %v2040 = vpop.permute.xlu0 %2039
    %2041 = vrot.lane.b32.xlu0 %v1962, 80
    %v2042 = vpop.permute.xlu0 %2041
    %2043 = vrot.lane.b32.xlu0 %v1965, 80
    %v2044 = vpop.permute.xlu0 %2043
    %v2052 = vmax.f32 %v1950, %v2032
    %v2053 = vmax.f32 %v1952, %v2034
    %v2054 = vmax.f32 %v1955, %v2036
    %v2055 = vmax.f32 %v1957, %v2038
    %v2056 = vmax.f32 %v1960, %v2040
    %v2057 = vmax.f32 %v1962, %v2042
    %v2058 = vmax.f32 %v1965, %v2044
    %2066 = vrot.lane.b32.xlu0 %v1950, 32
    %v2067 = vpop.permute.xlu0 %2066
    %2068 = vrot.lane.b32.xlu0 %v2006, 32
    %v2069 = vpop.permute.xlu0 %2068
    %2070 = vrot.lane.b32.xlu0 %v1952, 32
    %v2071 = vpop.permute.xlu0 %2070
    %2072 = vrot.lane.b32.xlu0 %v2008, 32
    %v2073 = vpop.permute.xlu0 %2072
    %2074 = vrot.lane.b32.xlu0 %v1955, 32
    %v2075 = vpop.permute.xlu0 %2074
    %2076 = vrot.lane.b32.xlu0 %v2011, 32
    %v2077 = vpop.permute.xlu0 %2076
    %2078 = vrot.lane.b32.xlu0 %v1957, 32
    %v2079 = vpop.permute.xlu0 %2078
    %2080 = vrot.lane.b32.xlu0 %v2013, 32
    %v2081 = vpop.permute.xlu0 %2080
    %2082 = vrot.lane.b32.xlu0 %v1960, 32
    %v2083 = vpop.permute.xlu0 %2082
    %2084 = vrot.lane.b32.xlu0 %v2016, 32
    %v2085 = vpop.permute.xlu0 %2084
    %2086 = vrot.lane.b32.xlu0 %v1962, 32
    %v2087 = vpop.permute.xlu0 %2086
    %2088 = vrot.lane.b32.xlu0 %v2018, 32
    %v2089 = vpop.permute.xlu0 %2088
    %2090 = vrot.lane.b32.xlu0 %v1965, 32
    %v2091 = vpop.permute.xlu0 %2090
    %2092 = vrot.lane.b32.xlu0 %v2021, 32
    %v2093 = vpop.permute.xlu0 %2092
    %v2094 = vsel %vm1330, %v2067, %v2069
    %v2095 = vsel %vm1330, %v2071, %v2073
    %v2096 = vsel %vm1330, %v2075, %v2077
    %v2097 = vsel %vm1330, %v2079, %v2081
    %v2098 = vsel %vm1330, %v2083, %v2085
    %v2099 = vsel %vm1330, %v2087, %v2089
    %v2100 = vsel %vm1330, %v2091, %v2093
    %v2108 = vmax.f32 %v2052, %v2094
    %v2109 = vmax.f32 %v2053, %v2095
    %v2110 = vmax.f32 %v2054, %v2096
    %v2111 = vmax.f32 %v2055, %v2097
    %v2112 = vmax.f32 %v2056, %v2098
    %v2113 = vmax.f32 %v2057, %v2099
    %v2114 = vmax.f32 %v2058, %v2100
    %2115 = vrot.lane.b32.xlu0 %v2006, 112
    %v2116 = vpop.permute.xlu0 %2115
    %2117 = vrot.lane.b32.xlu0 %v2008, 112
    %v2118 = vpop.permute.xlu0 %2117
    %2119 = vrot.lane.b32.xlu0 %v2011, 112
    %v2120 = vpop.permute.xlu0 %2119
    %2121 = vrot.lane.b32.xlu0 %v2013, 112
    %v2122 = vpop.permute.xlu0 %2121
    %2123 = vrot.lane.b32.xlu0 %v2016, 112
    %v2124 = vpop.permute.xlu0 %2123
    %2125 = vrot.lane.b32.xlu0 %v2018, 112
    %v2126 = vpop.permute.xlu0 %2125
    %2127 = vrot.lane.b32.xlu0 %v2021, 112
    %v2128 = vpop.permute.xlu0 %2127
    %v2136 = vmax.f32 %v2108, %v2116
    %v2137 = vmax.f32 %v2109, %v2118
    %v2138 = vmax.f32 %v2110, %v2120
    %v2139 = vmax.f32 %v2111, %v2122
    %v2140 = vmax.f32 %v2112, %v2124
    %v2141 = vmax.f32 %v2113, %v2126
    %v2142 = vmax.f32 %v2114, %v2128
    %vm2143 = vcmp.eq.s32.totalorder %v1184, 27
    %vm2144 = vcmp.eq.s32.totalorder %v1185, 27
    %vm2145 = vcmp.eq.s32.totalorder %v1186, 27
    %vm2146 = vcmp.eq.s32.totalorder %v1187, 27
    %vm2147 = vcmp.eq.s32.totalorder %v1188, 27
    %vm2148 = vcmp.eq.s32.totalorder %v1189, 27
    %vm2149 = vcmp.eq.s32.totalorder %v1190, 27
    %vm2150 = vcmp.eq.s32.totalorder %v1184, 55
    %vm2151 = vcmp.eq.s32.totalorder %v1185, 55
    %vm2152 = vcmp.eq.s32.totalorder %v1186, 55
    %vm2153 = vcmp.eq.s32.totalorder %v1187, 55
    %vm2154 = vcmp.eq.s32.totalorder %v1188, 55
    %vm2155 = vcmp.eq.s32.totalorder %v1189, 55
    %vm2156 = vcmp.eq.s32.totalorder %v1190, 55
    %vm2157 = vmor %vm2143, %vm2150
    %vm2158 = vmor %vm2144, %vm2151
    %vm2159 = vmor %vm2145, %vm2152
    %vm2160 = vmor %vm2146, %vm2153
    %vm2161 = vmor %vm2147, %vm2154
    %vm2162 = vmor %vm2148, %vm2155
    %vm2163 = vmor %vm2149, %vm2156
    %vm2164 = vcmp.ge.s32.totalorder %v1193, 36
    %vm2165 = vmand %vm2157, %vm2164
    %vm2166 = vmand %vm2158, %vm2164
    %vm2167 = vmand %vm2159, %vm2164
    %vm2168 = vmand %vm2160, %vm2164
    %vm2169 = vmand %vm2161, %vm2164
    %vm2170 = vmand %vm2162, %vm2164
    %vm2171 = vmand %vm2163, %vm2164
    %v2172 = vsel %vm2165, 0.0, %v2136
    %v2173 = vsel %vm2166, 0.0, %v2137
    %v2174 = vsel %vm2167, 0.0, %v2138
    %v2175 = vsel %vm2168, 0.0, %v2139
    %v2176 = vsel %vm2169, 0.0, %v2140
    %v2177 = vsel %vm2170, 0.0, %v2141
    %v2178 = vsel %vm2171, 0.0, %v2142
    %v2179 = vsel %vm131, %v2172, 0.0
    %v2180 = vsel %vm131, %v2173, 0.0
    %v2181 = vadd.f32 %v2179, %v2180
    %v2182 = vsel %vm131, %v2174, 0.0
    %v2183 = vadd.f32 %v2181, %v2182
    %v2184 = vsel %vm131, %v2175, 0.0
    %v2185 = vadd.f32 %v2183, %v2184
    %v2186 = vsel %vm131, %v2176, 0.0
    %v2187 = vadd.f32 %v2185, %v2186
    %v2188 = vsel %vm131, %v2177, 0.0
    %v2189 = vadd.f32 %v2187, %v2188
    %v2190 = vsel %vm131, %v2178, 0.0
    %v2191 = vadd.f32 %v2189, %v2190
    %v2192 = vrot.slane %v2191, 4
    %v2193 = vadd.f32 %v2191, %v2192
    %v2194 = vrot.slane %v2193, 2
    %v2195 = vadd.f32 %v2193, %v2194
    %v2196 = vrot.slane %v2195, 1
    %v2197 = vadd.f32 %v2195, %v2196
    %2199 = vrot.lane.b32.xlu0 %v2197, 104
    %v2200 = vpop.permute.xlu0 %2199
    %v2202 = vadd.f32 %v2197, %v2200
    %2204 = vrot.lane.b32.xlu0 %v2202, 116
    %v2205 = vpop.permute.xlu0 %2204
    %v2207 = vadd.f32 %v2202, %v2205
    %v2208 = vrcp.pop 222.0
    %v2209 = vmul.f32 222.0, %v2208
    %v2210 = vsub.f32 1.0, %v2209
    %v2211 = vmul.f32 %v2208, %v2210
    %v2212 = vadd.f32 %v2208, %v2211
    %vm2213 = vweird.f32 %v2208
    %v2214 = vsel %vm2213, %v2208, %v2212
    %v2215 = vmul.f32 %v2207, %v2214
    %2217 = vrot.lane.b32.xlu0 %v2215, 12
    %v2218 = vpop.permute.xlu0 %2217
    %2220 = vrot.lane.b32.xlu0 %v2215, 24
    %v2221 = vpop.permute.xlu0 %2220
    %2223 = vrot.lane.b32.xlu0 %v2215, 36
    %v2224 = vpop.permute.xlu0 %2223
    %vm2226 = vcmask 97280
    %v2227 = vsel %vm2226, %v2215, %v2218
    %v2228 = vsel %vm1328, %v2227, %v2221
    %vm2229 = vcmask 293888
    %v2230 = vsel %vm2229, %v2228, %v2224
    %v2231 = vperm.slane %v2230, 0
    %v2232 = vsub.f32 %v2172, %v2231
    %v2233 = vsub.f32 %v2173, %v2231
    %v2234 = vsub.f32 %v2174, %v2231
    %v2235 = vsub.f32 %v2175, %v2231
    %v2236 = vsub.f32 %v2176, %v2231
    %v2237 = vsub.f32 %v2177, %v2231
    %v2238 = vsub.f32 %v2178, %v2231
    %v2239 = vmul.f32 %v2232, %v2232
    %v2240 = vmul.f32 %v2233, %v2233
    %v2241 = vmul.f32 %v2234, %v2234
    %v2242 = vmul.f32 %v2235, %v2235
    %v2243 = vmul.f32 %v2236, %v2236
    %v2244 = vmul.f32 %v2237, %v2237
    %v2245 = vmul.f32 %v2238, %v2238
    %v2246 = vsel %vm131, %v2239, 0.0
    %v2247 = vsel %vm131, %v2240, 0.0
    %v2248 = vadd.f32 %v2246, %v2247
    %v2249 = vsel %vm131, %v2241, 0.0
    %v2250 = vadd.f32 %v2248, %v2249
    %v2251 = vsel %vm131, %v2242, 0.0
    %v2252 = vadd.f32 %v2250, %v2251
    %v2253 = vsel %vm131, %v2243, 0.0
    %v2254 = vadd.f32 %v2252, %v2253
    %v2255 = vsel %vm131, %v2244, 0.0
    %v2256 = vadd.f32 %v2254, %v2255
    %v2257 = vsel %vm131, %v2245, 0.0
    %v2258 = vadd.f32 %v2256, %v2257
    %v2259 = vrot.slane %v2258, 4
    %v2260 = vadd.f32 %v2258, %v2259
    %v2261 = vrot.slane %v2260, 2
    %v2262 = vadd.f32 %v2260, %v2261
    %v2263 = vrot.slane %v2262, 1
    %v2264 = vadd.f32 %v2262, %v2263
    %2266 = vrot.lane.b32.xlu0 %v2264, 104
    %v2267 = vpop.permute.xlu0 %2266
    %v2269 = vadd.f32 %v2264, %v2267
    %2271 = vrot.lane.b32.xlu0 %v2269, 116
    %v2272 = vpop.permute.xlu0 %2271
    %v2274 = vadd.f32 %v2269, %v2272
    %v2275 = vmul.f32 %v2215, %v2215
    %v2276 = vmul.f32 %v2275, 2.0
    %v2277 = vsub.f32 %v2274, %v2276
    %v2278 = vmul.f32 %v2277, %v2214
    %v2279 = vld [vmem:[%s5] sm:$0x1]
    %v2280 = vadd.f32 %v2278, 1e-05
    %v2281 = vrsqrt.pop %v2280
    %v2282 = vmul.f32 %v2281, %v2280
    %v2283 = vmul.f32 %v2282, %v2281
    %v2284 = vmul.f32 0.5, %v2283
    %v2285 = vsub.f32 1.5, %v2284
    %v2286 = vmul.f32 %v2281, %v2285
    %vm2287 = vweird.f32 %v2280
    %vm2288 = vweird.f32 %v2281
    %vm2289 = vmor %vm2287, %vm2288
    %v2290 = vsel %vm2289, %v2281, %v2286
    %v2291 = vmul.f32 %v2279, %v2290
    %v2292 = vld [vmem:[%s6] sm:$0x1]
    %v2293 = vmul.f32 %v2215, %v2291
    %v2294 = vsub.f32 %v2292, %v2293
    %v2296 = vperm.slane %v2291, 0
    %2297 = vrot.lane.b32.xlu0 %v2296, 12
    %v2298 = vpop.permute.xlu0 %2297
    %2300 = vrot.lane.b32.xlu0 %v2296, 24
    %v2301 = vpop.permute.xlu0 %2300
    %2303 = vrot.lane.b32.xlu0 %v2296, 36
    %v2304 = vpop.permute.xlu0 %2303
    %v2306 = vsel %vm2226, %v2291, %v2298
    %v2307 = vsel %vm1328, %v2306, %v2301
    %v2308 = vsel %vm2229, %v2307, %v2304
    %v2310 = vperm.slane %v2294, 0
    %2311 = vrot.lane.b32.xlu0 %v2310, 12
    %v2312 = vpop.permute.xlu0 %2311
    %2314 = vrot.lane.b32.xlu0 %v2310, 24
    %v2315 = vpop.permute.xlu0 %2314
    %2317 = vrot.lane.b32.xlu0 %v2310, 36
    %v2318 = vpop.permute.xlu0 %2317
    %v2320 = vsel %vm2226, %v2294, %v2312
    %v2321 = vsel %vm1328, %v2320, %v2315
    %v2322 = vsel %vm2229, %v2321, %v2318
    %v2323 = vperm.slane %v2308, 0
    %v2324 = vmul.f32 %v2172, %v2323
    %v2325 = vmul.f32 %v2173, %v2323
    %v2326 = vmul.f32 %v2174, %v2323
    %v2327 = vmul.f32 %v2175, %v2323
    %v2328 = vmul.f32 %v2176, %v2323
    %v2329 = vmul.f32 %v2177, %v2323
    %v2330 = vmul.f32 %v2178, %v2323
    %v2331 = vperm.slane %v2322, 0
    %v2332 = vadd.f32 %v2324, %v2331
    %v2333 = vadd.f32 %v2325, %v2331
    %v2334 = vadd.f32 %v2326, %v2331
    %v2335 = vadd.f32 %v2327, %v2331
    %v2336 = vadd.f32 %v2328, %v2331
    %v2337 = vadd.f32 %v2329, %v2331
    %v2338 = vadd.f32 %v2330, %v2331
    %vm2339 = vcmp.gt.f32.partialorder %v2332, 0.0
    %vm2340 = vcmp.gt.f32.partialorder %v2333, 0.0
    %vm2341 = vcmp.gt.f32.partialorder %v2334, 0.0
    %vm2342 = vcmp.gt.f32.partialorder %v2335, 0.0
    %vm2343 = vcmp.gt.f32.partialorder %v2336, 0.0
    %vm2344 = vcmp.gt.f32.partialorder %v2337, 0.0
    %vm2345 = vcmp.gt.f32.partialorder %v2338, 0.0
    %vm2346 = vcmp.lt.f32.partialorder %v2332, 0.0
    %vm2347 = vcmp.lt.f32.partialorder %v2333, 0.0
    %vm2348 = vcmp.lt.f32.partialorder %v2334, 0.0
    %vm2349 = vcmp.lt.f32.partialorder %v2335, 0.0
    %vm2350 = vcmp.lt.f32.partialorder %v2336, 0.0
    %vm2351 = vcmp.lt.f32.partialorder %v2337, 0.0
    %vm2352 = vcmp.lt.f32.partialorder %v2338, 0.0
    %v2353 = vsel %vm2346, -1.0, 0.0
    %v2354 = vsel %vm2347, -1.0, 0.0
    %v2355 = vsel %vm2348, -1.0, 0.0
    %v2356 = vsel %vm2349, -1.0, 0.0
    %v2357 = vsel %vm2350, -1.0, 0.0
    %v2358 = vsel %vm2351, -1.0, 0.0
    %v2359 = vsel %vm2352, -1.0, 0.0
    %v2360 = vsel %vm2339, 1.0, %v2353
    %v2361 = vsel %vm2340, 1.0, %v2354
    %v2362 = vsel %vm2341, 1.0, %v2355
    %v2363 = vsel %vm2342, 1.0, %v2356
    %v2364 = vsel %vm2343, 1.0, %v2357
    %v2365 = vsel %vm2344, 1.0, %v2358
    %v2366 = vsel %vm2345, 1.0, %v2359
    %v2367 = vsel %vm2165, 0.0, %v2360
    %v2368 = vsel %vm2166, 0.0, %v2361
    %v2369 = vsel %vm2167, 0.0, %v2362
    %v2370 = vsel %vm2168, 0.0, %v2363
    %v2371 = vsel %vm2169, 0.0, %v2364
    %v2372 = vsel %vm2170, 0.0, %v2365
    %v2373 = vsel %vm2171, 0.0, %v2366
    %2374 = vst.msk [vmem:[#allocation3 + $0x1] sm:$0xff] %vm131, %v2367
    %2375 = vst.msk [vmem:[#allocation3 + $0x9] sm:$0xff] %vm131, %v2368
    %2376 = vst.msk [vmem:[#allocation3 + $0x11] sm:$0xff] %vm131, %v2369
    %vm2377 = vcmask 388096
    %2378 = vst.msk [vmem:[#allocation3 + $0x19] sm:$0xf] %vm2377, %v2370
    %s2379 = scalar_lea.vmem [#allocation3], 32
    %vm2380 = vcmask 392196
    %2381 = vst.msk [vmem:[%s2379 - $0x3] sm:$0xf0] %vm2380, %v2370
    %2382 = vst.msk [vmem:[%s2379 + $0x5] sm:$0xff] %vm131, %v2371
    %2383 = vst.msk [vmem:[%s2379 + $0xd] sm:$0xff] %vm131, %v2372
    %2384 = vst.msk [vmem:[%s2379 + $0x15] sm:$0xff] %vm131, %v2373
    %v2385 = vld [vmem:[#allocation3] sm:$0xff]
    %v2386 = vld [vmem:[#allocation3 + $0x8] sm:$0xff]
    %v2387 = vld [vmem:[#allocation3 + $0x10] sm:$0xff]
    %v2388 = vld [vmem:[#allocation3 + $0x18] sm:$0x7]
    %v2389 = vld [vmem:[#allocation3 + $0x1] sm:$0xff]
    %v2390 = vld [vmem:[#allocation3 + $0x9] sm:$0xff]
    %v2391 = vld [vmem:[#allocation3 + $0x11] sm:$0xff]
    %v2392 = vld [vmem:[#allocation3 + $0x19] sm:$0x7]
    %v2393 = vld [vmem:[#allocation3 + $0x2] sm:$0xff]
    %v2394 = vld [vmem:[#allocation3 + $0xa] sm:$0xff]
    %v2395 = vld [vmem:[#allocation3 + $0x12] sm:$0xff]
    %v2396 = vld [vmem:[#allocation3 + $0x1a] sm:$0x7]
    %v2397 = vld [vmem:[#allocation3 + $0x3] sm:$0xff]
    %v2398 = vld [vmem:[#allocation3 + $0xb] sm:$0xff]
    %v2399 = vld [vmem:[#allocation3 + $0x13] sm:$0xff]
    %v2400 = vld [vmem:[#allocation3 + $0x1b] sm:$0x7]
    %2405 = vrot.lane.b32.xlu0 %v2389, 48
    %v2406 = vpop.permute.xlu0 %2405
    %2407 = vrot.lane.b32.xlu0 %v2390, 48
    %v2408 = vpop.permute.xlu0 %2407
    %2409 = vrot.lane.b32.xlu0 %v2391, 48
    %v2410 = vpop.permute.xlu0 %2409
    %2411 = vrot.lane.b32.xlu0 %v2392, 48
    %v2412 = vpop.permute.xlu0 %2411
    %2421 = vrot.lane.b32.xlu0 %v2393, 96
    %v2422 = vpop.permute.xlu0 %2421
    %2423 = vrot.lane.b32.xlu0 %v2394, 96
    %v2424 = vpop.permute.xlu0 %2423
    %2425 = vrot.lane.b32.xlu0 %v2395, 96
    %v2426 = vpop.permute.xlu0 %2425
    %2427 = vrot.lane.b32.xlu0 %v2396, 96
    %v2428 = vpop.permute.xlu0 %2427
    %2437 = vrot.lane.b32.xlu0 %v2397, 16
    %v2438 = vpop.permute.xlu0 %2437
    %2439 = vrot.lane.b32.xlu0 %v2398, 16
    %v2440 = vpop.permute.xlu0 %2439
    %2441 = vrot.lane.b32.xlu0 %v2399, 16
    %v2442 = vpop.permute.xlu0 %2441
    %2443 = vrot.lane.b32.xlu0 %v2400, 16
    %v2444 = vpop.permute.xlu0 %2443
    %v2449 = vsel %vm131, %v2385, %v2406
    %v2450 = vsel %vm131, %v2386, %v2408
    %v2451 = vsel %vm131, %v2387, %v2410
    %v2452 = vsel %vm131, %v2388, %v2412
    %v2453 = vsel %vm1344, %v2449, %v2422
    %v2454 = vsel %vm1344, %v2450, %v2424
    %v2455 = vsel %vm1344, %v2451, %v2426
    %v2456 = vsel %vm1344, %v2452, %v2428
    %v2457 = vsel %vm1326, %v2422, %v2438
    %v2458 = vsel %vm1326, %v2424, %v2440
    %v2459 = vsel %vm1326, %v2426, %v2442
    %v2460 = vsel %vm1326, %v2428, %v2444
    %v2461 = vld [vmem:[%s2379] sm:$0xff]
    %v2462 = vld [vmem:[%s2379 + $0x8] sm:$0xff]
    %v2463 = vld [vmem:[%s2379 + $0x10] sm:$0xff]
    %v2464 = vld [vmem:[%s2379 + $0x18] sm:$0x7]
    %v2465 = vld [vmem:[%s2379 + $0x1] sm:$0xff]
    %v2466 = vld [vmem:[%s2379 + $0x9] sm:$0xff]
    %v2467 = vld [vmem:[%s2379 + $0x11] sm:$0xff]
    %v2468 = vld [vmem:[%s2379 + $0x19] sm:$0x7]
    %v2469 = vld [vmem:[%s2379 + $0x2] sm:$0xff]
    %v2470 = vld [vmem:[%s2379 + $0xa] sm:$0xff]
    %v2471 = vld [vmem:[%s2379 + $0x12] sm:$0xff]
    %v2472 = vld [vmem:[%s2379 + $0x1a] sm:$0x7]
    %v2473 = vld [vmem:[%s2379 + $0x3] sm:$0xff]
    %v2474 = vld [vmem:[%s2379 + $0xb] sm:$0xff]
    %v2475 = vld [vmem:[%s2379 + $0x13] sm:$0xff]
    %v2476 = vld [vmem:[%s2379 + $0x1b] sm:$0x7]
    %2481 = vrot.lane.b32.xlu0 %v2465, 48
    %v2482 = vpop.permute.xlu0 %2481
    %2483 = vrot.lane.b32.xlu0 %v2466, 48
    %v2484 = vpop.permute.xlu0 %2483
    %2485 = vrot.lane.b32.xlu0 %v2467, 48
    %v2486 = vpop.permute.xlu0 %2485
    %2487 = vrot.lane.b32.xlu0 %v2468, 48
    %v2488 = vpop.permute.xlu0 %2487
    %2497 = vrot.lane.b32.xlu0 %v2469, 96
    %v2498 = vpop.permute.xlu0 %2497
    %2499 = vrot.lane.b32.xlu0 %v2470, 96
    %v2500 = vpop.permute.xlu0 %2499
    %2501 = vrot.lane.b32.xlu0 %v2471, 96
    %v2502 = vpop.permute.xlu0 %2501
    %2503 = vrot.lane.b32.xlu0 %v2472, 96
    %v2504 = vpop.permute.xlu0 %2503
    %2513 = vrot.lane.b32.xlu0 %v2473, 16
    %v2514 = vpop.permute.xlu0 %2513
    %2515 = vrot.lane.b32.xlu0 %v2474, 16
    %v2516 = vpop.permute.xlu0 %2515
    %2517 = vrot.lane.b32.xlu0 %v2475, 16
    %v2518 = vpop.permute.xlu0 %2517
    %2519 = vrot.lane.b32.xlu0 %v2476, 16
    %v2520 = vpop.permute.xlu0 %2519
    %v2525 = vsel %vm131, %v2461, %v2482
    %v2526 = vsel %vm131, %v2462, %v2484
    %v2527 = vsel %vm131, %v2463, %v2486
    %v2528 = vsel %vm131, %v2464, %v2488
    %v2529 = vsel %vm1344, %v2525, %v2498
    %v2530 = vsel %vm1344, %v2526, %v2500
    %v2531 = vsel %vm1344, %v2527, %v2502
    %v2532 = vsel %vm1344, %v2528, %v2504
    %v2533 = vsel %vm1326, %v2498, %v2514
    %v2534 = vsel %vm1326, %v2500, %v2516
    %v2535 = vsel %vm1326, %v2502, %v2518
    %v2536 = vsel %vm1326, %v2504, %v2520
    %vm2545 = vcmask 1042432
    %v2546 = vrot.slane %v2529, 5
    %v2547 = vrot.slane %v2533, 5
    %v2548 = vrot.slane %v2530, 5
    %v2549 = vsel %vm2545, %v2546, %v2548
    %v2550 = vrot.slane %v2534, 5
    %v2551 = vsel %vm2545, %v2547, %v2550
    %v2552 = vrot.slane %v2531, 5
    %v2553 = vsel %vm2545, %v2548, %v2552
    %v2554 = vrot.slane %v2535, 5
    %v2555 = vsel %vm2545, %v2550, %v2554
    %v2556 = vrot.slane %v2532, 5
    %v2557 = vsel %vm2545, %v2552, %v2556
    %v2558 = vrot.slane %v2536, 5
    %v2559 = vsel %vm2545, %v2554, %v2558
    %v2568 = vsel %vm2545, %v2456, %v2546
    %v2569 = vsel %vm2545, %v2460, %v2547
    %v2570 = vpack.c.bf16 %v2454, %v2453
    %v2571 = vpack.c.bf16 %v2458, %v2457
    %v2572 = vpack.c.bf16 %v2568, %v2455
    %v2573 = vpack.c.bf16 %v2569, %v2459
    %v2574 = vpack.c.bf16 %v2553, %v2549
    %v2575 = vpack.c.bf16 %v2555, %v2551
    %v2576 = vpack.c.bf16 %v2557, %v2557
    %v2577 = vpack.c.bf16 %v2559, %v2559
    %v2578 = vld [vmem:[#allocation11] sm:$0xff]
    %v2579 = vld [vmem:[#allocation11 + $0x8] sm:$0xf]
    %v2580 = vld [vmem:[#allocation11 + $0xc] sm:$0xff]
    %v2581 = vld [vmem:[#allocation11 + $0x14] sm:$0xf]
    %v2582 = vld [vmem:[#allocation11 + $0x18] sm:$0xff]
    %v2583 = vld [vmem:[#allocation11 + $0x20] sm:$0xf]
    %v2584 = vld [vmem:[#allocation11 + $0x24] sm:$0xff]
    %v2585 = vld [vmem:[#allocation11 + $0x2c] sm:$0xf]
    %v2586 = vld [vmem:[#allocation11 + $0x30] sm:$0xff]
    %v2587 = vld [vmem:[#allocation11 + $0x38] sm:$0xf]
    %v2588 = vld [vmem:[#allocation11 + $0x3c] sm:$0xff]
    %v2589 = vld [vmem:[#allocation11 + $0x44] sm:$0xf]
    %v2590 = vld [vmem:[#allocation11 + $0x48] sm:$0xff]
    %v2591 = vld [vmem:[#allocation11 + $0x50] sm:$0xf]
    %v2592 = vld [vmem:[#allocation11 + $0x54] sm:$0xff]
    %v2593 = vld [vmem:[#allocation11 + $0x5c] sm:$0xf]
    %v2594 = vld [vmem:[#allocation11 + $0x60] sm:$0xff]
    %v2595 = vld [vmem:[#allocation11 + $0x68] sm:$0xf]
    %v2596 = vld [vmem:[#allocation11 + $0x6c] sm:$0xff]
    %v2597 = vld [vmem:[#allocation11 + $0x74] sm:$0xf]
    %v2598 = vld [vmem:[#allocation11 + $0x78] sm:$0xff]
    %v2599 = vld [vmem:[#allocation11 + $0x80] sm:$0xf]
    %v2600 = vld [vmem:[#allocation11 + $0x84] sm:$0xff]
    %v2601 = vld [vmem:[#allocation11 + $0x8c] sm:$0xf]
    %v2602 = vld [vmem:[#allocation11 + $0x90] sm:$0xff]
    %v2603 = vld [vmem:[#allocation11 + $0x98] sm:$0xf]
    %v2604 = vld [vmem:[#allocation11 + $0x9c] sm:$0xff]
    %v2605 = vld [vmem:[#allocation11 + $0xa4] sm:$0xf]
    %v2606 = vld [vmem:[#allocation11 + $0xa8] sm:$0xff]
    %v2607 = vld [vmem:[#allocation11 + $0xb0] sm:$0xf]
    %v2608 = vld [vmem:[#allocation11 + $0xb4] sm:$0xff]
    %v2609 = vld [vmem:[#allocation11 + $0xbc] sm:$0xf]
    %v2610 = vld [vmem:[#allocation11 + $0xc0] sm:$0xff]
    %v2611 = vld [vmem:[#allocation11 + $0xc8] sm:$0xf]
    %v2612 = vld [vmem:[#allocation11 + $0xcc] sm:$0xff]
    %v2613 = vld [vmem:[#allocation11 + $0xd4] sm:$0xf]
    %v2614 = vld [vmem:[#allocation11 + $0xd8] sm:$0xff]
    %v2615 = vld [vmem:[#allocation11 + $0xe0] sm:$0xf]
    %v2616 = vld [vmem:[#allocation11 + $0xe4] sm:$0xff]
    %v2617 = vld [vmem:[#allocation11 + $0xec] sm:$0xf]
    %v2618 = vld [vmem:[#allocation11 + $0xf0] sm:$0xff]
    %v2619 = vld [vmem:[#allocation11 + $0xf8] sm:$0xf]
    %v2620 = vld [vmem:[#allocation11 + $0xfc] sm:$0xff]
    %v2621 = vld [vmem:[#allocation11 + $0x104] sm:$0xf]
    %v2622 = vld [vmem:[#allocation11 + $0x108] sm:$0xff]
    %v2623 = vld [vmem:[#allocation11 + $0x110] sm:$0xf]
    %v2624 = vld [vmem:[#allocation11 + $0x114] sm:$0xff]
    %v2625 = vld [vmem:[#allocation11 + $0x11c] sm:$0xf]
    %v2674 = vunpack.c.l.b16 %v2578
    %v2675 = vunpack.c.h.b16 %v2578
    %v2676 = vunpack.c.l.b16 %v2579
    %v2677 = vunpack.c.l.b16 %v2580
    %v2678 = vunpack.c.h.b16 %v2580
    %v2679 = vunpack.c.l.b16 %v2581
    %v2680 = vunpack.c.l.b16 %v2582
    %v2681 = vunpack.c.h.b16 %v2582
    %v2682 = vunpack.c.l.b16 %v2583
    %v2683 = vunpack.c.l.b16 %v2584
    %v2684 = vunpack.c.h.b16 %v2584
    %v2685 = vunpack.c.l.b16 %v2585
    %v2686 = vunpack.c.l.b16 %v2586
    %v2687 = vunpack.c.h.b16 %v2586
    %v2688 = vunpack.c.l.b16 %v2587
    %v2689 = vunpack.c.l.b16 %v2588
    %v2690 = vunpack.c.h.b16 %v2588
    %v2691 = vunpack.c.l.b16 %v2589
    %v2692 = vunpack.c.l.b16 %v2590
    %v2693 = vunpack.c.h.b16 %v2590
    %v2694 = vunpack.c.l.b16 %v2591
    %v2695 = vunpack.c.l.b16 %v2592
    %v2696 = vunpack.c.h.b16 %v2592
    %v2697 = vunpack.c.l.b16 %v2593
    %v2698 = vunpack.c.l.b16 %v2594
    %v2699 = vunpack.c.h.b16 %v2594
    %v2700 = vunpack.c.l.b16 %v2595
    %v2701 = vunpack.c.l.b16 %v2596
    %v2702 = vunpack.c.h.b16 %v2596
    %v2703 = vunpack.c.l.b16 %v2597
    %v2704 = vunpack.c.l.b16 %v2598
    %v2705 = vunpack.c.h.b16 %v2598
    %v2706 = vunpack.c.l.b16 %v2599
    %v2707 = vunpack.c.l.b16 %v2600
    %v2708 = vunpack.c.h.b16 %v2600
    %v2709 = vunpack.c.l.b16 %v2601
    %v2710 = vunpack.c.l.b16 %v2602
    %v2711 = vunpack.c.h.b16 %v2602
    %v2712 = vunpack.c.l.b16 %v2603
    %v2713 = vunpack.c.l.b16 %v2604
    %v2714 = vunpack.c.h.b16 %v2604
    %v2715 = vunpack.c.l.b16 %v2605
    %v2716 = vunpack.c.l.b16 %v2606
    %v2717 = vunpack.c.h.b16 %v2606
    %v2718 = vunpack.c.l.b16 %v2607
    %v2719 = vunpack.c.l.b16 %v2608
    %v2720 = vunpack.c.h.b16 %v2608
    %v2721 = vunpack.c.l.b16 %v2609
    %v2722 = vunpack.c.l.b16 %v2610
    %v2723 = vunpack.c.h.b16 %v2610
    %v2724 = vunpack.c.l.b16 %v2611
    %v2725 = vunpack.c.l.b16 %v2612
    %v2726 = vunpack.c.h.b16 %v2612
    %v2727 = vunpack.c.l.b16 %v2613
    %v2728 = vunpack.c.l.b16 %v2614
    %v2729 = vunpack.c.h.b16 %v2614
    %v2730 = vunpack.c.l.b16 %v2615
    %v2731 = vunpack.c.l.b16 %v2616
    %v2732 = vunpack.c.h.b16 %v2616
    %v2733 = vunpack.c.l.b16 %v2617
    %v2734 = vunpack.c.l.b16 %v2618
    %v2735 = vunpack.c.h.b16 %v2618
    %v2736 = vunpack.c.l.b16 %v2619
    %v2737 = vunpack.c.l.b16 %v2620
    %v2738 = vunpack.c.h.b16 %v2620
    %v2739 = vunpack.c.l.b16 %v2621
    %v2740 = vunpack.c.l.b16 %v2622
    %v2741 = vunpack.c.h.b16 %v2622
    %v2742 = vunpack.c.l.b16 %v2623
    %v2743 = vunpack.c.l.b16 %v2624
    %v2744 = vunpack.c.h.b16 %v2624
    %v2745 = vunpack.c.l.b16 %v2625
    %v2746 = vpack.c.b16 %v2677, %v2674
    %v2747 = vpack.c.b16 %v2678, %v2675
    %v2748 = vpack.c.b16 %v2679, %v2676
    %v2749 = vpack.c.b16 %v2683, %v2680
    %v2750 = vpack.c.b16 %v2684, %v2681
    %v2751 = vpack.c.b16 %v2685, %v2682
    %v2752 = vpack.c.b16 %v2689, %v2686
    %v2753 = vpack.c.b16 %v2690, %v2687
    %v2754 = vpack.c.b16 %v2691, %v2688
    %v2755 = vpack.c.b16 %v2695, %v2692
    %v2756 = vpack.c.b16 %v2696, %v2693
    %v2757 = vpack.c.b16 %v2697, %v2694
    %v2758 = vpack.c.b16 %v2701, %v2698
    %v2759 = vpack.c.b16 %v2702, %v2699
    %v2760 = vpack.c.b16 %v2703, %v2700
    %v2761 = vpack.c.b16 %v2707, %v2704
    %v2762 = vpack.c.b16 %v2708, %v2705
    %v2763 = vpack.c.b16 %v2709, %v2706
    %v2764 = vpack.c.b16 %v2713, %v2710
    %v2765 = vpack.c.b16 %v2714, %v2711
    %v2766 = vpack.c.b16 %v2715, %v2712
    %v2767 = vpack.c.b16 %v2719, %v2716
    %v2768 = vpack.c.b16 %v2720, %v2717
    %v2769 = vpack.c.b16 %v2721, %v2718
    %v2770 = vpack.c.b16 %v2725, %v2722
    %v2771 = vpack.c.b16 %v2726, %v2723
    %v2772 = vpack.c.b16 %v2727, %v2724
    %v2773 = vpack.c.b16 %v2731, %v2728
    %v2774 = vpack.c.b16 %v2732, %v2729
    %v2775 = vpack.c.b16 %v2733, %v2730
    %v2776 = vpack.c.b16 %v2737, %v2734
    %v2777 = vpack.c.b16 %v2738, %v2735
    %v2778 = vpack.c.b16 %v2739, %v2736
    %v2779 = vpack.c.b16 %v2743, %v2740
    %v2780 = vpack.c.b16 %v2744, %v2741
    %v2781 = vpack.c.b16 %v2745, %v2742
    %v2819 = vsel %vm141, %v2571, 0
    %v2822 = vsel %vm141, %v2573, 0
    %v2825 = vsel %vm141, %v2575, 0
    %v2828 = vsel %vm141, %v2577, 0
    %2830 = vmatpush.bf16.msra.mxu0 %v2767
    %2831 = vmatpush.bf16.msra.mxu0 %v2764
    %2832 = vmatpush.bf16.msra.mxu0 %v2761
    %2833 = vmatpush.bf16.msra.mxu0 %v2758
    %2834 = vmatpush.bf16.msra.mxu0 %v2755
    %2835 = vmatpush.bf16.msra.mxu0 %v2752
    %2836 = vmatpush.bf16.msra.mxu0 %v2749
    %2837 = vmatpush.bf16.msra.mxu0 %v2746
    %2838 = vmatmul.bf16.gmra.mxu0 %v2570
    %v2839 = vpop.f32.mrf.mxu0
    %v2840 = vadd.f32 0.0, %v2839
    %v2841 = vpop.f32.mrf.mxu0
    %v2842 = vadd.f32 0.0, %v2841
    %2843 = vmatmul.bf16.gmra.mxu0 %v2572
    %v2844 = vpop.f32.mrf.mxu0
    %v2845 = vadd.f32 0.0, %v2844
    %v2846 = vpop.f32.mrf.mxu0
    %v2847 = vadd.f32 0.0, %v2846
    %2848 = vmatmul.bf16.gmra.mxu0 %v2574
    %v2849 = vpop.f32.mrf.mxu0
    %v2850 = vadd.f32 0.0, %v2849
    %v2851 = vpop.f32.mrf.mxu0
    %v2852 = vadd.f32 0.0, %v2851
    %2853 = vmatmul.bf16.gmra.mxu0 %v2576
    %v2854 = vpop.f32.mrf.mxu0
    %v2855 = vadd.f32 0.0, %v2854
    %v2856 = vpop.f32.mrf.mxu0
    %2857 = vdwg.mxu0
    %2858 = vmatpush.bf16.msra.mxu0 0
    %2859 = vmatpush.bf16.msra.mxu0 0
    %2860 = vmatpush.bf16.msra.mxu0 0
    %2861 = vmatpush.bf16.msra.mxu0 0
    %2862 = vmatpush.bf16.msra.mxu0 %v2779
    %2863 = vmatpush.bf16.msra.mxu0 %v2776
    %2864 = vmatpush.bf16.msra.mxu0 %v2773
    %2865 = vmatpush.bf16.msra.mxu0 %v2770
    %2866 = vmatmul.bf16.gmra.mxu0 %v2819
    %v2867 = vpop.f32.mrf.mxu0
    %v2868 = vadd.f32 %v2840, %v2867
    %v2869 = vpop.f32.mrf.mxu0
    %v2870 = vadd.f32 %v2842, %v2869
    %2871 = vmatmul.bf16.gmra.mxu0 %v2822
    %v2872 = vpop.f32.mrf.mxu0
    %v2873 = vadd.f32 %v2845, %v2872
    %v2874 = vpop.f32.mrf.mxu0
    %v2875 = vadd.f32 %v2847, %v2874
    %2876 = vmatmul.bf16.gmra.mxu0 %v2825
    %v2877 = vpop.f32.mrf.mxu0
    %v2878 = vadd.f32 %v2850, %v2877
    %v2879 = vpop.f32.mrf.mxu0
    %v2880 = vadd.f32 %v2852, %v2879
    %2881 = vmatmul.bf16.gmra.mxu0 %v2828
    %v2882 = vpop.f32.mrf.mxu0
    %v2883 = vadd.f32 %v2855, %v2882
    %v2884 = vpop.f32.mrf.mxu0
    %2885 = vdwg.mxu0
    %2886 = vmatpush.bf16.msra.mxu0 %v2768
    %2887 = vmatpush.bf16.msra.mxu0 %v2765
    %2888 = vmatpush.bf16.msra.mxu0 %v2762
    %2889 = vmatpush.bf16.msra.mxu0 %v2759
    %2890 = vmatpush.bf16.msra.mxu0 %v2756
    %2891 = vmatpush.bf16.msra.mxu0 %v2753
    %2892 = vmatpush.bf16.msra.mxu0 %v2750
    %2893 = vmatpush.bf16.msra.mxu0 %v2747
    %2894 = vmatmul.bf16.gmra.mxu0 %v2570
    %v2895 = vpop.f32.mrf.mxu0
    %v2896 = vadd.f32 0.0, %v2895
    %v2897 = vpop.f32.mrf.mxu0
    %v2898 = vadd.f32 0.0, %v2897
    %2899 = vmatmul.bf16.gmra.mxu0 %v2572
    %v2900 = vpop.f32.mrf.mxu0
    %v2901 = vadd.f32 0.0, %v2900
    %v2902 = vpop.f32.mrf.mxu0
    %v2903 = vadd.f32 0.0, %v2902
    %2904 = vmatmul.bf16.gmra.mxu0 %v2574
    %v2905 = vpop.f32.mrf.mxu0
    %v2906 = vadd.f32 0.0, %v2905
    %v2907 = vpop.f32.mrf.mxu0
    %v2908 = vadd.f32 0.0, %v2907
    %2909 = vmatmul.bf16.gmra.mxu0 %v2576
    %v2910 = vpop.f32.mrf.mxu0
    %v2911 = vadd.f32 0.0, %v2910
    %v2912 = vpop.f32.mrf.mxu0
    %2913 = vdwg.mxu0
    %2914 = vmatpush.bf16.msra.mxu0 0
    %2915 = vmatpush.bf16.msra.mxu0 0
    %2916 = vmatpush.bf16.msra.mxu0 0
    %2917 = vmatpush.bf16.msra.mxu0 0
    %2918 = vmatpush.bf16.msra.mxu0 %v2780
    %2919 = vmatpush.bf16.msra.mxu0 %v2777
    %2920 = vmatpush.bf16.msra.mxu0 %v2774
    %2921 = vmatpush.bf16.msra.mxu0 %v2771
    %2922 = vmatmul.bf16.gmra.mxu0 %v2819
    %v2923 = vpop.f32.mrf.mxu0
    %v2924 = vadd.f32 %v2896, %v2923
    %v2925 = vpop.f32.mrf.mxu0
    %v2926 = vadd.f32 %v2898, %v2925
    %2927 = vmatmul.bf16.gmra.mxu0 %v2822
    %v2928 = vpop.f32.mrf.mxu0
    %v2929 = vadd.f32 %v2901, %v2928
    %v2930 = vpop.f32.mrf.mxu0
    %v2931 = vadd.f32 %v2903, %v2930
    %2932 = vmatmul.bf16.gmra.mxu0 %v2825
    %v2933 = vpop.f32.mrf.mxu0
    %v2934 = vadd.f32 %v2906, %v2933
    %v2935 = vpop.f32.mrf.mxu0
    %v2936 = vadd.f32 %v2908, %v2935
    %2937 = vmatmul.bf16.gmra.mxu0 %v2828
    %v2938 = vpop.f32.mrf.mxu0
    %v2939 = vadd.f32 %v2911, %v2938
    %v2940 = vpop.f32.mrf.mxu0
    %2941 = vdwg.mxu0
    %2942 = vmatpush.bf16.msra.mxu0 %v2769
    %2943 = vmatpush.bf16.msra.mxu0 %v2766
    %2944 = vmatpush.bf16.msra.mxu0 %v2763
    %2945 = vmatpush.bf16.msra.mxu0 %v2760
    %2946 = vmatpush.bf16.msra.mxu0 %v2757
    %2947 = vmatpush.bf16.msra.mxu0 %v2754
    %2948 = vmatpush.bf16.msra.mxu0 %v2751
    %2949 = vmatpush.bf16.msra.mxu0 %v2748
    %2950 = vmatmul.bf16.gmra.mxu0 %v2570
    %v2951 = vpop.f32.mrf.mxu0
    %v2952 = vadd.f32 0.0, %v2951
    %v2953 = vpop.f32.mrf.mxu0
    %v2954 = vadd.f32 0.0, %v2953
    %2955 = vmatmul.bf16.gmra.mxu0 %v2572
    %v2956 = vpop.f32.mrf.mxu0
    %v2957 = vadd.f32 0.0, %v2956
    %v2958 = vpop.f32.mrf.mxu0
    %v2959 = vadd.f32 0.0, %v2958
    %2960 = vmatmul.bf16.gmra.mxu0 %v2574
    %v2961 = vpop.f32.mrf.mxu0
    %v2962 = vadd.f32 0.0, %v2961
    %v2963 = vpop.f32.mrf.mxu0
    %v2964 = vadd.f32 0.0, %v2963
    %2965 = vmatmul.bf16.gmra.mxu0 %v2576
    %v2966 = vpop.f32.mrf.mxu0
    %v2967 = vadd.f32 0.0, %v2966
    %v2968 = vpop.f32.mrf.mxu0
    %2969 = vdwg.mxu0
    %2970 = vmatpush.bf16.msra.mxu0 0
    %2971 = vmatpush.bf16.msra.mxu0 0
    %2972 = vmatpush.bf16.msra.mxu0 0
    %2973 = vmatpush.bf16.msra.mxu0 0
    %2974 = vmatpush.bf16.msra.mxu0 %v2781
    %2975 = vmatpush.bf16.msra.mxu0 %v2778
    %2976 = vmatpush.bf16.msra.mxu0 %v2775
    %2977 = vmatpush.bf16.msra.mxu0 %v2772
    %2978 = vmatmul.bf16.gmra.mxu0 %v2819
    %v2979 = vpop.f32.mrf.mxu0
    %v2980 = vadd.f32 %v2952, %v2979
    %v2981 = vpop.f32.mrf.mxu0
    %v2982 = vadd.f32 %v2954, %v2981
    %2983 = vmatmul.bf16.gmra.mxu0 %v2822
    %v2984 = vpop.f32.mrf.mxu0
    %v2985 = vadd.f32 %v2957, %v2984
    %v2986 = vpop.f32.mrf.mxu0
    %v2987 = vadd.f32 %v2959, %v2986
    %2988 = vmatmul.bf16.gmra.mxu0 %v2825
    %v2989 = vpop.f32.mrf.mxu0
    %v2990 = vadd.f32 %v2962, %v2989
    %v2991 = vpop.f32.mrf.mxu0
    %v2992 = vadd.f32 %v2964, %v2991
    %2993 = vmatmul.bf16.gmra.mxu0 %v2828
    %v2994 = vpop.f32.mrf.mxu0
    %v2995 = vadd.f32 %v2967, %v2994
    %v2996 = vpop.f32.mrf.mxu0
    %2997 = vdwg.mxu0
    %3005 = vrot.lane.b32.xlu0 %v2868, 64
    %v3006 = vpop.permute.xlu0 %3005
    %3007 = vrot.lane.b32.xlu0 %v2870, 64
    %v3008 = vpop.permute.xlu0 %3007
    %3009 = vrot.lane.b32.xlu0 %v2873, 64
    %v3010 = vpop.permute.xlu0 %3009
    %3011 = vrot.lane.b32.xlu0 %v2875, 64
    %v3012 = vpop.permute.xlu0 %3011
    %3013 = vrot.lane.b32.xlu0 %v2878, 64
    %v3014 = vpop.permute.xlu0 %3013
    %3015 = vrot.lane.b32.xlu0 %v2880, 64
    %v3016 = vpop.permute.xlu0 %3015
    %3017 = vrot.lane.b32.xlu0 %v2883, 64
    %v3018 = vpop.permute.xlu0 %3017
    %v3026 = vmax.f32 %v2868, %v3006
    %v3027 = vmax.f32 %v2870, %v3008
    %v3028 = vmax.f32 %v2873, %v3010
    %v3029 = vmax.f32 %v2875, %v3012
    %v3030 = vmax.f32 %v2878, %v3014
    %v3031 = vmax.f32 %v2880, %v3016
    %v3032 = vmax.f32 %v2883, %v3018
    %v3033 = vmax.f32 %v3026, %v2924
    %v3034 = vmax.f32 %v3027, %v2926
    %v3035 = vmax.f32 %v3028, %v2929
    %v3036 = vmax.f32 %v3029, %v2931
    %v3037 = vmax.f32 %v3030, %v2934
    %v3038 = vmax.f32 %v3031, %v2936
    %v3039 = vmax.f32 %v3032, %v2939
    %3047 = vrot.lane.b32.xlu0 %v2924, 64
    %v3048 = vpop.permute.xlu0 %3047
    %3049 = vrot.lane.b32.xlu0 %v2926, 64
    %v3050 = vpop.permute.xlu0 %3049
    %3051 = vrot.lane.b32.xlu0 %v2929, 64
    %v3052 = vpop.permute.xlu0 %3051
    %3053 = vrot.lane.b32.xlu0 %v2931, 64
    %v3054 = vpop.permute.xlu0 %3053
    %3055 = vrot.lane.b32.xlu0 %v2934, 64
    %v3056 = vpop.permute.xlu0 %3055
    %3057 = vrot.lane.b32.xlu0 %v2936, 64
    %v3058 = vpop.permute.xlu0 %3057
    %3059 = vrot.lane.b32.xlu0 %v2939, 64
    %v3060 = vpop.permute.xlu0 %3059
    %v3068 = vmax.f32 %v3033, %v3048
    %v3069 = vmax.f32 %v3034, %v3050
    %v3070 = vmax.f32 %v3035, %v3052
    %v3071 = vmax.f32 %v3036, %v3054
    %v3072 = vmax.f32 %v3037, %v3056
    %v3073 = vmax.f32 %v3038, %v3058
    %v3074 = vmax.f32 %v3039, %v3060
    %v3075 = vmax.f32 %v3068, %v2980
    %v3076 = vmax.f32 %v3069, %v2982
    %v3077 = vmax.f32 %v3070, %v2985
    %v3078 = vmax.f32 %v3071, %v2987
    %v3079 = vmax.f32 %v3072, %v2990
    %v3080 = vmax.f32 %v3073, %v2992
    %v3081 = vmax.f32 %v3074, %v2995
    %v3082 = vsel %vm141, %v3075, 0.0
    %v3083 = vsel %vm141, %v3076, 0.0
    %v3084 = vadd.f32 %v3082, %v3083
    %v3085 = vsel %vm141, %v3077, 0.0
    %v3086 = vadd.f32 %v3084, %v3085
    %v3087 = vsel %vm141, %v3078, 0.0
    %v3088 = vadd.f32 %v3086, %v3087
    %v3089 = vsel %vm141, %v3079, 0.0
    %v3090 = vadd.f32 %v3088, %v3089
    %v3091 = vsel %vm141, %v3080, 0.0
    %v3092 = vadd.f32 %v3090, %v3091
    %v3093 = vsel %vm145, %v3081, 0.0
    %v3094 = vadd.f32 %v3092, %v3093
    %v3095 = vrot.slane %v3094, 4
    %v3096 = vadd.f32 %v3094, %v3095
    %v3097 = vrot.slane %v3096, 2
    %v3098 = vadd.f32 %v3096, %v3097
    %v3099 = vrot.slane %v3098, 1
    %v3100 = vadd.f32 %v3098, %v3099
    %3102 = vrot.lane.b32.xlu0 %v3100, 96
    %v3103 = vpop.permute.xlu0 %3102
    %v3105 = vadd.f32 %v3100, %v3103
    %v3106 = vrcp.pop 108.0
    %v3107 = vmul.f32 108.0, %v3106
    %v3108 = vsub.f32 1.0, %v3107
    %v3109 = vmul.f32 %v3106, %v3108
    %v3110 = vadd.f32 %v3106, %v3109
    %vm3111 = vweird.f32 %v3106
    %v3112 = vsel %vm3111, %v3106, %v3110
    %v3113 = vmul.f32 %v3105, %v3112
    %3115 = vrot.lane.b32.xlu0 %v3113, 32
    %v3116 = vpop.permute.xlu0 %3115
    %v3118 = vsel %vm1330, %v3113, %v3116
    %v3119 = vperm.slane %v3118, 0
    %v3120 = vsub.f32 %v3075, %v3119
    %v3121 = vsub.f32 %v3076, %v3119
    %v3122 = vsub.f32 %v3077, %v3119
    %v3123 = vsub.f32 %v3078, %v3119
    %v3124 = vsub.f32 %v3079, %v3119
    %v3125 = vsub.f32 %v3080, %v3119
    %v3126 = vsub.f32 %v3081, %v3119
    %v3127 = vmul.f32 %v3120, %v3120
    %v3128 = vmul.f32 %v3121, %v3121
    %v3129 = vmul.f32 %v3122, %v3122
    %v3130 = vmul.f32 %v3123, %v3123
    %v3131 = vmul.f32 %v3124, %v3124
    %v3132 = vmul.f32 %v3125, %v3125
    %v3133 = vmul.f32 %v3126, %v3126
    %v3134 = vsel %vm141, %v3127, 0.0
    %v3135 = vsel %vm141, %v3128, 0.0
    %v3136 = vadd.f32 %v3134, %v3135
    %v3137 = vsel %vm141, %v3129, 0.0
    %v3138 = vadd.f32 %v3136, %v3137
    %v3139 = vsel %vm141, %v3130, 0.0
    %v3140 = vadd.f32 %v3138, %v3139
    %v3141 = vsel %vm141, %v3131, 0.0
    %v3142 = vadd.f32 %v3140, %v3141
    %v3143 = vsel %vm141, %v3132, 0.0
    %v3144 = vadd.f32 %v3142, %v3143
    %v3145 = vsel %vm145, %v3133, 0.0
    %v3146 = vadd.f32 %v3144, %v3145
    %v3147 = vrot.slane %v3146, 4
    %v3148 = vadd.f32 %v3146, %v3147
    %v3149 = vrot.slane %v3148, 2
    %v3150 = vadd.f32 %v3148, %v3149
    %v3151 = vrot.slane %v3150, 1
    %v3152 = vadd.f32 %v3150, %v3151
    %3154 = vrot.lane.b32.xlu0 %v3152, 96
    %v3155 = vpop.permute.xlu0 %3154
    %v3157 = vadd.f32 %v3152, %v3155
    %v3158 = vmul.f32 %v3157, %v3112
    %v3159 = vld [vmem:[%s8] sm:$0x1]
    %v3160 = vadd.f32 %v3158, 1e-05
    %v3161 = vrsqrt.pop %v3160
    %v3162 = vmul.f32 %v3161, %v3160
    %v3163 = vmul.f32 %v3162, %v3161
    %v3164 = vmul.f32 0.5, %v3163
    %v3165 = vsub.f32 1.5, %v3164
    %v3166 = vmul.f32 %v3161, %v3165
    %vm3167 = vweird.f32 %v3160
    %vm3168 = vweird.f32 %v3161
    %vm3169 = vmor %vm3167, %vm3168
    %v3170 = vsel %vm3169, %v3161, %v3166
    %v3171 = vmul.f32 %v3159, %v3170
    %v3172 = vld [vmem:[%s9] sm:$0x1]
    %v3173 = vmul.f32 %v3113, %v3171
    %v3174 = vsub.f32 %v3172, %v3173
    %v3176 = vperm.slane %v3171, 0
    %3177 = vrot.lane.b32.xlu0 %v3176, 32
    %v3178 = vpop.permute.xlu0 %3177
    %v3180 = vsel %vm1330, %v3171, %v3178
    %v3182 = vperm.slane %v3174, 0
    %3183 = vrot.lane.b32.xlu0 %v3182, 32
    %v3184 = vpop.permute.xlu0 %3183
    %v3186 = vsel %vm1330, %v3174, %v3184
    %v3187 = vperm.slane %v3180, 0
    %v3188 = vmul.f32 %v3075, %v3187
    %v3189 = vmul.f32 %v3076, %v3187
    %v3190 = vmul.f32 %v3077, %v3187
    %v3191 = vmul.f32 %v3078, %v3187
    %v3192 = vmul.f32 %v3079, %v3187
    %v3193 = vmul.f32 %v3080, %v3187
    %v3194 = vmul.f32 %v3081, %v3187
    %v3195 = vperm.slane %v3186, 0
    %v3196 = vadd.f32 %v3188, %v3195
    %v3197 = vadd.f32 %v3189, %v3195
    %v3198 = vadd.f32 %v3190, %v3195
    %v3199 = vadd.f32 %v3191, %v3195
    %v3200 = vadd.f32 %v3192, %v3195
    %v3201 = vadd.f32 %v3193, %v3195
    %v3202 = vadd.f32 %v3194, %v3195
    %vm3203 = vcmp.gt.f32.partialorder %v3196, 0.0
    %vm3204 = vcmp.gt.f32.partialorder %v3197, 0.0
    %vm3205 = vcmp.gt.f32.partialorder %v3198, 0.0
    %vm3206 = vcmp.gt.f32.partialorder %v3199, 0.0
    %vm3207 = vcmp.gt.f32.partialorder %v3200, 0.0
    %vm3208 = vcmp.gt.f32.partialorder %v3201, 0.0
    %vm3209 = vcmp.gt.f32.partialorder %v3202, 0.0
    %vm3210 = vcmp.lt.f32.partialorder %v3196, 0.0
    %vm3211 = vcmp.lt.f32.partialorder %v3197, 0.0
    %vm3212 = vcmp.lt.f32.partialorder %v3198, 0.0
    %vm3213 = vcmp.lt.f32.partialorder %v3199, 0.0
    %vm3214 = vcmp.lt.f32.partialorder %v3200, 0.0
    %vm3215 = vcmp.lt.f32.partialorder %v3201, 0.0
    %vm3216 = vcmp.lt.f32.partialorder %v3202, 0.0
    %v3217 = vsel %vm3210, -1.0, 0.0
    %v3218 = vsel %vm3211, -1.0, 0.0
    %v3219 = vsel %vm3212, -1.0, 0.0
    %v3220 = vsel %vm3213, -1.0, 0.0
    %v3221 = vsel %vm3214, -1.0, 0.0
    %v3222 = vsel %vm3215, -1.0, 0.0
    %v3223 = vsel %vm3216, -1.0, 0.0
    %v3224 = vsel %vm3203, 1.0, %v3217
    %v3225 = vsel %vm3204, 1.0, %v3218
    %v3226 = vsel %vm3205, 1.0, %v3219
    %v3227 = vsel %vm3206, 1.0, %v3220
    %v3228 = vsel %vm3207, 1.0, %v3221
    %v3229 = vsel %vm3208, 1.0, %v3222
    %v3230 = vsel %vm3209, 1.0, %v3223
    %3235 = vrot.lane.b32.xlu0 %v3224, 96
    %v3236 = vpop.permute.xlu0 %3235
    %3237 = vrot.lane.b32.xlu0 %v3225, 96
    %v3238 = vpop.permute.xlu0 %3237
    %3239 = vrot.lane.b32.xlu0 %v3226, 96
    %v3240 = vpop.permute.xlu0 %3239
    %3241 = vrot.lane.b32.xlu0 %v3227, 96
    %v3242 = vpop.permute.xlu0 %3241
    %3247 = vst.msk [vmem:[#allocation4 + $0x2] sm:$0xff] %vm1330, %v3236
    %3248 = vst.msk [vmem:[#allocation4 + $0xa] sm:$0xff] %vm1330, %v3238
    %3249 = vst.msk [vmem:[#allocation4 + $0x12] sm:$0xff] %vm1330, %v3240
    %vm3250 = vcmask 256000
    %3251 = vst.msk [vmem:[#allocation4 + $0x1a] sm:$0x7] %vm3250, %v3242
    %3255 = vrot.lane.b32.xlu0 %v3228, 96
    %v3256 = vpop.permute.xlu0 %3255
    %3257 = vrot.lane.b32.xlu0 %v3229, 96
    %v3258 = vpop.permute.xlu0 %3257
    %3259 = vrot.lane.b32.xlu0 %v3230, 96
    %v3260 = vpop.permute.xlu0 %3259
    %s3264 = scalar_lea.vmem [#allocation4], 32
    %vm3265 = vcmask 261123
    %3266 = vst.msk [vmem:[%s3264 - $0x1] sm:$0xf8] %vm3265, %v3242
    %3267 = vst.msk [vmem:[%s3264 + $0x7] sm:$0xff] %vm1330, %v3256
    %3268 = vst.msk [vmem:[%s3264 + $0xf] sm:$0xff] %vm1330, %v3258
    %vm3269 = vcmask 259072
    %3270 = vst.msk [vmem:[%s3264 + $0x17] sm:$0x3f] %vm3269, %v3260
    %3271 = vrot.lane.b32.xlu0 %v3224, 32
    %v3272 = vpop.permute.xlu0 %3271
    %3273 = vrot.lane.b32.xlu0 %v3225, 32
    %v3274 = vpop.permute.xlu0 %3273
    %3275 = vrot.lane.b32.xlu0 %v3226, 32
    %v3276 = vpop.permute.xlu0 %3275
    %3277 = vrot.lane.b32.xlu0 %v3227, 32
    %v3278 = vpop.permute.xlu0 %3277
    %vm3283 = vcmask 523520
    %3284 = vst.msk [vmem:[#allocation4 + $0x1] sm:$0xff] %vm3283, %v3272
    %3285 = vst.msk [vmem:[#allocation4 + $0x9] sm:$0xff] %vm3283, %v3274
    %3286 = vst.msk [vmem:[#allocation4 + $0x11] sm:$0xff] %vm3283, %v3276
    %vm3287 = vcmask 518400
    %3288 = vst.msk [vmem:[#allocation4 + $0x19] sm:$0x7] %vm3287, %v3278
    %3289 = vrot.lane.b32.xlu0 %v3228, 32
    %v3290 = vpop.permute.xlu0 %3289
    %3291 = vrot.lane.b32.xlu0 %v3229, 32
    %v3292 = vpop.permute.xlu0 %3291
    %3293 = vrot.lane.b32.xlu0 %v3230, 32
    %v3294 = vpop.permute.xlu0 %3293
    %vm3298 = vcmask 523523
    %3299 = vst.msk [vmem:[%s3264 - $0x2] sm:$0xf8] %vm3298, %v3278
    %3300 = vst.msk [vmem:[%s3264 + $0x6] sm:$0xff] %vm3283, %v3290
    %3301 = vst.msk [vmem:[%s3264 + $0xe] sm:$0xff] %vm3283, %v3292
    %vm3302 = vcmask 521472
    %3303 = vst.msk [vmem:[%s3264 + $0x16] sm:$0x3f] %vm3302, %v3294
    %v3304 = vld [vmem:[#allocation4] sm:$0xff]
    %v3305 = vld [vmem:[#allocation4 + $0x8] sm:$0xff]
    %v3306 = vld [vmem:[#allocation4 + $0x10] sm:$0xff]
    %v3307 = vld [vmem:[#allocation4 + $0x18] sm:$0x3]
    %v3308 = vld [vmem:[#allocation4 + $0x1] sm:$0xff]
    %v3309 = vld [vmem:[#allocation4 + $0x9] sm:$0xff]
    %v3310 = vld [vmem:[#allocation4 + $0x11] sm:$0xff]
    %v3311 = vld [vmem:[#allocation4 + $0x19] sm:$0x3]
    %v3312 = vld [vmem:[#allocation4 + $0x2] sm:$0xff]
    %v3313 = vld [vmem:[#allocation4 + $0xa] sm:$0xff]
    %v3314 = vld [vmem:[#allocation4 + $0x12] sm:$0xff]
    %v3315 = vld [vmem:[#allocation4 + $0x1a] sm:$0x3]
    %v3316 = vld [vmem:[#allocation4 + $0x3] sm:$0xff]
    %v3317 = vld [vmem:[#allocation4 + $0xb] sm:$0xff]
    %v3318 = vld [vmem:[#allocation4 + $0x13] sm:$0xff]
    %v3319 = vld [vmem:[#allocation4 + $0x1b] sm:$0x3]
    %v3320 = vld [vmem:[#allocation4 + $0x4] sm:$0xff]
    %v3321 = vld [vmem:[#allocation4 + $0xc] sm:$0xff]
    %v3322 = vld [vmem:[#allocation4 + $0x14] sm:$0xff]
    %v3323 = vld [vmem:[#allocation4 + $0x1c] sm:$0x3]
    %3328 = vrot.lane.b32.xlu0 %v3308, 64
    %v3329 = vpop.permute.xlu0 %3328
    %3330 = vrot.lane.b32.xlu0 %v3309, 64
    %v3331 = vpop.permute.xlu0 %3330
    %3332 = vrot.lane.b32.xlu0 %v3310, 64
    %v3333 = vpop.permute.xlu0 %3332
    %3334 = vrot.lane.b32.xlu0 %v3311, 64
    %v3335 = vpop.permute.xlu0 %3334
    %3344 = vrot.lane.b32.xlu0 %v3316, 64
    %v3345 = vpop.permute.xlu0 %3344
    %3346 = vrot.lane.b32.xlu0 %v3317, 64
    %v3347 = vpop.permute.xlu0 %3346
    %3348 = vrot.lane.b32.xlu0 %v3318, 64
    %v3349 = vpop.permute.xlu0 %3348
    %3350 = vrot.lane.b32.xlu0 %v3319, 64
    %v3351 = vpop.permute.xlu0 %3350
    %v3356 = vsel %vm141, %v3304, %v3329
    %v3357 = vsel %vm141, %v3305, %v3331
    %v3358 = vsel %vm141, %v3306, %v3333
    %v3359 = vsel %vm141, %v3307, %v3335
    %v3360 = vsel %vm141, %v3312, %v3345
    %v3361 = vsel %vm141, %v3313, %v3347
    %v3362 = vsel %vm141, %v3314, %v3349
    %v3363 = vsel %vm141, %v3315, %v3351
    %v3364 = vld [vmem:[%s3264] sm:$0xff]
    %v3365 = vld [vmem:[%s3264 + $0x8] sm:$0xff]
    %v3366 = vld [vmem:[%s3264 + $0x10] sm:$0xff]
    %v3367 = vld [vmem:[%s3264 + $0x18] sm:$0x3]
    %v3368 = vld [vmem:[%s3264 + $0x1] sm:$0xff]
    %v3369 = vld [vmem:[%s3264 + $0x9] sm:$0xff]
    %v3370 = vld [vmem:[%s3264 + $0x11] sm:$0xff]
    %v3371 = vld [vmem:[%s3264 + $0x19] sm:$0x3]
    %v3372 = vld [vmem:[%s3264 + $0x2] sm:$0xff]
    %v3373 = vld [vmem:[%s3264 + $0xa] sm:$0xff]
    %v3374 = vld [vmem:[%s3264 + $0x12] sm:$0xff]
    %v3375 = vld [vmem:[%s3264 + $0x1a] sm:$0x3]
    %v3376 = vld [vmem:[%s3264 + $0x3] sm:$0xff]
    %v3377 = vld [vmem:[%s3264 + $0xb] sm:$0xff]
    %v3378 = vld [vmem:[%s3264 + $0x13] sm:$0xff]
    %v3379 = vld [vmem:[%s3264 + $0x1b] sm:$0x3]
    %v3380 = vld [vmem:[%s3264 + $0x4] sm:$0xff]
    %v3381 = vld [vmem:[%s3264 + $0xc] sm:$0xff]
    %v3382 = vld [vmem:[%s3264 + $0x14] sm:$0xff]
    %v3383 = vld [vmem:[%s3264 + $0x1c] sm:$0x3]
    %3388 = vrot.lane.b32.xlu0 %v3368, 64
    %v3389 = vpop.permute.xlu0 %3388
    %3390 = vrot.lane.b32.xlu0 %v3369, 64
    %v3391 = vpop.permute.xlu0 %3390
    %3392 = vrot.lane.b32.xlu0 %v3370, 64
    %v3393 = vpop.permute.xlu0 %3392
    %3394 = vrot.lane.b32.xlu0 %v3371, 64
    %v3395 = vpop.permute.xlu0 %3394
    %3404 = vrot.lane.b32.xlu0 %v3376, 64
    %v3405 = vpop.permute.xlu0 %3404
    %3406 = vrot.lane.b32.xlu0 %v3377, 64
    %v3407 = vpop.permute.xlu0 %3406
    %3408 = vrot.lane.b32.xlu0 %v3378, 64
    %v3409 = vpop.permute.xlu0 %3408
    %3410 = vrot.lane.b32.xlu0 %v3379, 64
    %v3411 = vpop.permute.xlu0 %3410
    %v3416 = vsel %vm141, %v3364, %v3389
    %v3417 = vsel %vm141, %v3365, %v3391
    %v3418 = vsel %vm141, %v3366, %v3393
    %v3419 = vsel %vm141, %v3367, %v3395
    %v3420 = vsel %vm141, %v3372, %v3405
    %v3421 = vsel %vm141, %v3373, %v3407
    %v3422 = vsel %vm141, %v3374, %v3409
    %v3423 = vsel %vm141, %v3375, %v3411
    %v3436 = vrot.slane %v3416, 6
    %v3437 = vrot.slane %v3420, 6
    %v3438 = vrot.slane %v3380, 6
    %v3439 = vrot.slane %v3417, 6
    %v3440 = vsel %vm1241, %v3436, %v3439
    %v3441 = vrot.slane %v3421, 6
    %v3442 = vsel %vm1241, %v3437, %v3441
    %v3443 = vrot.slane %v3381, 6
    %v3444 = vsel %vm1241, %v3438, %v3443
    %v3445 = vrot.slane %v3418, 6
    %v3446 = vsel %vm1241, %v3439, %v3445
    %v3447 = vrot.slane %v3422, 6
    %v3448 = vsel %vm1241, %v3441, %v3447
    %v3449 = vrot.slane %v3382, 6
    %v3450 = vsel %vm1241, %v3443, %v3449
    %v3451 = vrot.slane %v3419, 6
    %v3452 = vsel %vm1241, %v3445, %v3451
    %v3453 = vrot.slane %v3423, 6
    %v3454 = vsel %vm1241, %v3447, %v3453
    %v3455 = vrot.slane %v3383, 6
    %v3456 = vsel %vm1241, %v3449, %v3455
    %v3469 = vsel %vm1241, %v3359, %v3436
    %v3470 = vsel %vm1241, %v3363, %v3437
    %v3471 = vsel %vm1241, %v3323, %v3438
    %v3472 = vpack.c.bf16 %v3357, %v3356
    %v3473 = vpack.c.bf16 %v3361, %v3360
    %v3474 = vpack.c.bf16 %v3321, %v3320
    %v3475 = vpack.c.bf16 %v3469, %v3358
    %v3476 = vpack.c.bf16 %v3470, %v3362
    %v3477 = vpack.c.bf16 %v3471, %v3322
    %v3478 = vpack.c.bf16 %v3446, %v3440
    %v3479 = vpack.c.bf16 %v3448, %v3442
    %v3480 = vpack.c.bf16 %v3450, %v3444
    %v3481 = vpack.c.bf16 %v3452, %v3452
    %v3482 = vpack.c.bf16 %v3454, %v3454
    %v3483 = vpack.c.bf16 %v3456, %v3456
    %v3484 = vld [vmem:[%s10] sm:$0xff]
    %v3485 = vld [vmem:[%s10 + $0x8] sm:$0xff]
    %v3486 = vld [vmem:[%s10 + $0x10] sm:$0xff]
    %v3487 = vld [vmem:[%s10 + $0x18] sm:$0xff]
    %v3488 = vld [vmem:[%s10 + $0x20] sm:$0xff]
    %v3489 = vld [vmem:[%s10 + $0x28] sm:$0xff]
    %v3490 = vld [vmem:[%s10 + $0x30] sm:$0xff]
    %v3491 = vld [vmem:[%s10 + $0x38] sm:$0xff]
    %v3492 = vld [vmem:[%s10 + $0x40] sm:$0xff]
    %v3493 = vld [vmem:[%s10 + $0x48] sm:$0xff]
    %v3494 = vld [vmem:[%s10 + $0x50] sm:$0xff]
    %v3495 = vld [vmem:[%s10 + $0x58] sm:$0xff]
    %v3496 = vld [vmem:[%s10 + $0x60] sm:$0xff]
    %v3497 = vld [vmem:[%s10 + $0x68] sm:$0xff]
    %v3498 = vld [vmem:[%s10 + $0x70] sm:$0xff]
    %v3499 = vld [vmem:[%s10 + $0x78] sm:$0xff]
    %v3500 = vld [vmem:[%s10 + $0x80] sm:$0xff]
    %v3501 = vld [vmem:[%s10 + $0x88] sm:$0xff]
    %v3502 = vld [vmem:[%s10 + $0x90] sm:$0xff]
    %v3503 = vld [vmem:[%s10 + $0x98] sm:$0xff]
    %v3504 = vld [vmem:[%s10 + $0xa0] sm:$0xff]
    %v3505 = vld [vmem:[%s10 + $0xa8] sm:$0xff]
    %v3506 = vld [vmem:[%s10 + $0xb0] sm:$0xff]
    %v3507 = vld [vmem:[%s10 + $0xb8] sm:$0xff]
    %v3508 = vld [vmem:[%s10 + $0xc0] sm:$0xff]
    %v3509 = vld [vmem:[%s10 + $0xc8] sm:$0xff]
    %v3510 = vld [vmem:[%s10 + $0xd0] sm:$0xff]
    %v3511 = vld [vmem:[%s10 + $0xd8] sm:$0xff]
    %v3512 = vld [vmem:[%s10 + $0xe0] sm:$0xff]
    %v3513 = vld [vmem:[%s10 + $0xe8] sm:$0xff]
    %v3514 = vld [vmem:[%s10 + $0xf0] sm:$0xff]
    %v3515 = vld [vmem:[%s10 + $0xf8] sm:$0xff]
    %v3516 = vld [vmem:[%s10 + $0x100] sm:$0xff]
    %v3517 = vld [vmem:[%s10 + $0x108] sm:$0xff]
    %v3518 = vld [vmem:[%s10 + $0x110] sm:$0xff]
    %v3519 = vld [vmem:[%s10 + $0x118] sm:$0xff]
    %v3520 = vld [vmem:[%s10 + $0x120] sm:$0xff]
    %v3521 = vld [vmem:[%s10 + $0x128] sm:$0xff]
    %v3522 = vld [vmem:[%s10 + $0x130] sm:$0xff]
    %v3523 = vld [vmem:[%s10 + $0x138] sm:$0xff]
    %v3564 = vunpack.c.l.b16 %v3484
    %v3565 = vunpack.c.h.b16 %v3484
    %v3566 = vunpack.c.l.b16 %v3485
    %v3567 = vunpack.c.h.b16 %v3485
    %v3568 = vunpack.c.l.b16 %v3486
    %v3569 = vunpack.c.h.b16 %v3486
    %v3570 = vunpack.c.l.b16 %v3487
    %v3571 = vunpack.c.h.b16 %v3487
    %v3572 = vunpack.c.l.b16 %v3488
    %v3573 = vunpack.c.h.b16 %v3488
    %v3574 = vunpack.c.l.b16 %v3489
    %v3575 = vunpack.c.h.b16 %v3489
    %v3576 = vunpack.c.l.b16 %v3490
    %v3577 = vunpack.c.h.b16 %v3490
    %v3578 = vunpack.c.l.b16 %v3491
    %v3579 = vunpack.c.h.b16 %v3491
    %v3580 = vunpack.c.l.b16 %v3492
    %v3581 = vunpack.c.h.b16 %v3492
    %v3582 = vunpack.c.l.b16 %v3493
    %v3583 = vunpack.c.h.b16 %v3493
    %v3584 = vunpack.c.l.b16 %v3494
    %v3585 = vunpack.c.h.b16 %v3494
    %v3586 = vunpack.c.l.b16 %v3495
    %v3587 = vunpack.c.h.b16 %v3495
    %v3588 = vunpack.c.l.b16 %v3496
    %v3589 = vunpack.c.h.b16 %v3496
    %v3590 = vunpack.c.l.b16 %v3497
    %v3591 = vunpack.c.h.b16 %v3497
    %v3592 = vunpack.c.l.b16 %v3498
    %v3593 = vunpack.c.h.b16 %v3498
    %v3594 = vunpack.c.l.b16 %v3499
    %v3595 = vunpack.c.h.b16 %v3499
    %v3596 = vunpack.c.l.b16 %v3500
    %v3597 = vunpack.c.h.b16 %v3500
    %v3598 = vunpack.c.l.b16 %v3501
    %v3599 = vunpack.c.h.b16 %v3501
    %v3600 = vunpack.c.l.b16 %v3502
    %v3601 = vunpack.c.h.b16 %v3502
    %v3602 = vunpack.c.l.b16 %v3503
    %v3603 = vunpack.c.h.b16 %v3503
    %v3604 = vunpack.c.l.b16 %v3504
    %v3605 = vunpack.c.h.b16 %v3504
    %v3606 = vunpack.c.l.b16 %v3505
    %v3607 = vunpack.c.h.b16 %v3505
    %v3608 = vunpack.c.l.b16 %v3506
    %v3609 = vunpack.c.h.b16 %v3506
    %v3610 = vunpack.c.l.b16 %v3507
    %v3611 = vunpack.c.h.b16 %v3507
    %v3612 = vunpack.c.l.b16 %v3508
    %v3613 = vunpack.c.h.b16 %v3508
    %v3614 = vunpack.c.l.b16 %v3509
    %v3615 = vunpack.c.h.b16 %v3509
    %v3616 = vunpack.c.l.b16 %v3510
    %v3617 = vunpack.c.h.b16 %v3510
    %v3618 = vunpack.c.l.b16 %v3511
    %v3619 = vunpack.c.h.b16 %v3511
    %v3620 = vunpack.c.l.b16 %v3512
    %v3621 = vunpack.c.h.b16 %v3512
    %v3622 = vunpack.c.l.b16 %v3513
    %v3623 = vunpack.c.h.b16 %v3513
    %v3624 = vunpack.c.l.b16 %v3514
    %v3625 = vunpack.c.h.b16 %v3514
    %v3626 = vunpack.c.l.b16 %v3515
    %v3627 = vunpack.c.h.b16 %v3515
    %v3628 = vunpack.c.l.b16 %v3516
    %v3629 = vunpack.c.h.b16 %v3516
    %v3630 = vunpack.c.l.b16 %v3517
    %v3631 = vunpack.c.h.b16 %v3517
    %v3632 = vunpack.c.l.b16 %v3518
    %v3633 = vunpack.c.h.b16 %v3518
    %v3634 = vunpack.c.l.b16 %v3519
    %v3635 = vunpack.c.h.b16 %v3519
    %v3636 = vunpack.c.l.b16 %v3520
    %v3637 = vunpack.c.h.b16 %v3520
    %v3638 = vunpack.c.l.b16 %v3521
    %v3639 = vunpack.c.h.b16 %v3521
    %v3640 = vunpack.c.l.b16 %v3522
    %v3641 = vunpack.c.h.b16 %v3522
    %v3642 = vunpack.c.l.b16 %v3523
    %v3643 = vunpack.c.h.b16 %v3523
    %v3644 = vpack.c.b16 %v3566, %v3564
    %v3645 = vpack.c.b16 %v3567, %v3565
    %v3646 = vpack.c.b16 %v3570, %v3568
    %v3647 = vpack.c.b16 %v3571, %v3569
    %v3648 = vpack.c.b16 %v3574, %v3572
    %v3649 = vpack.c.b16 %v3575, %v3573
    %v3650 = vpack.c.b16 %v3578, %v3576
    %v3651 = vpack.c.b16 %v3579, %v3577
    %v3652 = vpack.c.b16 %v3582, %v3580
    %v3653 = vpack.c.b16 %v3583, %v3581
    %v3654 = vpack.c.b16 %v3586, %v3584
    %v3655 = vpack.c.b16 %v3587, %v3585
    %v3656 = vpack.c.b16 %v3590, %v3588
    %v3657 = vpack.c.b16 %v3591, %v3589
    %v3658 = vpack.c.b16 %v3594, %v3592
    %v3659 = vpack.c.b16 %v3595, %v3593
    %v3660 = vpack.c.b16 %v3598, %v3596
    %v3661 = vpack.c.b16 %v3599, %v3597
    %v3662 = vpack.c.b16 %v3602, %v3600
    %v3663 = vpack.c.b16 %v3603, %v3601
    %v3664 = vpack.c.b16 %v3606, %v3604
    %v3665 = vpack.c.b16 %v3607, %v3605
    %v3666 = vpack.c.b16 %v3610, %v3608
    %v3667 = vpack.c.b16 %v3611, %v3609
    %v3668 = vpack.c.b16 %v3614, %v3612
    %v3669 = vpack.c.b16 %v3615, %v3613
    %v3670 = vpack.c.b16 %v3618, %v3616
    %v3671 = vpack.c.b16 %v3619, %v3617
    %v3672 = vpack.c.b16 %v3622, %v3620
    %v3673 = vpack.c.b16 %v3623, %v3621
    %v3674 = vpack.c.b16 %v3626, %v3624
    %v3675 = vpack.c.b16 %v3627, %v3625
    %v3676 = vpack.c.b16 %v3630, %v3628
    %v3677 = vpack.c.b16 %v3631, %v3629
    %v3678 = vpack.c.b16 %v3634, %v3632
    %v3679 = vpack.c.b16 %v3635, %v3633
    %v3680 = vpack.c.b16 %v3638, %v3636
    %v3681 = vpack.c.b16 %v3639, %v3637
    %v3682 = vpack.c.b16 %v3642, %v3640
    %v3683 = vpack.c.b16 %v3643, %v3641
    %v3725 = vsel %vm141, %v3474, 0
    %v3728 = vsel %vm141, %v3477, 0
    %v3731 = vsel %vm141, %v3480, 0
    %v3734 = vsel %vm141, %v3483, 0
    %3736 = vmatpush.bf16.msra.mxu0 %v3658
    %3737 = vmatpush.bf16.msra.mxu0 %v3656
    %3738 = vmatpush.bf16.msra.mxu0 %v3654
    %3739 = vmatpush.bf16.msra.mxu0 %v3652
    %3740 = vmatpush.bf16.msra.mxu0 %v3650
    %3741 = vmatpush.bf16.msra.mxu0 %v3648
    %3742 = vmatpush.bf16.msra.mxu0 %v3646
    %3743 = vmatpush.bf16.msra.mxu0 %v3644
    %3744 = vmatmul.bf16.gmra.mxu0 %v3472
    %v3745 = vpop.f32.mrf.mxu0
    %v3746 = vadd.f32 0.0, %v3745
    %v3747 = vpop.f32.mrf.mxu0
    %v3748 = vadd.f32 0.0, %v3747
    %3749 = vmatmul.bf16.gmra.mxu0 %v3475
    %v3750 = vpop.f32.mrf.mxu0
    %v3751 = vadd.f32 0.0, %v3750
    %v3752 = vpop.f32.mrf.mxu0
    %v3753 = vadd.f32 0.0, %v3752
    %3754 = vmatmul.bf16.gmra.mxu0 %v3478
    %v3755 = vpop.f32.mrf.mxu0
    %v3756 = vadd.f32 0.0, %v3755
    %v3757 = vpop.f32.mrf.mxu0
    %v3758 = vadd.f32 0.0, %v3757
    %3759 = vmatmul.bf16.gmra.mxu0 %v3481
    %v3760 = vpop.f32.mrf.mxu0
    %v3761 = vadd.f32 0.0, %v3760
    %v3762 = vpop.f32.mrf.mxu0
    %3763 = vdwg.mxu0
    %3764 = vmatpush.bf16.msra.mxu0 %v3674
    %3765 = vmatpush.bf16.msra.mxu0 %v3672
    %3766 = vmatpush.bf16.msra.mxu0 %v3670
    %3767 = vmatpush.bf16.msra.mxu0 %v3668
    %3768 = vmatpush.bf16.msra.mxu0 %v3666
    %3769 = vmatpush.bf16.msra.mxu0 %v3664
    %3770 = vmatpush.bf16.msra.mxu0 %v3662
    %3771 = vmatpush.bf16.msra.mxu0 %v3660
    %3772 = vmatmul.bf16.gmra.mxu0 %v3473
    %v3773 = vpop.f32.mrf.mxu0
    %v3774 = vadd.f32 %v3746, %v3773
    %v3775 = vpop.f32.mrf.mxu0
    %v3776 = vadd.f32 %v3748, %v3775
    %3777 = vmatmul.bf16.gmra.mxu0 %v3476
    %v3778 = vpop.f32.mrf.mxu0
    %v3779 = vadd.f32 %v3751, %v3778
    %v3780 = vpop.f32.mrf.mxu0
    %v3781 = vadd.f32 %v3753, %v3780
    %3782 = vmatmul.bf16.gmra.mxu0 %v3479
    %v3783 = vpop.f32.mrf.mxu0
    %v3784 = vadd.f32 %v3756, %v3783
    %v3785 = vpop.f32.mrf.mxu0
    %v3786 = vadd.f32 %v3758, %v3785
    %3787 = vmatmul.bf16.gmra.mxu0 %v3482
    %v3788 = vpop.f32.mrf.mxu0
    %v3789 = vadd.f32 %v3761, %v3788
    %v3790 = vpop.f32.mrf.mxu0
    %3791 = vdwg.mxu0
    %3792 = vmatpush.bf16.msra.mxu0 0
    %3793 = vmatpush.bf16.msra.mxu0 0
    %3794 = vmatpush.bf16.msra.mxu0 0
    %3795 = vmatpush.bf16.msra.mxu0 0
    %3796 = vmatpush.bf16.msra.mxu0 %v3682
    %3797 = vmatpush.bf16.msra.mxu0 %v3680
    %3798 = vmatpush.bf16.msra.mxu0 %v3678
    %3799 = vmatpush.bf16.msra.mxu0 %v3676
    %3800 = vmatmul.bf16.gmra.mxu0 %v3725
    %v3801 = vpop.f32.mrf.mxu0
    %v3802 = vadd.f32 %v3774, %v3801
    %v3803 = vpop.f32.mrf.mxu0
    %v3804 = vadd.f32 %v3776, %v3803
    %3805 = vmatmul.bf16.gmra.mxu0 %v3728
    %v3806 = vpop.f32.mrf.mxu0
    %v3807 = vadd.f32 %v3779, %v3806
    %v3808 = vpop.f32.mrf.mxu0
    %v3809 = vadd.f32 %v3781, %v3808
    %3810 = vmatmul.bf16.gmra.mxu0 %v3731
    %v3811 = vpop.f32.mrf.mxu0
    %v3812 = vadd.f32 %v3784, %v3811
    %v3813 = vpop.f32.mrf.mxu0
    %v3814 = vadd.f32 %v3786, %v3813
    %3815 = vmatmul.bf16.gmra.mxu0 %v3734
    %v3816 = vpop.f32.mrf.mxu0
    %v3817 = vadd.f32 %v3789, %v3816
    %v3818 = vpop.f32.mrf.mxu0
    %3819 = vdwg.mxu0
    %3820 = vmatpush.bf16.msra.mxu0 %v3659
    %3821 = vmatpush.bf16.msra.mxu0 %v3657
    %3822 = vmatpush.bf16.msra.mxu0 %v3655
    %3823 = vmatpush.bf16.msra.mxu0 %v3653
    %3824 = vmatpush.bf16.msra.mxu0 %v3651
    %3825 = vmatpush.bf16.msra.mxu0 %v3649
    %3826 = vmatpush.bf16.msra.mxu0 %v3647
    %3827 = vmatpush.bf16.msra.mxu0 %v3645
    %3828 = vmatmul.bf16.gmra.mxu0 %v3472
    %v3829 = vpop.f32.mrf.mxu0
    %v3830 = vadd.f32 0.0, %v3829
    %v3831 = vpop.f32.mrf.mxu0
    %v3832 = vadd.f32 0.0, %v3831
    %3833 = vmatmul.bf16.gmra.mxu0 %v3475
    %v3834 = vpop.f32.mrf.mxu0
    %v3835 = vadd.f32 0.0, %v3834
    %v3836 = vpop.f32.mrf.mxu0
    %v3837 = vadd.f32 0.0, %v3836
    %3838 = vmatmul.bf16.gmra.mxu0 %v3478
    %v3839 = vpop.f32.mrf.mxu0
    %v3840 = vadd.f32 0.0, %v3839
    %v3841 = vpop.f32.mrf.mxu0
    %v3842 = vadd.f32 0.0, %v3841
    %3843 = vmatmul.bf16.gmra.mxu0 %v3481
    %v3844 = vpop.f32.mrf.mxu0
    %v3845 = vadd.f32 0.0, %v3844
    %v3846 = vpop.f32.mrf.mxu0
    %3847 = vdwg.mxu0
    %3848 = vmatpush.bf16.msra.mxu0 %v3675
    %3849 = vmatpush.bf16.msra.mxu0 %v3673
    %3850 = vmatpush.bf16.msra.mxu0 %v3671
    %3851 = vmatpush.bf16.msra.mxu0 %v3669
    %3852 = vmatpush.bf16.msra.mxu0 %v3667
    %3853 = vmatpush.bf16.msra.mxu0 %v3665
    %3854 = vmatpush.bf16.msra.mxu0 %v3663
    %3855 = vmatpush.bf16.msra.mxu0 %v3661
    %3856 = vmatmul.bf16.gmra.mxu0 %v3473
    %v3857 = vpop.f32.mrf.mxu0
    %v3858 = vadd.f32 %v3830, %v3857
    %v3859 = vpop.f32.mrf.mxu0
    %v3860 = vadd.f32 %v3832, %v3859
    %3861 = vmatmul.bf16.gmra.mxu0 %v3476
    %v3862 = vpop.f32.mrf.mxu0
    %v3863 = vadd.f32 %v3835, %v3862
    %v3864 = vpop.f32.mrf.mxu0
    %v3865 = vadd.f32 %v3837, %v3864
    %3866 = vmatmul.bf16.gmra.mxu0 %v3479
    %v3867 = vpop.f32.mrf.mxu0
    %v3868 = vadd.f32 %v3840, %v3867
    %v3869 = vpop.f32.mrf.mxu0
    %v3870 = vadd.f32 %v3842, %v3869
    %3871 = vmatmul.bf16.gmra.mxu0 %v3482
    %v3872 = vpop.f32.mrf.mxu0
    %v3873 = vadd.f32 %v3845, %v3872
    %v3874 = vpop.f32.mrf.mxu0
    %3875 = vdwg.mxu0
    %3876 = vmatpush.bf16.msra.mxu0 0
    %3877 = vmatpush.bf16.msra.mxu0 0
    %3878 = vmatpush.bf16.msra.mxu0 0
    %3879 = vmatpush.bf16.msra.mxu0 0
    %3880 = vmatpush.bf16.msra.mxu0 %v3683
    %3881 = vmatpush.bf16.msra.mxu0 %v3681
    %3882 = vmatpush.bf16.msra.mxu0 %v3679
    %3883 = vmatpush.bf16.msra.mxu0 %v3677
    %3884 = vmatmul.bf16.gmra.mxu0 %v3725
    %v3885 = vpop.f32.mrf.mxu0
    %v3886 = vadd.f32 %v3858, %v3885
    %v3887 = vpop.f32.mrf.mxu0
    %v3888 = vadd.f32 %v3860, %v3887
    %3889 = vmatmul.bf16.gmra.mxu0 %v3728
    %v3890 = vpop.f32.mrf.mxu0
    %v3891 = vadd.f32 %v3863, %v3890
    %v3892 = vpop.f32.mrf.mxu0
    %v3893 = vadd.f32 %v3865, %v3892
    %3894 = vmatmul.bf16.gmra.mxu0 %v3731
    %v3895 = vpop.f32.mrf.mxu0
    %v3896 = vadd.f32 %v3868, %v3895
    %v3897 = vpop.f32.mrf.mxu0
    %v3898 = vadd.f32 %v3870, %v3897
    %3899 = vmatmul.bf16.gmra.mxu0 %v3734
    %v3900 = vpop.f32.mrf.mxu0
    %v3901 = vadd.f32 %v3873, %v3900
    %v3902 = vpop.f32.mrf.mxu0
    %3903 = vdwg.mxu0
    %3911 = vrot.lane.b32.xlu0 %v3802, 64
    %v3912 = vpop.permute.xlu0 %3911
    %3913 = vrot.lane.b32.xlu0 %v3804, 64
    %v3914 = vpop.permute.xlu0 %3913
    %3915 = vrot.lane.b32.xlu0 %v3807, 64
    %v3916 = vpop.permute.xlu0 %3915
    %3917 = vrot.lane.b32.xlu0 %v3809, 64
    %v3918 = vpop.permute.xlu0 %3917
    %3919 = vrot.lane.b32.xlu0 %v3812, 64
    %v3920 = vpop.permute.xlu0 %3919
    %3921 = vrot.lane.b32.xlu0 %v3814, 64
    %v3922 = vpop.permute.xlu0 %3921
    %3923 = vrot.lane.b32.xlu0 %v3817, 64
    %v3924 = vpop.permute.xlu0 %3923
    %v3932 = vmax.f32 %v3802, %v3912
    %v3933 = vmax.f32 %v3804, %v3914
    %v3934 = vmax.f32 %v3807, %v3916
    %v3935 = vmax.f32 %v3809, %v3918
    %v3936 = vmax.f32 %v3812, %v3920
    %v3937 = vmax.f32 %v3814, %v3922
    %v3938 = vmax.f32 %v3817, %v3924
    %v3939 = vmax.f32 %v3932, %v3886
    %v3940 = vmax.f32 %v3933, %v3888
    %v3941 = vmax.f32 %v3934, %v3891
    %v3942 = vmax.f32 %v3935, %v3893
    %v3943 = vmax.f32 %v3936, %v3896
    %v3944 = vmax.f32 %v3937, %v3898
    %v3945 = vmax.f32 %v3938, %v3901
    %3953 = vrot.lane.b32.xlu0 %v3886, 64
    %v3954 = vpop.permute.xlu0 %3953
    %3955 = vrot.lane.b32.xlu0 %v3888, 64
    %v3956 = vpop.permute.xlu0 %3955
    %3957 = vrot.lane.b32.xlu0 %v3891, 64
    %v3958 = vpop.permute.xlu0 %3957
    %3959 = vrot.lane.b32.xlu0 %v3893, 64
    %v3960 = vpop.permute.xlu0 %3959
    %3961 = vrot.lane.b32.xlu0 %v3896, 64
    %v3962 = vpop.permute.xlu0 %3961
    %3963 = vrot.lane.b32.xlu0 %v3898, 64
    %v3964 = vpop.permute.xlu0 %3963
    %3965 = vrot.lane.b32.xlu0 %v3901, 64
    %v3966 = vpop.permute.xlu0 %3965
    %v3974 = vmax.f32 %v3939, %v3954
    %v3975 = vmax.f32 %v3940, %v3956
    %v3976 = vmax.f32 %v3941, %v3958
    %v3977 = vmax.f32 %v3942, %v3960
    %v3978 = vmax.f32 %v3943, %v3962
    %v3979 = vmax.f32 %v3944, %v3964
    %v3980 = vmax.f32 %v3945, %v3966
    %v3981 = vsel %vm141, %v3974, 0.0
    %v3982 = vsel %vm141, %v3975, 0.0
    %v3983 = vadd.f32 %v3981, %v3982
    %v3984 = vsel %vm141, %v3976, 0.0
    %v3985 = vadd.f32 %v3983, %v3984
    %v3986 = vsel %vm141, %v3977, 0.0
    %v3987 = vadd.f32 %v3985, %v3986
    %v3988 = vsel %vm141, %v3978, 0.0
    %v3989 = vadd.f32 %v3987, %v3988
    %v3990 = vsel %vm141, %v3979, 0.0
    %v3991 = vadd.f32 %v3989, %v3990
    %vm3992 = vcmask 519168
    %v3993 = vsel %vm3992, %v3980, 0.0
    %v3994 = vadd.f32 %v3991, %v3993
    %v3995 = vrot.slane %v3994, 4
    %v3996 = vadd.f32 %v3994, %v3995
    %v3997 = vrot.slane %v3996, 2
    %v3998 = vadd.f32 %v3996, %v3997
    %v3999 = vrot.slane %v3998, 1
    %v4000 = vadd.f32 %v3998, %v3999
    %v4001 = vrcp.pop 52.0
    %v4002 = vmul.f32 52.0, %v4001
    %v4003 = vsub.f32 1.0, %v4002
    %v4004 = vmul.f32 %v4001, %v4003
    %v4005 = vadd.f32 %v4001, %v4004
    %vm4006 = vweird.f32 %v4001
    %v4007 = vsel %vm4006, %v4001, %v4005
    %v4008 = vmul.f32 %v4000, %v4007
    %v4009 = vsub.f32 %v3974, %v4008
    %v4010 = vsub.f32 %v3975, %v4008
    %v4011 = vsub.f32 %v3976, %v4008
    %v4012 = vsub.f32 %v3977, %v4008
    %v4013 = vsub.f32 %v3978, %v4008
    %v4014 = vsub.f32 %v3979, %v4008
    %v4015 = vsub.f32 %v3980, %v4008
    %v4016 = vmul.f32 %v4009, %v4009
    %v4017 = vmul.f32 %v4010, %v4010
    %v4018 = vmul.f32 %v4011, %v4011
    %v4019 = vmul.f32 %v4012, %v4012
    %v4020 = vmul.f32 %v4013, %v4013
    %v4021 = vmul.f32 %v4014, %v4014
    %v4022 = vmul.f32 %v4015, %v4015
    %v4023 = vsel %vm141, %v4016, 0.0
    %v4024 = vsel %vm141, %v4017, 0.0
    %v4025 = vadd.f32 %v4023, %v4024
    %v4026 = vsel %vm141, %v4018, 0.0
    %v4027 = vadd.f32 %v4025, %v4026
    %v4028 = vsel %vm141, %v4019, 0.0
    %v4029 = vadd.f32 %v4027, %v4028
    %v4030 = vsel %vm141, %v4020, 0.0
    %v4031 = vadd.f32 %v4029, %v4030
    %v4032 = vsel %vm141, %v4021, 0.0
    %v4033 = vadd.f32 %v4031, %v4032
    %v4034 = vsel %vm3992, %v4022, 0.0
    %v4035 = vadd.f32 %v4033, %v4034
    %v4036 = vrot.slane %v4035, 4
    %v4037 = vadd.f32 %v4035, %v4036
    %v4038 = vrot.slane %v4037, 2
    %v4039 = vadd.f32 %v4037, %v4038
    %v4040 = vrot.slane %v4039, 1
    %v4041 = vadd.f32 %v4039, %v4040
    %v4042 = vmul.f32 %v4041, %v4007
    %v4043 = vld [vmem:[%s11] sm:$0x1]
    %v4044 = vadd.f32 %v4042, 1e-05
    %v4045 = vrsqrt.pop %v4044
    %v4046 = vmul.f32 %v4045, %v4044
    %v4047 = vmul.f32 %v4046, %v4045
    %v4048 = vmul.f32 0.5, %v4047
    %v4049 = vsub.f32 1.5, %v4048
    %v4050 = vmul.f32 %v4045, %v4049
    %vm4051 = vweird.f32 %v4044
    %vm4052 = vweird.f32 %v4045
    %vm4053 = vmor %vm4051, %vm4052
    %v4054 = vsel %vm4053, %v4045, %v4050
    %v4055 = vmul.f32 %v4043, %v4054
    %v4056 = vld [vmem:[%s12] sm:$0x1]
    %v4057 = vmul.f32 %v4008, %v4055
    %v4058 = vsub.f32 %v4056, %v4057
    %v4060 = vperm.slane %v4055, 0
    %v4062 = vmul.f32 %v3974, %v4060
    %v4063 = vmul.f32 %v3975, %v4060
    %v4064 = vmul.f32 %v3976, %v4060
    %v4065 = vmul.f32 %v3977, %v4060
    %v4066 = vmul.f32 %v3978, %v4060
    %v4067 = vmul.f32 %v3979, %v4060
    %v4068 = vmul.f32 %v3980, %v4060
    %v4070 = vperm.slane %v4058, 0
    %v4072 = vadd.f32 %v4062, %v4070
    %v4073 = vadd.f32 %v4063, %v4070
    %v4074 = vadd.f32 %v4064, %v4070
    %v4075 = vadd.f32 %v4065, %v4070
    %v4076 = vadd.f32 %v4066, %v4070
    %v4077 = vadd.f32 %v4067, %v4070
    %v4078 = vadd.f32 %v4068, %v4070
    %vm4079 = vcmp.gt.f32.partialorder %v4072, 0.0
    %vm4080 = vcmp.gt.f32.partialorder %v4073, 0.0
    %vm4081 = vcmp.gt.f32.partialorder %v4074, 0.0
    %vm4082 = vcmp.gt.f32.partialorder %v4075, 0.0
    %vm4083 = vcmp.gt.f32.partialorder %v4076, 0.0
    %vm4084 = vcmp.gt.f32.partialorder %v4077, 0.0
    %vm4085 = vcmp.gt.f32.partialorder %v4078, 0.0
    %vm4086 = vcmp.lt.f32.partialorder %v4072, 0.0
    %vm4087 = vcmp.lt.f32.partialorder %v4073, 0.0
    %vm4088 = vcmp.lt.f32.partialorder %v4074, 0.0
    %vm4089 = vcmp.lt.f32.partialorder %v4075, 0.0
    %vm4090 = vcmp.lt.f32.partialorder %v4076, 0.0
    %vm4091 = vcmp.lt.f32.partialorder %v4077, 0.0
    %vm4092 = vcmp.lt.f32.partialorder %v4078, 0.0
    %v4093 = vsel %vm4086, -1.0, 0.0
    %v4094 = vsel %vm4087, -1.0, 0.0
    %v4095 = vsel %vm4088, -1.0, 0.0
    %v4096 = vsel %vm4089, -1.0, 0.0
    %v4097 = vsel %vm4090, -1.0, 0.0
    %v4098 = vsel %vm4091, -1.0, 0.0
    %v4099 = vsel %vm4092, -1.0, 0.0
    %v4100 = vsel %vm4079, 1.0, %v4093
    %v4101 = vsel %vm4080, 1.0, %v4094
    %v4102 = vsel %vm4081, 1.0, %v4095
    %v4103 = vsel %vm4082, 1.0, %v4096
    %v4104 = vsel %vm4083, 1.0, %v4097
    %v4105 = vsel %vm4084, 1.0, %v4098
    %v4106 = vsel %vm4085, 1.0, %v4099
    %vm4107 = vcmask 516096
    %4108 = vst.msk [vmem:[#allocation5 + $0x8] sm:$0x1] %vm4107, %v4100
    %v4110 = vrot.slane %v4100, 1
    %4111 = vrot.lane.b32.xlu0 %v4110, 64
    %v4112 = vpop.permute.xlu0 %4111
    %vm4114 = vcmask 1040896
    %4115 = vst.msk [vmem:[#allocation5 + $0x8] sm:$0x1] %vm4114, %v4112
    %v4116 = vrot.slane %v4100, 2
    %4118 = vst.msk [vmem:[#allocation5 + $0x10] sm:$0x1] %vm4107, %v4116
    %v4119 = vrot.slane %v4100, 3
    %4120 = vrot.lane.b32.xlu0 %v4119, 64
    %v4121 = vpop.permute.xlu0 %4120
    %4123 = vst.msk [vmem:[#allocation5 + $0x10] sm:$0x1] %vm4114, %v4121
    %v4124 = vrot.slane %v4100, 4
    %4126 = vst.msk [vmem:[#allocation5 + $0x18] sm:$0x1] %vm4107, %v4124
    %v4127 = vrot.slane %v4100, 5
    %4128 = vrot.lane.b32.xlu0 %v4127, 64
    %v4129 = vpop.permute.xlu0 %4128
    %4131 = vst.msk [vmem:[#allocation5 + $0x18] sm:$0x1] %vm4114, %v4129
    %v4132 = vrot.slane %v4100, 6
    %4134 = vst.msk [vmem:[#allocation5 + $0x1] sm:$0x1] %vm4107, %v4132
    %v4135 = vrot.slane %v4100, 7
    %4136 = vrot.lane.b32.xlu0 %v4135, 64
    %v4137 = vpop.permute.xlu0 %4136
    %4139 = vst.msk [vmem:[#allocation5 + $0x1] sm:$0x1] %vm4114, %v4137
    %4140 = vst.msk [vmem:[#allocation5 + $0x9] sm:$0x1] %vm4107, %v4101
    %v4142 = vrot.slane %v4101, 1
    %4143 = vrot.lane.b32.xlu0 %v4142, 64
    %v4144 = vpop.permute.xlu0 %4143
    %4146 = vst.msk [vmem:[#allocation5 + $0x9] sm:$0x1] %vm4114, %v4144
    %v4147 = vrot.slane %v4101, 2
    %4149 = vst.msk [vmem:[#allocation5 + $0x11] sm:$0x1] %vm4107, %v4147
    %v4150 = vrot.slane %v4101, 3
    %4151 = vrot.lane.b32.xlu0 %v4150, 64
    %v4152 = vpop.permute.xlu0 %4151
    %4154 = vst.msk [vmem:[#allocation5 + $0x11] sm:$0x1] %vm4114, %v4152
    %v4155 = vrot.slane %v4101, 4
    %4157 = vst.msk [vmem:[#allocation5 + $0x19] sm:$0x1] %vm4107, %v4155
    %v4158 = vrot.slane %v4101, 5
    %4159 = vrot.lane.b32.xlu0 %v4158, 64
    %v4160 = vpop.permute.xlu0 %4159
    %4162 = vst.msk [vmem:[#allocation5 + $0x19] sm:$0x1] %vm4114, %v4160
    %v4163 = vrot.slane %v4101, 6
    %4165 = vst.msk [vmem:[#allocation5 + $0x2] sm:$0x1] %vm4107, %v4163
    %v4166 = vrot.slane %v4101, 7
    %4167 = vrot.lane.b32.xlu0 %v4166, 64
    %v4168 = vpop.permute.xlu0 %4167
    %4170 = vst.msk [vmem:[#allocation5 + $0x2] sm:$0x1] %vm4114, %v4168
    %4171 = vst.msk [vmem:[#allocation5 + $0xa] sm:$0x1] %vm4107, %v4102
    %v4173 = vrot.slane %v4102, 1
    %4174 = vrot.lane.b32.xlu0 %v4173, 64
    %v4175 = vpop.permute.xlu0 %4174
    %4177 = vst.msk [vmem:[#allocation5 + $0xa] sm:$0x1] %vm4114, %v4175
    %v4178 = vrot.slane %v4102, 2
    %4180 = vst.msk [vmem:[#allocation5 + $0x12] sm:$0x1] %vm4107, %v4178
    %v4181 = vrot.slane %v4102, 3
    %4182 = vrot.lane.b32.xlu0 %v4181, 64
    %v4183 = vpop.permute.xlu0 %4182
    %4185 = vst.msk [vmem:[#allocation5 + $0x12] sm:$0x1] %vm4114, %v4183
    %v4186 = vrot.slane %v4102, 4
    %4188 = vst.msk [vmem:[#allocation5 + $0x1a] sm:$0x1] %vm4107, %v4186
    %v4189 = vrot.slane %v4102, 5
    %4190 = vrot.lane.b32.xlu0 %v4189, 64
    %v4191 = vpop.permute.xlu0 %4190
    %4193 = vst.msk [vmem:[#allocation5 + $0x1a] sm:$0x1] %vm4114, %v4191
    %v4194 = vrot.slane %v4102, 6
    %4196 = vst.msk [vmem:[#allocation5 + $0x3] sm:$0x1] %vm4107, %v4194
    %v4197 = vrot.slane %v4102, 7
    %4198 = vrot.lane.b32.xlu0 %v4197, 64
    %v4199 = vpop.permute.xlu0 %4198
    %4201 = vst.msk [vmem:[#allocation5 + $0x3] sm:$0x1] %vm4114, %v4199
    %4202 = vst.msk [vmem:[#allocation5 + $0xb] sm:$0x1] %vm4107, %v4103
    %v4204 = vrot.slane %v4103, 1
    %4205 = vrot.lane.b32.xlu0 %v4204, 64
    %v4206 = vpop.permute.xlu0 %4205
    %4208 = vst.msk [vmem:[#allocation5 + $0xb] sm:$0x1] %vm4114, %v4206
    %v4209 = vrot.slane %v4103, 2
    %s4211 = scalar_lea.vmem [#allocation5], 32
    %4212 = vst.msk [vmem:[%s4211 + $0x8] sm:$0x1] %vm4107, %v4209
    %v4213 = vrot.slane %v4103, 3
    %4214 = vrot.lane.b32.xlu0 %v4213, 64
    %v4215 = vpop.permute.xlu0 %4214
    %4217 = vst.msk [vmem:[%s4211 + $0x8] sm:$0x1] %vm4114, %v4215
    %v4218 = vrot.slane %v4103, 4
    %4220 = vst.msk [vmem:[%s4211 + $0x10] sm:$0x1] %vm4107, %v4218
    %v4221 = vrot.slane %v4103, 5
    %4222 = vrot.lane.b32.xlu0 %v4221, 64
    %v4223 = vpop.permute.xlu0 %4222
    %4225 = vst.msk [vmem:[%s4211 + $0x10] sm:$0x1] %vm4114, %v4223
    %v4226 = vrot.slane %v4103, 6
    %4228 = vst.msk [vmem:[%s4211 + $0x18] sm:$0x1] %vm4107, %v4226
    %v4229 = vrot.slane %v4103, 7
    %4230 = vrot.lane.b32.xlu0 %v4229, 64
    %v4231 = vpop.permute.xlu0 %4230
    %4233 = vst.msk [vmem:[%s4211 + $0x18] sm:$0x1] %vm4114, %v4231
    %4234 = vst.msk [vmem:[%s4211 + $0x1] sm:$0x1] %vm4107, %v4104
    %v4236 = vrot.slane %v4104, 1
    %4237 = vrot.lane.b32.xlu0 %v4236, 64
    %v4238 = vpop.permute.xlu0 %4237
    %4240 = vst.msk [vmem:[%s4211 + $0x1] sm:$0x1] %vm4114, %v4238
    %v4241 = vrot.slane %v4104, 2
    %4243 = vst.msk [vmem:[%s4211 + $0x9] sm:$0x1] %vm4107, %v4241
    %v4244 = vrot.slane %v4104, 3
    %4245 = vrot.lane.b32.xlu0 %v4244, 64
    %v4246 = vpop.permute.xlu0 %4245
    %4248 = vst.msk [vmem:[%s4211 + $0x9] sm:$0x1] %vm4114, %v4246
    %v4249 = vrot.slane %v4104, 4
    %4251 = vst.msk [vmem:[%s4211 + $0x11] sm:$0x1] %vm4107, %v4249
    %v4252 = vrot.slane %v4104, 5
    %4253 = vrot.lane.b32.xlu0 %v4252, 64
    %v4254 = vpop.permute.xlu0 %4253
    %4256 = vst.msk [vmem:[%s4211 + $0x11] sm:$0x1] %vm4114, %v4254
    %v4257 = vrot.slane %v4104, 6
    %4259 = vst.msk [vmem:[%s4211 + $0x19] sm:$0x1] %vm4107, %v4257
    %v4260 = vrot.slane %v4104, 7
    %4261 = vrot.lane.b32.xlu0 %v4260, 64
    %v4262 = vpop.permute.xlu0 %4261
    %4264 = vst.msk [vmem:[%s4211 + $0x19] sm:$0x1] %vm4114, %v4262
    %4265 = vst.msk [vmem:[%s4211 + $0x2] sm:$0x1] %vm4107, %v4105
    %v4267 = vrot.slane %v4105, 1
    %4268 = vrot.lane.b32.xlu0 %v4267, 64
    %v4269 = vpop.permute.xlu0 %4268
    %4271 = vst.msk [vmem:[%s4211 + $0x2] sm:$0x1] %vm4114, %v4269
    %v4272 = vrot.slane %v4105, 2
    %4274 = vst.msk [vmem:[%s4211 + $0xa] sm:$0x1] %vm4107, %v4272
    %v4275 = vrot.slane %v4105, 3
    %4276 = vrot.lane.b32.xlu0 %v4275, 64
    %v4277 = vpop.permute.xlu0 %4276
    %4279 = vst.msk [vmem:[%s4211 + $0xa] sm:$0x1] %vm4114, %v4277
    %v4280 = vrot.slane %v4105, 4
    %4282 = vst.msk [vmem:[%s4211 + $0x12] sm:$0x1] %vm4107, %v4280
    %v4283 = vrot.slane %v4105, 5
    %4284 = vrot.lane.b32.xlu0 %v4283, 64
    %v4285 = vpop.permute.xlu0 %4284
    %4287 = vst.msk [vmem:[%s4211 + $0x12] sm:$0x1] %vm4114, %v4285
    %v4288 = vrot.slane %v4105, 6
    %4290 = vst.msk [vmem:[%s4211 + $0x1a] sm:$0x1] %vm4107, %v4288
    %v4291 = vrot.slane %v4105, 7
    %4292 = vrot.lane.b32.xlu0 %v4291, 64
    %v4293 = vpop.permute.xlu0 %4292
    %4295 = vst.msk [vmem:[%s4211 + $0x1a] sm:$0x1] %vm4114, %v4293
    %4296 = vst.msk [vmem:[%s4211 + $0x3] sm:$0x1] %vm4107, %v4106
    %v4298 = vrot.slane %v4106, 1
    %4299 = vrot.lane.b32.xlu0 %v4298, 64
    %v4300 = vpop.permute.xlu0 %4299
    %4302 = vst.msk [vmem:[%s4211 + $0x3] sm:$0x1] %vm4114, %v4300
    %v4303 = vrot.slane %v4106, 2
    %4305 = vst.msk [vmem:[%s4211 + $0xb] sm:$0x1] %vm4107, %v4303
    %v4306 = vrot.slane %v4106, 3
    %4307 = vrot.lane.b32.xlu0 %v4306, 64
    %v4308 = vpop.permute.xlu0 %4307
    %4310 = vst.msk [vmem:[%s4211 + $0xb] sm:$0x1] %vm4114, %v4308
    %v4311 = vld [vmem:[#allocation5] sm:$0xf]
    %v4312 = vld [vmem:[#allocation5 + $0x8] sm:$0xf]
    %v4313 = vld [vmem:[#allocation5 + $0x10] sm:$0xf]
    %v4314 = vld [vmem:[#allocation5 + $0x18] sm:$0xf]
    %v4315 = vld [vmem:[#allocation5] sm:$0x1e]
    %v4316 = vld [vmem:[#allocation5 + $0x8] sm:$0x1e]
    %v4317 = vld [vmem:[#allocation5 + $0x10] sm:$0x1e]
    %v4318 = vld [vmem:[#allocation5 + $0x18] sm:$0x1e]
    %v4323 = vrot.slane %v4315, 1
    %v4324 = vrot.slane %v4316, 1
    %v4325 = vrot.slane %v4317, 1
    %v4326 = vrot.slane %v4318, 1
    %v4331 = vld [vmem:[%s4211] sm:$0xf]
    %v4332 = vld [vmem:[%s4211 + $0x8] sm:$0xf]
    %v4333 = vld [vmem:[%s4211 + $0x10] sm:$0xf]
    %v4334 = vld [vmem:[%s4211 + $0x18] sm:$0xf]
    %v4335 = vld [vmem:[%s4211] sm:$0x1e]
    %v4336 = vld [vmem:[%s4211 + $0x8] sm:$0x1e]
    %v4337 = vld [vmem:[%s4211 + $0x10] sm:$0x1e]
    %v4338 = vld [vmem:[%s4211 + $0x18] sm:$0x1e]
    %v4343 = vrot.slane %v4335, 1
    %v4344 = vrot.slane %v4336, 1
    %v4345 = vrot.slane %v4337, 1
    %v4346 = vrot.slane %v4338, 1
    %v4351 = vrot.slane %v4331, 4
    %v4352 = vrot.slane %v4332, 4
    %v4353 = vrot.slane %v4333, 4
    %v4354 = vrot.slane %v4334, 4
    %v4355 = vrot.slane %v4343, 4
    %v4356 = vrot.slane %v4344, 4
    %v4357 = vrot.slane %v4345, 4
    %v4358 = vrot.slane %v4346, 4
    %v4367 = vsel %vm1687, %v4311, %v4351
    %v4368 = vsel %vm1687, %v4312, %v4352
    %v4369 = vsel %vm1687, %v4313, %v4353
    %v4370 = vsel %vm1687, %v4314, %v4354
    %v4371 = vsel %vm1687, %v4323, %v4355
    %v4372 = vsel %vm1687, %v4324, %v4356
    %v4373 = vsel %vm1687, %v4325, %v4357
    %v4374 = vsel %vm1687, %v4326, %v4358
    %v4375 = vpack.c.bf16 %v4367, %v4367
    %v4376 = vpack.c.bf16 %v4368, %v4368
    %v4377 = vpack.c.bf16 %v4369, %v4369
    %v4378 = vpack.c.bf16 %v4370, %v4370
    %v4379 = vpack.c.bf16 %v4371, %v4371
    %v4380 = vpack.c.bf16 %v4372, %v4372
    %v4381 = vpack.c.bf16 %v4373, %v4373
    %v4382 = vpack.c.bf16 %v4374, %v4374
    %v4383 = vld [vmem:[#allocation13] sm:$0xff]
    %v4384 = vld [vmem:[#allocation13 + $0x8] sm:$0xff]
    %v4385 = vld [vmem:[#allocation13 + $0x10] sm:$0xff]
    %v4386 = vld [vmem:[#allocation13 + $0x18] sm:$0xff]
    %v4387 = vld [vmem:[#allocation13 + $0x20] sm:$0xff]
    %v4388 = vld [vmem:[#allocation13 + $0x28] sm:$0xff]
    %v4389 = vld [vmem:[#allocation13 + $0x30] sm:$0xff]
    %v4390 = vld [vmem:[#allocation13 + $0x38] sm:$0xff]
    %v4391 = vld [vmem:[#allocation13 + $0x40] sm:$0xff]
    %v4392 = vld [vmem:[#allocation13 + $0x48] sm:$0xff]
    %v4393 = vld [vmem:[#allocation13 + $0x50] sm:$0xff]
    %v4394 = vld [vmem:[#allocation13 + $0x58] sm:$0xff]
    %v4395 = vld [vmem:[#allocation13 + $0x60] sm:$0xff]
    %v4396 = vld [vmem:[#allocation13 + $0x68] sm:$0xff]
    %v4397 = vld [vmem:[#allocation13 + $0x70] sm:$0xff]
    %v4398 = vld [vmem:[#allocation13 + $0x78] sm:$0xff]
    %v4399 = vld [vmem:[#allocation13 + $0x80] sm:$0xff]
    %v4400 = vld [vmem:[#allocation13 + $0x88] sm:$0xff]
    %v4401 = vld [vmem:[#allocation13 + $0x90] sm:$0xff]
    %v4402 = vld [vmem:[#allocation13 + $0x98] sm:$0xff]
    %v4403 = vld [vmem:[#allocation13 + $0xa0] sm:$0xff]
    %v4404 = vld [vmem:[#allocation13 + $0xa8] sm:$0xff]
    %v4405 = vld [vmem:[#allocation13 + $0xb0] sm:$0xff]
    %v4406 = vld [vmem:[#allocation13 + $0xb8] sm:$0xff]
    %v4407 = vld [vmem:[#allocation13 + $0xc0] sm:$0xff]
    %v4408 = vld [vmem:[#allocation13 + $0xc8] sm:$0xff]
    %v4409 = vld [vmem:[#allocation13 + $0xd0] sm:$0xff]
    %v4410 = vld [vmem:[#allocation13 + $0xd8] sm:$0xff]
    %v4411 = vld [vmem:[#allocation13 + $0xe0] sm:$0xff]
    %v4412 = vld [vmem:[#allocation13 + $0xe8] sm:$0xff]
    %v4413 = vld [vmem:[#allocation13 + $0xf0] sm:$0xff]
    %v4414 = vld [vmem:[#allocation13 + $0xf8] sm:$0xff]
    %v4415 = vld [vmem:[#allocation13 + $0x100] sm:$0xff]
    %v4416 = vld [vmem:[#allocation13 + $0x108] sm:$0xff]
    %v4417 = vld [vmem:[#allocation13 + $0x110] sm:$0xff]
    %v4418 = vld [vmem:[#allocation13 + $0x118] sm:$0xff]
    %v4419 = vld [vmem:[#allocation13 + $0x120] sm:$0xff]
    %v4420 = vld [vmem:[#allocation13 + $0x128] sm:$0xff]
    %v4421 = vld [vmem:[#allocation13 + $0x130] sm:$0xff]
    %v4422 = vld [vmem:[#allocation13 + $0x138] sm:$0xff]
    %v4423 = vld [vmem:[#allocation13 + $0x140] sm:$0xff]
    %v4424 = vld [vmem:[#allocation13 + $0x148] sm:$0xff]
    %v4425 = vld [vmem:[#allocation13 + $0x150] sm:$0xff]
    %v4426 = vld [vmem:[#allocation13 + $0x158] sm:$0xff]
    %v4427 = vld [vmem:[#allocation13 + $0x160] sm:$0xff]
    %v4428 = vld [vmem:[#allocation13 + $0x168] sm:$0xff]
    %v4429 = vld [vmem:[#allocation13 + $0x170] sm:$0xff]
    %v4430 = vld [vmem:[#allocation13 + $0x178] sm:$0xff]
    %v4431 = vld [vmem:[#allocation13 + $0x180] sm:$0xff]
    %v4432 = vld [vmem:[#allocation13 + $0x188] sm:$0xff]
    %v4433 = vld [vmem:[#allocation13 + $0x190] sm:$0xff]
    %v4434 = vld [vmem:[#allocation13 + $0x198] sm:$0xff]
    %v4435 = vld [vmem:[#allocation13 + $0x1a0] sm:$0xff]
    %v4436 = vld [vmem:[#allocation13 + $0x1a8] sm:$0xff]
    %v4437 = vld [vmem:[#allocation13 + $0x1b0] sm:$0xff]
    %v4438 = vld [vmem:[#allocation13 + $0x1b8] sm:$0xff]
    %v4439 = vld [vmem:[#allocation13 + $0x1c0] sm:$0xff]
    %v4440 = vld [vmem:[#allocation13 + $0x1c8] sm:$0xff]
    %v4441 = vld [vmem:[#allocation13 + $0x1d0] sm:$0xff]
    %v4442 = vld [vmem:[#allocation13 + $0x1d8] sm:$0xff]
    %v4443 = vld [vmem:[#allocation13 + $0x1e0] sm:$0xff]
    %v4444 = vld [vmem:[#allocation13 + $0x1e8] sm:$0xff]
    %v4445 = vld [vmem:[#allocation13 + $0x1f0] sm:$0xff]
    %v4446 = vld [vmem:[#allocation13 + $0x1f8] sm:$0xff]
    %v4447 = vld [vmem:[#allocation13 + $0x200] sm:$0xff]
    %v4448 = vld [vmem:[#allocation13 + $0x208] sm:$0xff]
    %v4449 = vld [vmem:[#allocation13 + $0x210] sm:$0xff]
    %v4450 = vld [vmem:[#allocation13 + $0x218] sm:$0xff]
    %v4451 = vld [vmem:[#allocation13 + $0x220] sm:$0xff]
    %v4452 = vld [vmem:[#allocation13 + $0x228] sm:$0xff]
    %v4453 = vld [vmem:[#allocation13 + $0x230] sm:$0xff]
    %v4454 = vld [vmem:[#allocation13 + $0x238] sm:$0xff]
    %v4455 = vld [vmem:[#allocation13 + $0x240] sm:$0xff]
    %v4456 = vld [vmem:[#allocation13 + $0x248] sm:$0xff]
    %v4457 = vld [vmem:[#allocation13 + $0x250] sm:$0xff]
    %v4458 = vld [vmem:[#allocation13 + $0x258] sm:$0xff]
    %v4459 = vld [vmem:[#allocation13 + $0x260] sm:$0xff]
    %v4460 = vld [vmem:[#allocation13 + $0x268] sm:$0xff]
    %v4461 = vld [vmem:[#allocation13 + $0x270] sm:$0xff]
    %v4462 = vld [vmem:[#allocation13 + $0x278] sm:$0xff]
    %v4463 = vld [vmem:[#allocation13 + $0x280] sm:$0xff]
    %v4464 = vld [vmem:[#allocation13 + $0x288] sm:$0xff]
    %v4465 = vld [vmem:[#allocation13 + $0x290] sm:$0xff]
    %v4466 = vld [vmem:[#allocation13 + $0x298] sm:$0xff]
    %v4467 = vld [vmem:[#allocation13 + $0x2a0] sm:$0xff]
    %v4468 = vld [vmem:[#allocation13 + $0x2a8] sm:$0xff]
    %v4469 = vld [vmem:[#allocation13 + $0x2b0] sm:$0xff]
    %v4470 = vld [vmem:[#allocation13 + $0x2b8] sm:$0xff]
    %v4471 = vld [vmem:[#allocation13 + $0x2c0] sm:$0xff]
    %v4472 = vld [vmem:[#allocation13 + $0x2c8] sm:$0xff]
    %v4473 = vld [vmem:[#allocation13 + $0x2d0] sm:$0xff]
    %v4474 = vld [vmem:[#allocation13 + $0x2d8] sm:$0xff]
    %v4475 = vld [vmem:[#allocation13 + $0x2e0] sm:$0xff]
    %v4476 = vld [vmem:[#allocation13 + $0x2e8] sm:$0xff]
    %v4477 = vld [vmem:[#allocation13 + $0x2f0] sm:$0xff]
    %v4478 = vld [vmem:[#allocation13 + $0x2f8] sm:$0xff]
    %v4479 = vld [vmem:[#allocation13 + $0x300] sm:$0xff]
    %v4480 = vld [vmem:[#allocation13 + $0x308] sm:$0xff]
    %v4481 = vld [vmem:[#allocation13 + $0x310] sm:$0xff]
    %v4482 = vld [vmem:[#allocation13 + $0x318] sm:$0xff]
    %v4483 = vld [vmem:[#allocation13 + $0x320] sm:$0xff]
    %v4484 = vld [vmem:[#allocation13 + $0x328] sm:$0xff]
    %v4485 = vld [vmem:[#allocation13 + $0x330] sm:$0xff]
    %v4486 = vld [vmem:[#allocation13 + $0x338] sm:$0xff]
    %v4487 = vld [vmem:[#allocation13 + $0x340] sm:$0xff]
    %v4488 = vld [vmem:[#allocation13 + $0x348] sm:$0xff]
    %v4489 = vld [vmem:[#allocation13 + $0x350] sm:$0xff]
    %v4490 = vld [vmem:[#allocation13 + $0x358] sm:$0xff]
    %v4491 = vld [vmem:[#allocation13 + $0x360] sm:$0xff]
    %v4492 = vld [vmem:[#allocation13 + $0x368] sm:$0xff]
    %v4493 = vld [vmem:[#allocation13 + $0x370] sm:$0xff]
    %v4494 = vld [vmem:[#allocation13 + $0x378] sm:$0xff]
    %v4495 = vld [vmem:[#allocation13 + $0x380] sm:$0xff]
    %v4496 = vld [vmem:[#allocation13 + $0x388] sm:$0xff]
    %v4497 = vld [vmem:[#allocation13 + $0x390] sm:$0xff]
    %v4498 = vld [vmem:[#allocation13 + $0x398] sm:$0xff]
    %v4499 = vld [vmem:[#allocation13 + $0x3a0] sm:$0xff]
    %v4500 = vld [vmem:[#allocation13 + $0x3a8] sm:$0xff]
    %v4501 = vld [vmem:[#allocation13 + $0x3b0] sm:$0xff]
    %v4502 = vld [vmem:[#allocation13 + $0x3b8] sm:$0xff]
    %v4503 = vld [vmem:[#allocation13 + $0x3c0] sm:$0xff]
    %v4504 = vld [vmem:[#allocation13 + $0x3c8] sm:$0xff]
    %v4505 = vld [vmem:[#allocation13 + $0x3d0] sm:$0xff]
    %v4506 = vld [vmem:[#allocation13 + $0x3d8] sm:$0xff]
    %v4507 = vld [vmem:[#allocation13 + $0x3e0] sm:$0xff]
    %v4508 = vld [vmem:[#allocation13 + $0x3e8] sm:$0xff]
    %v4509 = vld [vmem:[#allocation13 + $0x3f0] sm:$0xff]
    %v4510 = vld [vmem:[#allocation13 + $0x3f8] sm:$0xff]
    %v4511 = vld [vmem:[#allocation13 + $0x400] sm:$0xff]
    %v4512 = vld [vmem:[#allocation13 + $0x408] sm:$0xff]
    %v4513 = vld [vmem:[#allocation13 + $0x410] sm:$0xff]
    %v4514 = vld [vmem:[#allocation13 + $0x418] sm:$0xff]
    %v4515 = vld [vmem:[#allocation13 + $0x420] sm:$0xff]
    %v4516 = vld [vmem:[#allocation13 + $0x428] sm:$0xff]
    %v4517 = vld [vmem:[#allocation13 + $0x430] sm:$0xff]
    %v4518 = vld [vmem:[#allocation13 + $0x438] sm:$0xff]
    %v4519 = vld [vmem:[#allocation13 + $0x440] sm:$0xff]
    %v4520 = vld [vmem:[#allocation13 + $0x448] sm:$0xff]
    %v4521 = vld [vmem:[#allocation13 + $0x450] sm:$0xff]
    %v4522 = vld [vmem:[#allocation13 + $0x458] sm:$0xff]
    %v4523 = vld [vmem:[#allocation13 + $0x460] sm:$0xff]
    %v4524 = vld [vmem:[#allocation13 + $0x468] sm:$0xff]
    %v4525 = vld [vmem:[#allocation13 + $0x470] sm:$0xff]
    %v4526 = vld [vmem:[#allocation13 + $0x478] sm:$0xff]
    %v4527 = vld [vmem:[#allocation13 + $0x480] sm:$0xff]
    %v4528 = vld [vmem:[#allocation13 + $0x488] sm:$0xff]
    %v4529 = vld [vmem:[#allocation13 + $0x490] sm:$0xff]
    %v4530 = vld [vmem:[#allocation13 + $0x498] sm:$0xff]
    %v4531 = vld [vmem:[#allocation13 + $0x4a0] sm:$0xff]
    %v4532 = vld [vmem:[#allocation13 + $0x4a8] sm:$0xff]
    %v4533 = vld [vmem:[#allocation13 + $0x4b0] sm:$0xff]
    %v4534 = vld [vmem:[#allocation13 + $0x4b8] sm:$0xff]
    %v4535 = vld [vmem:[#allocation13 + $0x4c0] sm:$0xff]
    %v4536 = vld [vmem:[#allocation13 + $0x4c8] sm:$0xff]
    %v4537 = vld [vmem:[#allocation13 + $0x4d0] sm:$0xff]
    %v4538 = vld [vmem:[#allocation13 + $0x4d8] sm:$0xff]
    %v4539 = vld [vmem:[#allocation13 + $0x4e0] sm:$0xff]
    %v4540 = vld [vmem:[#allocation13 + $0x4e8] sm:$0xff]
    %v4541 = vld [vmem:[#allocation13 + $0x4f0] sm:$0xff]
    %v4542 = vld [vmem:[#allocation13 + $0x4f8] sm:$0xff]
    %v4543 = vld [vmem:[#allocation13 + $0x500] sm:$0xff]
    %v4544 = vld [vmem:[#allocation13 + $0x508] sm:$0xff]
    %v4545 = vld [vmem:[#allocation13 + $0x510] sm:$0xff]
    %v4546 = vld [vmem:[#allocation13 + $0x518] sm:$0xff]
    %v4547 = vld [vmem:[#allocation13 + $0x520] sm:$0xff]
    %v4548 = vld [vmem:[#allocation13 + $0x528] sm:$0xff]
    %v4549 = vld [vmem:[#allocation13 + $0x530] sm:$0xff]
    %v4550 = vld [vmem:[#allocation13 + $0x538] sm:$0xff]
    %v4551 = vld [vmem:[#allocation13 + $0x540] sm:$0xff]
    %v4552 = vld [vmem:[#allocation13 + $0x548] sm:$0xff]
    %v4553 = vld [vmem:[#allocation13 + $0x550] sm:$0xff]
    %v4554 = vld [vmem:[#allocation13 + $0x558] sm:$0xff]
    %v4555 = vld [vmem:[#allocation13 + $0x560] sm:$0xff]
    %v4556 = vld [vmem:[#allocation13 + $0x568] sm:$0xff]
    %v4557 = vld [vmem:[#allocation13 + $0x570] sm:$0xff]
    %v4558 = vld [vmem:[#allocation13 + $0x578] sm:$0xff]
    %v4559 = vld [vmem:[#allocation13 + $0x580] sm:$0xff]
    %v4560 = vld [vmem:[#allocation13 + $0x588] sm:$0xff]
    %v4561 = vld [vmem:[#allocation13 + $0x590] sm:$0xff]
    %v4562 = vld [vmem:[#allocation13 + $0x598] sm:$0xff]
    %v4563 = vld [vmem:[#allocation13 + $0x5a0] sm:$0xff]
    %v4564 = vld [vmem:[#allocation13 + $0x5a8] sm:$0xff]
    %v4565 = vld [vmem:[#allocation13 + $0x5b0] sm:$0xff]
    %v4566 = vld [vmem:[#allocation13 + $0x5b8] sm:$0xff]
    %v4567 = vld [vmem:[#allocation13 + $0x5c0] sm:$0xff]
    %v4568 = vld [vmem:[#allocation13 + $0x5c8] sm:$0xff]
    %v4569 = vld [vmem:[#allocation13 + $0x5d0] sm:$0xff]
    %v4570 = vld [vmem:[#allocation13 + $0x5d8] sm:$0xff]
    %v4571 = vld [vmem:[#allocation13 + $0x5e0] sm:$0xff]
    %v4572 = vld [vmem:[#allocation13 + $0x5e8] sm:$0xff]
    %v4573 = vld [vmem:[#allocation13 + $0x5f0] sm:$0xff]
    %v4574 = vld [vmem:[#allocation13 + $0x5f8] sm:$0xff]
    %v4575 = vld [vmem:[#allocation13 + $0x600] sm:$0xff]
    %v4576 = vld [vmem:[#allocation13 + $0x608] sm:$0xff]
    %v4577 = vld [vmem:[#allocation13 + $0x610] sm:$0xff]
    %v4578 = vld [vmem:[#allocation13 + $0x618] sm:$0xff]
    %v4579 = vld [vmem:[#allocation13 + $0x620] sm:$0xff]
    %v4580 = vld [vmem:[#allocation13 + $0x628] sm:$0xff]
    %v4581 = vld [vmem:[#allocation13 + $0x630] sm:$0xff]
    %v4582 = vld [vmem:[#allocation13 + $0x638] sm:$0xff]
    %v4583 = vld [vmem:[#allocation13 + $0x640] sm:$0xff]
    %v4584 = vld [vmem:[#allocation13 + $0x648] sm:$0xff]
    %v4585 = vld [vmem:[#allocation13 + $0x650] sm:$0xff]
    %v4586 = vld [vmem:[#allocation13 + $0x658] sm:$0xff]
    %v4587 = vld [vmem:[#allocation13 + $0x660] sm:$0xff]
    %v4588 = vld [vmem:[#allocation13 + $0x668] sm:$0xff]
    %v4589 = vld [vmem:[#allocation13 + $0x670] sm:$0xff]
    %v4590 = vld [vmem:[#allocation13 + $0x678] sm:$0xff]
    %v4591 = vld [vmem:[#allocation13 + $0x680] sm:$0xff]
    %v4592 = vld [vmem:[#allocation13 + $0x688] sm:$0xff]
    %v4593 = vld [vmem:[#allocation13 + $0x690] sm:$0xff]
    %v4594 = vld [vmem:[#allocation13 + $0x698] sm:$0xff]
    %v4595 = vld [vmem:[#allocation13 + $0x6a0] sm:$0xff]
    %v4596 = vld [vmem:[#allocation13 + $0x6a8] sm:$0xff]
    %v4597 = vld [vmem:[#allocation13 + $0x6b0] sm:$0xff]
    %v4598 = vld [vmem:[#allocation13 + $0x6b8] sm:$0xff]
    %v4599 = vld [vmem:[#allocation13 + $0x6c0] sm:$0xff]
    %v4600 = vld [vmem:[#allocation13 + $0x6c8] sm:$0xff]
    %v4601 = vld [vmem:[#allocation13 + $0x6d0] sm:$0xff]
    %v4602 = vld [vmem:[#allocation13 + $0x6d8] sm:$0xff]
    %v4603 = vld [vmem:[#allocation13 + $0x6e0] sm:$0xff]
    %v4604 = vld [vmem:[#allocation13 + $0x6e8] sm:$0xff]
    %v4605 = vld [vmem:[#allocation13 + $0x6f0] sm:$0xff]
    %v4606 = vld [vmem:[#allocation13 + $0x6f8] sm:$0xff]
    %v4607 = vld [vmem:[#allocation13 + $0x700] sm:$0xff]
    %v4608 = vld [vmem:[#allocation13 + $0x708] sm:$0xff]
    %v4609 = vld [vmem:[#allocation13 + $0x710] sm:$0xff]
    %v4610 = vld [vmem:[#allocation13 + $0x718] sm:$0xff]
    %v4611 = vld [vmem:[#allocation13 + $0x720] sm:$0xff]
    %v4612 = vld [vmem:[#allocation13 + $0x728] sm:$0xff]
    %v4613 = vld [vmem:[#allocation13 + $0x730] sm:$0xff]
    %v4614 = vld [vmem:[#allocation13 + $0x738] sm:$0xff]
    %v4615 = vld [vmem:[#allocation13 + $0x740] sm:$0xff]
    %v4616 = vld [vmem:[#allocation13 + $0x748] sm:$0xff]
    %v4617 = vld [vmem:[#allocation13 + $0x750] sm:$0xff]
    %v4618 = vld [vmem:[#allocation13 + $0x758] sm:$0xff]
    %v4619 = vld [vmem:[#allocation13 + $0x760] sm:$0xff]
    %v4620 = vld [vmem:[#allocation13 + $0x768] sm:$0xff]
    %v4621 = vld [vmem:[#allocation13 + $0x770] sm:$0xff]
    %v4622 = vld [vmem:[#allocation13 + $0x778] sm:$0xff]
    %v4623 = vld [vmem:[#allocation13 + $0x780] sm:$0xff]
    %v4624 = vld [vmem:[#allocation13 + $0x788] sm:$0xff]
    %v4625 = vld [vmem:[#allocation13 + $0x790] sm:$0xff]
    %v4626 = vld [vmem:[#allocation13 + $0x798] sm:$0xff]
    %v4627 = vld [vmem:[#allocation13 + $0x7a0] sm:$0xff]
    %v4628 = vld [vmem:[#allocation13 + $0x7a8] sm:$0xff]
    %v4629 = vld [vmem:[#allocation13 + $0x7b0] sm:$0xff]
    %v4630 = vld [vmem:[#allocation13 + $0x7b8] sm:$0xff]
    %v4631 = vld [vmem:[#allocation13 + $0x7c0] sm:$0xff]
    %v4632 = vld [vmem:[#allocation13 + $0x7c8] sm:$0xff]
    %v4633 = vld [vmem:[#allocation13 + $0x7d0] sm:$0xff]
    %v4634 = vld [vmem:[#allocation13 + $0x7d8] sm:$0xff]
    %v4635 = vld [vmem:[#allocation13 + $0x7e0] sm:$0xff]
    %v4636 = vld [vmem:[#allocation13 + $0x7e8] sm:$0xff]
    %v4637 = vld [vmem:[#allocation13 + $0x7f0] sm:$0xff]
    %v4638 = vld [vmem:[#allocation13 + $0x7f8] sm:$0xff]
    %v4895 = vunpack.c.l.b16 %v4383
    %v4896 = vunpack.c.h.b16 %v4383
    %v4897 = vunpack.c.l.b16 %v4384
    %v4898 = vunpack.c.h.b16 %v4384
    %v4899 = vunpack.c.l.b16 %v4385
    %v4900 = vunpack.c.h.b16 %v4385
    %v4901 = vunpack.c.l.b16 %v4386
    %v4902 = vunpack.c.h.b16 %v4386
    %v4903 = vunpack.c.l.b16 %v4387
    %v4904 = vunpack.c.h.b16 %v4387
    %v4905 = vunpack.c.l.b16 %v4388
    %v4906 = vunpack.c.h.b16 %v4388
    %v4907 = vunpack.c.l.b16 %v4389
    %v4908 = vunpack.c.h.b16 %v4389
    %v4909 = vunpack.c.l.b16 %v4390
    %v4910 = vunpack.c.h.b16 %v4390
    %v4911 = vunpack.c.l.b16 %v4391
    %v4912 = vunpack.c.h.b16 %v4391
    %v4913 = vunpack.c.l.b16 %v4392
    %v4914 = vunpack.c.h.b16 %v4392
    %v4915 = vunpack.c.l.b16 %v4393
    %v4916 = vunpack.c.h.b16 %v4393
    %v4917 = vunpack.c.l.b16 %v4394
    %v4918 = vunpack.c.h.b16 %v4394
    %v4919 = vunpack.c.l.b16 %v4395
    %v4920 = vunpack.c.h.b16 %v4395
    %v4921 = vunpack.c.l.b16 %v4396
    %v4922 = vunpack.c.h.b16 %v4396
    %v4923 = vunpack.c.l.b16 %v4397
    %v4924 = vunpack.c.h.b16 %v4397
    %v4925 = vunpack.c.l.b16 %v4398
    %v4926 = vunpack.c.h.b16 %v4398
    %v4927 = vunpack.c.l.b16 %v4399
    %v4928 = vunpack.c.h.b16 %v4399
    %v4929 = vunpack.c.l.b16 %v4400
    %v4930 = vunpack.c.h.b16 %v4400
    %v4931 = vunpack.c.l.b16 %v4401
    %v4932 = vunpack.c.h.b16 %v4401
    %v4933 = vunpack.c.l.b16 %v4402
    %v4934 = vunpack.c.h.b16 %v4402
    %v4935 = vunpack.c.l.b16 %v4403
    %v4936 = vunpack.c.h.b16 %v4403
    %v4937 = vunpack.c.l.b16 %v4404
    %v4938 = vunpack.c.h.b16 %v4404
    %v4939 = vunpack.c.l.b16 %v4405
    %v4940 = vunpack.c.h.b16 %v4405
    %v4941 = vunpack.c.l.b16 %v4406
    %v4942 = vunpack.c.h.b16 %v4406
    %v4943 = vunpack.c.l.b16 %v4407
    %v4944 = vunpack.c.h.b16 %v4407
    %v4945 = vunpack.c.l.b16 %v4408
    %v4946 = vunpack.c.h.b16 %v4408
    %v4947 = vunpack.c.l.b16 %v4409
    %v4948 = vunpack.c.h.b16 %v4409
    %v4949 = vunpack.c.l.b16 %v4410
    %v4950 = vunpack.c.h.b16 %v4410
    %v4951 = vunpack.c.l.b16 %v4411
    %v4952 = vunpack.c.h.b16 %v4411
    %v4953 = vunpack.c.l.b16 %v4412
    %v4954 = vunpack.c.h.b16 %v4412
    %v4955 = vunpack.c.l.b16 %v4413
    %v4956 = vunpack.c.h.b16 %v4413
    %v4957 = vunpack.c.l.b16 %v4414
    %v4958 = vunpack.c.h.b16 %v4414
    %v4959 = vunpack.c.l.b16 %v4415
    %v4960 = vunpack.c.h.b16 %v4415
    %v4961 = vunpack.c.l.b16 %v4416
    %v4962 = vunpack.c.h.b16 %v4416
    %v4963 = vunpack.c.l.b16 %v4417
    %v4964 = vunpack.c.h.b16 %v4417
    %v4965 = vunpack.c.l.b16 %v4418
    %v4966 = vunpack.c.h.b16 %v4418
    %v4967 = vunpack.c.l.b16 %v4419
    %v4968 = vunpack.c.h.b16 %v4419
    %v4969 = vunpack.c.l.b16 %v4420
    %v4970 = vunpack.c.h.b16 %v4420
    %v4971 = vunpack.c.l.b16 %v4421
    %v4972 = vunpack.c.h.b16 %v4421
    %v4973 = vunpack.c.l.b16 %v4422
    %v4974 = vunpack.c.h.b16 %v4422
    %v4975 = vunpack.c.l.b16 %v4423
    %v4976 = vunpack.c.h.b16 %v4423
    %v4977 = vunpack.c.l.b16 %v4424
    %v4978 = vunpack.c.h.b16 %v4424
    %v4979 = vunpack.c.l.b16 %v4425
    %v4980 = vunpack.c.h.b16 %v4425
    %v4981 = vunpack.c.l.b16 %v4426
    %v4982 = vunpack.c.h.b16 %v4426
    %v4983 = vunpack.c.l.b16 %v4427
    %v4984 = vunpack.c.h.b16 %v4427
    %v4985 = vunpack.c.l.b16 %v4428
    %v4986 = vunpack.c.h.b16 %v4428
    %v4987 = vunpack.c.l.b16 %v4429
    %v4988 = vunpack.c.h.b16 %v4429
    %v4989 = vunpack.c.l.b16 %v4430
    %v4990 = vunpack.c.h.b16 %v4430
    %v4991 = vunpack.c.l.b16 %v4431
    %v4992 = vunpack.c.h.b16 %v4431
    %v4993 = vunpack.c.l.b16 %v4432
    %v4994 = vunpack.c.h.b16 %v4432
    %v4995 = vunpack.c.l.b16 %v4433
    %v4996 = vunpack.c.h.b16 %v4433
    %v4997 = vunpack.c.l.b16 %v4434
    %v4998 = vunpack.c.h.b16 %v4434
    %v4999 = vunpack.c.l.b16 %v4435
    %v5000 = vunpack.c.h.b16 %v4435
    %v5001 = vunpack.c.l.b16 %v4436
    %v5002 = vunpack.c.h.b16 %v4436
    %v5003 = vunpack.c.l.b16 %v4437
    %v5004 = vunpack.c.h.b16 %v4437
    %v5005 = vunpack.c.l.b16 %v4438
    %v5006 = vunpack.c.h.b16 %v4438
    %v5007 = vunpack.c.l.b16 %v4439
    %v5008 = vunpack.c.h.b16 %v4439
    %v5009 = vunpack.c.l.b16 %v4440
    %v5010 = vunpack.c.h.b16 %v4440
    %v5011 = vunpack.c.l.b16 %v4441
    %v5012 = vunpack.c.h.b16 %v4441
    %v5013 = vunpack.c.l.b16 %v4442
    %v5014 = vunpack.c.h.b16 %v4442
    %v5015 = vunpack.c.l.b16 %v4443
    %v5016 = vunpack.c.h.b16 %v4443
    %v5017 = vunpack.c.l.b16 %v4444
    %v5018 = vunpack.c.h.b16 %v4444
    %v5019 = vunpack.c.l.b16 %v4445
    %v5020 = vunpack.c.h.b16 %v4445
    %v5021 = vunpack.c.l.b16 %v4446
    %v5022 = vunpack.c.h.b16 %v4446
    %v5023 = vunpack.c.l.b16 %v4447
    %v5024 = vunpack.c.h.b16 %v4447
    %v5025 = vunpack.c.l.b16 %v4448
    %v5026 = vunpack.c.h.b16 %v4448
    %v5027 = vunpack.c.l.b16 %v4449
    %v5028 = vunpack.c.h.b16 %v4449
    %v5029 = vunpack.c.l.b16 %v4450
    %v5030 = vunpack.c.h.b16 %v4450
    %v5031 = vunpack.c.l.b16 %v4451
    %v5032 = vunpack.c.h.b16 %v4451
    %v5033 = vunpack.c.l.b16 %v4452
    %v5034 = vunpack.c.h.b16 %v4452
    %v5035 = vunpack.c.l.b16 %v4453
    %v5036 = vunpack.c.h.b16 %v4453
    %v5037 = vunpack.c.l.b16 %v4454
    %v5038 = vunpack.c.h.b16 %v4454
    %v5039 = vunpack.c.l.b16 %v4455
    %v5040 = vunpack.c.h.b16 %v4455
    %v5041 = vunpack.c.l.b16 %v4456
    %v5042 = vunpack.c.h.b16 %v4456
    %v5043 = vunpack.c.l.b16 %v4457
    %v5044 = vunpack.c.h.b16 %v4457
    %v5045 = vunpack.c.l.b16 %v4458
    %v5046 = vunpack.c.h.b16 %v4458
    %v5047 = vunpack.c.l.b16 %v4459
    %v5048 = vunpack.c.h.b16 %v4459
    %v5049 = vunpack.c.l.b16 %v4460
    %v5050 = vunpack.c.h.b16 %v4460
    %v5051 = vunpack.c.l.b16 %v4461
    %v5052 = vunpack.c.h.b16 %v4461
    %v5053 = vunpack.c.l.b16 %v4462
    %v5054 = vunpack.c.h.b16 %v4462
    %v5055 = vunpack.c.l.b16 %v4463
    %v5056 = vunpack.c.h.b16 %v4463
    %v5057 = vunpack.c.l.b16 %v4464
    %v5058 = vunpack.c.h.b16 %v4464
    %v5059 = vunpack.c.l.b16 %v4465
    %v5060 = vunpack.c.h.b16 %v4465
    %v5061 = vunpack.c.l.b16 %v4466
    %v5062 = vunpack.c.h.b16 %v4466
    %v5063 = vunpack.c.l.b16 %v4467
    %v5064 = vunpack.c.h.b16 %v4467
    %v5065 = vunpack.c.l.b16 %v4468
    %v5066 = vunpack.c.h.b16 %v4468
    %v5067 = vunpack.c.l.b16 %v4469
    %v5068 = vunpack.c.h.b16 %v4469
    %v5069 = vunpack.c.l.b16 %v4470
    %v5070 = vunpack.c.h.b16 %v4470
    %v5071 = vunpack.c.l.b16 %v4471
    %v5072 = vunpack.c.h.b16 %v4471
    %v5073 = vunpack.c.l.b16 %v4472
    %v5074 = vunpack.c.h.b16 %v4472
    %v5075 = vunpack.c.l.b16 %v4473
    %v5076 = vunpack.c.h.b16 %v4473
    %v5077 = vunpack.c.l.b16 %v4474
    %v5078 = vunpack.c.h.b16 %v4474
    %v5079 = vunpack.c.l.b16 %v4475
    %v5080 = vunpack.c.h.b16 %v4475
    %v5081 = vunpack.c.l.b16 %v4476
    %v5082 = vunpack.c.h.b16 %v4476
    %v5083 = vunpack.c.l.b16 %v4477
    %v5084 = vunpack.c.h.b16 %v4477
    %v5085 = vunpack.c.l.b16 %v4478
    %v5086 = vunpack.c.h.b16 %v4478
    %v5087 = vunpack.c.l.b16 %v4479
    %v5088 = vunpack.c.h.b16 %v4479
    %v5089 = vunpack.c.l.b16 %v4480
    %v5090 = vunpack.c.h.b16 %v4480
    %v5091 = vunpack.c.l.b16 %v4481
    %v5092 = vunpack.c.h.b16 %v4481
    %v5093 = vunpack.c.l.b16 %v4482
    %v5094 = vunpack.c.h.b16 %v4482
    %v5095 = vunpack.c.l.b16 %v4483
    %v5096 = vunpack.c.h.b16 %v4483
    %v5097 = vunpack.c.l.b16 %v4484
    %v5098 = vunpack.c.h.b16 %v4484
    %v5099 = vunpack.c.l.b16 %v4485
    %v5100 = vunpack.c.h.b16 %v4485
    %v5101 = vunpack.c.l.b16 %v4486
    %v5102 = vunpack.c.h.b16 %v4486
    %v5103 = vunpack.c.l.b16 %v4487
    %v5104 = vunpack.c.h.b16 %v4487
    %v5105 = vunpack.c.l.b16 %v4488
    %v5106 = vunpack.c.h.b16 %v4488
    %v5107 = vunpack.c.l.b16 %v4489
    %v5108 = vunpack.c.h.b16 %v4489
    %v5109 = vunpack.c.l.b16 %v4490
    %v5110 = vunpack.c.h.b16 %v4490
    %v5111 = vunpack.c.l.b16 %v4491
    %v5112 = vunpack.c.h.b16 %v4491
    %v5113 = vunpack.c.l.b16 %v4492
    %v5114 = vunpack.c.h.b16 %v4492
    %v5115 = vunpack.c.l.b16 %v4493
    %v5116 = vunpack.c.h.b16 %v4493
    %v5117 = vunpack.c.l.b16 %v4494
    %v5118 = vunpack.c.h.b16 %v4494
    %v5119 = vunpack.c.l.b16 %v4495
    %v5120 = vunpack.c.h.b16 %v4495
    %v5121 = vunpack.c.l.b16 %v4496
    %v5122 = vunpack.c.h.b16 %v4496
    %v5123 = vunpack.c.l.b16 %v4497
    %v5124 = vunpack.c.h.b16 %v4497
    %v5125 = vunpack.c.l.b16 %v4498
    %v5126 = vunpack.c.h.b16 %v4498
    %v5127 = vunpack.c.l.b16 %v4499
    %v5128 = vunpack.c.h.b16 %v4499
    %v5129 = vunpack.c.l.b16 %v4500
    %v5130 = vunpack.c.h.b16 %v4500
    %v5131 = vunpack.c.l.b16 %v4501
    %v5132 = vunpack.c.h.b16 %v4501
    %v5133 = vunpack.c.l.b16 %v4502
    %v5134 = vunpack.c.h.b16 %v4502
    %v5135 = vunpack.c.l.b16 %v4503
    %v5136 = vunpack.c.h.b16 %v4503
    %v5137 = vunpack.c.l.b16 %v4504
    %v5138 = vunpack.c.h.b16 %v4504
    %v5139 = vunpack.c.l.b16 %v4505
    %v5140 = vunpack.c.h.b16 %v4505
    %v5141 = vunpack.c.l.b16 %v4506
    %v5142 = vunpack.c.h.b16 %v4506
    %v5143 = vunpack.c.l.b16 %v4507
    %v5144 = vunpack.c.h.b16 %v4507
    %v5145 = vunpack.c.l.b16 %v4508
    %v5146 = vunpack.c.h.b16 %v4508
    %v5147 = vunpack.c.l.b16 %v4509
    %v5148 = vunpack.c.h.b16 %v4509
    %v5149 = vunpack.c.l.b16 %v4510
    %v5150 = vunpack.c.h.b16 %v4510
    %v5151 = vunpack.c.l.b16 %v4511
    %v5152 = vunpack.c.h.b16 %v4511
    %v5153 = vunpack.c.l.b16 %v4512
    %v5154 = vunpack.c.h.b16 %v4512
    %v5155 = vunpack.c.l.b16 %v4513
    %v5156 = vunpack.c.h.b16 %v4513
    %v5157 = vunpack.c.l.b16 %v4514
    %v5158 = vunpack.c.h.b16 %v4514
    %v5159 = vunpack.c.l.b16 %v4515
    %v5160 = vunpack.c.h.b16 %v4515
    %v5161 = vunpack.c.l.b16 %v4516
    %v5162 = vunpack.c.h.b16 %v4516
    %v5163 = vunpack.c.l.b16 %v4517
    %v5164 = vunpack.c.h.b16 %v4517
    %v5165 = vunpack.c.l.b16 %v4518
    %v5166 = vunpack.c.h.b16 %v4518
    %v5167 = vunpack.c.l.b16 %v4519
    %v5168 = vunpack.c.h.b16 %v4519
    %v5169 = vunpack.c.l.b16 %v4520
    %v5170 = vunpack.c.h.b16 %v4520
    %v5171 = vunpack.c.l.b16 %v4521
    %v5172 = vunpack.c.h.b16 %v4521
    %v5173 = vunpack.c.l.b16 %v4522
    %v5174 = vunpack.c.h.b16 %v4522
    %v5175 = vunpack.c.l.b16 %v4523
    %v5176 = vunpack.c.h.b16 %v4523
    %v5177 = vunpack.c.l.b16 %v4524
    %v5178 = vunpack.c.h.b16 %v4524
    %v5179 = vunpack.c.l.b16 %v4525
    %v5180 = vunpack.c.h.b16 %v4525
    %v5181 = vunpack.c.l.b16 %v4526
    %v5182 = vunpack.c.h.b16 %v4526
    %v5183 = vunpack.c.l.b16 %v4527
    %v5184 = vunpack.c.h.b16 %v4527
    %v5185 = vunpack.c.l.b16 %v4528
    %v5186 = vunpack.c.h.b16 %v4528
    %v5187 = vunpack.c.l.b16 %v4529
    %v5188 = vunpack.c.h.b16 %v4529
    %v5189 = vunpack.c.l.b16 %v4530
    %v5190 = vunpack.c.h.b16 %v4530
    %v5191 = vunpack.c.l.b16 %v4531
    %v5192 = vunpack.c.h.b16 %v4531
    %v5193 = vunpack.c.l.b16 %v4532
    %v5194 = vunpack.c.h.b16 %v4532
    %v5195 = vunpack.c.l.b16 %v4533
    %v5196 = vunpack.c.h.b16 %v4533
    %v5197 = vunpack.c.l.b16 %v4534
    %v5198 = vunpack.c.h.b16 %v4534
    %v5199 = vunpack.c.l.b16 %v4535
    %v5200 = vunpack.c.h.b16 %v4535
    %v5201 = vunpack.c.l.b16 %v4536
    %v5202 = vunpack.c.h.b16 %v4536
    %v5203 = vunpack.c.l.b16 %v4537
    %v5204 = vunpack.c.h.b16 %v4537
    %v5205 = vunpack.c.l.b16 %v4538
    %v5206 = vunpack.c.h.b16 %v4538
    %v5207 = vunpack.c.l.b16 %v4539
    %v5208 = vunpack.c.h.b16 %v4539
    %v5209 = vunpack.c.l.b16 %v4540
    %v5210 = vunpack.c.h.b16 %v4540
    %v5211 = vunpack.c.l.b16 %v4541
    %v5212 = vunpack.c.h.b16 %v4541
    %v5213 = vunpack.c.l.b16 %v4542
    %v5214 = vunpack.c.h.b16 %v4542
    %v5215 = vunpack.c.l.b16 %v4543
    %v5216 = vunpack.c.h.b16 %v4543
    %v5217 = vunpack.c.l.b16 %v4544
    %v5218 = vunpack.c.h.b16 %v4544
    %v5219 = vunpack.c.l.b16 %v4545
    %v5220 = vunpack.c.h.b16 %v4545
    %v5221 = vunpack.c.l.b16 %v4546
    %v5222 = vunpack.c.h.b16 %v4546
    %v5223 = vunpack.c.l.b16 %v4547
    %v5224 = vunpack.c.h.b16 %v4547
    %v5225 = vunpack.c.l.b16 %v4548
    %v5226 = vunpack.c.h.b16 %v4548
    %v5227 = vunpack.c.l.b16 %v4549
    %v5228 = vunpack.c.h.b16 %v4549
    %v5229 = vunpack.c.l.b16 %v4550
    %v5230 = vunpack.c.h.b16 %v4550
    %v5231 = vunpack.c.l.b16 %v4551
    %v5232 = vunpack.c.h.b16 %v4551
    %v5233 = vunpack.c.l.b16 %v4552
    %v5234 = vunpack.c.h.b16 %v4552
    %v5235 = vunpack.c.l.b16 %v4553
    %v5236 = vunpack.c.h.b16 %v4553
    %v5237 = vunpack.c.l.b16 %v4554
    %v5238 = vunpack.c.h.b16 %v4554
    %v5239 = vunpack.c.l.b16 %v4555
    %v5240 = vunpack.c.h.b16 %v4555
    %v5241 = vunpack.c.l.b16 %v4556
    %v5242 = vunpack.c.h.b16 %v4556
    %v5243 = vunpack.c.l.b16 %v4557
    %v5244 = vunpack.c.h.b16 %v4557
    %v5245 = vunpack.c.l.b16 %v4558
    %v5246 = vunpack.c.h.b16 %v4558
    %v5247 = vunpack.c.l.b16 %v4559
    %v5248 = vunpack.c.h.b16 %v4559
    %v5249 = vunpack.c.l.b16 %v4560
    %v5250 = vunpack.c.h.b16 %v4560
    %v5251 = vunpack.c.l.b16 %v4561
    %v5252 = vunpack.c.h.b16 %v4561
    %v5253 = vunpack.c.l.b16 %v4562
    %v5254 = vunpack.c.h.b16 %v4562
    %v5255 = vunpack.c.l.b16 %v4563
    %v5256 = vunpack.c.h.b16 %v4563
    %v5257 = vunpack.c.l.b16 %v4564
    %v5258 = vunpack.c.h.b16 %v4564
    %v5259 = vunpack.c.l.b16 %v4565
    %v5260 = vunpack.c.h.b16 %v4565
    %v5261 = vunpack.c.l.b16 %v4566
    %v5262 = vunpack.c.h.b16 %v4566
    %v5263 = vunpack.c.l.b16 %v4567
    %v5264 = vunpack.c.h.b16 %v4567
    %v5265 = vunpack.c.l.b16 %v4568
    %v5266 = vunpack.c.h.b16 %v4568
    %v5267 = vunpack.c.l.b16 %v4569
    %v5268 = vunpack.c.h.b16 %v4569
    %v5269 = vunpack.c.l.b16 %v4570
    %v5270 = vunpack.c.h.b16 %v4570
    %v5271 = vunpack.c.l.b16 %v4571
    %v5272 = vunpack.c.h.b16 %v4571
    %v5273 = vunpack.c.l.b16 %v4572
    %v5274 = vunpack.c.h.b16 %v4572
    %v5275 = vunpack.c.l.b16 %v4573
    %v5276 = vunpack.c.h.b16 %v4573
    %v5277 = vunpack.c.l.b16 %v4574
    %v5278 = vunpack.c.h.b16 %v4574
    %v5279 = vunpack.c.l.b16 %v4575
    %v5280 = vunpack.c.h.b16 %v4575
    %v5281 = vunpack.c.l.b16 %v4576
    %v5282 = vunpack.c.h.b16 %v4576
    %v5283 = vunpack.c.l.b16 %v4577
    %v5284 = vunpack.c.h.b16 %v4577
    %v5285 = vunpack.c.l.b16 %v4578
    %v5286 = vunpack.c.h.b16 %v4578
    %v5287 = vunpack.c.l.b16 %v4579
    %v5288 = vunpack.c.h.b16 %v4579
    %v5289 = vunpack.c.l.b16 %v4580
    %v5290 = vunpack.c.h.b16 %v4580
    %v5291 = vunpack.c.l.b16 %v4581
    %v5292 = vunpack.c.h.b16 %v4581
    %v5293 = vunpack.c.l.b16 %v4582
    %v5294 = vunpack.c.h.b16 %v4582
    %v5295 = vunpack.c.l.b16 %v4583
    %v5296 = vunpack.c.h.b16 %v4583
    %v5297 = vunpack.c.l.b16 %v4584
    %v5298 = vunpack.c.h.b16 %v4584
    %v5299 = vunpack.c.l.b16 %v4585
    %v5300 = vunpack.c.h.b16 %v4585
    %v5301 = vunpack.c.l.b16 %v4586
    %v5302 = vunpack.c.h.b16 %v4586
    %v5303 = vunpack.c.l.b16 %v4587
    %v5304 = vunpack.c.h.b16 %v4587
    %v5305 = vunpack.c.l.b16 %v4588
    %v5306 = vunpack.c.h.b16 %v4588
    %v5307 = vunpack.c.l.b16 %v4589
    %v5308 = vunpack.c.h.b16 %v4589
    %v5309 = vunpack.c.l.b16 %v4590
    %v5310 = vunpack.c.h.b16 %v4590
    %v5311 = vunpack.c.l.b16 %v4591
    %v5312 = vunpack.c.h.b16 %v4591
    %v5313 = vunpack.c.l.b16 %v4592
    %v5314 = vunpack.c.h.b16 %v4592
    %v5315 = vunpack.c.l.b16 %v4593
    %v5316 = vunpack.c.h.b16 %v4593
    %v5317 = vunpack.c.l.b16 %v4594
    %v5318 = vunpack.c.h.b16 %v4594
    %v5319 = vunpack.c.l.b16 %v4595
    %v5320 = vunpack.c.h.b16 %v4595
    %v5321 = vunpack.c.l.b16 %v4596
    %v5322 = vunpack.c.h.b16 %v4596
    %v5323 = vunpack.c.l.b16 %v4597
    %v5324 = vunpack.c.h.b16 %v4597
    %v5325 = vunpack.c.l.b16 %v4598
    %v5326 = vunpack.c.h.b16 %v4598
    %v5327 = vunpack.c.l.b16 %v4599
    %v5328 = vunpack.c.h.b16 %v4599
    %v5329 = vunpack.c.l.b16 %v4600
    %v5330 = vunpack.c.h.b16 %v4600
    %v5331 = vunpack.c.l.b16 %v4601
    %v5332 = vunpack.c.h.b16 %v4601
    %v5333 = vunpack.c.l.b16 %v4602
    %v5334 = vunpack.c.h.b16 %v4602
    %v5335 = vunpack.c.l.b16 %v4603
    %v5336 = vunpack.c.h.b16 %v4603
    %v5337 = vunpack.c.l.b16 %v4604
    %v5338 = vunpack.c.h.b16 %v4604
    %v5339 = vunpack.c.l.b16 %v4605
    %v5340 = vunpack.c.h.b16 %v4605
    %v5341 = vunpack.c.l.b16 %v4606
    %v5342 = vunpack.c.h.b16 %v4606
    %v5343 = vunpack.c.l.b16 %v4607
    %v5344 = vunpack.c.h.b16 %v4607
    %v5345 = vunpack.c.l.b16 %v4608
    %v5346 = vunpack.c.h.b16 %v4608
    %v5347 = vunpack.c.l.b16 %v4609
    %v5348 = vunpack.c.h.b16 %v4609
    %v5349 = vunpack.c.l.b16 %v4610
    %v5350 = vunpack.c.h.b16 %v4610
    %v5351 = vunpack.c.l.b16 %v4611
    %v5352 = vunpack.c.h.b16 %v4611
    %v5353 = vunpack.c.l.b16 %v4612
    %v5354 = vunpack.c.h.b16 %v4612
    %v5355 = vunpack.c.l.b16 %v4613
    %v5356 = vunpack.c.h.b16 %v4613
    %v5357 = vunpack.c.l.b16 %v4614
    %v5358 = vunpack.c.h.b16 %v4614
    %v5359 = vunpack.c.l.b16 %v4615
    %v5360 = vunpack.c.h.b16 %v4615
    %v5361 = vunpack.c.l.b16 %v4616
    %v5362 = vunpack.c.h.b16 %v4616
    %v5363 = vunpack.c.l.b16 %v4617
    %v5364 = vunpack.c.h.b16 %v4617
    %v5365 = vunpack.c.l.b16 %v4618
    %v5366 = vunpack.c.h.b16 %v4618
    %v5367 = vunpack.c.l.b16 %v4619
    %v5368 = vunpack.c.h.b16 %v4619
    %v5369 = vunpack.c.l.b16 %v4620
    %v5370 = vunpack.c.h.b16 %v4620
    %v5371 = vunpack.c.l.b16 %v4621
    %v5372 = vunpack.c.h.b16 %v4621
    %v5373 = vunpack.c.l.b16 %v4622
    %v5374 = vunpack.c.h.b16 %v4622
    %v5375 = vunpack.c.l.b16 %v4623
    %v5376 = vunpack.c.h.b16 %v4623
    %v5377 = vunpack.c.l.b16 %v4624
    %v5378 = vunpack.c.h.b16 %v4624
    %v5379 = vunpack.c.l.b16 %v4625
    %v5380 = vunpack.c.h.b16 %v4625
    %v5381 = vunpack.c.l.b16 %v4626
    %v5382 = vunpack.c.h.b16 %v4626
    %v5383 = vunpack.c.l.b16 %v4627
    %v5384 = vunpack.c.h.b16 %v4627
    %v5385 = vunpack.c.l.b16 %v4628
    %v5386 = vunpack.c.h.b16 %v4628
    %v5387 = vunpack.c.l.b16 %v4629
    %v5388 = vunpack.c.h.b16 %v4629
    %v5389 = vunpack.c.l.b16 %v4630
    %v5390 = vunpack.c.h.b16 %v4630
    %v5391 = vunpack.c.l.b16 %v4631
    %v5392 = vunpack.c.h.b16 %v4631
    %v5393 = vunpack.c.l.b16 %v4632
    %v5394 = vunpack.c.h.b16 %v4632
    %v5395 = vunpack.c.l.b16 %v4633
    %v5396 = vunpack.c.h.b16 %v4633
    %v5397 = vunpack.c.l.b16 %v4634
    %v5398 = vunpack.c.h.b16 %v4634
    %v5399 = vunpack.c.l.b16 %v4635
    %v5400 = vunpack.c.h.b16 %v4635
    %v5401 = vunpack.c.l.b16 %v4636
    %v5402 = vunpack.c.h.b16 %v4636
    %v5403 = vunpack.c.l.b16 %v4637
    %v5404 = vunpack.c.h.b16 %v4637
    %v5405 = vunpack.c.l.b16 %v4638
    %v5406 = vunpack.c.h.b16 %v4638
    %v5407 = vpack.c.b16 %v4899, %v4895
    %v5408 = vpack.c.b16 %v4900, %v4896
    %v5409 = vpack.c.b16 %v4901, %v4897
    %v5410 = vpack.c.b16 %v4902, %v4898
    %v5411 = vpack.c.b16 %v4907, %v4903
    %v5412 = vpack.c.b16 %v4908, %v4904
    %v5413 = vpack.c.b16 %v4909, %v4905
    %v5414 = vpack.c.b16 %v4910, %v4906
    %v5415 = vpack.c.b16 %v4915, %v4911
    %v5416 = vpack.c.b16 %v4916, %v4912
    %v5417 = vpack.c.b16 %v4917, %v4913
    %v5418 = vpack.c.b16 %v4918, %v4914
    %v5419 = vpack.c.b16 %v4923, %v4919
    %v5420 = vpack.c.b16 %v4924, %v4920
    %v5421 = vpack.c.b16 %v4925, %v4921
    %v5422 = vpack.c.b16 %v4926, %v4922
    %v5423 = vpack.c.b16 %v4931, %v4927
    %v5424 = vpack.c.b16 %v4932, %v4928
    %v5425 = vpack.c.b16 %v4933, %v4929
    %v5426 = vpack.c.b16 %v4934, %v4930
    %v5427 = vpack.c.b16 %v4939, %v4935
    %v5428 = vpack.c.b16 %v4940, %v4936
    %v5429 = vpack.c.b16 %v4941, %v4937
    %v5430 = vpack.c.b16 %v4942, %v4938
    %v5431 = vpack.c.b16 %v4947, %v4943
    %v5432 = vpack.c.b16 %v4948, %v4944
    %v5433 = vpack.c.b16 %v4949, %v4945
    %v5434 = vpack.c.b16 %v4950, %v4946
    %v5435 = vpack.c.b16 %v4955, %v4951
    %v5436 = vpack.c.b16 %v4956, %v4952
    %v5437 = vpack.c.b16 %v4957, %v4953
    %v5438 = vpack.c.b16 %v4958, %v4954
    %v5439 = vpack.c.b16 %v4963, %v4959
    %v5440 = vpack.c.b16 %v4964, %v4960
    %v5441 = vpack.c.b16 %v4965, %v4961
    %v5442 = vpack.c.b16 %v4966, %v4962
    %v5443 = vpack.c.b16 %v4971, %v4967
    %v5444 = vpack.c.b16 %v4972, %v4968
    %v5445 = vpack.c.b16 %v4973, %v4969
    %v5446 = vpack.c.b16 %v4974, %v4970
    %v5447 = vpack.c.b16 %v4979, %v4975
    %v5448 = vpack.c.b16 %v4980, %v4976
    %v5449 = vpack.c.b16 %v4981, %v4977
    %v5450 = vpack.c.b16 %v4982, %v4978
    %v5451 = vpack.c.b16 %v4987, %v4983
    %v5452 = vpack.c.b16 %v4988, %v4984
    %v5453 = vpack.c.b16 %v4989, %v4985
    %v5454 = vpack.c.b16 %v4990, %v4986
    %v5455 = vpack.c.b16 %v4995, %v4991
    %v5456 = vpack.c.b16 %v4996, %v4992
    %v5457 = vpack.c.b16 %v4997, %v4993
    %v5458 = vpack.c.b16 %v4998, %v4994
    %v5459 = vpack.c.b16 %v5003, %v4999
    %v5460 = vpack.c.b16 %v5004, %v5000
    %v5461 = vpack.c.b16 %v5005, %v5001
    %v5462 = vpack.c.b16 %v5006, %v5002
    %v5463 = vpack.c.b16 %v5011, %v5007
    %v5464 = vpack.c.b16 %v5012, %v5008
    %v5465 = vpack.c.b16 %v5013, %v5009
    %v5466 = vpack.c.b16 %v5014, %v5010
    %v5467 = vpack.c.b16 %v5019, %v5015
    %v5468 = vpack.c.b16 %v5020, %v5016
    %v5469 = vpack.c.b16 %v5021, %v5017
    %v5470 = vpack.c.b16 %v5022, %v5018
    %v5471 = vpack.c.b16 %v5027, %v5023
    %v5472 = vpack.c.b16 %v5028, %v5024
    %v5473 = vpack.c.b16 %v5029, %v5025
    %v5474 = vpack.c.b16 %v5030, %v5026
    %v5475 = vpack.c.b16 %v5035, %v5031
    %v5476 = vpack.c.b16 %v5036, %v5032
    %v5477 = vpack.c.b16 %v5037, %v5033
    %v5478 = vpack.c.b16 %v5038, %v5034
    %v5479 = vpack.c.b16 %v5043, %v5039
    %v5480 = vpack.c.b16 %v5044, %v5040
    %v5481 = vpack.c.b16 %v5045, %v5041
    %v5482 = vpack.c.b16 %v5046, %v5042
    %v5483 = vpack.c.b16 %v5051, %v5047
    %v5484 = vpack.c.b16 %v5052, %v5048
    %v5485 = vpack.c.b16 %v5053, %v5049
    %v5486 = vpack.c.b16 %v5054, %v5050
    %v5487 = vpack.c.b16 %v5059, %v5055
    %v5488 = vpack.c.b16 %v5060, %v5056
    %v5489 = vpack.c.b16 %v5061, %v5057
    %v5490 = vpack.c.b16 %v5062, %v5058
    %v5491 = vpack.c.b16 %v5067, %v5063
    %v5492 = vpack.c.b16 %v5068, %v5064
    %v5493 = vpack.c.b16 %v5069, %v5065
    %v5494 = vpack.c.b16 %v5070, %v5066
    %v5495 = vpack.c.b16 %v5075, %v5071
    %v5496 = vpack.c.b16 %v5076, %v5072
    %v5497 = vpack.c.b16 %v5077, %v5073
    %v5498 = vpack.c.b16 %v5078, %v5074
    %v5499 = vpack.c.b16 %v5083, %v5079
    %v5500 = vpack.c.b16 %v5084, %v5080
    %v5501 = vpack.c.b16 %v5085, %v5081
    %v5502 = vpack.c.b16 %v5086, %v5082
    %v5503 = vpack.c.b16 %v5091, %v5087
    %v5504 = vpack.c.b16 %v5092, %v5088
    %v5505 = vpack.c.b16 %v5093, %v5089
    %v5506 = vpack.c.b16 %v5094, %v5090
    %v5507 = vpack.c.b16 %v5099, %v5095
    %v5508 = vpack.c.b16 %v5100, %v5096
    %v5509 = vpack.c.b16 %v5101, %v5097
    %v5510 = vpack.c.b16 %v5102, %v5098
    %v5511 = vpack.c.b16 %v5107, %v5103
    %v5512 = vpack.c.b16 %v5108, %v5104
    %v5513 = vpack.c.b16 %v5109, %v5105
    %v5514 = vpack.c.b16 %v5110, %v5106
    %v5515 = vpack.c.b16 %v5115, %v5111
    %v5516 = vpack.c.b16 %v5116, %v5112
    %v5517 = vpack.c.b16 %v5117, %v5113
    %v5518 = vpack.c.b16 %v5118, %v5114
    %v5519 = vpack.c.b16 %v5123, %v5119
    %v5520 = vpack.c.b16 %v5124, %v5120
    %v5521 = vpack.c.b16 %v5125, %v5121
    %v5522 = vpack.c.b16 %v5126, %v5122
    %v5523 = vpack.c.b16 %v5131, %v5127
    %v5524 = vpack.c.b16 %v5132, %v5128
    %v5525 = vpack.c.b16 %v5133, %v5129
    %v5526 = vpack.c.b16 %v5134, %v5130
    %v5527 = vpack.c.b16 %v5139, %v5135
    %v5528 = vpack.c.b16 %v5140, %v5136
    %v5529 = vpack.c.b16 %v5141, %v5137
    %v5530 = vpack.c.b16 %v5142, %v5138
    %v5531 = vpack.c.b16 %v5147, %v5143
    %v5532 = vpack.c.b16 %v5148, %v5144
    %v5533 = vpack.c.b16 %v5149, %v5145
    %v5534 = vpack.c.b16 %v5150, %v5146
    %v5535 = vpack.c.b16 %v5155, %v5151
    %v5536 = vpack.c.b16 %v5156, %v5152
    %v5537 = vpack.c.b16 %v5157, %v5153
    %v5538 = vpack.c.b16 %v5158, %v5154
    %v5539 = vpack.c.b16 %v5163, %v5159
    %v5540 = vpack.c.b16 %v5164, %v5160
    %v5541 = vpack.c.b16 %v5165, %v5161
    %v5542 = vpack.c.b16 %v5166, %v5162
    %v5543 = vpack.c.b16 %v5171, %v5167
    %v5544 = vpack.c.b16 %v5172, %v5168
    %v5545 = vpack.c.b16 %v5173, %v5169
    %v5546 = vpack.c.b16 %v5174, %v5170
    %v5547 = vpack.c.b16 %v5179, %v5175
    %v5548 = vpack.c.b16 %v5180, %v5176
    %v5549 = vpack.c.b16 %v5181, %v5177
    %v5550 = vpack.c.b16 %v5182, %v5178
    %v5551 = vpack.c.b16 %v5187, %v5183
    %v5552 = vpack.c.b16 %v5188, %v5184
    %v5553 = vpack.c.b16 %v5189, %v5185
    %v5554 = vpack.c.b16 %v5190, %v5186
    %v5555 = vpack.c.b16 %v5195, %v5191
    %v5556 = vpack.c.b16 %v5196, %v5192
    %v5557 = vpack.c.b16 %v5197, %v5193
    %v5558 = vpack.c.b16 %v5198, %v5194
    %v5559 = vpack.c.b16 %v5203, %v5199
    %v5560 = vpack.c.b16 %v5204, %v5200
    %v5561 = vpack.c.b16 %v5205, %v5201
    %v5562 = vpack.c.b16 %v5206, %v5202
    %v5563 = vpack.c.b16 %v5211, %v5207
    %v5564 = vpack.c.b16 %v5212, %v5208
    %v5565 = vpack.c.b16 %v5213, %v5209
    %v5566 = vpack.c.b16 %v5214, %v5210
    %v5567 = vpack.c.b16 %v5219, %v5215
    %v5568 = vpack.c.b16 %v5220, %v5216
    %v5569 = vpack.c.b16 %v5221, %v5217
    %v5570 = vpack.c.b16 %v5222, %v5218
    %v5571 = vpack.c.b16 %v5227, %v5223
    %v5572 = vpack.c.b16 %v5228, %v5224
    %v5573 = vpack.c.b16 %v5229, %v5225
    %v5574 = vpack.c.b16 %v5230, %v5226
    %v5575 = vpack.c.b16 %v5235, %v5231
    %v5576 = vpack.c.b16 %v5236, %v5232
    %v5577 = vpack.c.b16 %v5237, %v5233
    %v5578 = vpack.c.b16 %v5238, %v5234
    %v5579 = vpack.c.b16 %v5243, %v5239
    %v5580 = vpack.c.b16 %v5244, %v5240
    %v5581 = vpack.c.b16 %v5245, %v5241
    %v5582 = vpack.c.b16 %v5246, %v5242
    %v5583 = vpack.c.b16 %v5251, %v5247
    %v5584 = vpack.c.b16 %v5252, %v5248
    %v5585 = vpack.c.b16 %v5253, %v5249
    %v5586 = vpack.c.b16 %v5254, %v5250
    %v5587 = vpack.c.b16 %v5259, %v5255
    %v5588 = vpack.c.b16 %v5260, %v5256
    %v5589 = vpack.c.b16 %v5261, %v5257
    %v5590 = vpack.c.b16 %v5262, %v5258
    %v5591 = vpack.c.b16 %v5267, %v5263
    %v5592 = vpack.c.b16 %v5268, %v5264
    %v5593 = vpack.c.b16 %v5269, %v5265
    %v5594 = vpack.c.b16 %v5270, %v5266
    %v5595 = vpack.c.b16 %v5275, %v5271
    %v5596 = vpack.c.b16 %v5276, %v5272
    %v5597 = vpack.c.b16 %v5277, %v5273
    %v5598 = vpack.c.b16 %v5278, %v5274
    %v5599 = vpack.c.b16 %v5283, %v5279
    %v5600 = vpack.c.b16 %v5284, %v5280
    %v5601 = vpack.c.b16 %v5285, %v5281
    %v5602 = vpack.c.b16 %v5286, %v5282
    %v5603 = vpack.c.b16 %v5291, %v5287
    %v5604 = vpack.c.b16 %v5292, %v5288
    %v5605 = vpack.c.b16 %v5293, %v5289
    %v5606 = vpack.c.b16 %v5294, %v5290
    %v5607 = vpack.c.b16 %v5299, %v5295
    %v5608 = vpack.c.b16 %v5300, %v5296
    %v5609 = vpack.c.b16 %v5301, %v5297
    %v5610 = vpack.c.b16 %v5302, %v5298
    %v5611 = vpack.c.b16 %v5307, %v5303
    %v5612 = vpack.c.b16 %v5308, %v5304
    %v5613 = vpack.c.b16 %v5309, %v5305
    %v5614 = vpack.c.b16 %v5310, %v5306
    %v5615 = vpack.c.b16 %v5315, %v5311
    %v5616 = vpack.c.b16 %v5316, %v5312
    %v5617 = vpack.c.b16 %v5317, %v5313
    %v5618 = vpack.c.b16 %v5318, %v5314
    %v5619 = vpack.c.b16 %v5323, %v5319
    %v5620 = vpack.c.b16 %v5324, %v5320
    %v5621 = vpack.c.b16 %v5325, %v5321
    %v5622 = vpack.c.b16 %v5326, %v5322
    %v5623 = vpack.c.b16 %v5331, %v5327
    %v5624 = vpack.c.b16 %v5332, %v5328
    %v5625 = vpack.c.b16 %v5333, %v5329
    %v5626 = vpack.c.b16 %v5334, %v5330
    %v5627 = vpack.c.b16 %v5339, %v5335
    %v5628 = vpack.c.b16 %v5340, %v5336
    %v5629 = vpack.c.b16 %v5341, %v5337
    %v5630 = vpack.c.b16 %v5342, %v5338
    %v5631 = vpack.c.b16 %v5347, %v5343
    %v5632 = vpack.c.b16 %v5348, %v5344
    %v5633 = vpack.c.b16 %v5349, %v5345
    %v5634 = vpack.c.b16 %v5350, %v5346
    %v5635 = vpack.c.b16 %v5355, %v5351
    %v5636 = vpack.c.b16 %v5356, %v5352
    %v5637 = vpack.c.b16 %v5357, %v5353
    %v5638 = vpack.c.b16 %v5358, %v5354
    %v5639 = vpack.c.b16 %v5363, %v5359
    %v5640 = vpack.c.b16 %v5364, %v5360
    %v5641 = vpack.c.b16 %v5365, %v5361
    %v5642 = vpack.c.b16 %v5366, %v5362
    %v5643 = vpack.c.b16 %v5371, %v5367
    %v5644 = vpack.c.b16 %v5372, %v5368
    %v5645 = vpack.c.b16 %v5373, %v5369
    %v5646 = vpack.c.b16 %v5374, %v5370
    %v5647 = vpack.c.b16 %v5379, %v5375
    %v5648 = vpack.c.b16 %v5380, %v5376
    %v5649 = vpack.c.b16 %v5381, %v5377
    %v5650 = vpack.c.b16 %v5382, %v5378
    %v5651 = vpack.c.b16 %v5387, %v5383
    %v5652 = vpack.c.b16 %v5388, %v5384
    %v5653 = vpack.c.b16 %v5389, %v5385
    %v5654 = vpack.c.b16 %v5390, %v5386
    %v5655 = vpack.c.b16 %v5395, %v5391
    %v5656 = vpack.c.b16 %v5396, %v5392
    %v5657 = vpack.c.b16 %v5397, %v5393
    %v5658 = vpack.c.b16 %v5398, %v5394
    %v5659 = vpack.c.b16 %v5403, %v5399
    %v5660 = vpack.c.b16 %v5404, %v5400
    %v5661 = vpack.c.b16 %v5405, %v5401
    %v5662 = vpack.c.b16 %v5406, %v5402
    %5919 = vmatpush.bf16.msra.mxu0 %v5435
    %5920 = vmatpush.bf16.msra.mxu0 %v5431
    %5921 = vmatpush.bf16.msra.mxu0 %v5427
    %5922 = vmatpush.bf16.msra.mxu0 %v5423
    %5923 = vmatpush.bf16.msra.mxu0 %v5419
    %5924 = vmatpush.bf16.msra.mxu0 %v5415
    %5925 = vmatpush.bf16.msra.mxu0 %v5411
    %5926 = vmatpush.bf16.msra.mxu0 %v5407
    %5927 = vmatmul.bf16.gmra.mxu0 %v4375
    %v5928 = vpop.f32.mrf.mxu0
    %v5929 = vadd.f32 0.0, %v5928
    %v5930 = vpop.f32.mrf.mxu0
    %5931 = vdwg.mxu0
    %5932 = vmatpush.bf16.msra.mxu0 %v5467
    %5933 = vmatpush.bf16.msra.mxu0 %v5463
    %5934 = vmatpush.bf16.msra.mxu0 %v5459
    %5935 = vmatpush.bf16.msra.mxu0 %v5455
    %5936 = vmatpush.bf16.msra.mxu0 %v5451
    %5937 = vmatpush.bf16.msra.mxu0 %v5447
    %5938 = vmatpush.bf16.msra.mxu0 %v5443
    %5939 = vmatpush.bf16.msra.mxu0 %v5439
    %5940 = vmatmul.bf16.gmra.mxu0 %v4376
    %v5941 = vpop.f32.mrf.mxu0
    %v5942 = vadd.f32 %v5929, %v5941
    %v5943 = vpop.f32.mrf.mxu0
    %5944 = vdwg.mxu0
    %5945 = vmatpush.bf16.msra.mxu0 %v5499
    %5946 = vmatpush.bf16.msra.mxu0 %v5495
    %5947 = vmatpush.bf16.msra.mxu0 %v5491
    %5948 = vmatpush.bf16.msra.mxu0 %v5487
    %5949 = vmatpush.bf16.msra.mxu0 %v5483
    %5950 = vmatpush.bf16.msra.mxu0 %v5479
    %5951 = vmatpush.bf16.msra.mxu0 %v5475
    %5952 = vmatpush.bf16.msra.mxu0 %v5471
    %5953 = vmatmul.bf16.gmra.mxu0 %v4377
    %v5954 = vpop.f32.mrf.mxu0
    %v5955 = vadd.f32 %v5942, %v5954
    %v5956 = vpop.f32.mrf.mxu0
    %5957 = vdwg.mxu0
    %5958 = vmatpush.bf16.msra.mxu0 %v5531
    %5959 = vmatpush.bf16.msra.mxu0 %v5527
    %5960 = vmatpush.bf16.msra.mxu0 %v5523
    %5961 = vmatpush.bf16.msra.mxu0 %v5519
    %5962 = vmatpush.bf16.msra.mxu0 %v5515
    %5963 = vmatpush.bf16.msra.mxu0 %v5511
    %5964 = vmatpush.bf16.msra.mxu0 %v5507
    %5965 = vmatpush.bf16.msra.mxu0 %v5503
    %5966 = vmatmul.bf16.gmra.mxu0 %v4378
    %v5967 = vpop.f32.mrf.mxu0
    %v5968 = vadd.f32 %v5955, %v5967
    %v5969 = vpop.f32.mrf.mxu0
    %5970 = vdwg.mxu0
    %5971 = vmatpush.bf16.msra.mxu0 %v5563
    %5972 = vmatpush.bf16.msra.mxu0 %v5559
    %5973 = vmatpush.bf16.msra.mxu0 %v5555
    %5974 = vmatpush.bf16.msra.mxu0 %v5551
    %5975 = vmatpush.bf16.msra.mxu0 %v5547
    %5976 = vmatpush.bf16.msra.mxu0 %v5543
    %5977 = vmatpush.bf16.msra.mxu0 %v5539
    %5978 = vmatpush.bf16.msra.mxu0 %v5535
    %5979 = vmatmul.bf16.gmra.mxu0 %v4379
    %v5980 = vpop.f32.mrf.mxu0
    %v5981 = vadd.f32 %v5968, %v5980
    %v5982 = vpop.f32.mrf.mxu0
    %5983 = vdwg.mxu0
    %5984 = vmatpush.bf16.msra.mxu0 %v5595
    %5985 = vmatpush.bf16.msra.mxu0 %v5591
    %5986 = vmatpush.bf16.msra.mxu0 %v5587
    %5987 = vmatpush.bf16.msra.mxu0 %v5583
    %5988 = vmatpush.bf16.msra.mxu0 %v5579
    %5989 = vmatpush.bf16.msra.mxu0 %v5575
    %5990 = vmatpush.bf16.msra.mxu0 %v5571
    %5991 = vmatpush.bf16.msra.mxu0 %v5567
    %5992 = vmatmul.bf16.gmra.mxu0 %v4380
    %v5993 = vpop.f32.mrf.mxu0
    %v5994 = vadd.f32 %v5981, %v5993
    %v5995 = vpop.f32.mrf.mxu0
    %5996 = vdwg.mxu0
    %5997 = vmatpush.bf16.msra.mxu0 %v5627
    %5998 = vmatpush.bf16.msra.mxu0 %v5623
    %5999 = vmatpush.bf16.msra.mxu0 %v5619
    %6000 = vmatpush.bf16.msra.mxu0 %v5615
    %6001 = vmatpush.bf16.msra.mxu0 %v5611
    %6002 = vmatpush.bf16.msra.mxu0 %v5607
    %6003 = vmatpush.bf16.msra.mxu0 %v5603
    %6004 = vmatpush.bf16.msra.mxu0 %v5599
    %6005 = vmatmul.bf16.gmra.mxu0 %v4381
    %v6006 = vpop.f32.mrf.mxu0
    %v6007 = vadd.f32 %v5994, %v6006
    %v6008 = vpop.f32.mrf.mxu0
    %6009 = vdwg.mxu0
    %6010 = vmatpush.bf16.msra.mxu0 %v5659
    %6011 = vmatpush.bf16.msra.mxu0 %v5655
    %6012 = vmatpush.bf16.msra.mxu0 %v5651
    %6013 = vmatpush.bf16.msra.mxu0 %v5647
    %6014 = vmatpush.bf16.msra.mxu0 %v5643
    %6015 = vmatpush.bf16.msra.mxu0 %v5639
    %6016 = vmatpush.bf16.msra.mxu0 %v5635
    %6017 = vmatpush.bf16.msra.mxu0 %v5631
    %6018 = vmatmul.bf16.gmra.mxu0 %v4382
    %v6019 = vpop.f32.mrf.mxu0
    %v6020 = vadd.f32 %v6007, %v6019
    %v6021 = vpop.f32.mrf.mxu0
    %6022 = vdwg.mxu0
    %6023 = vmatpush.bf16.msra.mxu0 %v5436
    %6024 = vmatpush.bf16.msra.mxu0 %v5432
    %6025 = vmatpush.bf16.msra.mxu0 %v5428
    %6026 = vmatpush.bf16.msra.mxu0 %v5424
    %6027 = vmatpush.bf16.msra.mxu0 %v5420
    %6028 = vmatpush.bf16.msra.mxu0 %v5416
    %6029 = vmatpush.bf16.msra.mxu0 %v5412
    %6030 = vmatpush.bf16.msra.mxu0 %v5408
    %6031 = vmatmul.bf16.gmra.mxu0 %v4375
    %v6032 = vpop.f32.mrf.mxu0
    %v6033 = vadd.f32 0.0, %v6032
    %v6034 = vpop.f32.mrf.mxu0
    %6035 = vdwg.mxu0
    %6036 = vmatpush.bf16.msra.mxu0 %v5468
    %6037 = vmatpush.bf16.msra.mxu0 %v5464
    %6038 = vmatpush.bf16.msra.mxu0 %v5460
    %6039 = vmatpush.bf16.msra.mxu0 %v5456
    %6040 = vmatpush.bf16.msra.mxu0 %v5452
    %6041 = vmatpush.bf16.msra.mxu0 %v5448
    %6042 = vmatpush.bf16.msra.mxu0 %v5444
    %6043 = vmatpush.bf16.msra.mxu0 %v5440
    %6044 = vmatmul.bf16.gmra.mxu0 %v4376
    %v6045 = vpop.f32.mrf.mxu0
    %v6046 = vadd.f32 %v6033, %v6045
    %v6047 = vpop.f32.mrf.mxu0
    %6048 = vdwg.mxu0
    %6049 = vmatpush.bf16.msra.mxu0 %v5500
    %6050 = vmatpush.bf16.msra.mxu0 %v5496
    %6051 = vmatpush.bf16.msra.mxu0 %v5492
    %6052 = vmatpush.bf16.msra.mxu0 %v5488
    %6053 = vmatpush.bf16.msra.mxu0 %v5484
    %6054 = vmatpush.bf16.msra.mxu0 %v5480
    %6055 = vmatpush.bf16.msra.mxu0 %v5476
    %6056 = vmatpush.bf16.msra.mxu0 %v5472
    %6057 = vmatmul.bf16.gmra.mxu0 %v4377
    %v6058 = vpop.f32.mrf.mxu0
    %v6059 = vadd.f32 %v6046, %v6058
    %v6060 = vpop.f32.mrf.mxu0
    %6061 = vdwg.mxu0
    %6062 = vmatpush.bf16.msra.mxu0 %v5532
    %6063 = vmatpush.bf16.msra.mxu0 %v5528
    %6064 = vmatpush.bf16.msra.mxu0 %v5524
    %6065 = vmatpush.bf16.msra.mxu0 %v5520
    %6066 = vmatpush.bf16.msra.mxu0 %v5516
    %6067 = vmatpush.bf16.msra.mxu0 %v5512
    %6068 = vmatpush.bf16.msra.mxu0 %v5508
    %6069 = vmatpush.bf16.msra.mxu0 %v5504
    %6070 = vmatmul.bf16.gmra.mxu0 %v4378
    %v6071 = vpop.f32.mrf.mxu0
    %v6072 = vadd.f32 %v6059, %v6071
    %v6073 = vpop.f32.mrf.mxu0
    %6074 = vdwg.mxu0
    %6075 = vmatpush.bf16.msra.mxu0 %v5564
    %6076 = vmatpush.bf16.msra.mxu0 %v5560
    %6077 = vmatpush.bf16.msra.mxu0 %v5556
    %6078 = vmatpush.bf16.msra.mxu0 %v5552
    %6079 = vmatpush.bf16.msra.mxu0 %v5548
    %6080 = vmatpush.bf16.msra.mxu0 %v5544
    %6081 = vmatpush.bf16.msra.mxu0 %v5540
    %6082 = vmatpush.bf16.msra.mxu0 %v5536
    %6083 = vmatmul.bf16.gmra.mxu0 %v4379
    %v6084 = vpop.f32.mrf.mxu0
    %v6085 = vadd.f32 %v6072, %v6084
    %v6086 = vpop.f32.mrf.mxu0
    %6087 = vdwg.mxu0
    %6088 = vmatpush.bf16.msra.mxu0 %v5596
    %6089 = vmatpush.bf16.msra.mxu0 %v5592
    %6090 = vmatpush.bf16.msra.mxu0 %v5588
    %6091 = vmatpush.bf16.msra.mxu0 %v5584
    %6092 = vmatpush.bf16.msra.mxu0 %v5580
    %6093 = vmatpush.bf16.msra.mxu0 %v5576
    %6094 = vmatpush.bf16.msra.mxu0 %v5572
    %6095 = vmatpush.bf16.msra.mxu0 %v5568
    %6096 = vmatmul.bf16.gmra.mxu0 %v4380
    %v6097 = vpop.f32.mrf.mxu0
    %v6098 = vadd.f32 %v6085, %v6097
    %v6099 = vpop.f32.mrf.mxu0
    %6100 = vdwg.mxu0
    %6101 = vmatpush.bf16.msra.mxu0 %v5628
    %6102 = vmatpush.bf16.msra.mxu0 %v5624
    %6103 = vmatpush.bf16.msra.mxu0 %v5620
    %6104 = vmatpush.bf16.msra.mxu0 %v5616
    %6105 = vmatpush.bf16.msra.mxu0 %v5612
    %6106 = vmatpush.bf16.msra.mxu0 %v5608
    %6107 = vmatpush.bf16.msra.mxu0 %v5604
    %6108 = vmatpush.bf16.msra.mxu0 %v5600
    %6109 = vmatmul.bf16.gmra.mxu0 %v4381
    %v6110 = vpop.f32.mrf.mxu0
    %v6111 = vadd.f32 %v6098, %v6110
    %v6112 = vpop.f32.mrf.mxu0
    %6113 = vdwg.mxu0
    %6114 = vmatpush.bf16.msra.mxu0 %v5660
    %6115 = vmatpush.bf16.msra.mxu0 %v5656
    %6116 = vmatpush.bf16.msra.mxu0 %v5652
    %6117 = vmatpush.bf16.msra.mxu0 %v5648
    %6118 = vmatpush.bf16.msra.mxu0 %v5644
    %6119 = vmatpush.bf16.msra.mxu0 %v5640
    %6120 = vmatpush.bf16.msra.mxu0 %v5636
    %6121 = vmatpush.bf16.msra.mxu0 %v5632
    %6122 = vmatmul.bf16.gmra.mxu0 %v4382
    %v6123 = vpop.f32.mrf.mxu0
    %v6124 = vadd.f32 %v6111, %v6123
    %v6125 = vpop.f32.mrf.mxu0
    %6126 = vdwg.mxu0
    %6127 = vmatpush.bf16.msra.mxu0 %v5437
    %6128 = vmatpush.bf16.msra.mxu0 %v5433
    %6129 = vmatpush.bf16.msra.mxu0 %v5429
    %6130 = vmatpush.bf16.msra.mxu0 %v5425
    %6131 = vmatpush.bf16.msra.mxu0 %v5421
    %6132 = vmatpush.bf16.msra.mxu0 %v5417
    %6133 = vmatpush.bf16.msra.mxu0 %v5413
    %6134 = vmatpush.bf16.msra.mxu0 %v5409
    %6135 = vmatmul.bf16.gmra.mxu0 %v4375
    %v6136 = vpop.f32.mrf.mxu0
    %v6137 = vadd.f32 0.0, %v6136
    %v6138 = vpop.f32.mrf.mxu0
    %6139 = vdwg.mxu0
    %6140 = vmatpush.bf16.msra.mxu0 %v5469
    %6141 = vmatpush.bf16.msra.mxu0 %v5465
    %6142 = vmatpush.bf16.msra.mxu0 %v5461
    %6143 = vmatpush.bf16.msra.mxu0 %v5457
    %6144 = vmatpush.bf16.msra.mxu0 %v5453
    %6145 = vmatpush.bf16.msra.mxu0 %v5449
    %6146 = vmatpush.bf16.msra.mxu0 %v5445
    %6147 = vmatpush.bf16.msra.mxu0 %v5441
    %6148 = vmatmul.bf16.gmra.mxu0 %v4376
    %v6149 = vpop.f32.mrf.mxu0
    %v6150 = vadd.f32 %v6137, %v6149
    %v6151 = vpop.f32.mrf.mxu0
    %6152 = vdwg.mxu0
    %6153 = vmatpush.bf16.msra.mxu0 %v5501
    %6154 = vmatpush.bf16.msra.mxu0 %v5497
    %6155 = vmatpush.bf16.msra.mxu0 %v5493
    %6156 = vmatpush.bf16.msra.mxu0 %v5489
    %6157 = vmatpush.bf16.msra.mxu0 %v5485
    %6158 = vmatpush.bf16.msra.mxu0 %v5481
    %6159 = vmatpush.bf16.msra.mxu0 %v5477
    %6160 = vmatpush.bf16.msra.mxu0 %v5473
    %6161 = vmatmul.bf16.gmra.mxu0 %v4377
    %v6162 = vpop.f32.mrf.mxu0
    %v6163 = vadd.f32 %v6150, %v6162
    %v6164 = vpop.f32.mrf.mxu0
    %6165 = vdwg.mxu0
    %6166 = vmatpush.bf16.msra.mxu0 %v5533
    %6167 = vmatpush.bf16.msra.mxu0 %v5529
    %6168 = vmatpush.bf16.msra.mxu0 %v5525
    %6169 = vmatpush.bf16.msra.mxu0 %v5521
    %6170 = vmatpush.bf16.msra.mxu0 %v5517
    %6171 = vmatpush.bf16.msra.mxu0 %v5513
    %6172 = vmatpush.bf16.msra.mxu0 %v5509
    %6173 = vmatpush.bf16.msra.mxu0 %v5505
    %6174 = vmatmul.bf16.gmra.mxu0 %v4378
    %v6175 = vpop.f32.mrf.mxu0
    %v6176 = vadd.f32 %v6163, %v6175
    %v6177 = vpop.f32.mrf.mxu0
    %6178 = vdwg.mxu0
    %6179 = vmatpush.bf16.msra.mxu0 %v5565
    %6180 = vmatpush.bf16.msra.mxu0 %v5561
    %6181 = vmatpush.bf16.msra.mxu0 %v5557
    %6182 = vmatpush.bf16.msra.mxu0 %v5553
    %6183 = vmatpush.bf16.msra.mxu0 %v5549
    %6184 = vmatpush.bf16.msra.mxu0 %v5545
    %6185 = vmatpush.bf16.msra.mxu0 %v5541
    %6186 = vmatpush.bf16.msra.mxu0 %v5537
    %6187 = vmatmul.bf16.gmra.mxu0 %v4379
    %v6188 = vpop.f32.mrf.mxu0
    %v6189 = vadd.f32 %v6176, %v6188
    %v6190 = vpop.f32.mrf.mxu0
    %6191 = vdwg.mxu0
    %6192 = vmatpush.bf16.msra.mxu0 %v5597
    %6193 = vmatpush.bf16.msra.mxu0 %v5593
    %6194 = vmatpush.bf16.msra.mxu0 %v5589
    %6195 = vmatpush.bf16.msra.mxu0 %v5585
    %6196 = vmatpush.bf16.msra.mxu0 %v5581
    %6197 = vmatpush.bf16.msra.mxu0 %v5577
    %6198 = vmatpush.bf16.msra.mxu0 %v5573
    %6199 = vmatpush.bf16.msra.mxu0 %v5569
    %6200 = vmatmul.bf16.gmra.mxu0 %v4380
    %v6201 = vpop.f32.mrf.mxu0
    %v6202 = vadd.f32 %v6189, %v6201
    %v6203 = vpop.f32.mrf.mxu0
    %6204 = vdwg.mxu0
    %6205 = vmatpush.bf16.msra.mxu0 %v5629
    %6206 = vmatpush.bf16.msra.mxu0 %v5625
    %6207 = vmatpush.bf16.msra.mxu0 %v5621
    %6208 = vmatpush.bf16.msra.mxu0 %v5617
    %6209 = vmatpush.bf16.msra.mxu0 %v5613
    %6210 = vmatpush.bf16.msra.mxu0 %v5609
    %6211 = vmatpush.bf16.msra.mxu0 %v5605
    %6212 = vmatpush.bf16.msra.mxu0 %v5601
    %6213 = vmatmul.bf16.gmra.mxu0 %v4381
    %v6214 = vpop.f32.mrf.mxu0
    %v6215 = vadd.f32 %v6202, %v6214
    %v6216 = vpop.f32.mrf.mxu0
    %6217 = vdwg.mxu0
    %6218 = vmatpush.bf16.msra.mxu0 %v5661
    %6219 = vmatpush.bf16.msra.mxu0 %v5657
    %6220 = vmatpush.bf16.msra.mxu0 %v5653
    %6221 = vmatpush.bf16.msra.mxu0 %v5649
    %6222 = vmatpush.bf16.msra.mxu0 %v5645
    %6223 = vmatpush.bf16.msra.mxu0 %v5641
    %6224 = vmatpush.bf16.msra.mxu0 %v5637
    %6225 = vmatpush.bf16.msra.mxu0 %v5633
    %6226 = vmatmul.bf16.gmra.mxu0 %v4382
    %v6227 = vpop.f32.mrf.mxu0
    %v6228 = vadd.f32 %v6215, %v6227
    %v6229 = vpop.f32.mrf.mxu0
    %6230 = vdwg.mxu0
    %6231 = vmatpush.bf16.msra.mxu0 %v5438
    %6232 = vmatpush.bf16.msra.mxu0 %v5434
    %6233 = vmatpush.bf16.msra.mxu0 %v5430
    %6234 = vmatpush.bf16.msra.mxu0 %v5426
    %6235 = vmatpush.bf16.msra.mxu0 %v5422
    %6236 = vmatpush.bf16.msra.mxu0 %v5418
    %6237 = vmatpush.bf16.msra.mxu0 %v5414
    %6238 = vmatpush.bf16.msra.mxu0 %v5410
    %6239 = vmatmul.bf16.gmra.mxu0 %v4375
    %v6240 = vpop.f32.mrf.mxu0
    %v6241 = vadd.f32 0.0, %v6240
    %v6242 = vpop.f32.mrf.mxu0
    %6243 = vdwg.mxu0
    %6244 = vmatpush.bf16.msra.mxu0 %v5470
    %6245 = vmatpush.bf16.msra.mxu0 %v5466
    %6246 = vmatpush.bf16.msra.mxu0 %v5462
    %6247 = vmatpush.bf16.msra.mxu0 %v5458
    %6248 = vmatpush.bf16.msra.mxu0 %v5454
    %6249 = vmatpush.bf16.msra.mxu0 %v5450
    %6250 = vmatpush.bf16.msra.mxu0 %v5446
    %6251 = vmatpush.bf16.msra.mxu0 %v5442
    %6252 = vmatmul.bf16.gmra.mxu0 %v4376
    %v6253 = vpop.f32.mrf.mxu0
    %v6254 = vadd.f32 %v6241, %v6253
    %v6255 = vpop.f32.mrf.mxu0
    %6256 = vdwg.mxu0
    %6257 = vmatpush.bf16.msra.mxu0 %v5502
    %6258 = vmatpush.bf16.msra.mxu0 %v5498
    %6259 = vmatpush.bf16.msra.mxu0 %v5494
    %6260 = vmatpush.bf16.msra.mxu0 %v5490
    %6261 = vmatpush.bf16.msra.mxu0 %v5486
    %6262 = vmatpush.bf16.msra.mxu0 %v5482
    %6263 = vmatpush.bf16.msra.mxu0 %v5478
    %6264 = vmatpush.bf16.msra.mxu0 %v5474
    %6265 = vmatmul.bf16.gmra.mxu0 %v4377
    %v6266 = vpop.f32.mrf.mxu0
    %v6267 = vadd.f32 %v6254, %v6266
    %v6268 = vpop.f32.mrf.mxu0
    %6269 = vdwg.mxu0
    %6270 = vmatpush.bf16.msra.mxu0 %v5534
    %6271 = vmatpush.bf16.msra.mxu0 %v5530
    %6272 = vmatpush.bf16.msra.mxu0 %v5526
    %6273 = vmatpush.bf16.msra.mxu0 %v5522
    %6274 = vmatpush.bf16.msra.mxu0 %v5518
    %6275 = vmatpush.bf16.msra.mxu0 %v5514
    %6276 = vmatpush.bf16.msra.mxu0 %v5510
    %6277 = vmatpush.bf16.msra.mxu0 %v5506
    %6278 = vmatmul.bf16.gmra.mxu0 %v4378
    %v6279 = vpop.f32.mrf.mxu0
    %v6280 = vadd.f32 %v6267, %v6279
    %v6281 = vpop.f32.mrf.mxu0
    %6282 = vdwg.mxu0
    %6283 = vmatpush.bf16.msra.mxu0 %v5566
    %6284 = vmatpush.bf16.msra.mxu0 %v5562
    %6285 = vmatpush.bf16.msra.mxu0 %v5558
    %6286 = vmatpush.bf16.msra.mxu0 %v5554
    %6287 = vmatpush.bf16.msra.mxu0 %v5550
    %6288 = vmatpush.bf16.msra.mxu0 %v5546
    %6289 = vmatpush.bf16.msra.mxu0 %v5542
    %6290 = vmatpush.bf16.msra.mxu0 %v5538
    %6291 = vmatmul.bf16.gmra.mxu0 %v4379
    %v6292 = vpop.f32.mrf.mxu0
    %v6293 = vadd.f32 %v6280, %v6292
    %v6294 = vpop.f32.mrf.mxu0
    %6295 = vdwg.mxu0
    %6296 = vmatpush.bf16.msra.mxu0 %v5598
    %6297 = vmatpush.bf16.msra.mxu0 %v5594
    %6298 = vmatpush.bf16.msra.mxu0 %v5590
    %6299 = vmatpush.bf16.msra.mxu0 %v5586
    %6300 = vmatpush.bf16.msra.mxu0 %v5582
    %6301 = vmatpush.bf16.msra.mxu0 %v5578
    %6302 = vmatpush.bf16.msra.mxu0 %v5574
    %6303 = vmatpush.bf16.msra.mxu0 %v5570
    %6304 = vmatmul.bf16.gmra.mxu0 %v4380
    %v6305 = vpop.f32.mrf.mxu0
    %v6306 = vadd.f32 %v6293, %v6305
    %v6307 = vpop.f32.mrf.mxu0
    %6308 = vdwg.mxu0
    %6309 = vmatpush.bf16.msra.mxu0 %v5630
    %6310 = vmatpush.bf16.msra.mxu0 %v5626
    %6311 = vmatpush.bf16.msra.mxu0 %v5622
    %6312 = vmatpush.bf16.msra.mxu0 %v5618
    %6313 = vmatpush.bf16.msra.mxu0 %v5614
    %6314 = vmatpush.bf16.msra.mxu0 %v5610
    %6315 = vmatpush.bf16.msra.mxu0 %v5606
    %6316 = vmatpush.bf16.msra.mxu0 %v5602
    %6317 = vmatmul.bf16.gmra.mxu0 %v4381
    %v6318 = vpop.f32.mrf.mxu0
    %v6319 = vadd.f32 %v6306, %v6318
    %v6320 = vpop.f32.mrf.mxu0
    %6321 = vdwg.mxu0
    %6322 = vmatpush.bf16.msra.mxu0 %v5662
    %6323 = vmatpush.bf16.msra.mxu0 %v5658
    %6324 = vmatpush.bf16.msra.mxu0 %v5654
    %6325 = vmatpush.bf16.msra.mxu0 %v5650
    %6326 = vmatpush.bf16.msra.mxu0 %v5646
    %6327 = vmatpush.bf16.msra.mxu0 %v5642
    %6328 = vmatpush.bf16.msra.mxu0 %v5638
    %6329 = vmatpush.bf16.msra.mxu0 %v5634
    %6330 = vmatmul.bf16.gmra.mxu0 %v4382
    %v6331 = vpop.f32.mrf.mxu0
    %v6332 = vadd.f32 %v6319, %v6331
    %v6333 = vpop.f32.mrf.mxu0
    %6334 = vdwg.mxu0
    %v6335 = vmax.f32 %v6020, %v6228
    %v6336 = vmax.f32 %v6124, %v6332
    %v6337 = vadd.s32 %v1193, 128
    %vm6338 = vcmp.eq.s32.totalorder %v1184, 3
    %vm6339 = vcmp.eq.s32.totalorder %v1184, 7
    %vm6340 = vmor %vm6338, %vm6339
    %vm6341 = vcmp.ge.s32.totalorder %v1193, 64
    %vm6342 = vcmp.ge.s32.totalorder %v6337, 64
    %vm6343 = vmand %vm6340, %vm6341
    %vm6344 = vmand %vm6340, %vm6342
    %v6345 = vsel %vm6343, 0.0, %v6335
    %v6346 = vsel %vm6344, 0.0, %v6336
    %v6347 = vrot.slane %v6345, 4
    %v6348 = vadd.f32 %v6345, %v6347
    %v6349 = vrot.slane %v6348, 2
    %v6350 = vadd.f32 %v6348, %v6349
    %v6351 = vrot.slane %v6350, 1
    %v6352 = vadd.f32 %v6350, %v6351
    %v6353 = vrot.slane %v6346, 4
    %v6354 = vadd.f32 %v6346, %v6353
    %v6355 = vrot.slane %v6354, 2
    %v6356 = vadd.f32 %v6354, %v6355
    %v6357 = vrot.slane %v6356, 1
    %v6358 = vadd.f32 %v6356, %v6357
    %v6359 = vadd.f32 %v6352, %v6358
    %6361 = vrot.lane.b32.xlu0 %v6359, 64
    %v6362 = vpop.permute.xlu0 %6361
    %v6364 = vadd.f32 %v6359, %v6362
    %v6365 = vrcp.pop 26.0
    %v6366 = vmul.f32 26.0, %v6365
    %v6367 = vsub.f32 1.0, %v6366
    %v6368 = vmul.f32 %v6365, %v6367
    %v6369 = vadd.f32 %v6365, %v6368
    %vm6370 = vweird.f32 %v6365
    %v6371 = vsel %vm6370, %v6365, %v6369
    %v6372 = vmul.f32 %v6364, %v6371
    %6374 = vrot.lane.b32.xlu0 %v6372, 64
    %v6375 = vpop.permute.xlu0 %6374
    %v6377 = vsel %vm141, %v6372, %v6375
    %v6378 = vperm.slane %v6377, 0
    %v6379 = vsub.f32 %v6345, %v6378
    %v6380 = vsub.f32 %v6346, %v6378
    %v6381 = vmul.f32 %v6379, %v6379
    %v6382 = vmul.f32 %v6380, %v6380
    %v6383 = vrot.slane %v6381, 4
    %v6384 = vadd.f32 %v6381, %v6383
    %v6385 = vrot.slane %v6384, 2
    %v6386 = vadd.f32 %v6384, %v6385
    %v6387 = vrot.slane %v6386, 1
    %v6388 = vadd.f32 %v6386, %v6387
    %v6389 = vrot.slane %v6382, 4
    %v6390 = vadd.f32 %v6382, %v6389
    %v6391 = vrot.slane %v6390, 2
    %v6392 = vadd.f32 %v6390, %v6391
    %v6393 = vrot.slane %v6392, 1
    %v6394 = vadd.f32 %v6392, %v6393
    %v6395 = vadd.f32 %v6388, %v6394
    %6397 = vrot.lane.b32.xlu0 %v6395, 64
    %v6398 = vpop.permute.xlu0 %6397
    %v6400 = vadd.f32 %v6395, %v6398
    %v6401 = vmul.f32 %v6372, %v6372
    %v6402 = vmul.f32 %v6401, 6.0
    %v6403 = vsub.f32 %v6400, %v6402
    %v6404 = vmul.f32 %v6403, %v6371
    %v6405 = vld [vmem:[%s14] sm:$0x1]
    %v6406 = vadd.f32 %v6404, 1e-05
    %v6407 = vrsqrt.pop %v6406
    %v6408 = vmul.f32 %v6407, %v6406
    %v6409 = vmul.f32 %v6408, %v6407
    %v6410 = vmul.f32 0.5, %v6409
    %v6411 = vsub.f32 1.5, %v6410
    %v6412 = vmul.f32 %v6407, %v6411
    %vm6413 = vweird.f32 %v6406
    %vm6414 = vweird.f32 %v6407
    %vm6415 = vmor %vm6413, %vm6414
    %v6416 = vsel %vm6415, %v6407, %v6412
    %v6417 = vmul.f32 %v6405, %v6416
    %v6418 = vld [vmem:[%s15] sm:$0x1]
    %v6419 = vmul.f32 %v6372, %v6417
    %v6420 = vsub.f32 %v6418, %v6419
    %v6422 = vperm.slane %v6417, 0
    %6423 = vrot.lane.b32.xlu0 %v6422, 64
    %v6424 = vpop.permute.xlu0 %6423
    %v6426 = vsel %vm141, %v6417, %v6424
    %v6428 = vperm.slane %v6420, 0
    %6429 = vrot.lane.b32.xlu0 %v6428, 64
    %v6430 = vpop.permute.xlu0 %6429
    %v6432 = vsel %vm141, %v6420, %v6430
    %v6433 = vperm.slane %v6426, 0
    %v6434 = vmul.f32 %v6345, %v6433
    %v6435 = vmul.f32 %v6346, %v6433
    %v6436 = vperm.slane %v6432, 0
    %v6437 = vadd.f32 %v6434, %v6436
    %v6438 = vadd.f32 %v6435, %v6436
    %vm6439 = vcmp.gt.f32.partialorder %v6437, 0.0
    %vm6440 = vcmp.gt.f32.partialorder %v6438, 0.0
    %vm6441 = vcmp.lt.f32.partialorder %v6437, 0.0
    %vm6442 = vcmp.lt.f32.partialorder %v6438, 0.0
    %v6443 = vsel %vm6441, -1.0, 0.0
    %v6444 = vsel %vm6442, -1.0, 0.0
    %v6445 = vsel %vm6439, 1.0, %v6443
    %v6446 = vsel %vm6440, 1.0, %v6444
    %v6447 = vsel %vm6343, 0.0, %v6445
    %v6448 = vsel %vm6344, 0.0, %v6446
    %v6450 = vrot.slane %v6448, 7
    %6451 = vrot.lane.b32.xlu0 %v6450, 64
    %v6452 = vpop.permute.xlu0 %6451
    %vm6454 = vcmask 519169
    %6455 = vst.msk [vmem:[#allocation6] sm:$0xe] %vm6454, %v6452
    %6456 = vst.sshfl [vmem:[#allocation1] sm:$0xff pattern:$0x75316420] %v6448
    %s6457 = scalar_lea.vmem [#allocation1], 1
    %v6458 = vld [vmem:[%s6457] ss:$2 sm:$0xff]
    %v6459 = vrot.slane %v6458, 7
    %6460 = vrot.lane.b32.xlu0 %v6459, 64
    %v6461 = vpop.permute.xlu0 %6460
    %s6463 = scalar_lea.vmem [#allocation6], 8
    %6464 = vst.msk [vmem:[%s6463] sm:$0xe] %vm6454, %v6461
    %v6466 = vrot.slane %v6448, 4
    %v6467 = vsel %vm1687, %v6447, %v6466
    %6468 = vrot.lane.b32.xlu0 %v6467, 64
    %v6469 = vpop.permute.xlu0 %6468
    %v6470 = vrot.slane %v6469, 4
    %v6471 = vsel %vm141, %v6470, %v6469
    %vm6473 = vcmask 1043968
    %vm6474 = vcmask 1047556
    %vm6475 = vmor %vm6474, %vm6473
    %6476 = vst.msk [vmem:[#allocation6] sm:$0xff] %vm6475, %v6471
    %6477 = vst.sshfl [vmem:[#allocation1] sm:$0xff pattern:$0x75316420] %v6447
    %6478 = vst.sshfl [vmem:[#allocation1 + $0x8] sm:$0xff pattern:$0x75316420] %v6448
    %s6479 = scalar_lea.vmem [#allocation1], 1
    %v6480 = vld [vmem:[%s6479] ss:$2 sm:$0xff]
    %6481 = vrot.lane.b32.xlu0 %v6480, 64
    %v6482 = vpop.permute.xlu0 %6481
    %v6483 = vrot.slane %v6482, 4
    %v6484 = vsel %vm141, %v6483, %v6482
    %6486 = vst.msk [vmem:[%s6463] sm:$0xff] %vm6475, %v6484
    %v6487 = vld [vmem:[#allocation6] sm:$0x77]
    %v6488 = vld [vmem:[#allocation6] sm:$0xee]
    %6490 = vst [vmem:[#allocation1] ss:$2 sm:$0xff] %v6487
    %v6491 = vld.sshfl [vmem:[#allocation1] sm:$0xff pattern:$0x75316420]
    %v6492 = vld.sshfl [vmem:[#allocation1 + $0x8] sm:$0xff pattern:$0x75316420]
    %6496 = vst [vmem:[#allocation1] ss:$2 sm:$0xff] %v6488
    %v6497 = vld.sshfl [vmem:[#allocation1] sm:$0xff pattern:$0x75316420]
    %v6498 = vld.sshfl [vmem:[#allocation1 + $0x8] sm:$0xff pattern:$0x75316420]
    %v6499 = vrot.slane %v6497, 1
    %v6500 = vrot.slane %v6498, 1
    %v6503 = vld [vmem:[%s6463] sm:$0x77]
    %v6504 = vld [vmem:[%s6463] sm:$0xee]
    %6506 = vst [vmem:[#allocation1] ss:$2 sm:$0xff] %v6503
    %v6507 = vld.sshfl [vmem:[#allocation1] sm:$0xff pattern:$0x75316420]
    %v6508 = vld.sshfl [vmem:[#allocation1 + $0x8] sm:$0xff pattern:$0x75316420]
    %6510 = vst [vmem:[#allocation1] ss:$2 sm:$0xff] %v6504
    %v6511 = vld.sshfl [vmem:[#allocation1] sm:$0xff pattern:$0x75316420]
    %v6512 = vld.sshfl [vmem:[#allocation1 + $0x8] sm:$0xff pattern:$0x75316420]
    %v6513 = vrot.slane %v6511, 1
    %v6514 = vrot.slane %v6512, 1
    %v6515 = vrot.slane %v6507, 5
    %v6516 = vrot.slane %v6508, 5
    %v6517 = vrot.slane %v6513, 5
    %v6518 = vrot.slane %v6514, 5
    %v6523 = vsel %vm2545, %v6491, %v6515
    %v6524 = vsel %vm2545, %v6492, %v6516
    %v6525 = vsel %vm2545, %v6499, %v6517
    %v6526 = vsel %vm2545, %v6500, %v6518
    %v6527 = vpack.c.bf16 %v6523, %v6523
    %v6528 = vpack.c.bf16 %v6524, %v6524
    %v6529 = vpack.c.bf16 %v6525, %v6525
    %v6530 = vpack.c.bf16 %v6526, %v6526
    %v6531 = vld [vmem:[%s16] sm:$0xff]
    %v6532 = vld [vmem:[%s16 + $0x8] sm:$0xff]
    %v6533 = vld [vmem:[%s16 + $0x10] sm:$0xff]
    %v6534 = vld [vmem:[%s16 + $0x18] sm:$0xff]
    %v6535 = vld [vmem:[%s16 + $0x20] sm:$0xff]
    %v6536 = vld [vmem:[%s16 + $0x28] sm:$0xff]
    %v6537 = vld [vmem:[%s16 + $0x30] sm:$0xff]
    %v6538 = vld [vmem:[%s16 + $0x38] sm:$0xff]
    %v6539 = vld [vmem:[%s16 + $0x40] sm:$0xff]
    %v6540 = vld [vmem:[%s16 + $0x48] sm:$0xff]
    %v6541 = vld [vmem:[%s16 + $0x50] sm:$0xff]
    %v6542 = vld [vmem:[%s16 + $0x58] sm:$0xff]
    %v6543 = vld [vmem:[%s16 + $0x60] sm:$0xff]
    %v6544 = vld [vmem:[%s16 + $0x68] sm:$0xff]
    %v6545 = vld [vmem:[%s16 + $0x70] sm:$0xff]
    %v6546 = vld [vmem:[%s16 + $0x78] sm:$0xff]
    %v6547 = vld [vmem:[%s16 + $0x80] sm:$0xff]
    %v6548 = vld [vmem:[%s16 + $0x88] sm:$0xff]
    %v6549 = vld [vmem:[%s16 + $0x90] sm:$0xff]
    %v6550 = vld [vmem:[%s16 + $0x98] sm:$0xff]
    %v6551 = vld [vmem:[%s16 + $0xa0] sm:$0xff]
    %v6552 = vld [vmem:[%s16 + $0xa8] sm:$0xff]
    %v6553 = vld [vmem:[%s16 + $0xb0] sm:$0xff]
    %v6554 = vld [vmem:[%s16 + $0xb8] sm:$0xff]
    %v6555 = vld [vmem:[%s16 + $0xc0] sm:$0xff]
    %v6556 = vld [vmem:[%s16 + $0xc8] sm:$0xff]
    %v6557 = vld [vmem:[%s16 + $0xd0] sm:$0xff]
    %v6558 = vld [vmem:[%s16 + $0xd8] sm:$0xff]
    %v6559 = vld [vmem:[%s16 + $0xe0] sm:$0xff]
    %v6560 = vld [vmem:[%s16 + $0xe8] sm:$0xff]
    %v6561 = vld [vmem:[%s16 + $0xf0] sm:$0xff]
    %v6562 = vld [vmem:[%s16 + $0xf8] sm:$0xff]
    %v6563 = vld [vmem:[%s16 + $0x100] sm:$0xff]
    %v6564 = vld [vmem:[%s16 + $0x108] sm:$0xff]
    %v6565 = vld [vmem:[%s16 + $0x110] sm:$0xff]
    %v6566 = vld [vmem:[%s16 + $0x118] sm:$0xff]
    %v6567 = vld [vmem:[%s16 + $0x120] sm:$0xff]
    %v6568 = vld [vmem:[%s16 + $0x128] sm:$0xff]
    %v6569 = vld [vmem:[%s16 + $0x130] sm:$0xff]
    %v6570 = vld [vmem:[%s16 + $0x138] sm:$0xff]
    %v6571 = vld [vmem:[%s16 + $0x140] sm:$0xff]
    %v6572 = vld [vmem:[%s16 + $0x148] sm:$0xff]
    %v6573 = vld [vmem:[%s16 + $0x150] sm:$0xff]
    %v6574 = vld [vmem:[%s16 + $0x158] sm:$0xff]
    %v6575 = vld [vmem:[%s16 + $0x160] sm:$0xff]
    %v6576 = vld [vmem:[%s16 + $0x168] sm:$0xff]
    %v6577 = vld [vmem:[%s16 + $0x170] sm:$0xff]
    %v6578 = vld [vmem:[%s16 + $0x178] sm:$0xff]
    %v6579 = vld [vmem:[%s16 + $0x180] sm:$0xff]
    %v6580 = vld [vmem:[%s16 + $0x188] sm:$0xff]
    %v6581 = vld [vmem:[%s16 + $0x190] sm:$0xff]
    %v6582 = vld [vmem:[%s16 + $0x198] sm:$0xff]
    %v6583 = vld [vmem:[%s16 + $0x1a0] sm:$0xff]
    %v6584 = vld [vmem:[%s16 + $0x1a8] sm:$0xff]
    %v6585 = vld [vmem:[%s16 + $0x1b0] sm:$0xff]
    %v6586 = vld [vmem:[%s16 + $0x1b8] sm:$0xff]
    %v6587 = vld [vmem:[%s16 + $0x1c0] sm:$0xff]
    %v6588 = vld [vmem:[%s16 + $0x1c8] sm:$0xff]
    %v6589 = vld [vmem:[%s16 + $0x1d0] sm:$0xff]
    %v6590 = vld [vmem:[%s16 + $0x1d8] sm:$0xff]
    %v6591 = vld [vmem:[%s16 + $0x1e0] sm:$0xff]
    %v6592 = vld [vmem:[%s16 + $0x1e8] sm:$0xff]
    %v6593 = vld [vmem:[%s16 + $0x1f0] sm:$0xff]
    %v6594 = vld [vmem:[%s16 + $0x1f8] sm:$0xff]
    %v6659 = vunpack.c.l.b16 %v6531
    %v6660 = vunpack.c.h.b16 %v6531
    %v6661 = vunpack.c.l.b16 %v6532
    %v6662 = vunpack.c.h.b16 %v6532
    %v6663 = vunpack.c.l.b16 %v6533
    %v6664 = vunpack.c.h.b16 %v6533
    %v6665 = vunpack.c.l.b16 %v6534
    %v6666 = vunpack.c.h.b16 %v6534
    %v6667 = vunpack.c.l.b16 %v6535
    %v6668 = vunpack.c.h.b16 %v6535
    %v6669 = vunpack.c.l.b16 %v6536
    %v6670 = vunpack.c.h.b16 %v6536
    %v6671 = vunpack.c.l.b16 %v6537
    %v6672 = vunpack.c.h.b16 %v6537
    %v6673 = vunpack.c.l.b16 %v6538
    %v6674 = vunpack.c.h.b16 %v6538
    %v6675 = vunpack.c.l.b16 %v6539
    %v6676 = vunpack.c.h.b16 %v6539
    %v6677 = vunpack.c.l.b16 %v6540
    %v6678 = vunpack.c.h.b16 %v6540
    %v6679 = vunpack.c.l.b16 %v6541
    %v6680 = vunpack.c.h.b16 %v6541
    %v6681 = vunpack.c.l.b16 %v6542
    %v6682 = vunpack.c.h.b16 %v6542
    %v6683 = vunpack.c.l.b16 %v6543
    %v6684 = vunpack.c.h.b16 %v6543
    %v6685 = vunpack.c.l.b16 %v6544
    %v6686 = vunpack.c.h.b16 %v6544
    %v6687 = vunpack.c.l.b16 %v6545
    %v6688 = vunpack.c.h.b16 %v6545
    %v6689 = vunpack.c.l.b16 %v6546
    %v6690 = vunpack.c.h.b16 %v6546
    %v6691 = vunpack.c.l.b16 %v6547
    %v6692 = vunpack.c.h.b16 %v6547
    %v6693 = vunpack.c.l.b16 %v6548
    %v6694 = vunpack.c.h.b16 %v6548
    %v6695 = vunpack.c.l.b16 %v6549
    %v6696 = vunpack.c.h.b16 %v6549
    %v6697 = vunpack.c.l.b16 %v6550
    %v6698 = vunpack.c.h.b16 %v6550
    %v6699 = vunpack.c.l.b16 %v6551
    %v6700 = vunpack.c.h.b16 %v6551
    %v6701 = vunpack.c.l.b16 %v6552
    %v6702 = vunpack.c.h.b16 %v6552
    %v6703 = vunpack.c.l.b16 %v6553
    %v6704 = vunpack.c.h.b16 %v6553
    %v6705 = vunpack.c.l.b16 %v6554
    %v6706 = vunpack.c.h.b16 %v6554
    %v6707 = vunpack.c.l.b16 %v6555
    %v6708 = vunpack.c.h.b16 %v6555
    %v6709 = vunpack.c.l.b16 %v6556
    %v6710 = vunpack.c.h.b16 %v6556
    %v6711 = vunpack.c.l.b16 %v6557
    %v6712 = vunpack.c.h.b16 %v6557
    %v6713 = vunpack.c.l.b16 %v6558
    %v6714 = vunpack.c.h.b16 %v6558
    %v6715 = vunpack.c.l.b16 %v6559
    %v6716 = vunpack.c.h.b16 %v6559
    %v6717 = vunpack.c.l.b16 %v6560
    %v6718 = vunpack.c.h.b16 %v6560
    %v6719 = vunpack.c.l.b16 %v6561
    %v6720 = vunpack.c.h.b16 %v6561
    %v6721 = vunpack.c.l.b16 %v6562
    %v6722 = vunpack.c.h.b16 %v6562
    %v6723 = vunpack.c.l.b16 %v6563
    %v6724 = vunpack.c.h.b16 %v6563
    %v6725 = vunpack.c.l.b16 %v6564
    %v6726 = vunpack.c.h.b16 %v6564
    %v6727 = vunpack.c.l.b16 %v6565
    %v6728 = vunpack.c.h.b16 %v6565
    %v6729 = vunpack.c.l.b16 %v6566
    %v6730 = vunpack.c.h.b16 %v6566
    %v6731 = vunpack.c.l.b16 %v6567
    %v6732 = vunpack.c.h.b16 %v6567
    %v6733 = vunpack.c.l.b16 %v6568
    %v6734 = vunpack.c.h.b16 %v6568
    %v6735 = vunpack.c.l.b16 %v6569
    %v6736 = vunpack.c.h.b16 %v6569
    %v6737 = vunpack.c.l.b16 %v6570
    %v6738 = vunpack.c.h.b16 %v6570
    %v6739 = vunpack.c.l.b16 %v6571
    %v6740 = vunpack.c.h.b16 %v6571
    %v6741 = vunpack.c.l.b16 %v6572
    %v6742 = vunpack.c.h.b16 %v6572
    %v6743 = vunpack.c.l.b16 %v6573
    %v6744 = vunpack.c.h.b16 %v6573
    %v6745 = vunpack.c.l.b16 %v6574
    %v6746 = vunpack.c.h.b16 %v6574
    %v6747 = vunpack.c.l.b16 %v6575
    %v6748 = vunpack.c.h.b16 %v6575
    %v6749 = vunpack.c.l.b16 %v6576
    %v6750 = vunpack.c.h.b16 %v6576
    %v6751 = vunpack.c.l.b16 %v6577
    %v6752 = vunpack.c.h.b16 %v6577
    %v6753 = vunpack.c.l.b16 %v6578
    %v6754 = vunpack.c.h.b16 %v6578
    %v6755 = vunpack.c.l.b16 %v6579
    %v6756 = vunpack.c.h.b16 %v6579
    %v6757 = vunpack.c.l.b16 %v6580
    %v6758 = vunpack.c.h.b16 %v6580
    %v6759 = vunpack.c.l.b16 %v6581
    %v6760 = vunpack.c.h.b16 %v6581
    %v6761 = vunpack.c.l.b16 %v6582
    %v6762 = vunpack.c.h.b16 %v6582
    %v6763 = vunpack.c.l.b16 %v6583
    %v6764 = vunpack.c.h.b16 %v6583
    %v6765 = vunpack.c.l.b16 %v6584
    %v6766 = vunpack.c.h.b16 %v6584
    %v6767 = vunpack.c.l.b16 %v6585
    %v6768 = vunpack.c.h.b16 %v6585
    %v6769 = vunpack.c.l.b16 %v6586
    %v6770 = vunpack.c.h.b16 %v6586
    %v6771 = vunpack.c.l.b16 %v6587
    %v6772 = vunpack.c.h.b16 %v6587
    %v6773 = vunpack.c.l.b16 %v6588
    %v6774 = vunpack.c.h.b16 %v6588
    %v6775 = vunpack.c.l.b16 %v6589
    %v6776 = vunpack.c.h.b16 %v6589
    %v6777 = vunpack.c.l.b16 %v6590
    %v6778 = vunpack.c.h.b16 %v6590
    %v6779 = vunpack.c.l.b16 %v6591
    %v6780 = vunpack.c.h.b16 %v6591
    %v6781 = vunpack.c.l.b16 %v6592
    %v6782 = vunpack.c.h.b16 %v6592
    %v6783 = vunpack.c.l.b16 %v6593
    %v6784 = vunpack.c.h.b16 %v6593
    %v6785 = vunpack.c.l.b16 %v6594
    %v6786 = vunpack.c.h.b16 %v6594
    %v6787 = vpack.c.b16 %v6661, %v6659
    %v6788 = vpack.c.b16 %v6662, %v6660
    %v6789 = vpack.c.b16 %v6665, %v6663
    %v6790 = vpack.c.b16 %v6666, %v6664
    %v6791 = vpack.c.b16 %v6669, %v6667
    %v6792 = vpack.c.b16 %v6670, %v6668
    %v6793 = vpack.c.b16 %v6673, %v6671
    %v6794 = vpack.c.b16 %v6674, %v6672
    %v6795 = vpack.c.b16 %v6677, %v6675
    %v6796 = vpack.c.b16 %v6678, %v6676
    %v6797 = vpack.c.b16 %v6681, %v6679
    %v6798 = vpack.c.b16 %v6682, %v6680
    %v6799 = vpack.c.b16 %v6685, %v6683
    %v6800 = vpack.c.b16 %v6686, %v6684
    %v6801 = vpack.c.b16 %v6689, %v6687
    %v6802 = vpack.c.b16 %v6690, %v6688
    %v6803 = vpack.c.b16 %v6693, %v6691
    %v6804 = vpack.c.b16 %v6694, %v6692
    %v6805 = vpack.c.b16 %v6697, %v6695
    %v6806 = vpack.c.b16 %v6698, %v6696
    %v6807 = vpack.c.b16 %v6701, %v6699
    %v6808 = vpack.c.b16 %v6702, %v6700
    %v6809 = vpack.c.b16 %v6705, %v6703
    %v6810 = vpack.c.b16 %v6706, %v6704
    %v6811 = vpack.c.b16 %v6709, %v6707
    %v6812 = vpack.c.b16 %v6710, %v6708
    %v6813 = vpack.c.b16 %v6713, %v6711
    %v6814 = vpack.c.b16 %v6714, %v6712
    %v6815 = vpack.c.b16 %v6717, %v6715
    %v6816 = vpack.c.b16 %v6718, %v6716
    %v6817 = vpack.c.b16 %v6721, %v6719
    %v6818 = vpack.c.b16 %v6722, %v6720
    %v6819 = vpack.c.b16 %v6725, %v6723
    %v6820 = vpack.c.b16 %v6726, %v6724
    %v6821 = vpack.c.b16 %v6729, %v6727
    %v6822 = vpack.c.b16 %v6730, %v6728
    %v6823 = vpack.c.b16 %v6733, %v6731
    %v6824 = vpack.c.b16 %v6734, %v6732
    %v6825 = vpack.c.b16 %v6737, %v6735
    %v6826 = vpack.c.b16 %v6738, %v6736
    %v6827 = vpack.c.b16 %v6741, %v6739
    %v6828 = vpack.c.b16 %v6742, %v6740
    %v6829 = vpack.c.b16 %v6745, %v6743
    %v6830 = vpack.c.b16 %v6746, %v6744
    %v6831 = vpack.c.b16 %v6749, %v6747
    %v6832 = vpack.c.b16 %v6750, %v6748
    %v6833 = vpack.c.b16 %v6753, %v6751
    %v6834 = vpack.c.b16 %v6754, %v6752
    %v6835 = vpack.c.b16 %v6757, %v6755
    %v6836 = vpack.c.b16 %v6758, %v6756
    %v6837 = vpack.c.b16 %v6761, %v6759
    %v6838 = vpack.c.b16 %v6762, %v6760
    %v6839 = vpack.c.b16 %v6765, %v6763
    %v6840 = vpack.c.b16 %v6766, %v6764
    %v6841 = vpack.c.b16 %v6769, %v6767
    %v6842 = vpack.c.b16 %v6770, %v6768
    %v6843 = vpack.c.b16 %v6773, %v6771
    %v6844 = vpack.c.b16 %v6774, %v6772
    %v6845 = vpack.c.b16 %v6777, %v6775
    %v6846 = vpack.c.b16 %v6778, %v6776
    %v6847 = vpack.c.b16 %v6781, %v6779
    %v6848 = vpack.c.b16 %v6782, %v6780
    %v6849 = vpack.c.b16 %v6785, %v6783
    %v6850 = vpack.c.b16 %v6786, %v6784
    %6915 = vmatpush.bf16.msra.mxu0 %v6801
    %6916 = vmatpush.bf16.msra.mxu0 %v6799
    %6917 = vmatpush.bf16.msra.mxu0 %v6797
    %6918 = vmatpush.bf16.msra.mxu0 %v6795
    %6919 = vmatpush.bf16.msra.mxu0 %v6793
    %6920 = vmatpush.bf16.msra.mxu0 %v6791
    %6921 = vmatpush.bf16.msra.mxu0 %v6789
    %6922 = vmatpush.bf16.msra.mxu0 %v6787
    %6923 = vmatmul.bf16.gmra.mxu0 %v6527
    %v6924 = vpop.f32.mrf.mxu0
    %v6925 = vadd.f32 0.0, %v6924
    %v6926 = vpop.f32.mrf.mxu0
    %6927 = vdwg.mxu0
    %6928 = vmatpush.bf16.msra.mxu0 %v6817
    %6929 = vmatpush.bf16.msra.mxu0 %v6815
    %6930 = vmatpush.bf16.msra.mxu0 %v6813
    %6931 = vmatpush.bf16.msra.mxu0 %v6811
    %6932 = vmatpush.bf16.msra.mxu0 %v6809
    %6933 = vmatpush.bf16.msra.mxu0 %v6807
    %6934 = vmatpush.bf16.msra.mxu0 %v6805
    %6935 = vmatpush.bf16.msra.mxu0 %v6803
    %6936 = vmatmul.bf16.gmra.mxu0 %v6528
    %v6937 = vpop.f32.mrf.mxu0
    %v6938 = vadd.f32 %v6925, %v6937
    %v6939 = vpop.f32.mrf.mxu0
    %6940 = vdwg.mxu0
    %6941 = vmatpush.bf16.msra.mxu0 %v6833
    %6942 = vmatpush.bf16.msra.mxu0 %v6831
    %6943 = vmatpush.bf16.msra.mxu0 %v6829
    %6944 = vmatpush.bf16.msra.mxu0 %v6827
    %6945 = vmatpush.bf16.msra.mxu0 %v6825
    %6946 = vmatpush.bf16.msra.mxu0 %v6823
    %6947 = vmatpush.bf16.msra.mxu0 %v6821
    %6948 = vmatpush.bf16.msra.mxu0 %v6819
    %6949 = vmatmul.bf16.gmra.mxu0 %v6529
    %v6950 = vpop.f32.mrf.mxu0
    %v6951 = vadd.f32 %v6938, %v6950
    %v6952 = vpop.f32.mrf.mxu0
    %6953 = vdwg.mxu0
    %6954 = vmatpush.bf16.msra.mxu0 %v6849
    %6955 = vmatpush.bf16.msra.mxu0 %v6847
    %6956 = vmatpush.bf16.msra.mxu0 %v6845
    %6957 = vmatpush.bf16.msra.mxu0 %v6843
    %6958 = vmatpush.bf16.msra.mxu0 %v6841
    %6959 = vmatpush.bf16.msra.mxu0 %v6839
    %6960 = vmatpush.bf16.msra.mxu0 %v6837
    %6961 = vmatpush.bf16.msra.mxu0 %v6835
    %6962 = vmatmul.bf16.gmra.mxu0 %v6530
    %v6963 = vpop.f32.mrf.mxu0
    %v6964 = vadd.f32 %v6951, %v6963
    %v6965 = vpop.f32.mrf.mxu0
    %6966 = vdwg.mxu0
    %6967 = vmatpush.bf16.msra.mxu0 %v6802
    %6968 = vmatpush.bf16.msra.mxu0 %v6800
    %6969 = vmatpush.bf16.msra.mxu0 %v6798
    %6970 = vmatpush.bf16.msra.mxu0 %v6796
    %6971 = vmatpush.bf16.msra.mxu0 %v6794
    %6972 = vmatpush.bf16.msra.mxu0 %v6792
    %6973 = vmatpush.bf16.msra.mxu0 %v6790
    %6974 = vmatpush.bf16.msra.mxu0 %v6788
    %6975 = vmatmul.bf16.gmra.mxu0 %v6527
    %v6976 = vpop.f32.mrf.mxu0
    %v6977 = vadd.f32 0.0, %v6976
    %v6978 = vpop.f32.mrf.mxu0
    %6979 = vdwg.mxu0
    %6980 = vmatpush.bf16.msra.mxu0 %v6818
    %6981 = vmatpush.bf16.msra.mxu0 %v6816
    %6982 = vmatpush.bf16.msra.mxu0 %v6814
    %6983 = vmatpush.bf16.msra.mxu0 %v6812
    %6984 = vmatpush.bf16.msra.mxu0 %v6810
    %6985 = vmatpush.bf16.msra.mxu0 %v6808
    %6986 = vmatpush.bf16.msra.mxu0 %v6806
    %6987 = vmatpush.bf16.msra.mxu0 %v6804
    %6988 = vmatmul.bf16.gmra.mxu0 %v6528
    %v6989 = vpop.f32.mrf.mxu0
    %v6990 = vadd.f32 %v6977, %v6989
    %v6991 = vpop.f32.mrf.mxu0
    %6992 = vdwg.mxu0
    %6993 = vmatpush.bf16.msra.mxu0 %v6834
    %6994 = vmatpush.bf16.msra.mxu0 %v6832
    %6995 = vmatpush.bf16.msra.mxu0 %v6830
    %6996 = vmatpush.bf16.msra.mxu0 %v6828
    %6997 = vmatpush.bf16.msra.mxu0 %v6826
    %6998 = vmatpush.bf16.msra.mxu0 %v6824
    %6999 = vmatpush.bf16.msra.mxu0 %v6822
    %7000 = vmatpush.bf16.msra.mxu0 %v6820
    %7001 = vmatmul.bf16.gmra.mxu0 %v6529
    %v7002 = vpop.f32.mrf.mxu0
    %v7003 = vadd.f32 %v6990, %v7002
    %v7004 = vpop.f32.mrf.mxu0
    %7005 = vdwg.mxu0
    %7006 = vmatpush.bf16.msra.mxu0 %v6850
    %7007 = vmatpush.bf16.msra.mxu0 %v6848
    %7008 = vmatpush.bf16.msra.mxu0 %v6846
    %7009 = vmatpush.bf16.msra.mxu0 %v6844
    %7010 = vmatpush.bf16.msra.mxu0 %v6842
    %7011 = vmatpush.bf16.msra.mxu0 %v6840
    %7012 = vmatpush.bf16.msra.mxu0 %v6838
    %7013 = vmatpush.bf16.msra.mxu0 %v6836
    %7014 = vmatmul.bf16.gmra.mxu0 %v6530
    %v7015 = vpop.f32.mrf.mxu0
    %v7016 = vadd.f32 %v7003, %v7015
    %v7017 = vpop.f32.mrf.mxu0
    %7018 = vdwg.mxu0
    %v7019 = vmax.f32 %v6964, %v7016
    %vm7020 = vcmask 1045504
    %v7021 = vsel %vm7020, %v7019, 0.0
    %v7022 = vrot.slane %v7021, 4
    %v7023 = vadd.f32 %v7021, %v7022
    %v7024 = vrot.slane %v7023, 2
    %v7025 = vadd.f32 %v7023, %v7024
    %v7026 = vrot.slane %v7025, 1
    %v7027 = vadd.f32 %v7025, %v7026
    %7029 = vrot.lane.b32.xlu0 %v7027, 64
    %v7030 = vpop.permute.xlu0 %7029
    %v7032 = vadd.f32 %v7027, %v7030
    %v7033 = vrcp.pop 12.0
    %v7034 = vmul.f32 12.0, %v7033
    %v7035 = vsub.f32 1.0, %v7034
    %v7036 = vmul.f32 %v7033, %v7035
    %v7037 = vadd.f32 %v7033, %v7036
    %vm7038 = vweird.f32 %v7033
    %v7039 = vsel %vm7038, %v7033, %v7037
    %v7040 = vmul.f32 %v7032, %v7039
    %7042 = vrot.lane.b32.xlu0 %v7040, 64
    %v7043 = vpop.permute.xlu0 %7042
    %v7045 = vsel %vm141, %v7040, %v7043
    %v7046 = vperm.slane %v7045, 0
    %v7047 = vsub.f32 %v7019, %v7046
    %v7048 = vmul.f32 %v7047, %v7047
    %v7049 = vsel %vm7020, %v7048, 0.0
    %v7050 = vrot.slane %v7049, 4
    %v7051 = vadd.f32 %v7049, %v7050
    %v7052 = vrot.slane %v7051, 2
    %v7053 = vadd.f32 %v7051, %v7052
    %v7054 = vrot.slane %v7053, 1
    %v7055 = vadd.f32 %v7053, %v7054
    %7057 = vrot.lane.b32.xlu0 %v7055, 64
    %v7058 = vpop.permute.xlu0 %7057
    %v7060 = vadd.f32 %v7055, %v7058
    %v7061 = vmul.f32 %v7060, %v7039
    %v7062 = vld [vmem:[%s17] sm:$0x1]
    %v7063 = vadd.f32 %v7061, 1e-05
    %v7064 = vrsqrt.pop %v7063
    %v7065 = vmul.f32 %v7064, %v7063
    %v7066 = vmul.f32 %v7065, %v7064
    %v7067 = vmul.f32 0.5, %v7066
    %v7068 = vsub.f32 1.5, %v7067
    %v7069 = vmul.f32 %v7064, %v7068
    %vm7070 = vweird.f32 %v7063
    %vm7071 = vweird.f32 %v7064
    %vm7072 = vmor %vm7070, %vm7071
    %v7073 = vsel %vm7072, %v7064, %v7069
    %v7074 = vmul.f32 %v7062, %v7073
    %v7075 = vld [vmem:[%s18] sm:$0x1]
    %v7076 = vmul.f32 %v7040, %v7074
    %v7077 = vsub.f32 %v7075, %v7076
    %v7079 = vperm.slane %v7074, 0
    %7080 = vrot.lane.b32.xlu0 %v7079, 64
    %v7081 = vpop.permute.xlu0 %7080
    %v7083 = vsel %vm141, %v7074, %v7081
    %v7085 = vperm.slane %v7077, 0
    %7086 = vrot.lane.b32.xlu0 %v7085, 64
    %v7087 = vpop.permute.xlu0 %7086
    %v7089 = vsel %vm141, %v7077, %v7087
    %v7090 = vperm.slane %v7083, 0
    %v7091 = vmul.f32 %v7019, %v7090
    %v7092 = vperm.slane %v7089, 0
    %v7093 = vadd.f32 %v7091, %v7092
    %vm7094 = vcmp.gt.f32.partialorder %v7093, 0.0
    %vm7095 = vcmp.lt.f32.partialorder %v7093, 0.0
    %v7096 = vsel %vm7095, -1.0, 0.0
    %v7097 = vsel %vm7094, 1.0, %v7096
    %7099 = vrot.lane.b32.xlu0 %v7097, 64
    %v7100 = vpop.permute.xlu0 %7099
    %vm7102 = vcmask 518144
    %7103 = vst.msk [vmem:[#allocation7 + $0x1] sm:$0x7] %vm7102, %v7100
    %s7104 = scalar_lea.vmem [#allocation7], 4
    %vm7105 = vcmask 521219
    %7106 = vst.msk [vmem:[%s7104 - $0x2] sm:$0x38] %vm7105, %v7100
    %vm7107 = vcmask 1042944
    %7108 = vst.msk [vmem:[#allocation7] sm:$0x7] %vm7107, %v7100
    %vm7109 = vcmask 1046019
    %7110 = vst.msk [vmem:[%s7104 - $0x3] sm:$0x38] %vm7109, %v7100
    %v7111 = vld [vmem:[#allocation7] sm:$0x7]
    %v7112 = vld [vmem:[#allocation7 + $0x1] sm:$0x7]
    %v7113 = vld [vmem:[%s7104] sm:$0x7]
    %v7114 = vld [vmem:[%s7104 + $0x1] sm:$0x7]
    %v7117 = vrot.slane %v7113, 5
    %v7118 = vrot.slane %v7114, 5
    %v7121 = vsel %vm2545, %v7111, %v7117
    %v7122 = vsel %vm2545, %v7112, %v7118
    %v7123 = vpack.c.bf16 %v7121, %v7121
    %v7124 = vpack.c.bf16 %v7122, %v7122
    %v7125 = vld [vmem:[%s19] sm:$0xff]
    %v7126 = vld [vmem:[%s19 + $0x8] sm:$0xff]
    %v7127 = vld [vmem:[%s19 + $0x10] sm:$0xff]
    %v7128 = vld [vmem:[%s19 + $0x18] sm:$0xff]
    %v7129 = vld [vmem:[%s19 + $0x20] sm:$0xff]
    %v7130 = vld [vmem:[%s19 + $0x28] sm:$0xff]
    %v7131 = vld [vmem:[%s19 + $0x30] sm:$0xff]
    %v7132 = vld [vmem:[%s19 + $0x38] sm:$0xff]
    %v7133 = vld [vmem:[%s19 + $0x40] sm:$0xff]
    %v7134 = vld [vmem:[%s19 + $0x48] sm:$0xff]
    %v7135 = vld [vmem:[%s19 + $0x50] sm:$0xff]
    %v7136 = vld [vmem:[%s19 + $0x58] sm:$0xff]
    %v7137 = vld [vmem:[%s19 + $0x60] sm:$0xff]
    %v7138 = vld [vmem:[%s19 + $0x68] sm:$0xff]
    %v7139 = vld [vmem:[%s19 + $0x70] sm:$0xff]
    %v7140 = vld [vmem:[%s19 + $0x78] sm:$0xff]
    %v7141 = vld [vmem:[%s19 + $0x80] sm:$0xff]
    %v7142 = vld [vmem:[%s19 + $0x88] sm:$0xff]
    %v7143 = vld [vmem:[%s19 + $0x90] sm:$0xff]
    %v7144 = vld [vmem:[%s19 + $0x98] sm:$0xff]
    %v7145 = vld [vmem:[%s19 + $0xa0] sm:$0xff]
    %v7146 = vld [vmem:[%s19 + $0xa8] sm:$0xff]
    %v7147 = vld [vmem:[%s19 + $0xb0] sm:$0xff]
    %v7148 = vld [vmem:[%s19 + $0xb8] sm:$0xff]
    %v7149 = vld [vmem:[%s19 + $0xc0] sm:$0xff]
    %v7150 = vld [vmem:[%s19 + $0xc8] sm:$0xff]
    %v7151 = vld [vmem:[%s19 + $0xd0] sm:$0xff]
    %v7152 = vld [vmem:[%s19 + $0xd8] sm:$0xff]
    %v7153 = vld [vmem:[%s19 + $0xe0] sm:$0xff]
    %v7154 = vld [vmem:[%s19 + $0xe8] sm:$0xff]
    %v7155 = vld [vmem:[%s19 + $0xf0] sm:$0xff]
    %v7156 = vld [vmem:[%s19 + $0xf8] sm:$0xff]
    %v7189 = vunpack.c.l.b16 %v7125
    %v7190 = vunpack.c.h.b16 %v7125
    %v7191 = vunpack.c.l.b16 %v7126
    %v7192 = vunpack.c.h.b16 %v7126
    %v7193 = vunpack.c.l.b16 %v7127
    %v7194 = vunpack.c.h.b16 %v7127
    %v7195 = vunpack.c.l.b16 %v7128
    %v7196 = vunpack.c.h.b16 %v7128
    %v7197 = vunpack.c.l.b16 %v7129
    %v7198 = vunpack.c.h.b16 %v7129
    %v7199 = vunpack.c.l.b16 %v7130
    %v7200 = vunpack.c.h.b16 %v7130
    %v7201 = vunpack.c.l.b16 %v7131
    %v7202 = vunpack.c.h.b16 %v7131
    %v7203 = vunpack.c.l.b16 %v7132
    %v7204 = vunpack.c.h.b16 %v7132
    %v7205 = vunpack.c.l.b16 %v7133
    %v7206 = vunpack.c.h.b16 %v7133
    %v7207 = vunpack.c.l.b16 %v7134
    %v7208 = vunpack.c.h.b16 %v7134
    %v7209 = vunpack.c.l.b16 %v7135
    %v7210 = vunpack.c.h.b16 %v7135
    %v7211 = vunpack.c.l.b16 %v7136
    %v7212 = vunpack.c.h.b16 %v7136
    %v7213 = vunpack.c.l.b16 %v7137
    %v7214 = vunpack.c.h.b16 %v7137
    %v7215 = vunpack.c.l.b16 %v7138
    %v7216 = vunpack.c.h.b16 %v7138
    %v7217 = vunpack.c.l.b16 %v7139
    %v7218 = vunpack.c.h.b16 %v7139
    %v7219 = vunpack.c.l.b16 %v7140
    %v7220 = vunpack.c.h.b16 %v7140
    %v7221 = vunpack.c.l.b16 %v7141
    %v7222 = vunpack.c.h.b16 %v7141
    %v7223 = vunpack.c.l.b16 %v7142
    %v7224 = vunpack.c.h.b16 %v7142
    %v7225 = vunpack.c.l.b16 %v7143
    %v7226 = vunpack.c.h.b16 %v7143
    %v7227 = vunpack.c.l.b16 %v7144
    %v7228 = vunpack.c.h.b16 %v7144
    %v7229 = vunpack.c.l.b16 %v7145
    %v7230 = vunpack.c.h.b16 %v7145
    %v7231 = vunpack.c.l.b16 %v7146
    %v7232 = vunpack.c.h.b16 %v7146
    %v7233 = vunpack.c.l.b16 %v7147
    %v7234 = vunpack.c.h.b16 %v7147
    %v7235 = vunpack.c.l.b16 %v7148
    %v7236 = vunpack.c.h.b16 %v7148
    %v7237 = vunpack.c.l.b16 %v7149
    %v7238 = vunpack.c.h.b16 %v7149
    %v7239 = vunpack.c.l.b16 %v7150
    %v7240 = vunpack.c.h.b16 %v7150
    %v7241 = vunpack.c.l.b16 %v7151
    %v7242 = vunpack.c.h.b16 %v7151
    %v7243 = vunpack.c.l.b16 %v7152
    %v7244 = vunpack.c.h.b16 %v7152
    %v7245 = vunpack.c.l.b16 %v7153
    %v7246 = vunpack.c.h.b16 %v7153
    %v7247 = vunpack.c.l.b16 %v7154
    %v7248 = vunpack.c.h.b16 %v7154
    %v7249 = vunpack.c.l.b16 %v7155
    %v7250 = vunpack.c.h.b16 %v7155
    %v7251 = vunpack.c.l.b16 %v7156
    %v7252 = vunpack.c.h.b16 %v7156
    %v7253 = vpack.c.b16 %v7191, %v7189
    %v7254 = vpack.c.b16 %v7192, %v7190
    %v7255 = vpack.c.b16 %v7195, %v7193
    %v7256 = vpack.c.b16 %v7196, %v7194
    %v7257 = vpack.c.b16 %v7199, %v7197
    %v7258 = vpack.c.b16 %v7200, %v7198
    %v7259 = vpack.c.b16 %v7203, %v7201
    %v7260 = vpack.c.b16 %v7204, %v7202
    %v7261 = vpack.c.b16 %v7207, %v7205
    %v7262 = vpack.c.b16 %v7208, %v7206
    %v7263 = vpack.c.b16 %v7211, %v7209
    %v7264 = vpack.c.b16 %v7212, %v7210
    %v7265 = vpack.c.b16 %v7215, %v7213
    %v7266 = vpack.c.b16 %v7216, %v7214
    %v7267 = vpack.c.b16 %v7219, %v7217
    %v7268 = vpack.c.b16 %v7220, %v7218
    %v7269 = vpack.c.b16 %v7223, %v7221
    %v7270 = vpack.c.b16 %v7224, %v7222
    %v7271 = vpack.c.b16 %v7227, %v7225
    %v7272 = vpack.c.b16 %v7228, %v7226
    %v7273 = vpack.c.b16 %v7231, %v7229
    %v7274 = vpack.c.b16 %v7232, %v7230
    %v7275 = vpack.c.b16 %v7235, %v7233
    %v7276 = vpack.c.b16 %v7236, %v7234
    %v7277 = vpack.c.b16 %v7239, %v7237
    %v7278 = vpack.c.b16 %v7240, %v7238
    %v7279 = vpack.c.b16 %v7243, %v7241
    %v7280 = vpack.c.b16 %v7244, %v7242
    %v7281 = vpack.c.b16 %v7247, %v7245
    %v7282 = vpack.c.b16 %v7248, %v7246
    %v7283 = vpack.c.b16 %v7251, %v7249
    %v7284 = vpack.c.b16 %v7252, %v7250
    %7317 = vmatpush.bf16.msra.mxu0 %v7267
    %7318 = vmatpush.bf16.msra.mxu0 %v7265
    %7319 = vmatpush.bf16.msra.mxu0 %v7263
    %7320 = vmatpush.bf16.msra.mxu0 %v7261
    %7321 = vmatpush.bf16.msra.mxu0 %v7259
    %7322 = vmatpush.bf16.msra.mxu0 %v7257
    %7323 = vmatpush.bf16.msra.mxu0 %v7255
    %7324 = vmatpush.bf16.msra.mxu0 %v7253
    %7325 = vmatmul.bf16.gmra.mxu0 %v7123
    %v7326 = vpop.f32.mrf.mxu0
    %v7327 = vadd.f32 0.0, %v7326
    %v7328 = vpop.f32.mrf.mxu0
    %7329 = vdwg.mxu0
    %7330 = vmatpush.bf16.msra.mxu0 %v7283
    %7331 = vmatpush.bf16.msra.mxu0 %v7281
    %7332 = vmatpush.bf16.msra.mxu0 %v7279
    %7333 = vmatpush.bf16.msra.mxu0 %v7277
    %7334 = vmatpush.bf16.msra.mxu0 %v7275
    %7335 = vmatpush.bf16.msra.mxu0 %v7273
    %7336 = vmatpush.bf16.msra.mxu0 %v7271
    %7337 = vmatpush.bf16.msra.mxu0 %v7269
    %7338 = vmatmul.bf16.gmra.mxu0 %v7124
    %v7339 = vpop.f32.mrf.mxu0
    %v7340 = vadd.f32 %v7327, %v7339
    %v7341 = vpop.f32.mrf.mxu0
    %7342 = vdwg.mxu0
    %7343 = vmatpush.bf16.msra.mxu0 %v7268
    %7344 = vmatpush.bf16.msra.mxu0 %v7266
    %7345 = vmatpush.bf16.msra.mxu0 %v7264
    %7346 = vmatpush.bf16.msra.mxu0 %v7262
    %7347 = vmatpush.bf16.msra.mxu0 %v7260
    %7348 = vmatpush.bf16.msra.mxu0 %v7258
    %7349 = vmatpush.bf16.msra.mxu0 %v7256
    %7350 = vmatpush.bf16.msra.mxu0 %v7254
    %7351 = vmatmul.bf16.gmra.mxu0 %v7123
    %v7352 = vpop.f32.mrf.mxu0
    %v7353 = vadd.f32 0.0, %v7352
    %v7354 = vpop.f32.mrf.mxu0
    %7355 = vdwg.mxu0
    %7356 = vmatpush.bf16.msra.mxu0 %v7284
    %7357 = vmatpush.bf16.msra.mxu0 %v7282
    %7358 = vmatpush.bf16.msra.mxu0 %v7280
    %7359 = vmatpush.bf16.msra.mxu0 %v7278
    %7360 = vmatpush.bf16.msra.mxu0 %v7276
    %7361 = vmatpush.bf16.msra.mxu0 %v7274
    %7362 = vmatpush.bf16.msra.mxu0 %v7272
    %7363 = vmatpush.bf16.msra.mxu0 %v7270
    %7364 = vmatmul.bf16.gmra.mxu0 %v7124
    %v7365 = vpop.f32.mrf.mxu0
    %v7366 = vadd.f32 %v7353, %v7365
    %v7367 = vpop.f32.mrf.mxu0
    %7368 = vdwg.mxu0
    %7371 = vrot.lane.b32.xlu0 %v7340, 56
    %v7372 = vpop.permute.xlu0 %7371
    %7373 = vrot.lane.b32.xlu0 %v7366, 56
    %v7374 = vpop.permute.xlu0 %7373
    %v7375 = vsel %vm1335, %v7372, %v7374
    %v7377 = vmax.f32 %v7340, %v7375
    %vm7378 = vcmask 586752
    %v7379 = vsel %vm7378, %v7377, 0.0
    %v7380 = vrot.slane %v7379, 4
    %v7381 = vadd.f32 %v7379, %v7380
    %v7382 = vrot.slane %v7381, 2
    %v7383 = vadd.f32 %v7381, %v7382
    %v7384 = vrot.slane %v7383, 1
    %v7385 = vadd.f32 %v7383, %v7384
    %v7386 = vrcp.pop 6.0
    %v7387 = vmul.f32 6.0, %v7386
    %v7388 = vsub.f32 1.0, %v7387
    %v7389 = vmul.f32 %v7386, %v7388
    %v7390 = vadd.f32 %v7386, %v7389
    %vm7391 = vweird.f32 %v7386
    %v7392 = vsel %vm7391, %v7386, %v7390
    %v7393 = vmul.f32 %v7385, %v7392
    %v7394 = vsub.f32 %v7377, %v7393
    %v7395 = vmul.f32 %v7394, %v7394
    %v7396 = vsel %vm7378, %v7395, 0.0
    %v7397 = vrot.slane %v7396, 4
    %v7398 = vadd.f32 %v7396, %v7397
    %v7399 = vrot.slane %v7398, 2
    %v7400 = vadd.f32 %v7398, %v7399
    %v7401 = vrot.slane %v7400, 1
    %v7402 = vadd.f32 %v7400, %v7401
    %v7403 = vmul.f32 %v7402, %v7392
    %v7404 = vld [vmem:[%s20] sm:$0x1]
    %v7405 = vadd.f32 %v7403, 1e-05
    %v7406 = vrsqrt.pop %v7405
    %v7407 = vmul.f32 %v7406, %v7405
    %v7408 = vmul.f32 %v7407, %v7406
    %v7409 = vmul.f32 0.5, %v7408
    %v7410 = vsub.f32 1.5, %v7409
    %v7411 = vmul.f32 %v7406, %v7410
    %vm7412 = vweird.f32 %v7405
    %vm7413 = vweird.f32 %v7406
    %vm7414 = vmor %vm7412, %vm7413
    %v7415 = vsel %vm7414, %v7406, %v7411
    %v7416 = vmul.f32 %v7404, %v7415
    %v7417 = vld [vmem:[%s21] sm:$0x1]
    %v7418 = vmul.f32 %v7393, %v7416
    %v7419 = vsub.f32 %v7417, %v7418
    %v7421 = vperm.slane %v7416, 0
    %v7423 = vmul.f32 %v7377, %v7421
    %v7425 = vperm.slane %v7419, 0
    %v7427 = vadd.f32 %v7423, %v7425
    %vm7428 = vcmp.gt.f32.partialorder %v7427, 0.0
    %vm7429 = vcmp.lt.f32.partialorder %v7427, 0.0
    %v7430 = vsel %vm7429, -1.0, 0.0
    %v7431 = vsel %vm7428, 1.0, %v7430
    %v7433 = vrot.slane %v7431, 1
    %7434 = vrot.lane.b32.xlu0 %v7433, 72
    %v7435 = vpop.permute.xlu0 %7434
    %v7437 = vrot.slane %v7431, 2
    %7438 = vrot.lane.b32.xlu0 %v7437, 16
    %v7439 = vpop.permute.xlu0 %7438
    %v7441 = vsel %vm1338, %v7431, %v7435
    %v7442 = vsel %vm1326, %v7435, %v7439
    %v7445 = vrot.slane %v7441, 2
    %v7446 = vrot.slane %v7442, 2
    %vm7449 = vcmask 1040384
    %v7450 = vsel %vm7449, %v7441, %v7445
    %v7451 = vsel %vm7449, %v7442, %v7446
    %v7452 = vpack.c.bf16 %v7450, %v7450
    %v7453 = vpack.c.bf16 %v7451, %v7451
    %v7454 = vld [vmem:[%s22] sm:$0xf]
    %v7455 = vld [vmem:[%s22 + $0x4] sm:$0xf]
    %v7456 = vld [vmem:[%s22 + $0x8] sm:$0xf]
    %v7457 = vld [vmem:[%s22 + $0xc] sm:$0xf]
    %v7458 = vld [vmem:[%s22 + $0x10] sm:$0xf]
    %v7459 = vld [vmem:[%s22 + $0x14] sm:$0xf]
    %v7460 = vld [vmem:[%s22 + $0x18] sm:$0xf]
    %v7461 = vld [vmem:[%s22 + $0x1c] sm:$0xf]
    %v7462 = vld [vmem:[%s22 + $0x20] sm:$0xf]
    %v7463 = vld [vmem:[%s22 + $0x24] sm:$0xf]
    %v7464 = vld [vmem:[%s22 + $0x28] sm:$0xf]
    %v7465 = vld [vmem:[%s22 + $0x2c] sm:$0xf]
    %v7466 = vld [vmem:[%s22 + $0x30] sm:$0xf]
    %v7467 = vld [vmem:[%s22 + $0x34] sm:$0xf]
    %v7468 = vld [vmem:[%s22 + $0x38] sm:$0xf]
    %v7469 = vld [vmem:[%s22 + $0x3c] sm:$0xf]
    %v7470 = vld [vmem:[%s22 + $0x40] sm:$0xf]
    %v7471 = vld [vmem:[%s22 + $0x44] sm:$0xf]
    %v7472 = vld [vmem:[%s22 + $0x48] sm:$0xf]
    %v7473 = vld [vmem:[%s22 + $0x4c] sm:$0xf]
    %v7474 = vld [vmem:[%s22 + $0x50] sm:$0xf]
    %v7475 = vld [vmem:[%s22 + $0x54] sm:$0xf]
    %v7476 = vld [vmem:[%s22 + $0x58] sm:$0xf]
    %v7477 = vld [vmem:[%s22 + $0x5c] sm:$0xf]
    %v7478 = vld [vmem:[%s22 + $0x60] sm:$0xf]
    %v7479 = vld [vmem:[%s22 + $0x64] sm:$0xf]
    %v7480 = vld [vmem:[%s22 + $0x68] sm:$0xf]
    %v7508 = vunpack.c.l.b16 %v7454
    %v7509 = vunpack.c.l.b16 %v7455
    %v7510 = vunpack.c.l.b16 %v7456
    %v7511 = vunpack.c.l.b16 %v7457
    %v7512 = vunpack.c.l.b16 %v7458
    %v7513 = vunpack.c.l.b16 %v7459
    %v7514 = vunpack.c.l.b16 %v7460
    %v7515 = vunpack.c.l.b16 %v7461
    %v7516 = vunpack.c.l.b16 %v7462
    %v7517 = vunpack.c.l.b16 %v7463
    %v7518 = vunpack.c.l.b16 %v7464
    %v7519 = vunpack.c.l.b16 %v7465
    %v7520 = vunpack.c.l.b16 %v7466
    %v7521 = vunpack.c.l.b16 %v7467
    %v7522 = vunpack.c.l.b16 %v7468
    %v7523 = vunpack.c.l.b16 %v7469
    %v7524 = vunpack.c.l.b16 %v7470
    %v7525 = vunpack.c.l.b16 %v7471
    %v7526 = vunpack.c.l.b16 %v7472
    %v7527 = vunpack.c.l.b16 %v7473
    %v7528 = vunpack.c.l.b16 %v7474
    %v7529 = vunpack.c.l.b16 %v7475
    %v7530 = vunpack.c.l.b16 %v7476
    %v7531 = vunpack.c.l.b16 %v7477
    %v7532 = vunpack.c.l.b16 %v7478
    %v7533 = vunpack.c.l.b16 %v7479
    %v7534 = vunpack.c.l.b16 %v7480
    %v7535 = vpack.c.b16 %v7509, %v7508
    %v7536 = vpack.c.b16 %v7511, %v7510
    %v7537 = vpack.c.b16 %v7513, %v7512
    %v7538 = vpack.c.b16 %v7515, %v7514
    %v7539 = vpack.c.b16 %v7517, %v7516
    %v7540 = vpack.c.b16 %v7519, %v7518
    %v7541 = vpack.c.b16 %v7521, %v7520
    %v7542 = vpack.c.b16 %v7523, %v7522
    %v7543 = vpack.c.b16 %v7525, %v7524
    %v7544 = vpack.c.b16 %v7527, %v7526
    %v7545 = vpack.c.b16 %v7529, %v7528
    %v7546 = vpack.c.b16 %v7531, %v7530
    %v7547 = vpack.c.b16 %v7533, %v7532
    %v7548 = vpack.c.b16 %v7534, %v7534
    %v7563 = vsel %vm1342, %v7453, 0
    %v7566 = vsel %vm1687, %v7548, 0
    %7568 = vmatpush.bf16.msra.mxu0 %v7542
    %7569 = vmatpush.bf16.msra.mxu0 %v7541
    %7570 = vmatpush.bf16.msra.mxu0 %v7540
    %7571 = vmatpush.bf16.msra.mxu0 %v7539
    %7572 = vmatpush.bf16.msra.mxu0 %v7538
    %7573 = vmatpush.bf16.msra.mxu0 %v7537
    %7574 = vmatpush.bf16.msra.mxu0 %v7536
    %7575 = vmatpush.bf16.msra.mxu0 %v7535
    %7576 = vmatmul.bf16.gmra.mxu0 %v7452
    %v7577 = vpop.f32.mrf.mxu0
    %v7578 = vadd.f32 0.0, %v7577
    %v7579 = vpop.f32.mrf.mxu0
    %7580 = vdwg.mxu0
    %7581 = vmatpush.bf16.msra.mxu0 0
    %7582 = vmatpush.bf16.msra.mxu0 0
    %7583 = vmatpush.bf16.msra.mxu0 %v7566
    %7584 = vmatpush.bf16.msra.mxu0 %v7547
    %7585 = vmatpush.bf16.msra.mxu0 %v7546
    %7586 = vmatpush.bf16.msra.mxu0 %v7545
    %7587 = vmatpush.bf16.msra.mxu0 %v7544
    %7588 = vmatpush.bf16.msra.mxu0 %v7543
    %7589 = vmatmul.bf16.gmra.mxu0 %v7563
    %v7590 = vpop.f32.mrf.mxu0
    %v7591 = vadd.f32 %v7578, %v7590
    %v7592 = vpop.f32.mrf.mxu0
    %7593 = vdwg.mxu0
    %vm7594 = vcmask 33792
    %7595 = vst.msk [vmem:[#allocation14] sm:$0x3] %vm7594, %v7591
    // Predicated region
    $region106: #{binet_forward.1} parent=1 // pred_check
      _
    $region107: #{binet_forward.1} parent=1 // pred_check_branch
      %7597 = sbr.rel (0) target = $region109
    $region108: #{binet_forward.1} parent=1 // pred_region
      %7599 = vsyncadd [#allocation10], 0
      %s7601 = sshll.u32 [#allocation14], 4
      %s7602 = int_to_ptr.vmem [resolvable:$true] %s7601
      %s7603 = sshll.u32 %s23, 4
      %s7604 = int_to_ptr.hbm [resolvable:$true] %s7603
      %7606 = dma.vmem_to_hbm [thread:$0]  %s7602, 32, %s7604, [#allocation10]
    $region109: #{binet_forward.1} parent=1 // pred_fallthru
      _
    // Predicated region
    $region110: #{binet_forward.1} parent=1 // pred_check
      _
    $region111: #{binet_forward.1} parent=1 // pred_check_branch
      %7608 = sbr.rel (0) target = $region113
    $region112: #{binet_forward.1} parent=1 // pred_region
      %7610 = dma.done [#allocation10], 32
    $region113: #{binet_forward.1} parent=1 // pred_fallthru
      _
    %7611 = vsyncpa [#allocation9], 1
    %7612 = vsyncpa [#allocation12], 1
    %7613 = vsyncpa [#allocation10], 1

</llo_original>
